<compile_context>
chip_gen: v5e
topology: v5e:2x2
jax: 0.10.0
libtpu: 0.0.40
codegen_flags: <defaults>
</compile_context>

<pallas_src>
import re

import jax
import jax.numpy as jnp
from jax.experimental import pallas as pl
from jax.experimental.pallas import tpu as pltpu


def _round_up(x, m):
    return ((x + m - 1) // m) * m


def _tpu_generation():
    """Best-effort TPU generation (5 / 6 / 7) from device_kind; None if unknown."""
    try:
        kind = jax.devices()[0].device_kind.lower()
    except Exception:
        return None
    m = re.search(r"(\d+)", kind)
    return int(m.group(1)) if m else None


def _pick_tile_m(M, gen):
    """Row tile: biggest bounded multiple-of-8 tile; split only for v7x megacore."""
    m8 = _round_up(M, 8)
    if m8 <= 256:
        return m8                       # single small tile, no padding waste
    if gen == 7 and m8 >= 512:
        # 2 TensorCores: ensure >= 2 steps on the "parallel" row axis while
        # keeping each step a full >=256-row MXU pass.
        return 512 if m8 >= 1024 else 256
    # Single-TC chips (v5e/v6e) or unknown: no artificial splits.
    return 512 if m8 >= 512 else 256


def _pick_tile_h(H, gen):
    """Hidden-axis tile for the streaming fallback."""
    if H % 128 != 0:
        return H  # full block (allowed: equals the array dim)
    # v5e (4x128^2 MXU, lowest HBM BW): prefer smaller streamed weight tiles.
    prefs = (512, 256, 384, 128) if gen == 5 else (768, 512, 1024, 256, 128)
    for cand in prefs:
        if H % cand == 0:
            return cand
    return H


def ffn_resident_kernel(x_ref, w1_ref, b1_ref, w2_ref, b2_ref, o_ref):
    # x_ref : (tm, C) native dtype     w1_ref: (C, H) bf16   b1_ref: (1, H) f32
    # w2_ref: (H, C)  bf16             b2_ref: (1, C) f32    o_ref : (tm, C)
    x = x_ref[...].astype(jnp.bfloat16)                       # in-kernel cast
    h = jnp.dot(x, w1_ref[...], preferred_element_type=jnp.float32)
    h = jnp.maximum(h + b1_ref[...], 0.0)                     # bias + ReLU in f32
    y = jnp.dot(h.astype(jnp.bfloat16), w2_ref[...],
                preferred_element_type=jnp.float32)
    o_ref[...] = (y + b2_ref[...]).astype(o_ref.dtype)


def ffn_streaming_kernel(x_ref, w1_ref, b1_ref, w2_ref, b2_ref, o_ref, acc_ref):
    # Fallback for weights too large to keep resident in VMEM.
    h_idx = pl.program_id(1)

    @pl.when(h_idx == 0)
    def _():
        acc_ref[...] = jnp.zeros_like(acc_ref)

    x = x_ref[...].astype(jnp.bfloat16)
    h = jnp.dot(x, w1_ref[...], preferred_element_type=jnp.float32)
    h = jnp.maximum(h + b1_ref[...], 0.0)
    acc_ref[...] += jnp.dot(h.astype(jnp.bfloat16), w2_ref[...],
                            preferred_element_type=jnp.float32)

    @pl.when(h_idx == pl.num_programs(1) - 1)
    def _():
        o_ref[...] = (acc_ref[...] + b2_ref[...]).astype(o_ref.dtype)


def feed_forward(x, w1, b1, w2, b2, *, tm=None, th=None):
    """x: (B, T, C).  w1: (C, H), b1: (H,), w2: (H, C), b2: (C,).  Returns (B, T, C)."""
    B, T, C = x.shape
    C_in, H = w1.shape
    assert C_in == C and w2.shape == (H, C) and b1.shape == (H,) and b2.shape == (C,)
    M = B * T
    out_dtype = x.dtype

    gen = _tpu_generation()
    if tm is None:
        tm = _pick_tile_m(M, gen)
    assert tm % 8 == 0, "row tile must be a multiple of 8 (f32 sublane)"
    M_pad = _round_up(M, tm)
    num_m = M_pad // tm

    xf = x.reshape(M, C)
    if M_pad != M:
        xf = jnp.pad(xf, ((0, M_pad - M), (0, 0)))

    # Weights are reused across every row tile -> cast to bf16 once here.
    # x stays in its native dtype and is cast inside the kernel.
    w1_bf = w1.astype(jnp.bfloat16)
    w2_bf = w2.astype(jnp.bfloat16)
    b1_2d = b1.reshape(1, H).astype(jnp.float32)
    b2_2d = b2.reshape(1, C).astype(jnp.float32)

    # Per-generation budgets: v7x has 64 MiB per-TC VMEM; v5e/v6e have 128 MiB.
    is_v7_or_unknown = (gen is None) or (gen >= 7)
    vmem_limit = (48 if is_v7_or_unknown else 96) * 1024 * 1024
    resident_budget = (40 if is_v7_or_unknown else 80) * 1024 * 1024

    weight_bytes = 2 * C * H * 2                     # W1 + W2 in bf16
    flops = 4 * M_pad * C * H                        # two matmuls, 2*M*C*H each
    out_itemsize = jnp.dtype(out_dtype).itemsize
    x_bytes = M_pad * C * xf.dtype.itemsize
    out_bytes = M_pad * C * out_itemsize
    bias_bytes = (H + C) * 4

    if weight_bytes <= resident_budget:
        # ---------------- Resident-weight fast path ----------------
        cost = pl.CostEstimate(
            flops=flops, transcendentals=0,
            bytes_accessed=x_bytes + weight_bytes + bias_bytes + out_bytes)
        out = pl.pallas_call(
            ffn_resident_kernel,
            out_shape=jax.ShapeDtypeStruct((M_pad, C), out_dtype),
            grid_spec=pltpu.PrefetchScalarGridSpec(
                num_scalar_prefetch=0,
                grid=(num_m,),
                in_specs=[
                    pl.BlockSpec((tm, C), lambda i: (i, 0)),  # x rows (streams)
                    pl.BlockSpec((C, H), lambda i: (0, 0)),   # W1 (resident)
                    pl.BlockSpec((1, H), lambda i: (0, 0)),   # b1 (resident)
                    pl.BlockSpec((H, C), lambda i: (0, 0)),   # W2 (resident)
                    pl.BlockSpec((1, C), lambda i: (0, 0)),   # b2 (resident)
                ],
                out_specs=pl.BlockSpec((tm, C), lambda i: (i, 0)),
            ),
            compiler_params=pltpu.CompilerParams(
                dimension_semantics=("parallel",),
                vmem_limit_bytes=vmem_limit,
            ),
            cost_estimate=cost,
        )(xf, w1_bf, b1_2d, w2_bf, b2_2d)
    else:
        # ---------------- Streaming fallback (huge weights) ----------------
        if th is None:
            th = _pick_tile_h(H, gen)
        assert H % th == 0
        num_h = H // th
        cost = pl.CostEstimate(
            flops=flops, transcendentals=0,
            bytes_accessed=(x_bytes + num_m * weight_bytes + num_m * H * 4
                            + C * 4 + out_bytes))
        out = pl.pallas_call(
            ffn_streaming_kernel,
            out_shape=jax.ShapeDtypeStruct((M_pad, C), out_dtype),
            grid_spec=pltpu.PrefetchScalarGridSpec(
                num_scalar_prefetch=0,
                grid=(num_m, num_h),                 # reduction (hidden) axis last
                in_specs=[
                    pl.BlockSpec((tm, C), lambda i, h: (i, 0)),  # x (resident over h)
                    pl.BlockSpec((C, th), lambda i, h: (0, h)),  # W1 column tile
                    pl.BlockSpec((1, th), lambda i, h: (0, h)),  # b1 tile
                    pl.BlockSpec((th, C), lambda i, h: (h, 0)),  # W2 row tile
                    pl.BlockSpec((1, C), lambda i, h: (0, 0)),   # b2 (resident)
                ],
                out_specs=pl.BlockSpec((tm, C), lambda i, h: (i, 0)),
                scratch_shapes=[pltpu.VMEM((tm, C), jnp.float32)],  # accumulator
            ),
            compiler_params=pltpu.CompilerParams(
                dimension_semantics=("parallel", "arbitrary"),
                vmem_limit_bytes=vmem_limit,
            ),
            cost_estimate=cost,
        )(xf, w1_bf, b1_2d, w2_bf, b2_2d)

    return out[:M].reshape(B, T, C)


def _ref_forward(x, w1, b1, w2, b2):
    h = jnp.maximum(x @ w1 + b1, 0.0)
    return h @ w2 + b2


if __name__ == "__main__":
    # Shapes consistent with the module: n_embd = 576, hidden = 4 * n_embd.
    B, T, n_embd = 2, 8, 576
    hidden = 4 * n_embd

    key = jax.random.PRNGKey(0)
    kx, kw1, kb1, kw2, kb2 = jax.random.split(key, 5)

    # PyTorch-style init: U(-1/sqrt(fan_in), 1/sqrt(fan_in)).
    lim1 = 1.0 / (n_embd ** 0.5)
    lim2 = 1.0 / (hidden ** 0.5)
    w1 = jax.random.uniform(kw1, (n_embd, hidden), jnp.float32, -lim1, lim1)
    b1 = jax.random.uniform(kb1, (hidden,), jnp.float32, -lim1, lim1)
    w2 = jax.random.uniform(kw2, (hidden, n_embd), jnp.float32, -lim2, lim2)
    b2 = jax.random.uniform(kb2, (n_embd,), jnp.float32, -lim2, lim2)

    x = jax.random.normal(kx, (B, T, n_embd), jnp.float32)

    out = feed_forward(x, w1, b1, w2, b2)
    out = jax.block_until_ready(out)

    ref = _ref_forward(x, w1, b1, w2, b2)
    assert out.shape == (B, T, n_embd)
    # Tolerance loosened vs the f32 reference because matmul inputs are bf16
    # (accumulation is f32).
    assert jnp.allclose(out, ref, atol=3e-2, rtol=3e-2), float(
        jnp.max(jnp.abs(out - ref)))

    print("KERNEL_OK")
</pallas_src>

<mosaic_0001>
module attributes {stable_mosaic.version = 11 : i64} {
  func.func @ffn_resident_kernel(%arg0: i32, %arg1: memref<16x576xf32, #tpu.memory_space<vmem>>, %arg2: memref<576x2304xbf16, #tpu.memory_space<vmem>>, %arg3: memref<1x2304xf32, #tpu.memory_space<vmem>>, %arg4: memref<2304x576xbf16, #tpu.memory_space<vmem>>, %arg5: memref<1x576xf32, #tpu.memory_space<vmem>>, %arg6: memref<16x576xf32, #tpu.memory_space<vmem>>) attributes {dimension_semantics = [#tpu.dimension_semantics<parallel>], iteration_bounds = array<i64: 1>, scalar_prefetch = 0 : i64, scratch_operands = 0 : i64, tpu.core_type = #tpu.core_type<tc>, window_params = [{transform_indices = @transform_0, window_bounds = array<i64: 16, 576>}, {pipeline_mode = #tpu.pipeline_mode<synchronous>, transform_indices = @transform_1, window_bounds = array<i64: 576, 2304>}, {pipeline_mode = #tpu.pipeline_mode<synchronous>, transform_indices = @transform_2, window_bounds = array<i64: 1, 2304>}, {pipeline_mode = #tpu.pipeline_mode<synchronous>, transform_indices = @transform_3, window_bounds = array<i64: 2304, 576>}, {pipeline_mode = #tpu.pipeline_mode<synchronous>, transform_indices = @transform_4, window_bounds = array<i64: 1, 576>}, {transform_indices = @transform_5, window_bounds = array<i64: 16, 576>}]} {
    %c0 = arith.constant 0 : index
    %c0_0 = arith.constant 0 : index
    %0 = vector.load %arg1[%c0, %c0_0] : memref<16x576xf32, #tpu.memory_space<vmem>>, vector<16x576xf32>
    %1 = arith.truncf %0 : vector<16x576xf32> to vector<16x576xbf16>
    %c0_1 = arith.constant 0 : index
    %c0_2 = arith.constant 0 : index
    %2 = vector.load %arg2[%c0_1, %c0_2] : memref<576x2304xbf16, #tpu.memory_space<vmem>>, vector<576x2304xbf16>
    %cst = arith.constant dense<0.000000e+00> : vector<16x2304xf32>
    %3 = tpu.matmul %1, %2, %cst {dimension_numbers = #tpu.dot_dimension_numbers<[1], [0], [0], [1], [0, 0, 1, 1], [], []>} : vector<16x576xbf16>, vector<576x2304xbf16>, vector<16x2304xf32> -> vector<16x2304xf32>
    %c0_3 = arith.constant 0 : index
    %c0_4 = arith.constant 0 : index
    %4 = vector.load %arg3[%c0_3, %c0_4] : memref<1x2304xf32, #tpu.memory_space<vmem>>, vector<1x2304xf32>
    %5 = vector.broadcast %4 : vector<1x2304xf32> to vector<16x2304xf32>
    %6 = arith.addf %3, %5 : vector<16x2304xf32>
    %cst_5 = arith.constant 0.000000e+00 : f32
    %7 = vector.broadcast %cst_5 : f32 to vector<16x2304xf32>
    %8 = arith.maximumf %6, %7 : vector<16x2304xf32>
    %9 = arith.truncf %8 : vector<16x2304xf32> to vector<16x2304xbf16>
    %c0_6 = arith.constant 0 : index
    %c0_7 = arith.constant 0 : index
    %10 = vector.load %arg4[%c0_6, %c0_7] : memref<2304x576xbf16, #tpu.memory_space<vmem>>, vector<2304x576xbf16>
    %cst_8 = arith.constant dense<0.000000e+00> : vector<16x576xf32>
    %11 = tpu.matmul %9, %10, %cst_8 {dimension_numbers = #tpu.dot_dimension_numbers<[1], [0], [0], [1], [0, 0, 1, 1], [], []>} : vector<16x2304xbf16>, vector<2304x576xbf16>, vector<16x576xf32> -> vector<16x576xf32>
    %c0_9 = arith.constant 0 : index
    %c0_10 = arith.constant 0 : index
    %12 = vector.load %arg5[%c0_9, %c0_10] : memref<1x576xf32, #tpu.memory_space<vmem>>, vector<1x576xf32>
    %13 = vector.broadcast %12 : vector<1x576xf32> to vector<16x576xf32>
    %14 = arith.addf %11, %13 : vector<16x576xf32>
    %c0_11 = arith.constant 0 : index
    %c0_12 = arith.constant 0 : index
    %15 = vector.load %arg6[%c0_11, %c0_12] : memref<16x576xf32, #tpu.memory_space<vmem>>, vector<16x576xf32>
    tpu.vector_store %arg6[%c0_11, %c0_12], %14 {strides = array<i32>} : memref<16x576xf32, #tpu.memory_space<vmem>>, vector<16x576xf32>,
    return
  }
  func.func @transform_0(%arg0: i32) -> (i32, i32) {
    %c0_i32 = arith.constant 0 : i32
    %c0_i32_0 = arith.constant 0 : i32
    return %arg0, %c0_i32 : i32, i32
  }
  func.func @transform_1(%arg0: i32) -> (i32, i32) {
    %c0_i32 = arith.constant 0 : i32
    %c0_i32_0 = arith.constant 0 : i32
    %c0_i32_1 = arith.constant 0 : i32
    return %c0_i32, %c0_i32_0 : i32, i32
  }
  func.func @transform_2(%arg0: i32) -> (i32, i32) {
    %c0_i32 = arith.constant 0 : i32
    %c0_i32_0 = arith.constant 0 : i32
    %c0_i32_1 = arith.constant 0 : i32
    return %c0_i32, %c0_i32_0 : i32, i32
  }
  func.func @transform_3(%arg0: i32) -> (i32, i32) {
    %c0_i32 = arith.constant 0 : i32
    %c0_i32_0 = arith.constant 0 : i32
    %c0_i32_1 = arith.constant 0 : i32
    return %c0_i32, %c0_i32_0 : i32, i32
  }
  func.func @transform_4(%arg0: i32) -> (i32, i32) {
    %c0_i32 = arith.constant 0 : i32
    %c0_i32_0 = arith.constant 0 : i32
    %c0_i32_1 = arith.constant 0 : i32
    return %c0_i32, %c0_i32_0 : i32, i32
  }
  func.func @transform_5(%arg0: i32) -> (i32, i32) {
    %c0_i32 = arith.constant 0 : i32
    %c0_i32_0 = arith.constant 0 : i32
    return %arg0, %c0_i32 : i32, i32
  }
}

</mosaic_0001>

<llo_original>
// kernel: tpu_custom_call.1
$region0: #{tpu_custom_call.1}
  #allocation0 [shape = 'u32[]', space=smem, size = 0x4, offset = 0x4, fixed_abs, tag = 'smem constant byte address 0x4 - core index']
  #allocation1 [shape = 'u32[72,128]{1,0:T(1,128)}', space=vmem, size = 0x9000, scoped, tag = 'internal scratch']
  %s0 = inlined_call_operand.vmem [shape: f32[16,576], index: 0, kind: input, shape index: {}]
  %s1 = inlined_call_operand.vmem [shape: bf16[576,2304], index: 1, kind: input, shape index: {}]
  %s2 = inlined_call_operand.vmem [shape: f32[1,2304], index: 2, kind: input, shape index: {}]
  %s3 = inlined_call_operand.vmem [shape: bf16[2304,576], index: 3, kind: input, shape index: {}]
  %s4 = inlined_call_operand.vmem [shape: f32[1,576], index: 4, kind: input, shape index: {}]
  %s5 = inlined_call_operand.hbm [shape: f32[16,576], index: 5, kind: output, shape index: {}]
  %s6 = sld [smem:[#allocation0]]
  $region30: #{tpu_custom_call.1} parent=0
    _
  %s8 = ssub.s32 1, %s6
  %s9 = scalar_select 0, %s8, %s6
  $region1: #{tpu_custom_call.1} parent=0
    #allocation2 [shape = 'u8[40960]{0}', space=vmem, size = 0xa000, scoped, tag = 'output window, operand 0, single buffered']
    #allocation3 [shape = 's32[1]{0}', space=sflag, size = 0x4, scoped, tag = 'scoped memory for tpu_custom_call.1']
    %10 = vsyncpa [#allocation3], 0
    // Predicated region
    $region2: #{tpu_custom_call.1} parent=1 // pred_check
      _
    $region3: #{tpu_custom_call.1} parent=1 // pred_check_branch
      %12 = sbr.rel (0) target = $region5
    $region4: #{tpu_custom_call.1} parent=1 // pred_region
      _
    $region5: #{tpu_custom_call.1} parent=1 // pred_fallthru
      _
    // Predicated region
    $region6: #{tpu_custom_call.1} parent=1 // pred_check
      _
    $region7: #{tpu_custom_call.1} parent=1 // pred_check_branch
      %14 = sbr.rel (0) target = $region9
    $region8: #{tpu_custom_call.1} parent=1 // pred_region
      _
    $region9: #{tpu_custom_call.1} parent=1 // pred_fallthru
      _
    // Predicated region
    $region10: #{tpu_custom_call.1} parent=1 // pred_check
      _
    $region11: #{tpu_custom_call.1} parent=1 // pred_check_branch
      %16 = sbr.rel (0) target = $region13
    $region12: #{tpu_custom_call.1} parent=1 // pred_region
      _
    $region13: #{tpu_custom_call.1} parent=1 // pred_fallthru
      _
    // Predicated region
    $region14: #{tpu_custom_call.1} parent=1 // pred_check
      _
    $region15: #{tpu_custom_call.1} parent=1 // pred_check_branch
      %18 = sbr.rel (0) target = $region17
    $region16: #{tpu_custom_call.1} parent=1 // pred_region
      _
    $region17: #{tpu_custom_call.1} parent=1 // pred_fallthru
      _
    // Predicated region
    $region18: #{tpu_custom_call.1} parent=1 // pred_check
      _
    $region19: #{tpu_custom_call.1} parent=1 // pred_check_branch
      %20 = sbr.rel (0) target = $region21
    $region20: #{tpu_custom_call.1} parent=1 // pred_region
      _
    $region21: #{tpu_custom_call.1} parent=1 // pred_fallthru
      _
    %v22 = vld [vmem:[%s0] sm:$0xff]
    %v23 = vld [vmem:[%s0 + $0x8] sm:$0xff]
    %v24 = vld [vmem:[%s0 + $0x10] sm:$0xff]
    %v25 = vld [vmem:[%s0 + $0x18] sm:$0xff]
    %v26 = vld [vmem:[%s0 + $0x20] sm:$0xff]
    %v27 = vld [vmem:[%s0 + $0x28] sm:$0xff]
    %v28 = vld [vmem:[%s0 + $0x30] sm:$0xff]
    %v29 = vld [vmem:[%s0 + $0x38] sm:$0xff]
    %v30 = vld [vmem:[%s0 + $0x40] sm:$0xff]
    %v31 = vld [vmem:[%s0 + $0x48] sm:$0xff]
    %v32 = vpack.c.bf16 %v27, %v22
    %v33 = vpack.c.bf16 %v28, %v23
    %v34 = vpack.c.bf16 %v29, %v24
    %v35 = vpack.c.bf16 %v30, %v25
    %v36 = vpack.c.bf16 %v31, %v26
    %v37 = vld [vmem:[%s1] sm:$0xff]
    %v38 = vld [vmem:[%s1 + $0x8] sm:$0xff]
    %v39 = vld [vmem:[%s1 + $0x10] sm:$0xff]
    %v40 = vld [vmem:[%s1 + $0x18] sm:$0xff]
    %v41 = vld [vmem:[%s1 + $0x20] sm:$0xff]
    %v42 = vld [vmem:[%s1 + $0x28] sm:$0xff]
    %v43 = vld [vmem:[%s1 + $0x30] sm:$0xff]
    %v44 = vld [vmem:[%s1 + $0x38] sm:$0xff]
    %v45 = vld [vmem:[%s1 + $0x40] sm:$0xff]
    %v46 = vld [vmem:[%s1 + $0x48] sm:$0xff]
    %v47 = vld [vmem:[%s1 + $0x50] sm:$0xff]
    %v48 = vld [vmem:[%s1 + $0x58] sm:$0xff]
    %v49 = vld [vmem:[%s1 + $0x60] sm:$0xff]
    %v50 = vld [vmem:[%s1 + $0x68] sm:$0xff]
    %v51 = vld [vmem:[%s1 + $0x70] sm:$0xff]
    %v52 = vld [vmem:[%s1 + $0x78] sm:$0xff]
    %v53 = vld [vmem:[%s1 + $0x80] sm:$0xff]
    %v54 = vld [vmem:[%s1 + $0x88] sm:$0xff]
    %v55 = vld [vmem:[%s1 + $0x90] sm:$0xff]
    %v56 = vld [vmem:[%s1 + $0x98] sm:$0xff]
    %v57 = vld [vmem:[%s1 + $0xa0] sm:$0xff]
    %v58 = vld [vmem:[%s1 + $0xa8] sm:$0xff]
    %v59 = vld [vmem:[%s1 + $0xb0] sm:$0xff]
    %v60 = vld [vmem:[%s1 + $0xb8] sm:$0xff]
    %v61 = vld [vmem:[%s1 + $0xc0] sm:$0xff]
    %v62 = vld [vmem:[%s1 + $0xc8] sm:$0xff]
    %v63 = vld [vmem:[%s1 + $0xd0] sm:$0xff]
    %v64 = vld [vmem:[%s1 + $0xd8] sm:$0xff]
    %v65 = vld [vmem:[%s1 + $0xe0] sm:$0xff]
    %v66 = vld [vmem:[%s1 + $0xe8] sm:$0xff]
    %v67 = vld [vmem:[%s1 + $0xf0] sm:$0xff]
    %v68 = vld [vmem:[%s1 + $0xf8] sm:$0xff]
    %v69 = vld [vmem:[%s1 + $0x100] sm:$0xff]
    %v70 = vld [vmem:[%s1 + $0x108] sm:$0xff]
    %v71 = vld [vmem:[%s1 + $0x110] sm:$0xff]
    %v72 = vld [vmem:[%s1 + $0x118] sm:$0xff]
    %v73 = vld [vmem:[%s1 + $0x120] sm:$0xff]
    %v74 = vld [vmem:[%s1 + $0x128] sm:$0xff]
    %v75 = vld [vmem:[%s1 + $0x130] sm:$0xff]
    %v76 = vld [vmem:[%s1 + $0x138] sm:$0xff]
    %v77 = vld [vmem:[%s1 + $0x140] sm:$0xff]
    %v78 = vld [vmem:[%s1 + $0x148] sm:$0xff]
    %v79 = vld [vmem:[%s1 + $0x150] sm:$0xff]
    %v80 = vld [vmem:[%s1 + $0x158] sm:$0xff]
    %v81 = vld [vmem:[%s1 + $0x160] sm:$0xff]
    %v82 = vld [vmem:[%s1 + $0x168] sm:$0xff]
    %v83 = vld [vmem:[%s1 + $0x170] sm:$0xff]
    %v84 = vld [vmem:[%s1 + $0x178] sm:$0xff]
    %v85 = vld [vmem:[%s1 + $0x180] sm:$0xff]
    %v86 = vld [vmem:[%s1 + $0x188] sm:$0xff]
    %v87 = vld [vmem:[%s1 + $0x190] sm:$0xff]
    %v88 = vld [vmem:[%s1 + $0x198] sm:$0xff]
    %v89 = vld [vmem:[%s1 + $0x1a0] sm:$0xff]
    %v90 = vld [vmem:[%s1 + $0x1a8] sm:$0xff]
    %v91 = vld [vmem:[%s1 + $0x1b0] sm:$0xff]
    %v92 = vld [vmem:[%s1 + $0x1b8] sm:$0xff]
    %v93 = vld [vmem:[%s1 + $0x1c0] sm:$0xff]
    %v94 = vld [vmem:[%s1 + $0x1c8] sm:$0xff]
    %v95 = vld [vmem:[%s1 + $0x1d0] sm:$0xff]
    %v96 = vld [vmem:[%s1 + $0x1d8] sm:$0xff]
    %v97 = vld [vmem:[%s1 + $0x1e0] sm:$0xff]
    %v98 = vld [vmem:[%s1 + $0x1e8] sm:$0xff]
    %v99 = vld [vmem:[%s1 + $0x1f0] sm:$0xff]
    %v100 = vld [vmem:[%s1 + $0x1f8] sm:$0xff]
    %v101 = vld [vmem:[%s1 + $0x200] sm:$0xff]
    %v102 = vld [vmem:[%s1 + $0x208] sm:$0xff]
    %v103 = vld [vmem:[%s1 + $0x210] sm:$0xff]
    %v104 = vld [vmem:[%s1 + $0x218] sm:$0xff]
    %v105 = vld [vmem:[%s1 + $0x220] sm:$0xff]
    %v106 = vld [vmem:[%s1 + $0x228] sm:$0xff]
    %v107 = vld [vmem:[%s1 + $0x230] sm:$0xff]
    %v108 = vld [vmem:[%s1 + $0x238] sm:$0xff]
    %v109 = vld [vmem:[%s1 + $0x240] sm:$0xff]
    %v110 = vld [vmem:[%s1 + $0x248] sm:$0xff]
    %v111 = vld [vmem:[%s1 + $0x250] sm:$0xff]
    %v112 = vld [vmem:[%s1 + $0x258] sm:$0xff]
    %v113 = vld [vmem:[%s1 + $0x260] sm:$0xff]
    %v114 = vld [vmem:[%s1 + $0x268] sm:$0xff]
    %v115 = vld [vmem:[%s1 + $0x270] sm:$0xff]
    %v116 = vld [vmem:[%s1 + $0x278] sm:$0xff]
    %v117 = vld [vmem:[%s1 + $0x280] sm:$0xff]
    %v118 = vld [vmem:[%s1 + $0x288] sm:$0xff]
    %v119 = vld [vmem:[%s1 + $0x290] sm:$0xff]
    %v120 = vld [vmem:[%s1 + $0x298] sm:$0xff]
    %v121 = vld [vmem:[%s1 + $0x2a0] sm:$0xff]
    %v122 = vld [vmem:[%s1 + $0x2a8] sm:$0xff]
    %v123 = vld [vmem:[%s1 + $0x2b0] sm:$0xff]
    %v124 = vld [vmem:[%s1 + $0x2b8] sm:$0xff]
    %v125 = vld [vmem:[%s1 + $0x2c0] sm:$0xff]
    %v126 = vld [vmem:[%s1 + $0x2c8] sm:$0xff]
    %v127 = vld [vmem:[%s1 + $0x2d0] sm:$0xff]
    %v128 = vld [vmem:[%s1 + $0x2d8] sm:$0xff]
    %v129 = vld [vmem:[%s1 + $0x2e0] sm:$0xff]
    %v130 = vld [vmem:[%s1 + $0x2e8] sm:$0xff]
    %v131 = vld [vmem:[%s1 + $0x2f0] sm:$0xff]
    %v132 = vld [vmem:[%s1 + $0x2f8] sm:$0xff]
    %v133 = vld [vmem:[%s1 + $0x300] sm:$0xff]
    %v134 = vld [vmem:[%s1 + $0x308] sm:$0xff]
    %v135 = vld [vmem:[%s1 + $0x310] sm:$0xff]
    %v136 = vld [vmem:[%s1 + $0x318] sm:$0xff]
    %v137 = vld [vmem:[%s1 + $0x320] sm:$0xff]
    %v138 = vld [vmem:[%s1 + $0x328] sm:$0xff]
    %v139 = vld [vmem:[%s1 + $0x330] sm:$0xff]
    %v140 = vld [vmem:[%s1 + $0x338] sm:$0xff]
    %v141 = vld [vmem:[%s1 + $0x340] sm:$0xff]
    %v142 = vld [vmem:[%s1 + $0x348] sm:$0xff]
    %v143 = vld [vmem:[%s1 + $0x350] sm:$0xff]
    %v144 = vld [vmem:[%s1 + $0x358] sm:$0xff]
    %v145 = vld [vmem:[%s1 + $0x360] sm:$0xff]
    %v146 = vld [vmem:[%s1 + $0x368] sm:$0xff]
    %v147 = vld [vmem:[%s1 + $0x370] sm:$0xff]
    %v148 = vld [vmem:[%s1 + $0x378] sm:$0xff]
    %v149 = vld [vmem:[%s1 + $0x380] sm:$0xff]
    %v150 = vld [vmem:[%s1 + $0x388] sm:$0xff]
    %v151 = vld [vmem:[%s1 + $0x390] sm:$0xff]
    %v152 = vld [vmem:[%s1 + $0x398] sm:$0xff]
    %v153 = vld [vmem:[%s1 + $0x3a0] sm:$0xff]
    %v154 = vld [vmem:[%s1 + $0x3a8] sm:$0xff]
    %v155 = vld [vmem:[%s1 + $0x3b0] sm:$0xff]
    %v156 = vld [vmem:[%s1 + $0x3b8] sm:$0xff]
    %v157 = vld [vmem:[%s1 + $0x3c0] sm:$0xff]
    %v158 = vld [vmem:[%s1 + $0x3c8] sm:$0xff]
    %v159 = vld [vmem:[%s1 + $0x3d0] sm:$0xff]
    %v160 = vld [vmem:[%s1 + $0x3d8] sm:$0xff]
    %v161 = vld [vmem:[%s1 + $0x3e0] sm:$0xff]
    %v162 = vld [vmem:[%s1 + $0x3e8] sm:$0xff]
    %v163 = vld [vmem:[%s1 + $0x3f0] sm:$0xff]
    %v164 = vld [vmem:[%s1 + $0x3f8] sm:$0xff]
    %v165 = vld [vmem:[%s1 + $0x400] sm:$0xff]
    %v166 = vld [vmem:[%s1 + $0x408] sm:$0xff]
    %v167 = vld [vmem:[%s1 + $0x410] sm:$0xff]
    %v168 = vld [vmem:[%s1 + $0x418] sm:$0xff]
    %v169 = vld [vmem:[%s1 + $0x420] sm:$0xff]
    %v170 = vld [vmem:[%s1 + $0x428] sm:$0xff]
    %v171 = vld [vmem:[%s1 + $0x430] sm:$0xff]
    %v172 = vld [vmem:[%s1 + $0x438] sm:$0xff]
    %v173 = vld [vmem:[%s1 + $0x440] sm:$0xff]
    %v174 = vld [vmem:[%s1 + $0x448] sm:$0xff]
    %v175 = vld [vmem:[%s1 + $0x450] sm:$0xff]
    %v176 = vld [vmem:[%s1 + $0x458] sm:$0xff]
    %v177 = vld [vmem:[%s1 + $0x460] sm:$0xff]
    %v178 = vld [vmem:[%s1 + $0x468] sm:$0xff]
    %v179 = vld [vmem:[%s1 + $0x470] sm:$0xff]
    %v180 = vld [vmem:[%s1 + $0x478] sm:$0xff]
    %v181 = vld [vmem:[%s1 + $0x480] sm:$0xff]
    %v182 = vld [vmem:[%s1 + $0x488] sm:$0xff]
    %v183 = vld [vmem:[%s1 + $0x490] sm:$0xff]
    %v184 = vld [vmem:[%s1 + $0x498] sm:$0xff]
    %v185 = vld [vmem:[%s1 + $0x4a0] sm:$0xff]
    %v186 = vld [vmem:[%s1 + $0x4a8] sm:$0xff]
    %v187 = vld [vmem:[%s1 + $0x4b0] sm:$0xff]
    %v188 = vld [vmem:[%s1 + $0x4b8] sm:$0xff]
    %v189 = vld [vmem:[%s1 + $0x4c0] sm:$0xff]
    %v190 = vld [vmem:[%s1 + $0x4c8] sm:$0xff]
    %v191 = vld [vmem:[%s1 + $0x4d0] sm:$0xff]
    %v192 = vld [vmem:[%s1 + $0x4d8] sm:$0xff]
    %v193 = vld [vmem:[%s1 + $0x4e0] sm:$0xff]
    %v194 = vld [vmem:[%s1 + $0x4e8] sm:$0xff]
    %v195 = vld [vmem:[%s1 + $0x4f0] sm:$0xff]
    %v196 = vld [vmem:[%s1 + $0x4f8] sm:$0xff]
    %v197 = vld [vmem:[%s1 + $0x500] sm:$0xff]
    %v198 = vld [vmem:[%s1 + $0x508] sm:$0xff]
    %v199 = vld [vmem:[%s1 + $0x510] sm:$0xff]
    %v200 = vld [vmem:[%s1 + $0x518] sm:$0xff]
    %v201 = vld [vmem:[%s1 + $0x520] sm:$0xff]
    %v202 = vld [vmem:[%s1 + $0x528] sm:$0xff]
    %v203 = vld [vmem:[%s1 + $0x530] sm:$0xff]
    %v204 = vld [vmem:[%s1 + $0x538] sm:$0xff]
    %v205 = vld [vmem:[%s1 + $0x540] sm:$0xff]
    %v206 = vld [vmem:[%s1 + $0x548] sm:$0xff]
    %v207 = vld [vmem:[%s1 + $0x550] sm:$0xff]
    %v208 = vld [vmem:[%s1 + $0x558] sm:$0xff]
    %v209 = vld [vmem:[%s1 + $0x560] sm:$0xff]
    %v210 = vld [vmem:[%s1 + $0x568] sm:$0xff]
    %v211 = vld [vmem:[%s1 + $0x570] sm:$0xff]
    %v212 = vld [vmem:[%s1 + $0x578] sm:$0xff]
    %v213 = vld [vmem:[%s1 + $0x580] sm:$0xff]
    %v214 = vld [vmem:[%s1 + $0x588] sm:$0xff]
    %v215 = vld [vmem:[%s1 + $0x590] sm:$0xff]
    %v216 = vld [vmem:[%s1 + $0x598] sm:$0xff]
    %v217 = vld [vmem:[%s1 + $0x5a0] sm:$0xff]
    %v218 = vld [vmem:[%s1 + $0x5a8] sm:$0xff]
    %v219 = vld [vmem:[%s1 + $0x5b0] sm:$0xff]
    %v220 = vld [vmem:[%s1 + $0x5b8] sm:$0xff]
    %v221 = vld [vmem:[%s1 + $0x5c0] sm:$0xff]
    %v222 = vld [vmem:[%s1 + $0x5c8] sm:$0xff]
    %v223 = vld [vmem:[%s1 + $0x5d0] sm:$0xff]
    %v224 = vld [vmem:[%s1 + $0x5d8] sm:$0xff]
    %v225 = vld [vmem:[%s1 + $0x5e0] sm:$0xff]
    %v226 = vld [vmem:[%s1 + $0x5e8] sm:$0xff]
    %v227 = vld [vmem:[%s1 + $0x5f0] sm:$0xff]
    %v228 = vld [vmem:[%s1 + $0x5f8] sm:$0xff]
    %v229 = vld [vmem:[%s1 + $0x600] sm:$0xff]
    %v230 = vld [vmem:[%s1 + $0x608] sm:$0xff]
    %v231 = vld [vmem:[%s1 + $0x610] sm:$0xff]
    %v232 = vld [vmem:[%s1 + $0x618] sm:$0xff]
    %v233 = vld [vmem:[%s1 + $0x620] sm:$0xff]
    %v234 = vld [vmem:[%s1 + $0x628] sm:$0xff]
    %v235 = vld [vmem:[%s1 + $0x630] sm:$0xff]
    %v236 = vld [vmem:[%s1 + $0x638] sm:$0xff]
    %v237 = vld [vmem:[%s1 + $0x640] sm:$0xff]
    %v238 = vld [vmem:[%s1 + $0x648] sm:$0xff]
    %v239 = vld [vmem:[%s1 + $0x650] sm:$0xff]
    %v240 = vld [vmem:[%s1 + $0x658] sm:$0xff]
    %v241 = vld [vmem:[%s1 + $0x660] sm:$0xff]
    %v242 = vld [vmem:[%s1 + $0x668] sm:$0xff]
    %v243 = vld [vmem:[%s1 + $0x670] sm:$0xff]
    %v244 = vld [vmem:[%s1 + $0x678] sm:$0xff]
    %v245 = vld [vmem:[%s1 + $0x680] sm:$0xff]
    %v246 = vld [vmem:[%s1 + $0x688] sm:$0xff]
    %v247 = vld [vmem:[%s1 + $0x690] sm:$0xff]
    %v248 = vld [vmem:[%s1 + $0x698] sm:$0xff]
    %v249 = vld [vmem:[%s1 + $0x6a0] sm:$0xff]
    %v250 = vld [vmem:[%s1 + $0x6a8] sm:$0xff]
    %v251 = vld [vmem:[%s1 + $0x6b0] sm:$0xff]
    %v252 = vld [vmem:[%s1 + $0x6b8] sm:$0xff]
    %v253 = vld [vmem:[%s1 + $0x6c0] sm:$0xff]
    %v254 = vld [vmem:[%s1 + $0x6c8] sm:$0xff]
    %v255 = vld [vmem:[%s1 + $0x6d0] sm:$0xff]
    %v256 = vld [vmem:[%s1 + $0x6d8] sm:$0xff]
    %v257 = vld [vmem:[%s1 + $0x6e0] sm:$0xff]
    %v258 = vld [vmem:[%s1 + $0x6e8] sm:$0xff]
    %v259 = vld [vmem:[%s1 + $0x6f0] sm:$0xff]
    %v260 = vld [vmem:[%s1 + $0x6f8] sm:$0xff]
    %v261 = vld [vmem:[%s1 + $0x700] sm:$0xff]
    %v262 = vld [vmem:[%s1 + $0x708] sm:$0xff]
    %v263 = vld [vmem:[%s1 + $0x710] sm:$0xff]
    %v264 = vld [vmem:[%s1 + $0x718] sm:$0xff]
    %v265 = vld [vmem:[%s1 + $0x720] sm:$0xff]
    %v266 = vld [vmem:[%s1 + $0x728] sm:$0xff]
    %v267 = vld [vmem:[%s1 + $0x730] sm:$0xff]
    %v268 = vld [vmem:[%s1 + $0x738] sm:$0xff]
    %v269 = vld [vmem:[%s1 + $0x740] sm:$0xff]
    %v270 = vld [vmem:[%s1 + $0x748] sm:$0xff]
    %v271 = vld [vmem:[%s1 + $0x750] sm:$0xff]
    %v272 = vld [vmem:[%s1 + $0x758] sm:$0xff]
    %v273 = vld [vmem:[%s1 + $0x760] sm:$0xff]
    %v274 = vld [vmem:[%s1 + $0x768] sm:$0xff]
    %v275 = vld [vmem:[%s1 + $0x770] sm:$0xff]
    %v276 = vld [vmem:[%s1 + $0x778] sm:$0xff]
    %v277 = vld [vmem:[%s1 + $0x780] sm:$0xff]
    %v278 = vld [vmem:[%s1 + $0x788] sm:$0xff]
    %v279 = vld [vmem:[%s1 + $0x790] sm:$0xff]
    %v280 = vld [vmem:[%s1 + $0x798] sm:$0xff]
    %v281 = vld [vmem:[%s1 + $0x7a0] sm:$0xff]
    %v282 = vld [vmem:[%s1 + $0x7a8] sm:$0xff]
    %v283 = vld [vmem:[%s1 + $0x7b0] sm:$0xff]
    %v284 = vld [vmem:[%s1 + $0x7b8] sm:$0xff]
    %v285 = vld [vmem:[%s1 + $0x7c0] sm:$0xff]
    %v286 = vld [vmem:[%s1 + $0x7c8] sm:$0xff]
    %v287 = vld [vmem:[%s1 + $0x7d0] sm:$0xff]
    %v288 = vld [vmem:[%s1 + $0x7d8] sm:$0xff]
    %v289 = vld [vmem:[%s1 + $0x7e0] sm:$0xff]
    %v290 = vld [vmem:[%s1 + $0x7e8] sm:$0xff]
    %v291 = vld [vmem:[%s1 + $0x7f0] sm:$0xff]
    %v292 = vld [vmem:[%s1 + $0x7f8] sm:$0xff]
    %v293 = vld [vmem:[%s1 + $0x800] sm:$0xff]
    %v294 = vld [vmem:[%s1 + $0x808] sm:$0xff]
    %v295 = vld [vmem:[%s1 + $0x810] sm:$0xff]
    %v296 = vld [vmem:[%s1 + $0x818] sm:$0xff]
    %v297 = vld [vmem:[%s1 + $0x820] sm:$0xff]
    %v298 = vld [vmem:[%s1 + $0x828] sm:$0xff]
    %v299 = vld [vmem:[%s1 + $0x830] sm:$0xff]
    %v300 = vld [vmem:[%s1 + $0x838] sm:$0xff]
    %v301 = vld [vmem:[%s1 + $0x840] sm:$0xff]
    %v302 = vld [vmem:[%s1 + $0x848] sm:$0xff]
    %v303 = vld [vmem:[%s1 + $0x850] sm:$0xff]
    %v304 = vld [vmem:[%s1 + $0x858] sm:$0xff]
    %v305 = vld [vmem:[%s1 + $0x860] sm:$0xff]
    %v306 = vld [vmem:[%s1 + $0x868] sm:$0xff]
    %v307 = vld [vmem:[%s1 + $0x870] sm:$0xff]
    %v308 = vld [vmem:[%s1 + $0x878] sm:$0xff]
    %v309 = vld [vmem:[%s1 + $0x880] sm:$0xff]
    %v310 = vld [vmem:[%s1 + $0x888] sm:$0xff]
    %v311 = vld [vmem:[%s1 + $0x890] sm:$0xff]
    %v312 = vld [vmem:[%s1 + $0x898] sm:$0xff]
    %v313 = vld [vmem:[%s1 + $0x8a0] sm:$0xff]
    %v314 = vld [vmem:[%s1 + $0x8a8] sm:$0xff]
    %v315 = vld [vmem:[%s1 + $0x8b0] sm:$0xff]
    %v316 = vld [vmem:[%s1 + $0x8b8] sm:$0xff]
    %v317 = vld [vmem:[%s1 + $0x8c0] sm:$0xff]
    %v318 = vld [vmem:[%s1 + $0x8c8] sm:$0xff]
    %v319 = vld [vmem:[%s1 + $0x8d0] sm:$0xff]
    %v320 = vld [vmem:[%s1 + $0x8d8] sm:$0xff]
    %v321 = vld [vmem:[%s1 + $0x8e0] sm:$0xff]
    %v322 = vld [vmem:[%s1 + $0x8e8] sm:$0xff]
    %v323 = vld [vmem:[%s1 + $0x8f0] sm:$0xff]
    %v324 = vld [vmem:[%s1 + $0x8f8] sm:$0xff]
    %v325 = vld [vmem:[%s1 + $0x900] sm:$0xff]
    %v326 = vld [vmem:[%s1 + $0x908] sm:$0xff]
    %v327 = vld [vmem:[%s1 + $0x910] sm:$0xff]
    %v328 = vld [vmem:[%s1 + $0x918] sm:$0xff]
    %v329 = vld [vmem:[%s1 + $0x920] sm:$0xff]
    %v330 = vld [vmem:[%s1 + $0x928] sm:$0xff]
    %v331 = vld [vmem:[%s1 + $0x930] sm:$0xff]
    %v332 = vld [vmem:[%s1 + $0x938] sm:$0xff]
    %v333 = vld [vmem:[%s1 + $0x940] sm:$0xff]
    %v334 = vld [vmem:[%s1 + $0x948] sm:$0xff]
    %v335 = vld [vmem:[%s1 + $0x950] sm:$0xff]
    %v336 = vld [vmem:[%s1 + $0x958] sm:$0xff]
    %v337 = vld [vmem:[%s1 + $0x960] sm:$0xff]
    %v338 = vld [vmem:[%s1 + $0x968] sm:$0xff]
    %v339 = vld [vmem:[%s1 + $0x970] sm:$0xff]
    %v340 = vld [vmem:[%s1 + $0x978] sm:$0xff]
    %v341 = vld [vmem:[%s1 + $0x980] sm:$0xff]
    %v342 = vld [vmem:[%s1 + $0x988] sm:$0xff]
    %v343 = vld [vmem:[%s1 + $0x990] sm:$0xff]
    %v344 = vld [vmem:[%s1 + $0x998] sm:$0xff]
    %v345 = vld [vmem:[%s1 + $0x9a0] sm:$0xff]
    %v346 = vld [vmem:[%s1 + $0x9a8] sm:$0xff]
    %v347 = vld [vmem:[%s1 + $0x9b0] sm:$0xff]
    %v348 = vld [vmem:[%s1 + $0x9b8] sm:$0xff]
    %v349 = vld [vmem:[%s1 + $0x9c0] sm:$0xff]
    %v350 = vld [vmem:[%s1 + $0x9c8] sm:$0xff]
    %v351 = vld [vmem:[%s1 + $0x9d0] sm:$0xff]
    %v352 = vld [vmem:[%s1 + $0x9d8] sm:$0xff]
    %v353 = vld [vmem:[%s1 + $0x9e0] sm:$0xff]
    %v354 = vld [vmem:[%s1 + $0x9e8] sm:$0xff]
    %v355 = vld [vmem:[%s1 + $0x9f0] sm:$0xff]
    %v356 = vld [vmem:[%s1 + $0x9f8] sm:$0xff]
    %v357 = vld [vmem:[%s1 + $0xa00] sm:$0xff]
    %v358 = vld [vmem:[%s1 + $0xa08] sm:$0xff]
    %v359 = vld [vmem:[%s1 + $0xa10] sm:$0xff]
    %v360 = vld [vmem:[%s1 + $0xa18] sm:$0xff]
    %v361 = vld [vmem:[%s1 + $0xa20] sm:$0xff]
    %v362 = vld [vmem:[%s1 + $0xa28] sm:$0xff]
    %v363 = vld [vmem:[%s1 + $0xa30] sm:$0xff]
    %v364 = vld [vmem:[%s1 + $0xa38] sm:$0xff]
    %v365 = vld [vmem:[%s1 + $0xa40] sm:$0xff]
    %v366 = vld [vmem:[%s1 + $0xa48] sm:$0xff]
    %v367 = vld [vmem:[%s1 + $0xa50] sm:$0xff]
    %v368 = vld [vmem:[%s1 + $0xa58] sm:$0xff]
    %v369 = vld [vmem:[%s1 + $0xa60] sm:$0xff]
    %v370 = vld [vmem:[%s1 + $0xa68] sm:$0xff]
    %v371 = vld [vmem:[%s1 + $0xa70] sm:$0xff]
    %v372 = vld [vmem:[%s1 + $0xa78] sm:$0xff]
    %v373 = vld [vmem:[%s1 + $0xa80] sm:$0xff]
    %v374 = vld [vmem:[%s1 + $0xa88] sm:$0xff]
    %v375 = vld [vmem:[%s1 + $0xa90] sm:$0xff]
    %v376 = vld [vmem:[%s1 + $0xa98] sm:$0xff]
    %v377 = vld [vmem:[%s1 + $0xaa0] sm:$0xff]
    %v378 = vld [vmem:[%s1 + $0xaa8] sm:$0xff]
    %v379 = vld [vmem:[%s1 + $0xab0] sm:$0xff]
    %v380 = vld [vmem:[%s1 + $0xab8] sm:$0xff]
    %v381 = vld [vmem:[%s1 + $0xac0] sm:$0xff]
    %v382 = vld [vmem:[%s1 + $0xac8] sm:$0xff]
    %v383 = vld [vmem:[%s1 + $0xad0] sm:$0xff]
    %v384 = vld [vmem:[%s1 + $0xad8] sm:$0xff]
    %v385 = vld [vmem:[%s1 + $0xae0] sm:$0xff]
    %v386 = vld [vmem:[%s1 + $0xae8] sm:$0xff]
    %v387 = vld [vmem:[%s1 + $0xaf0] sm:$0xff]
    %v388 = vld [vmem:[%s1 + $0xaf8] sm:$0xff]
    %v389 = vld [vmem:[%s1 + $0xb00] sm:$0xff]
    %v390 = vld [vmem:[%s1 + $0xb08] sm:$0xff]
    %v391 = vld [vmem:[%s1 + $0xb10] sm:$0xff]
    %v392 = vld [vmem:[%s1 + $0xb18] sm:$0xff]
    %v393 = vld [vmem:[%s1 + $0xb20] sm:$0xff]
    %v394 = vld [vmem:[%s1 + $0xb28] sm:$0xff]
    %v395 = vld [vmem:[%s1 + $0xb30] sm:$0xff]
    %v396 = vld [vmem:[%s1 + $0xb38] sm:$0xff]
    %v397 = vld [vmem:[%s1 + $0xb40] sm:$0xff]
    %v398 = vld [vmem:[%s1 + $0xb48] sm:$0xff]
    %v399 = vld [vmem:[%s1 + $0xb50] sm:$0xff]
    %v400 = vld [vmem:[%s1 + $0xb58] sm:$0xff]
    %v401 = vld [vmem:[%s1 + $0xb60] sm:$0xff]
    %v402 = vld [vmem:[%s1 + $0xb68] sm:$0xff]
    %v403 = vld [vmem:[%s1 + $0xb70] sm:$0xff]
    %v404 = vld [vmem:[%s1 + $0xb78] sm:$0xff]
    %v405 = vld [vmem:[%s1 + $0xb80] sm:$0xff]
    %v406 = vld [vmem:[%s1 + $0xb88] sm:$0xff]
    %v407 = vld [vmem:[%s1 + $0xb90] sm:$0xff]
    %v408 = vld [vmem:[%s1 + $0xb98] sm:$0xff]
    %v409 = vld [vmem:[%s1 + $0xba0] sm:$0xff]
    %v410 = vld [vmem:[%s1 + $0xba8] sm:$0xff]
    %v411 = vld [vmem:[%s1 + $0xbb0] sm:$0xff]
    %v412 = vld [vmem:[%s1 + $0xbb8] sm:$0xff]
    %v413 = vld [vmem:[%s1 + $0xbc0] sm:$0xff]
    %v414 = vld [vmem:[%s1 + $0xbc8] sm:$0xff]
    %v415 = vld [vmem:[%s1 + $0xbd0] sm:$0xff]
    %v416 = vld [vmem:[%s1 + $0xbd8] sm:$0xff]
    %v417 = vld [vmem:[%s1 + $0xbe0] sm:$0xff]
    %v418 = vld [vmem:[%s1 + $0xbe8] sm:$0xff]
    %v419 = vld [vmem:[%s1 + $0xbf0] sm:$0xff]
    %v420 = vld [vmem:[%s1 + $0xbf8] sm:$0xff]
    %v421 = vld [vmem:[%s1 + $0xc00] sm:$0xff]
    %v422 = vld [vmem:[%s1 + $0xc08] sm:$0xff]
    %v423 = vld [vmem:[%s1 + $0xc10] sm:$0xff]
    %v424 = vld [vmem:[%s1 + $0xc18] sm:$0xff]
    %v425 = vld [vmem:[%s1 + $0xc20] sm:$0xff]
    %v426 = vld [vmem:[%s1 + $0xc28] sm:$0xff]
    %v427 = vld [vmem:[%s1 + $0xc30] sm:$0xff]
    %v428 = vld [vmem:[%s1 + $0xc38] sm:$0xff]
    %v429 = vld [vmem:[%s1 + $0xc40] sm:$0xff]
    %v430 = vld [vmem:[%s1 + $0xc48] sm:$0xff]
    %v431 = vld [vmem:[%s1 + $0xc50] sm:$0xff]
    %v432 = vld [vmem:[%s1 + $0xc58] sm:$0xff]
    %v433 = vld [vmem:[%s1 + $0xc60] sm:$0xff]
    %v434 = vld [vmem:[%s1 + $0xc68] sm:$0xff]
    %v435 = vld [vmem:[%s1 + $0xc70] sm:$0xff]
    %v436 = vld [vmem:[%s1 + $0xc78] sm:$0xff]
    %v437 = vld [vmem:[%s1 + $0xc80] sm:$0xff]
    %v438 = vld [vmem:[%s1 + $0xc88] sm:$0xff]
    %v439 = vld [vmem:[%s1 + $0xc90] sm:$0xff]
    %v440 = vld [vmem:[%s1 + $0xc98] sm:$0xff]
    %v441 = vld [vmem:[%s1 + $0xca0] sm:$0xff]
    %v442 = vld [vmem:[%s1 + $0xca8] sm:$0xff]
    %v443 = vld [vmem:[%s1 + $0xcb0] sm:$0xff]
    %v444 = vld [vmem:[%s1 + $0xcb8] sm:$0xff]
    %v445 = vld [vmem:[%s1 + $0xcc0] sm:$0xff]
    %v446 = vld [vmem:[%s1 + $0xcc8] sm:$0xff]
    %v447 = vld [vmem:[%s1 + $0xcd0] sm:$0xff]
    %v448 = vld [vmem:[%s1 + $0xcd8] sm:$0xff]
    %v449 = vld [vmem:[%s1 + $0xce0] sm:$0xff]
    %v450 = vld [vmem:[%s1 + $0xce8] sm:$0xff]
    %v451 = vld [vmem:[%s1 + $0xcf0] sm:$0xff]
    %v452 = vld [vmem:[%s1 + $0xcf8] sm:$0xff]
    %v453 = vld [vmem:[%s1 + $0xd00] sm:$0xff]
    %v454 = vld [vmem:[%s1 + $0xd08] sm:$0xff]
    %v455 = vld [vmem:[%s1 + $0xd10] sm:$0xff]
    %v456 = vld [vmem:[%s1 + $0xd18] sm:$0xff]
    %v457 = vld [vmem:[%s1 + $0xd20] sm:$0xff]
    %v458 = vld [vmem:[%s1 + $0xd28] sm:$0xff]
    %v459 = vld [vmem:[%s1 + $0xd30] sm:$0xff]
    %v460 = vld [vmem:[%s1 + $0xd38] sm:$0xff]
    %v461 = vld [vmem:[%s1 + $0xd40] sm:$0xff]
    %v462 = vld [vmem:[%s1 + $0xd48] sm:$0xff]
    %v463 = vld [vmem:[%s1 + $0xd50] sm:$0xff]
    %v464 = vld [vmem:[%s1 + $0xd58] sm:$0xff]
    %v465 = vld [vmem:[%s1 + $0xd60] sm:$0xff]
    %v466 = vld [vmem:[%s1 + $0xd68] sm:$0xff]
    %v467 = vld [vmem:[%s1 + $0xd70] sm:$0xff]
    %v468 = vld [vmem:[%s1 + $0xd78] sm:$0xff]
    %v469 = vld [vmem:[%s1 + $0xd80] sm:$0xff]
    %v470 = vld [vmem:[%s1 + $0xd88] sm:$0xff]
    %v471 = vld [vmem:[%s1 + $0xd90] sm:$0xff]
    %v472 = vld [vmem:[%s1 + $0xd98] sm:$0xff]
    %v473 = vld [vmem:[%s1 + $0xda0] sm:$0xff]
    %v474 = vld [vmem:[%s1 + $0xda8] sm:$0xff]
    %v475 = vld [vmem:[%s1 + $0xdb0] sm:$0xff]
    %v476 = vld [vmem:[%s1 + $0xdb8] sm:$0xff]
    %v477 = vld [vmem:[%s1 + $0xdc0] sm:$0xff]
    %v478 = vld [vmem:[%s1 + $0xdc8] sm:$0xff]
    %v479 = vld [vmem:[%s1 + $0xdd0] sm:$0xff]
    %v480 = vld [vmem:[%s1 + $0xdd8] sm:$0xff]
    %v481 = vld [vmem:[%s1 + $0xde0] sm:$0xff]
    %v482 = vld [vmem:[%s1 + $0xde8] sm:$0xff]
    %v483 = vld [vmem:[%s1 + $0xdf0] sm:$0xff]
    %v484 = vld [vmem:[%s1 + $0xdf8] sm:$0xff]
    %v485 = vld [vmem:[%s1 + $0xe00] sm:$0xff]
    %v486 = vld [vmem:[%s1 + $0xe08] sm:$0xff]
    %v487 = vld [vmem:[%s1 + $0xe10] sm:$0xff]
    %v488 = vld [vmem:[%s1 + $0xe18] sm:$0xff]
    %v489 = vld [vmem:[%s1 + $0xe20] sm:$0xff]
    %v490 = vld [vmem:[%s1 + $0xe28] sm:$0xff]
    %v491 = vld [vmem:[%s1 + $0xe30] sm:$0xff]
    %v492 = vld [vmem:[%s1 + $0xe38] sm:$0xff]
    %v493 = vld [vmem:[%s1 + $0xe40] sm:$0xff]
    %v494 = vld [vmem:[%s1 + $0xe48] sm:$0xff]
    %v495 = vld [vmem:[%s1 + $0xe50] sm:$0xff]
    %v496 = vld [vmem:[%s1 + $0xe58] sm:$0xff]
    %v497 = vld [vmem:[%s1 + $0xe60] sm:$0xff]
    %v498 = vld [vmem:[%s1 + $0xe68] sm:$0xff]
    %v499 = vld [vmem:[%s1 + $0xe70] sm:$0xff]
    %v500 = vld [vmem:[%s1 + $0xe78] sm:$0xff]
    %v501 = vld [vmem:[%s1 + $0xe80] sm:$0xff]
    %v502 = vld [vmem:[%s1 + $0xe88] sm:$0xff]
    %v503 = vld [vmem:[%s1 + $0xe90] sm:$0xff]
    %v504 = vld [vmem:[%s1 + $0xe98] sm:$0xff]
    %v505 = vld [vmem:[%s1 + $0xea0] sm:$0xff]
    %v506 = vld [vmem:[%s1 + $0xea8] sm:$0xff]
    %v507 = vld [vmem:[%s1 + $0xeb0] sm:$0xff]
    %v508 = vld [vmem:[%s1 + $0xeb8] sm:$0xff]
    %v509 = vld [vmem:[%s1 + $0xec0] sm:$0xff]
    %v510 = vld [vmem:[%s1 + $0xec8] sm:$0xff]
    %v511 = vld [vmem:[%s1 + $0xed0] sm:$0xff]
    %v512 = vld [vmem:[%s1 + $0xed8] sm:$0xff]
    %v513 = vld [vmem:[%s1 + $0xee0] sm:$0xff]
    %v514 = vld [vmem:[%s1 + $0xee8] sm:$0xff]
    %v515 = vld [vmem:[%s1 + $0xef0] sm:$0xff]
    %v516 = vld [vmem:[%s1 + $0xef8] sm:$0xff]
    %v517 = vld [vmem:[%s1 + $0xf00] sm:$0xff]
    %v518 = vld [vmem:[%s1 + $0xf08] sm:$0xff]
    %v519 = vld [vmem:[%s1 + $0xf10] sm:$0xff]
    %v520 = vld [vmem:[%s1 + $0xf18] sm:$0xff]
    %v521 = vld [vmem:[%s1 + $0xf20] sm:$0xff]
    %v522 = vld [vmem:[%s1 + $0xf28] sm:$0xff]
    %v523 = vld [vmem:[%s1 + $0xf30] sm:$0xff]
    %v524 = vld [vmem:[%s1 + $0xf38] sm:$0xff]
    %v525 = vld [vmem:[%s1 + $0xf40] sm:$0xff]
    %v526 = vld [vmem:[%s1 + $0xf48] sm:$0xff]
    %v527 = vld [vmem:[%s1 + $0xf50] sm:$0xff]
    %v528 = vld [vmem:[%s1 + $0xf58] sm:$0xff]
    %v529 = vld [vmem:[%s1 + $0xf60] sm:$0xff]
    %v530 = vld [vmem:[%s1 + $0xf68] sm:$0xff]
    %v531 = vld [vmem:[%s1 + $0xf70] sm:$0xff]
    %v532 = vld [vmem:[%s1 + $0xf78] sm:$0xff]
    %v533 = vld [vmem:[%s1 + $0xf80] sm:$0xff]
    %v534 = vld [vmem:[%s1 + $0xf88] sm:$0xff]
    %v535 = vld [vmem:[%s1 + $0xf90] sm:$0xff]
    %v536 = vld [vmem:[%s1 + $0xf98] sm:$0xff]
    %v537 = vld [vmem:[%s1 + $0xfa0] sm:$0xff]
    %v538 = vld [vmem:[%s1 + $0xfa8] sm:$0xff]
    %v539 = vld [vmem:[%s1 + $0xfb0] sm:$0xff]
    %v540 = vld [vmem:[%s1 + $0xfb8] sm:$0xff]
    %v541 = vld [vmem:[%s1 + $0xfc0] sm:$0xff]
    %v542 = vld [vmem:[%s1 + $0xfc8] sm:$0xff]
    %v543 = vld [vmem:[%s1 + $0xfd0] sm:$0xff]
    %v544 = vld [vmem:[%s1 + $0xfd8] sm:$0xff]
    %v545 = vld [vmem:[%s1 + $0xfe0] sm:$0xff]
    %v546 = vld [vmem:[%s1 + $0xfe8] sm:$0xff]
    %v547 = vld [vmem:[%s1 + $0xff0] sm:$0xff]
    %v548 = vld [vmem:[%s1 + $0xff8] sm:$0xff]
    %v549 = vld [vmem:[%s1 + $0x1000] sm:$0xff]
    %v550 = vld [vmem:[%s1 + $0x1008] sm:$0xff]
    %v551 = vld [vmem:[%s1 + $0x1010] sm:$0xff]
    %v552 = vld [vmem:[%s1 + $0x1018] sm:$0xff]
    %v553 = vld [vmem:[%s1 + $0x1020] sm:$0xff]
    %v554 = vld [vmem:[%s1 + $0x1028] sm:$0xff]
    %v555 = vld [vmem:[%s1 + $0x1030] sm:$0xff]
    %v556 = vld [vmem:[%s1 + $0x1038] sm:$0xff]
    %v557 = vld [vmem:[%s1 + $0x1040] sm:$0xff]
    %v558 = vld [vmem:[%s1 + $0x1048] sm:$0xff]
    %v559 = vld [vmem:[%s1 + $0x1050] sm:$0xff]
    %v560 = vld [vmem:[%s1 + $0x1058] sm:$0xff]
    %v561 = vld [vmem:[%s1 + $0x1060] sm:$0xff]
    %v562 = vld [vmem:[%s1 + $0x1068] sm:$0xff]
    %v563 = vld [vmem:[%s1 + $0x1070] sm:$0xff]
    %v564 = vld [vmem:[%s1 + $0x1078] sm:$0xff]
    %v565 = vld [vmem:[%s1 + $0x1080] sm:$0xff]
    %v566 = vld [vmem:[%s1 + $0x1088] sm:$0xff]
    %v567 = vld [vmem:[%s1 + $0x1090] sm:$0xff]
    %v568 = vld [vmem:[%s1 + $0x1098] sm:$0xff]
    %v569 = vld [vmem:[%s1 + $0x10a0] sm:$0xff]
    %v570 = vld [vmem:[%s1 + $0x10a8] sm:$0xff]
    %v571 = vld [vmem:[%s1 + $0x10b0] sm:$0xff]
    %v572 = vld [vmem:[%s1 + $0x10b8] sm:$0xff]
    %v573 = vld [vmem:[%s1 + $0x10c0] sm:$0xff]
    %v574 = vld [vmem:[%s1 + $0x10c8] sm:$0xff]
    %v575 = vld [vmem:[%s1 + $0x10d0] sm:$0xff]
    %v576 = vld [vmem:[%s1 + $0x10d8] sm:$0xff]
    %v577 = vld [vmem:[%s1 + $0x10e0] sm:$0xff]
    %v578 = vld [vmem:[%s1 + $0x10e8] sm:$0xff]
    %v579 = vld [vmem:[%s1 + $0x10f0] sm:$0xff]
    %v580 = vld [vmem:[%s1 + $0x10f8] sm:$0xff]
    %v581 = vld [vmem:[%s1 + $0x1100] sm:$0xff]
    %v582 = vld [vmem:[%s1 + $0x1108] sm:$0xff]
    %v583 = vld [vmem:[%s1 + $0x1110] sm:$0xff]
    %v584 = vld [vmem:[%s1 + $0x1118] sm:$0xff]
    %v585 = vld [vmem:[%s1 + $0x1120] sm:$0xff]
    %v586 = vld [vmem:[%s1 + $0x1128] sm:$0xff]
    %v587 = vld [vmem:[%s1 + $0x1130] sm:$0xff]
    %v588 = vld [vmem:[%s1 + $0x1138] sm:$0xff]
    %v589 = vld [vmem:[%s1 + $0x1140] sm:$0xff]
    %v590 = vld [vmem:[%s1 + $0x1148] sm:$0xff]
    %v591 = vld [vmem:[%s1 + $0x1150] sm:$0xff]
    %v592 = vld [vmem:[%s1 + $0x1158] sm:$0xff]
    %v593 = vld [vmem:[%s1 + $0x1160] sm:$0xff]
    %v594 = vld [vmem:[%s1 + $0x1168] sm:$0xff]
    %v595 = vld [vmem:[%s1 + $0x1170] sm:$0xff]
    %v596 = vld [vmem:[%s1 + $0x1178] sm:$0xff]
    %v597 = vld [vmem:[%s1 + $0x1180] sm:$0xff]
    %v598 = vld [vmem:[%s1 + $0x1188] sm:$0xff]
    %v599 = vld [vmem:[%s1 + $0x1190] sm:$0xff]
    %v600 = vld [vmem:[%s1 + $0x1198] sm:$0xff]
    %v601 = vld [vmem:[%s1 + $0x11a0] sm:$0xff]
    %v602 = vld [vmem:[%s1 + $0x11a8] sm:$0xff]
    %v603 = vld [vmem:[%s1 + $0x11b0] sm:$0xff]
    %v604 = vld [vmem:[%s1 + $0x11b8] sm:$0xff]
    %v605 = vld [vmem:[%s1 + $0x11c0] sm:$0xff]
    %v606 = vld [vmem:[%s1 + $0x11c8] sm:$0xff]
    %v607 = vld [vmem:[%s1 + $0x11d0] sm:$0xff]
    %v608 = vld [vmem:[%s1 + $0x11d8] sm:$0xff]
    %v609 = vld [vmem:[%s1 + $0x11e0] sm:$0xff]
    %v610 = vld [vmem:[%s1 + $0x11e8] sm:$0xff]
    %v611 = vld [vmem:[%s1 + $0x11f0] sm:$0xff]
    %v612 = vld [vmem:[%s1 + $0x11f8] sm:$0xff]
    %v613 = vld [vmem:[%s1 + $0x1200] sm:$0xff]
    %v614 = vld [vmem:[%s1 + $0x1208] sm:$0xff]
    %v615 = vld [vmem:[%s1 + $0x1210] sm:$0xff]
    %v616 = vld [vmem:[%s1 + $0x1218] sm:$0xff]
    %v617 = vld [vmem:[%s1 + $0x1220] sm:$0xff]
    %v618 = vld [vmem:[%s1 + $0x1228] sm:$0xff]
    %v619 = vld [vmem:[%s1 + $0x1230] sm:$0xff]
    %v620 = vld [vmem:[%s1 + $0x1238] sm:$0xff]
    %v621 = vld [vmem:[%s1 + $0x1240] sm:$0xff]
    %v622 = vld [vmem:[%s1 + $0x1248] sm:$0xff]
    %v623 = vld [vmem:[%s1 + $0x1250] sm:$0xff]
    %v624 = vld [vmem:[%s1 + $0x1258] sm:$0xff]
    %v625 = vld [vmem:[%s1 + $0x1260] sm:$0xff]
    %v626 = vld [vmem:[%s1 + $0x1268] sm:$0xff]
    %v627 = vld [vmem:[%s1 + $0x1270] sm:$0xff]
    %v628 = vld [vmem:[%s1 + $0x1278] sm:$0xff]
    %v629 = vld [vmem:[%s1 + $0x1280] sm:$0xff]
    %v630 = vld [vmem:[%s1 + $0x1288] sm:$0xff]
    %v631 = vld [vmem:[%s1 + $0x1290] sm:$0xff]
    %v632 = vld [vmem:[%s1 + $0x1298] sm:$0xff]
    %v633 = vld [vmem:[%s1 + $0x12a0] sm:$0xff]
    %v634 = vld [vmem:[%s1 + $0x12a8] sm:$0xff]
    %v635 = vld [vmem:[%s1 + $0x12b0] sm:$0xff]
    %v636 = vld [vmem:[%s1 + $0x12b8] sm:$0xff]
    %v637 = vld [vmem:[%s1 + $0x12c0] sm:$0xff]
    %v638 = vld [vmem:[%s1 + $0x12c8] sm:$0xff]
    %v639 = vld [vmem:[%s1 + $0x12d0] sm:$0xff]
    %v640 = vld [vmem:[%s1 + $0x12d8] sm:$0xff]
    %v641 = vld [vmem:[%s1 + $0x12e0] sm:$0xff]
    %v642 = vld [vmem:[%s1 + $0x12e8] sm:$0xff]
    %v643 = vld [vmem:[%s1 + $0x12f0] sm:$0xff]
    %v644 = vld [vmem:[%s1 + $0x12f8] sm:$0xff]
    %v645 = vld [vmem:[%s1 + $0x1300] sm:$0xff]
    %v646 = vld [vmem:[%s1 + $0x1308] sm:$0xff]
    %v647 = vld [vmem:[%s1 + $0x1310] sm:$0xff]
    %v648 = vld [vmem:[%s1 + $0x1318] sm:$0xff]
    %v649 = vld [vmem:[%s1 + $0x1320] sm:$0xff]
    %v650 = vld [vmem:[%s1 + $0x1328] sm:$0xff]
    %v651 = vld [vmem:[%s1 + $0x1330] sm:$0xff]
    %v652 = vld [vmem:[%s1 + $0x1338] sm:$0xff]
    %v653 = vld [vmem:[%s1 + $0x1340] sm:$0xff]
    %v654 = vld [vmem:[%s1 + $0x1348] sm:$0xff]
    %v655 = vld [vmem:[%s1 + $0x1350] sm:$0xff]
    %v656 = vld [vmem:[%s1 + $0x1358] sm:$0xff]
    %v657 = vld [vmem:[%s1 + $0x1360] sm:$0xff]
    %v658 = vld [vmem:[%s1 + $0x1368] sm:$0xff]
    %v659 = vld [vmem:[%s1 + $0x1370] sm:$0xff]
    %v660 = vld [vmem:[%s1 + $0x1378] sm:$0xff]
    %v661 = vld [vmem:[%s1 + $0x1380] sm:$0xff]
    %v662 = vld [vmem:[%s1 + $0x1388] sm:$0xff]
    %v663 = vld [vmem:[%s1 + $0x1390] sm:$0xff]
    %v664 = vld [vmem:[%s1 + $0x1398] sm:$0xff]
    %v665 = vld [vmem:[%s1 + $0x13a0] sm:$0xff]
    %v666 = vld [vmem:[%s1 + $0x13a8] sm:$0xff]
    %v667 = vld [vmem:[%s1 + $0x13b0] sm:$0xff]
    %v668 = vld [vmem:[%s1 + $0x13b8] sm:$0xff]
    %v669 = vld [vmem:[%s1 + $0x13c0] sm:$0xff]
    %v670 = vld [vmem:[%s1 + $0x13c8] sm:$0xff]
    %v671 = vld [vmem:[%s1 + $0x13d0] sm:$0xff]
    %v672 = vld [vmem:[%s1 + $0x13d8] sm:$0xff]
    %v673 = vld [vmem:[%s1 + $0x13e0] sm:$0xff]
    %v674 = vld [vmem:[%s1 + $0x13e8] sm:$0xff]
    %v675 = vld [vmem:[%s1 + $0x13f0] sm:$0xff]
    %v676 = vld [vmem:[%s1 + $0x13f8] sm:$0xff]
    %v677 = vld [vmem:[%s1 + $0x1400] sm:$0xff]
    %v678 = vld [vmem:[%s1 + $0x1408] sm:$0xff]
    %v679 = vld [vmem:[%s1 + $0x1410] sm:$0xff]
    %v680 = vld [vmem:[%s1 + $0x1418] sm:$0xff]
    %v681 = vld [vmem:[%s1 + $0x1420] sm:$0xff]
    %v682 = vld [vmem:[%s1 + $0x1428] sm:$0xff]
    %v683 = vld [vmem:[%s1 + $0x1430] sm:$0xff]
    %v684 = vld [vmem:[%s1 + $0x1438] sm:$0xff]
    %v685 = vld [vmem:[%s2] sm:$0xff]
    %v686 = vld [vmem:[%s2 + $0x8] sm:$0xff]
    %v687 = vld [vmem:[%s2 + $0x10] sm:$0x3]
    %v691 = vperm.slane %v685, 0
    %v692 = vperm.slane %v685, 1
    %v693 = vperm.slane %v685, 2
    %v694 = vperm.slane %v685, 3
    %v695 = vperm.slane %v685, 4
    %v696 = vperm.slane %v685, 5
    %v697 = vperm.slane %v685, 6
    %v698 = vperm.slane %v685, 7
    %v699 = vperm.slane %v686, 0
    %v700 = vperm.slane %v686, 1
    %v701 = vperm.slane %v686, 2
    %v702 = vperm.slane %v686, 3
    %v703 = vperm.slane %v686, 4
    %v704 = vperm.slane %v686, 5
    %v705 = vperm.slane %v686, 6
    %v706 = vperm.slane %v686, 7
    %v707 = vperm.slane %v687, 0
    %v708 = vperm.slane %v687, 1
    %v1375 = vunpack.c.l.b16 %v37
    %v1376 = vunpack.c.h.b16 %v37
    %v1377 = vunpack.c.l.b16 %v38
    %v1378 = vunpack.c.h.b16 %v38
    %v1379 = vunpack.c.l.b16 %v39
    %v1380 = vunpack.c.h.b16 %v39
    %v1381 = vunpack.c.l.b16 %v40
    %v1382 = vunpack.c.h.b16 %v40
    %v1383 = vunpack.c.l.b16 %v41
    %v1384 = vunpack.c.h.b16 %v41
    %v1385 = vunpack.c.l.b16 %v42
    %v1386 = vunpack.c.h.b16 %v42
    %v1387 = vunpack.c.l.b16 %v43
    %v1388 = vunpack.c.h.b16 %v43
    %v1389 = vunpack.c.l.b16 %v44
    %v1390 = vunpack.c.h.b16 %v44
    %v1391 = vunpack.c.l.b16 %v45
    %v1392 = vunpack.c.h.b16 %v45
    %v1393 = vunpack.c.l.b16 %v46
    %v1394 = vunpack.c.h.b16 %v46
    %v1395 = vunpack.c.l.b16 %v47
    %v1396 = vunpack.c.h.b16 %v47
    %v1397 = vunpack.c.l.b16 %v48
    %v1398 = vunpack.c.h.b16 %v48
    %v1399 = vunpack.c.l.b16 %v49
    %v1400 = vunpack.c.h.b16 %v49
    %v1401 = vunpack.c.l.b16 %v50
    %v1402 = vunpack.c.h.b16 %v50
    %v1403 = vunpack.c.l.b16 %v51
    %v1404 = vunpack.c.h.b16 %v51
    %v1405 = vunpack.c.l.b16 %v52
    %v1406 = vunpack.c.h.b16 %v52
    %v1407 = vunpack.c.l.b16 %v53
    %v1408 = vunpack.c.h.b16 %v53
    %v1409 = vunpack.c.l.b16 %v54
    %v1410 = vunpack.c.h.b16 %v54
    %v1411 = vunpack.c.l.b16 %v55
    %v1412 = vunpack.c.h.b16 %v55
    %v1413 = vunpack.c.l.b16 %v56
    %v1414 = vunpack.c.h.b16 %v56
    %v1415 = vunpack.c.l.b16 %v57
    %v1416 = vunpack.c.h.b16 %v57
    %v1417 = vunpack.c.l.b16 %v58
    %v1418 = vunpack.c.h.b16 %v58
    %v1419 = vunpack.c.l.b16 %v59
    %v1420 = vunpack.c.h.b16 %v59
    %v1421 = vunpack.c.l.b16 %v60
    %v1422 = vunpack.c.h.b16 %v60
    %v1423 = vunpack.c.l.b16 %v61
    %v1424 = vunpack.c.h.b16 %v61
    %v1425 = vunpack.c.l.b16 %v62
    %v1426 = vunpack.c.h.b16 %v62
    %v1427 = vunpack.c.l.b16 %v63
    %v1428 = vunpack.c.h.b16 %v63
    %v1429 = vunpack.c.l.b16 %v64
    %v1430 = vunpack.c.h.b16 %v64
    %v1431 = vunpack.c.l.b16 %v65
    %v1432 = vunpack.c.h.b16 %v65
    %v1433 = vunpack.c.l.b16 %v66
    %v1434 = vunpack.c.h.b16 %v66
    %v1435 = vunpack.c.l.b16 %v67
    %v1436 = vunpack.c.h.b16 %v67
    %v1437 = vunpack.c.l.b16 %v68
    %v1438 = vunpack.c.h.b16 %v68
    %v1439 = vunpack.c.l.b16 %v69
    %v1440 = vunpack.c.h.b16 %v69
    %v1441 = vunpack.c.l.b16 %v70
    %v1442 = vunpack.c.h.b16 %v70
    %v1443 = vunpack.c.l.b16 %v71
    %v1444 = vunpack.c.h.b16 %v71
    %v1445 = vunpack.c.l.b16 %v72
    %v1446 = vunpack.c.h.b16 %v72
    %v1447 = vunpack.c.l.b16 %v73
    %v1448 = vunpack.c.h.b16 %v73
    %v1449 = vunpack.c.l.b16 %v74
    %v1450 = vunpack.c.h.b16 %v74
    %v1451 = vunpack.c.l.b16 %v75
    %v1452 = vunpack.c.h.b16 %v75
    %v1453 = vunpack.c.l.b16 %v76
    %v1454 = vunpack.c.h.b16 %v76
    %v1455 = vunpack.c.l.b16 %v77
    %v1456 = vunpack.c.h.b16 %v77
    %v1457 = vunpack.c.l.b16 %v78
    %v1458 = vunpack.c.h.b16 %v78
    %v1459 = vunpack.c.l.b16 %v79
    %v1460 = vunpack.c.h.b16 %v79
    %v1461 = vunpack.c.l.b16 %v80
    %v1462 = vunpack.c.h.b16 %v80
    %v1463 = vunpack.c.l.b16 %v81
    %v1464 = vunpack.c.h.b16 %v81
    %v1465 = vunpack.c.l.b16 %v82
    %v1466 = vunpack.c.h.b16 %v82
    %v1467 = vunpack.c.l.b16 %v83
    %v1468 = vunpack.c.h.b16 %v83
    %v1469 = vunpack.c.l.b16 %v84
    %v1470 = vunpack.c.h.b16 %v84
    %v1471 = vunpack.c.l.b16 %v85
    %v1472 = vunpack.c.h.b16 %v85
    %v1473 = vunpack.c.l.b16 %v86
    %v1474 = vunpack.c.h.b16 %v86
    %v1475 = vunpack.c.l.b16 %v87
    %v1476 = vunpack.c.h.b16 %v87
    %v1477 = vunpack.c.l.b16 %v88
    %v1478 = vunpack.c.h.b16 %v88
    %v1479 = vunpack.c.l.b16 %v89
    %v1480 = vunpack.c.h.b16 %v89
    %v1481 = vunpack.c.l.b16 %v90
    %v1482 = vunpack.c.h.b16 %v90
    %v1483 = vunpack.c.l.b16 %v91
    %v1484 = vunpack.c.h.b16 %v91
    %v1485 = vunpack.c.l.b16 %v92
    %v1486 = vunpack.c.h.b16 %v92
    %v1487 = vunpack.c.l.b16 %v93
    %v1488 = vunpack.c.h.b16 %v93
    %v1489 = vunpack.c.l.b16 %v94
    %v1490 = vunpack.c.h.b16 %v94
    %v1491 = vunpack.c.l.b16 %v95
    %v1492 = vunpack.c.h.b16 %v95
    %v1493 = vunpack.c.l.b16 %v96
    %v1494 = vunpack.c.h.b16 %v96
    %v1495 = vunpack.c.l.b16 %v97
    %v1496 = vunpack.c.h.b16 %v97
    %v1497 = vunpack.c.l.b16 %v98
    %v1498 = vunpack.c.h.b16 %v98
    %v1499 = vunpack.c.l.b16 %v99
    %v1500 = vunpack.c.h.b16 %v99
    %v1501 = vunpack.c.l.b16 %v100
    %v1502 = vunpack.c.h.b16 %v100
    %v1503 = vunpack.c.l.b16 %v101
    %v1504 = vunpack.c.h.b16 %v101
    %v1505 = vunpack.c.l.b16 %v102
    %v1506 = vunpack.c.h.b16 %v102
    %v1507 = vunpack.c.l.b16 %v103
    %v1508 = vunpack.c.h.b16 %v103
    %v1509 = vunpack.c.l.b16 %v104
    %v1510 = vunpack.c.h.b16 %v104
    %v1511 = vunpack.c.l.b16 %v105
    %v1512 = vunpack.c.h.b16 %v105
    %v1513 = vunpack.c.l.b16 %v106
    %v1514 = vunpack.c.h.b16 %v106
    %v1515 = vunpack.c.l.b16 %v107
    %v1516 = vunpack.c.h.b16 %v107
    %v1517 = vunpack.c.l.b16 %v108
    %v1518 = vunpack.c.h.b16 %v108
    %v1519 = vunpack.c.l.b16 %v109
    %v1520 = vunpack.c.h.b16 %v109
    %v1521 = vunpack.c.l.b16 %v110
    %v1522 = vunpack.c.h.b16 %v110
    %v1523 = vunpack.c.l.b16 %v111
    %v1524 = vunpack.c.h.b16 %v111
    %v1525 = vunpack.c.l.b16 %v112
    %v1526 = vunpack.c.h.b16 %v112
    %v1527 = vunpack.c.l.b16 %v113
    %v1528 = vunpack.c.h.b16 %v113
    %v1529 = vunpack.c.l.b16 %v114
    %v1530 = vunpack.c.h.b16 %v114
    %v1531 = vunpack.c.l.b16 %v115
    %v1532 = vunpack.c.h.b16 %v115
    %v1533 = vunpack.c.l.b16 %v116
    %v1534 = vunpack.c.h.b16 %v116
    %v1535 = vunpack.c.l.b16 %v117
    %v1536 = vunpack.c.h.b16 %v117
    %v1537 = vunpack.c.l.b16 %v118
    %v1538 = vunpack.c.h.b16 %v118
    %v1539 = vunpack.c.l.b16 %v119
    %v1540 = vunpack.c.h.b16 %v119
    %v1541 = vunpack.c.l.b16 %v120
    %v1542 = vunpack.c.h.b16 %v120
    %v1543 = vunpack.c.l.b16 %v121
    %v1544 = vunpack.c.h.b16 %v121
    %v1545 = vunpack.c.l.b16 %v122
    %v1546 = vunpack.c.h.b16 %v122
    %v1547 = vunpack.c.l.b16 %v123
    %v1548 = vunpack.c.h.b16 %v123
    %v1549 = vunpack.c.l.b16 %v124
    %v1550 = vunpack.c.h.b16 %v124
    %v1551 = vunpack.c.l.b16 %v125
    %v1552 = vunpack.c.h.b16 %v125
    %v1553 = vunpack.c.l.b16 %v126
    %v1554 = vunpack.c.h.b16 %v126
    %v1555 = vunpack.c.l.b16 %v127
    %v1556 = vunpack.c.h.b16 %v127
    %v1557 = vunpack.c.l.b16 %v128
    %v1558 = vunpack.c.h.b16 %v128
    %v1559 = vunpack.c.l.b16 %v129
    %v1560 = vunpack.c.h.b16 %v129
    %v1561 = vunpack.c.l.b16 %v130
    %v1562 = vunpack.c.h.b16 %v130
    %v1563 = vunpack.c.l.b16 %v131
    %v1564 = vunpack.c.h.b16 %v131
    %v1565 = vunpack.c.l.b16 %v132
    %v1566 = vunpack.c.h.b16 %v132
    %v1567 = vunpack.c.l.b16 %v133
    %v1568 = vunpack.c.h.b16 %v133
    %v1569 = vunpack.c.l.b16 %v134
    %v1570 = vunpack.c.h.b16 %v134
    %v1571 = vunpack.c.l.b16 %v135
    %v1572 = vunpack.c.h.b16 %v135
    %v1573 = vunpack.c.l.b16 %v136
    %v1574 = vunpack.c.h.b16 %v136
    %v1575 = vunpack.c.l.b16 %v137
    %v1576 = vunpack.c.h.b16 %v137
    %v1577 = vunpack.c.l.b16 %v138
    %v1578 = vunpack.c.h.b16 %v138
    %v1579 = vunpack.c.l.b16 %v139
    %v1580 = vunpack.c.h.b16 %v139
    %v1581 = vunpack.c.l.b16 %v140
    %v1582 = vunpack.c.h.b16 %v140
    %v1583 = vunpack.c.l.b16 %v141
    %v1584 = vunpack.c.h.b16 %v141
    %v1585 = vunpack.c.l.b16 %v142
    %v1586 = vunpack.c.h.b16 %v142
    %v1587 = vunpack.c.l.b16 %v143
    %v1588 = vunpack.c.h.b16 %v143
    %v1589 = vunpack.c.l.b16 %v144
    %v1590 = vunpack.c.h.b16 %v144
    %v1591 = vunpack.c.l.b16 %v145
    %v1592 = vunpack.c.h.b16 %v145
    %v1593 = vunpack.c.l.b16 %v146
    %v1594 = vunpack.c.h.b16 %v146
    %v1595 = vunpack.c.l.b16 %v147
    %v1596 = vunpack.c.h.b16 %v147
    %v1597 = vunpack.c.l.b16 %v148
    %v1598 = vunpack.c.h.b16 %v148
    %v1599 = vunpack.c.l.b16 %v149
    %v1600 = vunpack.c.h.b16 %v149
    %v1601 = vunpack.c.l.b16 %v150
    %v1602 = vunpack.c.h.b16 %v150
    %v1603 = vunpack.c.l.b16 %v151
    %v1604 = vunpack.c.h.b16 %v151
    %v1605 = vunpack.c.l.b16 %v152
    %v1606 = vunpack.c.h.b16 %v152
    %v1607 = vunpack.c.l.b16 %v153
    %v1608 = vunpack.c.h.b16 %v153
    %v1609 = vunpack.c.l.b16 %v154
    %v1610 = vunpack.c.h.b16 %v154
    %v1611 = vunpack.c.l.b16 %v155
    %v1612 = vunpack.c.h.b16 %v155
    %v1613 = vunpack.c.l.b16 %v156
    %v1614 = vunpack.c.h.b16 %v156
    %v1615 = vunpack.c.l.b16 %v157
    %v1616 = vunpack.c.h.b16 %v157
    %v1617 = vunpack.c.l.b16 %v158
    %v1618 = vunpack.c.h.b16 %v158
    %v1619 = vunpack.c.l.b16 %v159
    %v1620 = vunpack.c.h.b16 %v159
    %v1621 = vunpack.c.l.b16 %v160
    %v1622 = vunpack.c.h.b16 %v160
    %v1623 = vunpack.c.l.b16 %v161
    %v1624 = vunpack.c.h.b16 %v161
    %v1625 = vunpack.c.l.b16 %v162
    %v1626 = vunpack.c.h.b16 %v162
    %v1627 = vunpack.c.l.b16 %v163
    %v1628 = vunpack.c.h.b16 %v163
    %v1629 = vunpack.c.l.b16 %v164
    %v1630 = vunpack.c.h.b16 %v164
    %v1631 = vunpack.c.l.b16 %v165
    %v1632 = vunpack.c.h.b16 %v165
    %v1633 = vunpack.c.l.b16 %v166
    %v1634 = vunpack.c.h.b16 %v166
    %v1635 = vunpack.c.l.b16 %v167
    %v1636 = vunpack.c.h.b16 %v167
    %v1637 = vunpack.c.l.b16 %v168
    %v1638 = vunpack.c.h.b16 %v168
    %v1639 = vunpack.c.l.b16 %v169
    %v1640 = vunpack.c.h.b16 %v169
    %v1641 = vunpack.c.l.b16 %v170
    %v1642 = vunpack.c.h.b16 %v170
    %v1643 = vunpack.c.l.b16 %v171
    %v1644 = vunpack.c.h.b16 %v171
    %v1645 = vunpack.c.l.b16 %v172
    %v1646 = vunpack.c.h.b16 %v172
    %v1647 = vunpack.c.l.b16 %v173
    %v1648 = vunpack.c.h.b16 %v173
    %v1649 = vunpack.c.l.b16 %v174
    %v1650 = vunpack.c.h.b16 %v174
    %v1651 = vunpack.c.l.b16 %v175
    %v1652 = vunpack.c.h.b16 %v175
    %v1653 = vunpack.c.l.b16 %v176
    %v1654 = vunpack.c.h.b16 %v176
    %v1655 = vunpack.c.l.b16 %v177
    %v1656 = vunpack.c.h.b16 %v177
    %v1657 = vunpack.c.l.b16 %v178
    %v1658 = vunpack.c.h.b16 %v178
    %v1659 = vunpack.c.l.b16 %v179
    %v1660 = vunpack.c.h.b16 %v179
    %v1661 = vunpack.c.l.b16 %v180
    %v1662 = vunpack.c.h.b16 %v180
    %v1663 = vunpack.c.l.b16 %v181
    %v1664 = vunpack.c.h.b16 %v181
    %v1665 = vunpack.c.l.b16 %v182
    %v1666 = vunpack.c.h.b16 %v182
    %v1667 = vunpack.c.l.b16 %v183
    %v1668 = vunpack.c.h.b16 %v183
    %v1669 = vunpack.c.l.b16 %v184
    %v1670 = vunpack.c.h.b16 %v184
    %v1671 = vunpack.c.l.b16 %v185
    %v1672 = vunpack.c.h.b16 %v185
    %v1673 = vunpack.c.l.b16 %v186
    %v1674 = vunpack.c.h.b16 %v186
    %v1675 = vunpack.c.l.b16 %v187
    %v1676 = vunpack.c.h.b16 %v187
    %v1677 = vunpack.c.l.b16 %v188
    %v1678 = vunpack.c.h.b16 %v188
    %v1679 = vunpack.c.l.b16 %v189
    %v1680 = vunpack.c.h.b16 %v189
    %v1681 = vunpack.c.l.b16 %v190
    %v1682 = vunpack.c.h.b16 %v190
    %v1683 = vunpack.c.l.b16 %v191
    %v1684 = vunpack.c.h.b16 %v191
    %v1685 = vunpack.c.l.b16 %v192
    %v1686 = vunpack.c.h.b16 %v192
    %v1687 = vunpack.c.l.b16 %v193
    %v1688 = vunpack.c.h.b16 %v193
    %v1689 = vunpack.c.l.b16 %v194
    %v1690 = vunpack.c.h.b16 %v194
    %v1691 = vunpack.c.l.b16 %v195
    %v1692 = vunpack.c.h.b16 %v195
    %v1693 = vunpack.c.l.b16 %v196
    %v1694 = vunpack.c.h.b16 %v196
    %v1695 = vunpack.c.l.b16 %v197
    %v1696 = vunpack.c.h.b16 %v197
    %v1697 = vunpack.c.l.b16 %v198
    %v1698 = vunpack.c.h.b16 %v198
    %v1699 = vunpack.c.l.b16 %v199
    %v1700 = vunpack.c.h.b16 %v199
    %v1701 = vunpack.c.l.b16 %v200
    %v1702 = vunpack.c.h.b16 %v200
    %v1703 = vunpack.c.l.b16 %v201
    %v1704 = vunpack.c.h.b16 %v201
    %v1705 = vunpack.c.l.b16 %v202
    %v1706 = vunpack.c.h.b16 %v202
    %v1707 = vunpack.c.l.b16 %v203
    %v1708 = vunpack.c.h.b16 %v203
    %v1709 = vunpack.c.l.b16 %v204
    %v1710 = vunpack.c.h.b16 %v204
    %v1711 = vunpack.c.l.b16 %v205
    %v1712 = vunpack.c.h.b16 %v205
    %v1713 = vunpack.c.l.b16 %v206
    %v1714 = vunpack.c.h.b16 %v206
    %v1715 = vunpack.c.l.b16 %v207
    %v1716 = vunpack.c.h.b16 %v207
    %v1717 = vunpack.c.l.b16 %v208
    %v1718 = vunpack.c.h.b16 %v208
    %v1719 = vunpack.c.l.b16 %v209
    %v1720 = vunpack.c.h.b16 %v209
    %v1721 = vunpack.c.l.b16 %v210
    %v1722 = vunpack.c.h.b16 %v210
    %v1723 = vunpack.c.l.b16 %v211
    %v1724 = vunpack.c.h.b16 %v211
    %v1725 = vunpack.c.l.b16 %v212
    %v1726 = vunpack.c.h.b16 %v212
    %v1727 = vunpack.c.l.b16 %v213
    %v1728 = vunpack.c.h.b16 %v213
    %v1729 = vunpack.c.l.b16 %v214
    %v1730 = vunpack.c.h.b16 %v214
    %v1731 = vunpack.c.l.b16 %v215
    %v1732 = vunpack.c.h.b16 %v215
    %v1733 = vunpack.c.l.b16 %v216
    %v1734 = vunpack.c.h.b16 %v216
    %v1735 = vunpack.c.l.b16 %v217
    %v1736 = vunpack.c.h.b16 %v217
    %v1737 = vunpack.c.l.b16 %v218
    %v1738 = vunpack.c.h.b16 %v218
    %v1739 = vunpack.c.l.b16 %v219
    %v1740 = vunpack.c.h.b16 %v219
    %v1741 = vunpack.c.l.b16 %v220
    %v1742 = vunpack.c.h.b16 %v220
    %v1743 = vunpack.c.l.b16 %v221
    %v1744 = vunpack.c.h.b16 %v221
    %v1745 = vunpack.c.l.b16 %v222
    %v1746 = vunpack.c.h.b16 %v222
    %v1747 = vunpack.c.l.b16 %v223
    %v1748 = vunpack.c.h.b16 %v223
    %v1749 = vunpack.c.l.b16 %v224
    %v1750 = vunpack.c.h.b16 %v224
    %v1751 = vunpack.c.l.b16 %v225
    %v1752 = vunpack.c.h.b16 %v225
    %v1753 = vunpack.c.l.b16 %v226
    %v1754 = vunpack.c.h.b16 %v226
    %v1755 = vunpack.c.l.b16 %v227
    %v1756 = vunpack.c.h.b16 %v227
    %v1757 = vunpack.c.l.b16 %v228
    %v1758 = vunpack.c.h.b16 %v228
    %v1759 = vunpack.c.l.b16 %v229
    %v1760 = vunpack.c.h.b16 %v229
    %v1761 = vunpack.c.l.b16 %v230
    %v1762 = vunpack.c.h.b16 %v230
    %v1763 = vunpack.c.l.b16 %v231
    %v1764 = vunpack.c.h.b16 %v231
    %v1765 = vunpack.c.l.b16 %v232
    %v1766 = vunpack.c.h.b16 %v232
    %v1767 = vunpack.c.l.b16 %v233
    %v1768 = vunpack.c.h.b16 %v233
    %v1769 = vunpack.c.l.b16 %v234
    %v1770 = vunpack.c.h.b16 %v234
    %v1771 = vunpack.c.l.b16 %v235
    %v1772 = vunpack.c.h.b16 %v235
    %v1773 = vunpack.c.l.b16 %v236
    %v1774 = vunpack.c.h.b16 %v236
    %v1775 = vunpack.c.l.b16 %v237
    %v1776 = vunpack.c.h.b16 %v237
    %v1777 = vunpack.c.l.b16 %v238
    %v1778 = vunpack.c.h.b16 %v238
    %v1779 = vunpack.c.l.b16 %v239
    %v1780 = vunpack.c.h.b16 %v239
    %v1781 = vunpack.c.l.b16 %v240
    %v1782 = vunpack.c.h.b16 %v240
    %v1783 = vunpack.c.l.b16 %v241
    %v1784 = vunpack.c.h.b16 %v241
    %v1785 = vunpack.c.l.b16 %v242
    %v1786 = vunpack.c.h.b16 %v242
    %v1787 = vunpack.c.l.b16 %v243
    %v1788 = vunpack.c.h.b16 %v243
    %v1789 = vunpack.c.l.b16 %v244
    %v1790 = vunpack.c.h.b16 %v244
    %v1791 = vunpack.c.l.b16 %v245
    %v1792 = vunpack.c.h.b16 %v245
    %v1793 = vunpack.c.l.b16 %v246
    %v1794 = vunpack.c.h.b16 %v246
    %v1795 = vunpack.c.l.b16 %v247
    %v1796 = vunpack.c.h.b16 %v247
    %v1797 = vunpack.c.l.b16 %v248
    %v1798 = vunpack.c.h.b16 %v248
    %v1799 = vunpack.c.l.b16 %v249
    %v1800 = vunpack.c.h.b16 %v249
    %v1801 = vunpack.c.l.b16 %v250
    %v1802 = vunpack.c.h.b16 %v250
    %v1803 = vunpack.c.l.b16 %v251
    %v1804 = vunpack.c.h.b16 %v251
    %v1805 = vunpack.c.l.b16 %v252
    %v1806 = vunpack.c.h.b16 %v252
    %v1807 = vunpack.c.l.b16 %v253
    %v1808 = vunpack.c.h.b16 %v253
    %v1809 = vunpack.c.l.b16 %v254
    %v1810 = vunpack.c.h.b16 %v254
    %v1811 = vunpack.c.l.b16 %v255
    %v1812 = vunpack.c.h.b16 %v255
    %v1813 = vunpack.c.l.b16 %v256
    %v1814 = vunpack.c.h.b16 %v256
    %v1815 = vunpack.c.l.b16 %v257
    %v1816 = vunpack.c.h.b16 %v257
    %v1817 = vunpack.c.l.b16 %v258
    %v1818 = vunpack.c.h.b16 %v258
    %v1819 = vunpack.c.l.b16 %v259
    %v1820 = vunpack.c.h.b16 %v259
    %v1821 = vunpack.c.l.b16 %v260
    %v1822 = vunpack.c.h.b16 %v260
    %v1823 = vunpack.c.l.b16 %v261
    %v1824 = vunpack.c.h.b16 %v261
    %v1825 = vunpack.c.l.b16 %v262
    %v1826 = vunpack.c.h.b16 %v262
    %v1827 = vunpack.c.l.b16 %v263
    %v1828 = vunpack.c.h.b16 %v263
    %v1829 = vunpack.c.l.b16 %v264
    %v1830 = vunpack.c.h.b16 %v264
    %v1831 = vunpack.c.l.b16 %v265
    %v1832 = vunpack.c.h.b16 %v265
    %v1833 = vunpack.c.l.b16 %v266
    %v1834 = vunpack.c.h.b16 %v266
    %v1835 = vunpack.c.l.b16 %v267
    %v1836 = vunpack.c.h.b16 %v267
    %v1837 = vunpack.c.l.b16 %v268
    %v1838 = vunpack.c.h.b16 %v268
    %v1839 = vunpack.c.l.b16 %v269
    %v1840 = vunpack.c.h.b16 %v269
    %v1841 = vunpack.c.l.b16 %v270
    %v1842 = vunpack.c.h.b16 %v270
    %v1843 = vunpack.c.l.b16 %v271
    %v1844 = vunpack.c.h.b16 %v271
    %v1845 = vunpack.c.l.b16 %v272
    %v1846 = vunpack.c.h.b16 %v272
    %v1847 = vunpack.c.l.b16 %v273
    %v1848 = vunpack.c.h.b16 %v273
    %v1849 = vunpack.c.l.b16 %v274
    %v1850 = vunpack.c.h.b16 %v274
    %v1851 = vunpack.c.l.b16 %v275
    %v1852 = vunpack.c.h.b16 %v275
    %v1853 = vunpack.c.l.b16 %v276
    %v1854 = vunpack.c.h.b16 %v276
    %v1855 = vunpack.c.l.b16 %v277
    %v1856 = vunpack.c.h.b16 %v277
    %v1857 = vunpack.c.l.b16 %v278
    %v1858 = vunpack.c.h.b16 %v278
    %v1859 = vunpack.c.l.b16 %v279
    %v1860 = vunpack.c.h.b16 %v279
    %v1861 = vunpack.c.l.b16 %v280
    %v1862 = vunpack.c.h.b16 %v280
    %v1863 = vunpack.c.l.b16 %v281
    %v1864 = vunpack.c.h.b16 %v281
    %v1865 = vunpack.c.l.b16 %v282
    %v1866 = vunpack.c.h.b16 %v282
    %v1867 = vunpack.c.l.b16 %v283
    %v1868 = vunpack.c.h.b16 %v283
    %v1869 = vunpack.c.l.b16 %v284
    %v1870 = vunpack.c.h.b16 %v284
    %v1871 = vunpack.c.l.b16 %v285
    %v1872 = vunpack.c.h.b16 %v285
    %v1873 = vunpack.c.l.b16 %v286
    %v1874 = vunpack.c.h.b16 %v286
    %v1875 = vunpack.c.l.b16 %v287
    %v1876 = vunpack.c.h.b16 %v287
    %v1877 = vunpack.c.l.b16 %v288
    %v1878 = vunpack.c.h.b16 %v288
    %v1879 = vunpack.c.l.b16 %v289
    %v1880 = vunpack.c.h.b16 %v289
    %v1881 = vunpack.c.l.b16 %v290
    %v1882 = vunpack.c.h.b16 %v290
    %v1883 = vunpack.c.l.b16 %v291
    %v1884 = vunpack.c.h.b16 %v291
    %v1885 = vunpack.c.l.b16 %v292
    %v1886 = vunpack.c.h.b16 %v292
    %v1887 = vunpack.c.l.b16 %v293
    %v1888 = vunpack.c.h.b16 %v293
    %v1889 = vunpack.c.l.b16 %v294
    %v1890 = vunpack.c.h.b16 %v294
    %v1891 = vunpack.c.l.b16 %v295
    %v1892 = vunpack.c.h.b16 %v295
    %v1893 = vunpack.c.l.b16 %v296
    %v1894 = vunpack.c.h.b16 %v296
    %v1895 = vunpack.c.l.b16 %v297
    %v1896 = vunpack.c.h.b16 %v297
    %v1897 = vunpack.c.l.b16 %v298
    %v1898 = vunpack.c.h.b16 %v298
    %v1899 = vunpack.c.l.b16 %v299
    %v1900 = vunpack.c.h.b16 %v299
    %v1901 = vunpack.c.l.b16 %v300
    %v1902 = vunpack.c.h.b16 %v300
    %v1903 = vunpack.c.l.b16 %v301
    %v1904 = vunpack.c.h.b16 %v301
    %v1905 = vunpack.c.l.b16 %v302
    %v1906 = vunpack.c.h.b16 %v302
    %v1907 = vunpack.c.l.b16 %v303
    %v1908 = vunpack.c.h.b16 %v303
    %v1909 = vunpack.c.l.b16 %v304
    %v1910 = vunpack.c.h.b16 %v304
    %v1911 = vunpack.c.l.b16 %v305
    %v1912 = vunpack.c.h.b16 %v305
    %v1913 = vunpack.c.l.b16 %v306
    %v1914 = vunpack.c.h.b16 %v306
    %v1915 = vunpack.c.l.b16 %v307
    %v1916 = vunpack.c.h.b16 %v307
    %v1917 = vunpack.c.l.b16 %v308
    %v1918 = vunpack.c.h.b16 %v308
    %v1919 = vunpack.c.l.b16 %v309
    %v1920 = vunpack.c.h.b16 %v309
    %v1921 = vunpack.c.l.b16 %v310
    %v1922 = vunpack.c.h.b16 %v310
    %v1923 = vunpack.c.l.b16 %v311
    %v1924 = vunpack.c.h.b16 %v311
    %v1925 = vunpack.c.l.b16 %v312
    %v1926 = vunpack.c.h.b16 %v312
    %v1927 = vunpack.c.l.b16 %v313
    %v1928 = vunpack.c.h.b16 %v313
    %v1929 = vunpack.c.l.b16 %v314
    %v1930 = vunpack.c.h.b16 %v314
    %v1931 = vunpack.c.l.b16 %v315
    %v1932 = vunpack.c.h.b16 %v315
    %v1933 = vunpack.c.l.b16 %v316
    %v1934 = vunpack.c.h.b16 %v316
    %v1935 = vunpack.c.l.b16 %v317
    %v1936 = vunpack.c.h.b16 %v317
    %v1937 = vunpack.c.l.b16 %v318
    %v1938 = vunpack.c.h.b16 %v318
    %v1939 = vunpack.c.l.b16 %v319
    %v1940 = vunpack.c.h.b16 %v319
    %v1941 = vunpack.c.l.b16 %v320
    %v1942 = vunpack.c.h.b16 %v320
    %v1943 = vunpack.c.l.b16 %v321
    %v1944 = vunpack.c.h.b16 %v321
    %v1945 = vunpack.c.l.b16 %v322
    %v1946 = vunpack.c.h.b16 %v322
    %v1947 = vunpack.c.l.b16 %v323
    %v1948 = vunpack.c.h.b16 %v323
    %v1949 = vunpack.c.l.b16 %v324
    %v1950 = vunpack.c.h.b16 %v324
    %v1951 = vunpack.c.l.b16 %v325
    %v1952 = vunpack.c.h.b16 %v325
    %v1953 = vunpack.c.l.b16 %v326
    %v1954 = vunpack.c.h.b16 %v326
    %v1955 = vunpack.c.l.b16 %v327
    %v1956 = vunpack.c.h.b16 %v327
    %v1957 = vunpack.c.l.b16 %v328
    %v1958 = vunpack.c.h.b16 %v328
    %v1959 = vunpack.c.l.b16 %v329
    %v1960 = vunpack.c.h.b16 %v329
    %v1961 = vunpack.c.l.b16 %v330
    %v1962 = vunpack.c.h.b16 %v330
    %v1963 = vunpack.c.l.b16 %v331
    %v1964 = vunpack.c.h.b16 %v331
    %v1965 = vunpack.c.l.b16 %v332
    %v1966 = vunpack.c.h.b16 %v332
    %v1967 = vunpack.c.l.b16 %v333
    %v1968 = vunpack.c.h.b16 %v333
    %v1969 = vunpack.c.l.b16 %v334
    %v1970 = vunpack.c.h.b16 %v334
    %v1971 = vunpack.c.l.b16 %v335
    %v1972 = vunpack.c.h.b16 %v335
    %v1973 = vunpack.c.l.b16 %v336
    %v1974 = vunpack.c.h.b16 %v336
    %v1975 = vunpack.c.l.b16 %v337
    %v1976 = vunpack.c.h.b16 %v337
    %v1977 = vunpack.c.l.b16 %v338
    %v1978 = vunpack.c.h.b16 %v338
    %v1979 = vunpack.c.l.b16 %v339
    %v1980 = vunpack.c.h.b16 %v339
    %v1981 = vunpack.c.l.b16 %v340
    %v1982 = vunpack.c.h.b16 %v340
    %v1983 = vunpack.c.l.b16 %v341
    %v1984 = vunpack.c.h.b16 %v341
    %v1985 = vunpack.c.l.b16 %v342
    %v1986 = vunpack.c.h.b16 %v342
    %v1987 = vunpack.c.l.b16 %v343
    %v1988 = vunpack.c.h.b16 %v343
    %v1989 = vunpack.c.l.b16 %v344
    %v1990 = vunpack.c.h.b16 %v344
    %v1991 = vunpack.c.l.b16 %v345
    %v1992 = vunpack.c.h.b16 %v345
    %v1993 = vunpack.c.l.b16 %v346
    %v1994 = vunpack.c.h.b16 %v346
    %v1995 = vunpack.c.l.b16 %v347
    %v1996 = vunpack.c.h.b16 %v347
    %v1997 = vunpack.c.l.b16 %v348
    %v1998 = vunpack.c.h.b16 %v348
    %v1999 = vunpack.c.l.b16 %v349
    %v2000 = vunpack.c.h.b16 %v349
    %v2001 = vunpack.c.l.b16 %v350
    %v2002 = vunpack.c.h.b16 %v350
    %v2003 = vunpack.c.l.b16 %v351
    %v2004 = vunpack.c.h.b16 %v351
    %v2005 = vunpack.c.l.b16 %v352
    %v2006 = vunpack.c.h.b16 %v352
    %v2007 = vunpack.c.l.b16 %v353
    %v2008 = vunpack.c.h.b16 %v353
    %v2009 = vunpack.c.l.b16 %v354
    %v2010 = vunpack.c.h.b16 %v354
    %v2011 = vunpack.c.l.b16 %v355
    %v2012 = vunpack.c.h.b16 %v355
    %v2013 = vunpack.c.l.b16 %v356
    %v2014 = vunpack.c.h.b16 %v356
    %v2015 = vunpack.c.l.b16 %v357
    %v2016 = vunpack.c.h.b16 %v357
    %v2017 = vunpack.c.l.b16 %v358
    %v2018 = vunpack.c.h.b16 %v358
    %v2019 = vunpack.c.l.b16 %v359
    %v2020 = vunpack.c.h.b16 %v359
    %v2021 = vunpack.c.l.b16 %v360
    %v2022 = vunpack.c.h.b16 %v360
    %v2023 = vunpack.c.l.b16 %v361
    %v2024 = vunpack.c.h.b16 %v361
    %v2025 = vunpack.c.l.b16 %v362
    %v2026 = vunpack.c.h.b16 %v362
    %v2027 = vunpack.c.l.b16 %v363
    %v2028 = vunpack.c.h.b16 %v363
    %v2029 = vunpack.c.l.b16 %v364
    %v2030 = vunpack.c.h.b16 %v364
    %v2031 = vunpack.c.l.b16 %v365
    %v2032 = vunpack.c.h.b16 %v365
    %v2033 = vunpack.c.l.b16 %v366
    %v2034 = vunpack.c.h.b16 %v366
    %v2035 = vunpack.c.l.b16 %v367
    %v2036 = vunpack.c.h.b16 %v367
    %v2037 = vunpack.c.l.b16 %v368
    %v2038 = vunpack.c.h.b16 %v368
    %v2039 = vunpack.c.l.b16 %v369
    %v2040 = vunpack.c.h.b16 %v369
    %v2041 = vunpack.c.l.b16 %v370
    %v2042 = vunpack.c.h.b16 %v370
    %v2043 = vunpack.c.l.b16 %v371
    %v2044 = vunpack.c.h.b16 %v371
    %v2045 = vunpack.c.l.b16 %v372
    %v2046 = vunpack.c.h.b16 %v372
    %v2047 = vunpack.c.l.b16 %v373
    %v2048 = vunpack.c.h.b16 %v373
    %v2049 = vunpack.c.l.b16 %v374
    %v2050 = vunpack.c.h.b16 %v374
    %v2051 = vunpack.c.l.b16 %v375
    %v2052 = vunpack.c.h.b16 %v375
    %v2053 = vunpack.c.l.b16 %v376
    %v2054 = vunpack.c.h.b16 %v376
    %v2055 = vunpack.c.l.b16 %v377
    %v2056 = vunpack.c.h.b16 %v377
    %v2057 = vunpack.c.l.b16 %v378
    %v2058 = vunpack.c.h.b16 %v378
    %v2059 = vunpack.c.l.b16 %v379
    %v2060 = vunpack.c.h.b16 %v379
    %v2061 = vunpack.c.l.b16 %v380
    %v2062 = vunpack.c.h.b16 %v380
    %v2063 = vunpack.c.l.b16 %v381
    %v2064 = vunpack.c.h.b16 %v381
    %v2065 = vunpack.c.l.b16 %v382
    %v2066 = vunpack.c.h.b16 %v382
    %v2067 = vunpack.c.l.b16 %v383
    %v2068 = vunpack.c.h.b16 %v383
    %v2069 = vunpack.c.l.b16 %v384
    %v2070 = vunpack.c.h.b16 %v384
    %v2071 = vunpack.c.l.b16 %v385
    %v2072 = vunpack.c.h.b16 %v385
    %v2073 = vunpack.c.l.b16 %v386
    %v2074 = vunpack.c.h.b16 %v386
    %v2075 = vunpack.c.l.b16 %v387
    %v2076 = vunpack.c.h.b16 %v387
    %v2077 = vunpack.c.l.b16 %v388
    %v2078 = vunpack.c.h.b16 %v388
    %v2079 = vunpack.c.l.b16 %v389
    %v2080 = vunpack.c.h.b16 %v389
    %v2081 = vunpack.c.l.b16 %v390
    %v2082 = vunpack.c.h.b16 %v390
    %v2083 = vunpack.c.l.b16 %v391
    %v2084 = vunpack.c.h.b16 %v391
    %v2085 = vunpack.c.l.b16 %v392
    %v2086 = vunpack.c.h.b16 %v392
    %v2087 = vunpack.c.l.b16 %v393
    %v2088 = vunpack.c.h.b16 %v393
    %v2089 = vunpack.c.l.b16 %v394
    %v2090 = vunpack.c.h.b16 %v394
    %v2091 = vunpack.c.l.b16 %v395
    %v2092 = vunpack.c.h.b16 %v395
    %v2093 = vunpack.c.l.b16 %v396
    %v2094 = vunpack.c.h.b16 %v396
    %v2095 = vunpack.c.l.b16 %v397
    %v2096 = vunpack.c.h.b16 %v397
    %v2097 = vunpack.c.l.b16 %v398
    %v2098 = vunpack.c.h.b16 %v398
    %v2099 = vunpack.c.l.b16 %v399
    %v2100 = vunpack.c.h.b16 %v399
    %v2101 = vunpack.c.l.b16 %v400
    %v2102 = vunpack.c.h.b16 %v400
    %v2103 = vunpack.c.l.b16 %v401
    %v2104 = vunpack.c.h.b16 %v401
    %v2105 = vunpack.c.l.b16 %v402
    %v2106 = vunpack.c.h.b16 %v402
    %v2107 = vunpack.c.l.b16 %v403
    %v2108 = vunpack.c.h.b16 %v403
    %v2109 = vunpack.c.l.b16 %v404
    %v2110 = vunpack.c.h.b16 %v404
    %v2111 = vunpack.c.l.b16 %v405
    %v2112 = vunpack.c.h.b16 %v405
    %v2113 = vunpack.c.l.b16 %v406
    %v2114 = vunpack.c.h.b16 %v406
    %v2115 = vunpack.c.l.b16 %v407
    %v2116 = vunpack.c.h.b16 %v407
    %v2117 = vunpack.c.l.b16 %v408
    %v2118 = vunpack.c.h.b16 %v408
    %v2119 = vunpack.c.l.b16 %v409
    %v2120 = vunpack.c.h.b16 %v409
    %v2121 = vunpack.c.l.b16 %v410
    %v2122 = vunpack.c.h.b16 %v410
    %v2123 = vunpack.c.l.b16 %v411
    %v2124 = vunpack.c.h.b16 %v411
    %v2125 = vunpack.c.l.b16 %v412
    %v2126 = vunpack.c.h.b16 %v412
    %v2127 = vunpack.c.l.b16 %v413
    %v2128 = vunpack.c.h.b16 %v413
    %v2129 = vunpack.c.l.b16 %v414
    %v2130 = vunpack.c.h.b16 %v414
    %v2131 = vunpack.c.l.b16 %v415
    %v2132 = vunpack.c.h.b16 %v415
    %v2133 = vunpack.c.l.b16 %v416
    %v2134 = vunpack.c.h.b16 %v416
    %v2135 = vunpack.c.l.b16 %v417
    %v2136 = vunpack.c.h.b16 %v417
    %v2137 = vunpack.c.l.b16 %v418
    %v2138 = vunpack.c.h.b16 %v418
    %v2139 = vunpack.c.l.b16 %v419
    %v2140 = vunpack.c.h.b16 %v419
    %v2141 = vunpack.c.l.b16 %v420
    %v2142 = vunpack.c.h.b16 %v420
    %v2143 = vunpack.c.l.b16 %v421
    %v2144 = vunpack.c.h.b16 %v421
    %v2145 = vunpack.c.l.b16 %v422
    %v2146 = vunpack.c.h.b16 %v422
    %v2147 = vunpack.c.l.b16 %v423
    %v2148 = vunpack.c.h.b16 %v423
    %v2149 = vunpack.c.l.b16 %v424
    %v2150 = vunpack.c.h.b16 %v424
    %v2151 = vunpack.c.l.b16 %v425
    %v2152 = vunpack.c.h.b16 %v425
    %v2153 = vunpack.c.l.b16 %v426
    %v2154 = vunpack.c.h.b16 %v426
    %v2155 = vunpack.c.l.b16 %v427
    %v2156 = vunpack.c.h.b16 %v427
    %v2157 = vunpack.c.l.b16 %v428
    %v2158 = vunpack.c.h.b16 %v428
    %v2159 = vunpack.c.l.b16 %v429
    %v2160 = vunpack.c.h.b16 %v429
    %v2161 = vunpack.c.l.b16 %v430
    %v2162 = vunpack.c.h.b16 %v430
    %v2163 = vunpack.c.l.b16 %v431
    %v2164 = vunpack.c.h.b16 %v431
    %v2165 = vunpack.c.l.b16 %v432
    %v2166 = vunpack.c.h.b16 %v432
    %v2167 = vunpack.c.l.b16 %v433
    %v2168 = vunpack.c.h.b16 %v433
    %v2169 = vunpack.c.l.b16 %v434
    %v2170 = vunpack.c.h.b16 %v434
    %v2171 = vunpack.c.l.b16 %v435
    %v2172 = vunpack.c.h.b16 %v435
    %v2173 = vunpack.c.l.b16 %v436
    %v2174 = vunpack.c.h.b16 %v436
    %v2175 = vunpack.c.l.b16 %v437
    %v2176 = vunpack.c.h.b16 %v437
    %v2177 = vunpack.c.l.b16 %v438
    %v2178 = vunpack.c.h.b16 %v438
    %v2179 = vunpack.c.l.b16 %v439
    %v2180 = vunpack.c.h.b16 %v439
    %v2181 = vunpack.c.l.b16 %v440
    %v2182 = vunpack.c.h.b16 %v440
    %v2183 = vunpack.c.l.b16 %v441
    %v2184 = vunpack.c.h.b16 %v441
    %v2185 = vunpack.c.l.b16 %v442
    %v2186 = vunpack.c.h.b16 %v442
    %v2187 = vunpack.c.l.b16 %v443
    %v2188 = vunpack.c.h.b16 %v443
    %v2189 = vunpack.c.l.b16 %v444
    %v2190 = vunpack.c.h.b16 %v444
    %v2191 = vunpack.c.l.b16 %v445
    %v2192 = vunpack.c.h.b16 %v445
    %v2193 = vunpack.c.l.b16 %v446
    %v2194 = vunpack.c.h.b16 %v446
    %v2195 = vunpack.c.l.b16 %v447
    %v2196 = vunpack.c.h.b16 %v447
    %v2197 = vunpack.c.l.b16 %v448
    %v2198 = vunpack.c.h.b16 %v448
    %v2199 = vunpack.c.l.b16 %v449
    %v2200 = vunpack.c.h.b16 %v449
    %v2201 = vunpack.c.l.b16 %v450
    %v2202 = vunpack.c.h.b16 %v450
    %v2203 = vunpack.c.l.b16 %v451
    %v2204 = vunpack.c.h.b16 %v451
    %v2205 = vunpack.c.l.b16 %v452
    %v2206 = vunpack.c.h.b16 %v452
    %v2207 = vunpack.c.l.b16 %v453
    %v2208 = vunpack.c.h.b16 %v453
    %v2209 = vunpack.c.l.b16 %v454
    %v2210 = vunpack.c.h.b16 %v454
    %v2211 = vunpack.c.l.b16 %v455
    %v2212 = vunpack.c.h.b16 %v455
    %v2213 = vunpack.c.l.b16 %v456
    %v2214 = vunpack.c.h.b16 %v456
    %v2215 = vunpack.c.l.b16 %v457
    %v2216 = vunpack.c.h.b16 %v457
    %v2217 = vunpack.c.l.b16 %v458
    %v2218 = vunpack.c.h.b16 %v458
    %v2219 = vunpack.c.l.b16 %v459
    %v2220 = vunpack.c.h.b16 %v459
    %v2221 = vunpack.c.l.b16 %v460
    %v2222 = vunpack.c.h.b16 %v460
    %v2223 = vunpack.c.l.b16 %v461
    %v2224 = vunpack.c.h.b16 %v461
    %v2225 = vunpack.c.l.b16 %v462
    %v2226 = vunpack.c.h.b16 %v462
    %v2227 = vunpack.c.l.b16 %v463
    %v2228 = vunpack.c.h.b16 %v463
    %v2229 = vunpack.c.l.b16 %v464
    %v2230 = vunpack.c.h.b16 %v464
    %v2231 = vunpack.c.l.b16 %v465
    %v2232 = vunpack.c.h.b16 %v465
    %v2233 = vunpack.c.l.b16 %v466
    %v2234 = vunpack.c.h.b16 %v466
    %v2235 = vunpack.c.l.b16 %v467
    %v2236 = vunpack.c.h.b16 %v467
    %v2237 = vunpack.c.l.b16 %v468
    %v2238 = vunpack.c.h.b16 %v468
    %v2239 = vunpack.c.l.b16 %v469
    %v2240 = vunpack.c.h.b16 %v469
    %v2241 = vunpack.c.l.b16 %v470
    %v2242 = vunpack.c.h.b16 %v470
    %v2243 = vunpack.c.l.b16 %v471
    %v2244 = vunpack.c.h.b16 %v471
    %v2245 = vunpack.c.l.b16 %v472
    %v2246 = vunpack.c.h.b16 %v472
    %v2247 = vunpack.c.l.b16 %v473
    %v2248 = vunpack.c.h.b16 %v473
    %v2249 = vunpack.c.l.b16 %v474
    %v2250 = vunpack.c.h.b16 %v474
    %v2251 = vunpack.c.l.b16 %v475
    %v2252 = vunpack.c.h.b16 %v475
    %v2253 = vunpack.c.l.b16 %v476
    %v2254 = vunpack.c.h.b16 %v476
    %v2255 = vunpack.c.l.b16 %v477
    %v2256 = vunpack.c.h.b16 %v477
    %v2257 = vunpack.c.l.b16 %v478
    %v2258 = vunpack.c.h.b16 %v478
    %v2259 = vunpack.c.l.b16 %v479
    %v2260 = vunpack.c.h.b16 %v479
    %v2261 = vunpack.c.l.b16 %v480
    %v2262 = vunpack.c.h.b16 %v480
    %v2263 = vunpack.c.l.b16 %v481
    %v2264 = vunpack.c.h.b16 %v481
    %v2265 = vunpack.c.l.b16 %v482
    %v2266 = vunpack.c.h.b16 %v482
    %v2267 = vunpack.c.l.b16 %v483
    %v2268 = vunpack.c.h.b16 %v483
    %v2269 = vunpack.c.l.b16 %v484
    %v2270 = vunpack.c.h.b16 %v484
    %v2271 = vunpack.c.l.b16 %v485
    %v2272 = vunpack.c.h.b16 %v485
    %v2273 = vunpack.c.l.b16 %v486
    %v2274 = vunpack.c.h.b16 %v486
    %v2275 = vunpack.c.l.b16 %v487
    %v2276 = vunpack.c.h.b16 %v487
    %v2277 = vunpack.c.l.b16 %v488
    %v2278 = vunpack.c.h.b16 %v488
    %v2279 = vunpack.c.l.b16 %v489
    %v2280 = vunpack.c.h.b16 %v489
    %v2281 = vunpack.c.l.b16 %v490
    %v2282 = vunpack.c.h.b16 %v490
    %v2283 = vunpack.c.l.b16 %v491
    %v2284 = vunpack.c.h.b16 %v491
    %v2285 = vunpack.c.l.b16 %v492
    %v2286 = vunpack.c.h.b16 %v492
    %v2287 = vunpack.c.l.b16 %v493
    %v2288 = vunpack.c.h.b16 %v493
    %v2289 = vunpack.c.l.b16 %v494
    %v2290 = vunpack.c.h.b16 %v494
    %v2291 = vunpack.c.l.b16 %v495
    %v2292 = vunpack.c.h.b16 %v495
    %v2293 = vunpack.c.l.b16 %v496
    %v2294 = vunpack.c.h.b16 %v496
    %v2295 = vunpack.c.l.b16 %v497
    %v2296 = vunpack.c.h.b16 %v497
    %v2297 = vunpack.c.l.b16 %v498
    %v2298 = vunpack.c.h.b16 %v498
    %v2299 = vunpack.c.l.b16 %v499
    %v2300 = vunpack.c.h.b16 %v499
    %v2301 = vunpack.c.l.b16 %v500
    %v2302 = vunpack.c.h.b16 %v500
    %v2303 = vunpack.c.l.b16 %v501
    %v2304 = vunpack.c.h.b16 %v501
    %v2305 = vunpack.c.l.b16 %v502
    %v2306 = vunpack.c.h.b16 %v502
    %v2307 = vunpack.c.l.b16 %v503
    %v2308 = vunpack.c.h.b16 %v503
    %v2309 = vunpack.c.l.b16 %v504
    %v2310 = vunpack.c.h.b16 %v504
    %v2311 = vunpack.c.l.b16 %v505
    %v2312 = vunpack.c.h.b16 %v505
    %v2313 = vunpack.c.l.b16 %v506
    %v2314 = vunpack.c.h.b16 %v506
    %v2315 = vunpack.c.l.b16 %v507
    %v2316 = vunpack.c.h.b16 %v507
    %v2317 = vunpack.c.l.b16 %v508
    %v2318 = vunpack.c.h.b16 %v508
    %v2319 = vunpack.c.l.b16 %v509
    %v2320 = vunpack.c.h.b16 %v509
    %v2321 = vunpack.c.l.b16 %v510
    %v2322 = vunpack.c.h.b16 %v510
    %v2323 = vunpack.c.l.b16 %v511
    %v2324 = vunpack.c.h.b16 %v511
    %v2325 = vunpack.c.l.b16 %v512
    %v2326 = vunpack.c.h.b16 %v512
    %v2327 = vunpack.c.l.b16 %v513
    %v2328 = vunpack.c.h.b16 %v513
    %v2329 = vunpack.c.l.b16 %v514
    %v2330 = vunpack.c.h.b16 %v514
    %v2331 = vunpack.c.l.b16 %v515
    %v2332 = vunpack.c.h.b16 %v515
    %v2333 = vunpack.c.l.b16 %v516
    %v2334 = vunpack.c.h.b16 %v516
    %v2335 = vunpack.c.l.b16 %v517
    %v2336 = vunpack.c.h.b16 %v517
    %v2337 = vunpack.c.l.b16 %v518
    %v2338 = vunpack.c.h.b16 %v518
    %v2339 = vunpack.c.l.b16 %v519
    %v2340 = vunpack.c.h.b16 %v519
    %v2341 = vunpack.c.l.b16 %v520
    %v2342 = vunpack.c.h.b16 %v520
    %v2343 = vunpack.c.l.b16 %v521
    %v2344 = vunpack.c.h.b16 %v521
    %v2345 = vunpack.c.l.b16 %v522
    %v2346 = vunpack.c.h.b16 %v522
    %v2347 = vunpack.c.l.b16 %v523
    %v2348 = vunpack.c.h.b16 %v523
    %v2349 = vunpack.c.l.b16 %v524
    %v2350 = vunpack.c.h.b16 %v524
    %v2351 = vunpack.c.l.b16 %v525
    %v2352 = vunpack.c.h.b16 %v525
    %v2353 = vunpack.c.l.b16 %v526
    %v2354 = vunpack.c.h.b16 %v526
    %v2355 = vunpack.c.l.b16 %v527
    %v2356 = vunpack.c.h.b16 %v527
    %v2357 = vunpack.c.l.b16 %v528
    %v2358 = vunpack.c.h.b16 %v528
    %v2359 = vunpack.c.l.b16 %v529
    %v2360 = vunpack.c.h.b16 %v529
    %v2361 = vunpack.c.l.b16 %v530
    %v2362 = vunpack.c.h.b16 %v530
    %v2363 = vunpack.c.l.b16 %v531
    %v2364 = vunpack.c.h.b16 %v531
    %v2365 = vunpack.c.l.b16 %v532
    %v2366 = vunpack.c.h.b16 %v532
    %v2367 = vunpack.c.l.b16 %v533
    %v2368 = vunpack.c.h.b16 %v533
    %v2369 = vunpack.c.l.b16 %v534
    %v2370 = vunpack.c.h.b16 %v534
    %v2371 = vunpack.c.l.b16 %v535
    %v2372 = vunpack.c.h.b16 %v535
    %v2373 = vunpack.c.l.b16 %v536
    %v2374 = vunpack.c.h.b16 %v536
    %v2375 = vunpack.c.l.b16 %v537
    %v2376 = vunpack.c.h.b16 %v537
    %v2377 = vunpack.c.l.b16 %v538
    %v2378 = vunpack.c.h.b16 %v538
    %v2379 = vunpack.c.l.b16 %v539
    %v2380 = vunpack.c.h.b16 %v539
    %v2381 = vunpack.c.l.b16 %v540
    %v2382 = vunpack.c.h.b16 %v540
    %v2383 = vunpack.c.l.b16 %v541
    %v2384 = vunpack.c.h.b16 %v541
    %v2385 = vunpack.c.l.b16 %v542
    %v2386 = vunpack.c.h.b16 %v542
    %v2387 = vunpack.c.l.b16 %v543
    %v2388 = vunpack.c.h.b16 %v543
    %v2389 = vunpack.c.l.b16 %v544
    %v2390 = vunpack.c.h.b16 %v544
    %v2391 = vunpack.c.l.b16 %v545
    %v2392 = vunpack.c.h.b16 %v545
    %v2393 = vunpack.c.l.b16 %v546
    %v2394 = vunpack.c.h.b16 %v546
    %v2395 = vunpack.c.l.b16 %v547
    %v2396 = vunpack.c.h.b16 %v547
    %v2397 = vunpack.c.l.b16 %v548
    %v2398 = vunpack.c.h.b16 %v548
    %v2399 = vunpack.c.l.b16 %v549
    %v2400 = vunpack.c.h.b16 %v549
    %v2401 = vunpack.c.l.b16 %v550
    %v2402 = vunpack.c.h.b16 %v550
    %v2403 = vunpack.c.l.b16 %v551
    %v2404 = vunpack.c.h.b16 %v551
    %v2405 = vunpack.c.l.b16 %v552
    %v2406 = vunpack.c.h.b16 %v552
    %v2407 = vunpack.c.l.b16 %v553
    %v2408 = vunpack.c.h.b16 %v553
    %v2409 = vunpack.c.l.b16 %v554
    %v2410 = vunpack.c.h.b16 %v554
    %v2411 = vunpack.c.l.b16 %v555
    %v2412 = vunpack.c.h.b16 %v555
    %v2413 = vunpack.c.l.b16 %v556
    %v2414 = vunpack.c.h.b16 %v556
    %v2415 = vunpack.c.l.b16 %v557
    %v2416 = vunpack.c.h.b16 %v557
    %v2417 = vunpack.c.l.b16 %v558
    %v2418 = vunpack.c.h.b16 %v558
    %v2419 = vunpack.c.l.b16 %v559
    %v2420 = vunpack.c.h.b16 %v559
    %v2421 = vunpack.c.l.b16 %v560
    %v2422 = vunpack.c.h.b16 %v560
    %v2423 = vunpack.c.l.b16 %v561
    %v2424 = vunpack.c.h.b16 %v561
    %v2425 = vunpack.c.l.b16 %v562
    %v2426 = vunpack.c.h.b16 %v562
    %v2427 = vunpack.c.l.b16 %v563
    %v2428 = vunpack.c.h.b16 %v563
    %v2429 = vunpack.c.l.b16 %v564
    %v2430 = vunpack.c.h.b16 %v564
    %v2431 = vunpack.c.l.b16 %v565
    %v2432 = vunpack.c.h.b16 %v565
    %v2433 = vunpack.c.l.b16 %v566
    %v2434 = vunpack.c.h.b16 %v566
    %v2435 = vunpack.c.l.b16 %v567
    %v2436 = vunpack.c.h.b16 %v567
    %v2437 = vunpack.c.l.b16 %v568
    %v2438 = vunpack.c.h.b16 %v568
    %v2439 = vunpack.c.l.b16 %v569
    %v2440 = vunpack.c.h.b16 %v569
    %v2441 = vunpack.c.l.b16 %v570
    %v2442 = vunpack.c.h.b16 %v570
    %v2443 = vunpack.c.l.b16 %v571
    %v2444 = vunpack.c.h.b16 %v571
    %v2445 = vunpack.c.l.b16 %v572
    %v2446 = vunpack.c.h.b16 %v572
    %v2447 = vunpack.c.l.b16 %v573
    %v2448 = vunpack.c.h.b16 %v573
    %v2449 = vunpack.c.l.b16 %v574
    %v2450 = vunpack.c.h.b16 %v574
    %v2451 = vunpack.c.l.b16 %v575
    %v2452 = vunpack.c.h.b16 %v575
    %v2453 = vunpack.c.l.b16 %v576
    %v2454 = vunpack.c.h.b16 %v576
    %v2455 = vunpack.c.l.b16 %v577
    %v2456 = vunpack.c.h.b16 %v577
    %v2457 = vunpack.c.l.b16 %v578
    %v2458 = vunpack.c.h.b16 %v578
    %v2459 = vunpack.c.l.b16 %v579
    %v2460 = vunpack.c.h.b16 %v579
    %v2461 = vunpack.c.l.b16 %v580
    %v2462 = vunpack.c.h.b16 %v580
    %v2463 = vunpack.c.l.b16 %v581
    %v2464 = vunpack.c.h.b16 %v581
    %v2465 = vunpack.c.l.b16 %v582
    %v2466 = vunpack.c.h.b16 %v582
    %v2467 = vunpack.c.l.b16 %v583
    %v2468 = vunpack.c.h.b16 %v583
    %v2469 = vunpack.c.l.b16 %v584
    %v2470 = vunpack.c.h.b16 %v584
    %v2471 = vunpack.c.l.b16 %v585
    %v2472 = vunpack.c.h.b16 %v585
    %v2473 = vunpack.c.l.b16 %v586
    %v2474 = vunpack.c.h.b16 %v586
    %v2475 = vunpack.c.l.b16 %v587
    %v2476 = vunpack.c.h.b16 %v587
    %v2477 = vunpack.c.l.b16 %v588
    %v2478 = vunpack.c.h.b16 %v588
    %v2479 = vunpack.c.l.b16 %v589
    %v2480 = vunpack.c.h.b16 %v589
    %v2481 = vunpack.c.l.b16 %v590
    %v2482 = vunpack.c.h.b16 %v590
    %v2483 = vunpack.c.l.b16 %v591
    %v2484 = vunpack.c.h.b16 %v591
    %v2485 = vunpack.c.l.b16 %v592
    %v2486 = vunpack.c.h.b16 %v592
    %v2487 = vunpack.c.l.b16 %v593
    %v2488 = vunpack.c.h.b16 %v593
    %v2489 = vunpack.c.l.b16 %v594
    %v2490 = vunpack.c.h.b16 %v594
    %v2491 = vunpack.c.l.b16 %v595
    %v2492 = vunpack.c.h.b16 %v595
    %v2493 = vunpack.c.l.b16 %v596
    %v2494 = vunpack.c.h.b16 %v596
    %v2495 = vunpack.c.l.b16 %v597
    %v2496 = vunpack.c.h.b16 %v597
    %v2497 = vunpack.c.l.b16 %v598
    %v2498 = vunpack.c.h.b16 %v598
    %v2499 = vunpack.c.l.b16 %v599
    %v2500 = vunpack.c.h.b16 %v599
    %v2501 = vunpack.c.l.b16 %v600
    %v2502 = vunpack.c.h.b16 %v600
    %v2503 = vunpack.c.l.b16 %v601
    %v2504 = vunpack.c.h.b16 %v601
    %v2505 = vunpack.c.l.b16 %v602
    %v2506 = vunpack.c.h.b16 %v602
    %v2507 = vunpack.c.l.b16 %v603
    %v2508 = vunpack.c.h.b16 %v603
    %v2509 = vunpack.c.l.b16 %v604
    %v2510 = vunpack.c.h.b16 %v604
    %v2511 = vunpack.c.l.b16 %v605
    %v2512 = vunpack.c.h.b16 %v605
    %v2513 = vunpack.c.l.b16 %v606
    %v2514 = vunpack.c.h.b16 %v606
    %v2515 = vunpack.c.l.b16 %v607
    %v2516 = vunpack.c.h.b16 %v607
    %v2517 = vunpack.c.l.b16 %v608
    %v2518 = vunpack.c.h.b16 %v608
    %v2519 = vunpack.c.l.b16 %v609
    %v2520 = vunpack.c.h.b16 %v609
    %v2521 = vunpack.c.l.b16 %v610
    %v2522 = vunpack.c.h.b16 %v610
    %v2523 = vunpack.c.l.b16 %v611
    %v2524 = vunpack.c.h.b16 %v611
    %v2525 = vunpack.c.l.b16 %v612
    %v2526 = vunpack.c.h.b16 %v612
    %v2527 = vunpack.c.l.b16 %v613
    %v2528 = vunpack.c.h.b16 %v613
    %v2529 = vunpack.c.l.b16 %v614
    %v2530 = vunpack.c.h.b16 %v614
    %v2531 = vunpack.c.l.b16 %v615
    %v2532 = vunpack.c.h.b16 %v615
    %v2533 = vunpack.c.l.b16 %v616
    %v2534 = vunpack.c.h.b16 %v616
    %v2535 = vunpack.c.l.b16 %v617
    %v2536 = vunpack.c.h.b16 %v617
    %v2537 = vunpack.c.l.b16 %v618
    %v2538 = vunpack.c.h.b16 %v618
    %v2539 = vunpack.c.l.b16 %v619
    %v2540 = vunpack.c.h.b16 %v619
    %v2541 = vunpack.c.l.b16 %v620
    %v2542 = vunpack.c.h.b16 %v620
    %v2543 = vunpack.c.l.b16 %v621
    %v2544 = vunpack.c.h.b16 %v621
    %v2545 = vunpack.c.l.b16 %v622
    %v2546 = vunpack.c.h.b16 %v622
    %v2547 = vunpack.c.l.b16 %v623
    %v2548 = vunpack.c.h.b16 %v623
    %v2549 = vunpack.c.l.b16 %v624
    %v2550 = vunpack.c.h.b16 %v624
    %v2551 = vunpack.c.l.b16 %v625
    %v2552 = vunpack.c.h.b16 %v625
    %v2553 = vunpack.c.l.b16 %v626
    %v2554 = vunpack.c.h.b16 %v626
    %v2555 = vunpack.c.l.b16 %v627
    %v2556 = vunpack.c.h.b16 %v627
    %v2557 = vunpack.c.l.b16 %v628
    %v2558 = vunpack.c.h.b16 %v628
    %v2559 = vunpack.c.l.b16 %v629
    %v2560 = vunpack.c.h.b16 %v629
    %v2561 = vunpack.c.l.b16 %v630
    %v2562 = vunpack.c.h.b16 %v630
    %v2563 = vunpack.c.l.b16 %v631
    %v2564 = vunpack.c.h.b16 %v631
    %v2565 = vunpack.c.l.b16 %v632
    %v2566 = vunpack.c.h.b16 %v632
    %v2567 = vunpack.c.l.b16 %v633
    %v2568 = vunpack.c.h.b16 %v633
    %v2569 = vunpack.c.l.b16 %v634
    %v2570 = vunpack.c.h.b16 %v634
    %v2571 = vunpack.c.l.b16 %v635
    %v2572 = vunpack.c.h.b16 %v635
    %v2573 = vunpack.c.l.b16 %v636
    %v2574 = vunpack.c.h.b16 %v636
    %v2575 = vunpack.c.l.b16 %v637
    %v2576 = vunpack.c.h.b16 %v637
    %v2577 = vunpack.c.l.b16 %v638
    %v2578 = vunpack.c.h.b16 %v638
    %v2579 = vunpack.c.l.b16 %v639
    %v2580 = vunpack.c.h.b16 %v639
    %v2581 = vunpack.c.l.b16 %v640
    %v2582 = vunpack.c.h.b16 %v640
    %v2583 = vunpack.c.l.b16 %v641
    %v2584 = vunpack.c.h.b16 %v641
    %v2585 = vunpack.c.l.b16 %v642
    %v2586 = vunpack.c.h.b16 %v642
    %v2587 = vunpack.c.l.b16 %v643
    %v2588 = vunpack.c.h.b16 %v643
    %v2589 = vunpack.c.l.b16 %v644
    %v2590 = vunpack.c.h.b16 %v644
    %v2591 = vunpack.c.l.b16 %v645
    %v2592 = vunpack.c.h.b16 %v645
    %v2593 = vunpack.c.l.b16 %v646
    %v2594 = vunpack.c.h.b16 %v646
    %v2595 = vunpack.c.l.b16 %v647
    %v2596 = vunpack.c.h.b16 %v647
    %v2597 = vunpack.c.l.b16 %v648
    %v2598 = vunpack.c.h.b16 %v648
    %v2599 = vunpack.c.l.b16 %v649
    %v2600 = vunpack.c.h.b16 %v649
    %v2601 = vunpack.c.l.b16 %v650
    %v2602 = vunpack.c.h.b16 %v650
    %v2603 = vunpack.c.l.b16 %v651
    %v2604 = vunpack.c.h.b16 %v651
    %v2605 = vunpack.c.l.b16 %v652
    %v2606 = vunpack.c.h.b16 %v652
    %v2607 = vunpack.c.l.b16 %v653
    %v2608 = vunpack.c.h.b16 %v653
    %v2609 = vunpack.c.l.b16 %v654
    %v2610 = vunpack.c.h.b16 %v654
    %v2611 = vunpack.c.l.b16 %v655
    %v2612 = vunpack.c.h.b16 %v655
    %v2613 = vunpack.c.l.b16 %v656
    %v2614 = vunpack.c.h.b16 %v656
    %v2615 = vunpack.c.l.b16 %v657
    %v2616 = vunpack.c.h.b16 %v657
    %v2617 = vunpack.c.l.b16 %v658
    %v2618 = vunpack.c.h.b16 %v658
    %v2619 = vunpack.c.l.b16 %v659
    %v2620 = vunpack.c.h.b16 %v659
    %v2621 = vunpack.c.l.b16 %v660
    %v2622 = vunpack.c.h.b16 %v660
    %v2623 = vunpack.c.l.b16 %v661
    %v2624 = vunpack.c.h.b16 %v661
    %v2625 = vunpack.c.l.b16 %v662
    %v2626 = vunpack.c.h.b16 %v662
    %v2627 = vunpack.c.l.b16 %v663
    %v2628 = vunpack.c.h.b16 %v663
    %v2629 = vunpack.c.l.b16 %v664
    %v2630 = vunpack.c.h.b16 %v664
    %v2631 = vunpack.c.l.b16 %v665
    %v2632 = vunpack.c.h.b16 %v665
    %v2633 = vunpack.c.l.b16 %v666
    %v2634 = vunpack.c.h.b16 %v666
    %v2635 = vunpack.c.l.b16 %v667
    %v2636 = vunpack.c.h.b16 %v667
    %v2637 = vunpack.c.l.b16 %v668
    %v2638 = vunpack.c.h.b16 %v668
    %v2639 = vunpack.c.l.b16 %v669
    %v2640 = vunpack.c.h.b16 %v669
    %v2641 = vunpack.c.l.b16 %v670
    %v2642 = vunpack.c.h.b16 %v670
    %v2643 = vunpack.c.l.b16 %v671
    %v2644 = vunpack.c.h.b16 %v671
    %v2645 = vunpack.c.l.b16 %v672
    %v2646 = vunpack.c.h.b16 %v672
    %v2647 = vunpack.c.l.b16 %v673
    %v2648 = vunpack.c.h.b16 %v673
    %v2649 = vunpack.c.l.b16 %v674
    %v2650 = vunpack.c.h.b16 %v674
    %v2651 = vunpack.c.l.b16 %v675
    %v2652 = vunpack.c.h.b16 %v675
    %v2653 = vunpack.c.l.b16 %v676
    %v2654 = vunpack.c.h.b16 %v676
    %v2655 = vunpack.c.l.b16 %v677
    %v2656 = vunpack.c.h.b16 %v677
    %v2657 = vunpack.c.l.b16 %v678
    %v2658 = vunpack.c.h.b16 %v678
    %v2659 = vunpack.c.l.b16 %v679
    %v2660 = vunpack.c.h.b16 %v679
    %v2661 = vunpack.c.l.b16 %v680
    %v2662 = vunpack.c.h.b16 %v680
    %v2663 = vunpack.c.l.b16 %v681
    %v2664 = vunpack.c.h.b16 %v681
    %v2665 = vunpack.c.l.b16 %v682
    %v2666 = vunpack.c.h.b16 %v682
    %v2667 = vunpack.c.l.b16 %v683
    %v2668 = vunpack.c.h.b16 %v683
    %v2669 = vunpack.c.l.b16 %v684
    %v2670 = vunpack.c.h.b16 %v684
    %v2671 = vpack.c.b16 %v1393, %v1375
    %v2672 = vpack.c.b16 %v1394, %v1376
    %v2673 = vpack.c.b16 %v1395, %v1377
    %v2674 = vpack.c.b16 %v1396, %v1378
    %v2675 = vpack.c.b16 %v1397, %v1379
    %v2676 = vpack.c.b16 %v1398, %v1380
    %v2677 = vpack.c.b16 %v1399, %v1381
    %v2678 = vpack.c.b16 %v1400, %v1382
    %v2679 = vpack.c.b16 %v1401, %v1383
    %v2680 = vpack.c.b16 %v1402, %v1384
    %v2681 = vpack.c.b16 %v1403, %v1385
    %v2682 = vpack.c.b16 %v1404, %v1386
    %v2683 = vpack.c.b16 %v1405, %v1387
    %v2684 = vpack.c.b16 %v1406, %v1388
    %v2685 = vpack.c.b16 %v1407, %v1389
    %v2686 = vpack.c.b16 %v1408, %v1390
    %v2687 = vpack.c.b16 %v1409, %v1391
    %v2688 = vpack.c.b16 %v1410, %v1392
    %v2689 = vpack.c.b16 %v1429, %v1411
    %v2690 = vpack.c.b16 %v1430, %v1412
    %v2691 = vpack.c.b16 %v1431, %v1413
    %v2692 = vpack.c.b16 %v1432, %v1414
    %v2693 = vpack.c.b16 %v1433, %v1415
    %v2694 = vpack.c.b16 %v1434, %v1416
    %v2695 = vpack.c.b16 %v1435, %v1417
    %v2696 = vpack.c.b16 %v1436, %v1418
    %v2697 = vpack.c.b16 %v1437, %v1419
    %v2698 = vpack.c.b16 %v1438, %v1420
    %v2699 = vpack.c.b16 %v1439, %v1421
    %v2700 = vpack.c.b16 %v1440, %v1422
    %v2701 = vpack.c.b16 %v1441, %v1423
    %v2702 = vpack.c.b16 %v1442, %v1424
    %v2703 = vpack.c.b16 %v1443, %v1425
    %v2704 = vpack.c.b16 %v1444, %v1426
    %v2705 = vpack.c.b16 %v1445, %v1427
    %v2706 = vpack.c.b16 %v1446, %v1428
    %v2707 = vpack.c.b16 %v1465, %v1447
    %v2708 = vpack.c.b16 %v1466, %v1448
    %v2709 = vpack.c.b16 %v1467, %v1449
    %v2710 = vpack.c.b16 %v1468, %v1450
    %v2711 = vpack.c.b16 %v1469, %v1451
    %v2712 = vpack.c.b16 %v1470, %v1452
    %v2713 = vpack.c.b16 %v1471, %v1453
    %v2714 = vpack.c.b16 %v1472, %v1454
    %v2715 = vpack.c.b16 %v1473, %v1455
    %v2716 = vpack.c.b16 %v1474, %v1456
    %v2717 = vpack.c.b16 %v1475, %v1457
    %v2718 = vpack.c.b16 %v1476, %v1458
    %v2719 = vpack.c.b16 %v1477, %v1459
    %v2720 = vpack.c.b16 %v1478, %v1460
    %v2721 = vpack.c.b16 %v1479, %v1461
    %v2722 = vpack.c.b16 %v1480, %v1462
    %v2723 = vpack.c.b16 %v1481, %v1463
    %v2724 = vpack.c.b16 %v1482, %v1464
    %v2725 = vpack.c.b16 %v1501, %v1483
    %v2726 = vpack.c.b16 %v1502, %v1484
    %v2727 = vpack.c.b16 %v1503, %v1485
    %v2728 = vpack.c.b16 %v1504, %v1486
    %v2729 = vpack.c.b16 %v1505, %v1487
    %v2730 = vpack.c.b16 %v1506, %v1488
    %v2731 = vpack.c.b16 %v1507, %v1489
    %v2732 = vpack.c.b16 %v1508, %v1490
    %v2733 = vpack.c.b16 %v1509, %v1491
    %v2734 = vpack.c.b16 %v1510, %v1492
    %v2735 = vpack.c.b16 %v1511, %v1493
    %v2736 = vpack.c.b16 %v1512, %v1494
    %v2737 = vpack.c.b16 %v1513, %v1495
    %v2738 = vpack.c.b16 %v1514, %v1496
    %v2739 = vpack.c.b16 %v1515, %v1497
    %v2740 = vpack.c.b16 %v1516, %v1498
    %v2741 = vpack.c.b16 %v1517, %v1499
    %v2742 = vpack.c.b16 %v1518, %v1500
    %v2743 = vpack.c.b16 %v1537, %v1519
    %v2744 = vpack.c.b16 %v1538, %v1520
    %v2745 = vpack.c.b16 %v1539, %v1521
    %v2746 = vpack.c.b16 %v1540, %v1522
    %v2747 = vpack.c.b16 %v1541, %v1523
    %v2748 = vpack.c.b16 %v1542, %v1524
    %v2749 = vpack.c.b16 %v1543, %v1525
    %v2750 = vpack.c.b16 %v1544, %v1526
    %v2751 = vpack.c.b16 %v1545, %v1527
    %v2752 = vpack.c.b16 %v1546, %v1528
    %v2753 = vpack.c.b16 %v1547, %v1529
    %v2754 = vpack.c.b16 %v1548, %v1530
    %v2755 = vpack.c.b16 %v1549, %v1531
    %v2756 = vpack.c.b16 %v1550, %v1532
    %v2757 = vpack.c.b16 %v1551, %v1533
    %v2758 = vpack.c.b16 %v1552, %v1534
    %v2759 = vpack.c.b16 %v1553, %v1535
    %v2760 = vpack.c.b16 %v1554, %v1536
    %v2761 = vpack.c.b16 %v1573, %v1555
    %v2762 = vpack.c.b16 %v1574, %v1556
    %v2763 = vpack.c.b16 %v1575, %v1557
    %v2764 = vpack.c.b16 %v1576, %v1558
    %v2765 = vpack.c.b16 %v1577, %v1559
    %v2766 = vpack.c.b16 %v1578, %v1560
    %v2767 = vpack.c.b16 %v1579, %v1561
    %v2768 = vpack.c.b16 %v1580, %v1562
    %v2769 = vpack.c.b16 %v1581, %v1563
    %v2770 = vpack.c.b16 %v1582, %v1564
    %v2771 = vpack.c.b16 %v1583, %v1565
    %v2772 = vpack.c.b16 %v1584, %v1566
    %v2773 = vpack.c.b16 %v1585, %v1567
    %v2774 = vpack.c.b16 %v1586, %v1568
    %v2775 = vpack.c.b16 %v1587, %v1569
    %v2776 = vpack.c.b16 %v1588, %v1570
    %v2777 = vpack.c.b16 %v1589, %v1571
    %v2778 = vpack.c.b16 %v1590, %v1572
    %v2779 = vpack.c.b16 %v1609, %v1591
    %v2780 = vpack.c.b16 %v1610, %v1592
    %v2781 = vpack.c.b16 %v1611, %v1593
    %v2782 = vpack.c.b16 %v1612, %v1594
    %v2783 = vpack.c.b16 %v1613, %v1595
    %v2784 = vpack.c.b16 %v1614, %v1596
    %v2785 = vpack.c.b16 %v1615, %v1597
    %v2786 = vpack.c.b16 %v1616, %v1598
    %v2787 = vpack.c.b16 %v1617, %v1599
    %v2788 = vpack.c.b16 %v1618, %v1600
    %v2789 = vpack.c.b16 %v1619, %v1601
    %v2790 = vpack.c.b16 %v1620, %v1602
    %v2791 = vpack.c.b16 %v1621, %v1603
    %v2792 = vpack.c.b16 %v1622, %v1604
    %v2793 = vpack.c.b16 %v1623, %v1605
    %v2794 = vpack.c.b16 %v1624, %v1606
    %v2795 = vpack.c.b16 %v1625, %v1607
    %v2796 = vpack.c.b16 %v1626, %v1608
    %v2797 = vpack.c.b16 %v1645, %v1627
    %v2798 = vpack.c.b16 %v1646, %v1628
    %v2799 = vpack.c.b16 %v1647, %v1629
    %v2800 = vpack.c.b16 %v1648, %v1630
    %v2801 = vpack.c.b16 %v1649, %v1631
    %v2802 = vpack.c.b16 %v1650, %v1632
    %v2803 = vpack.c.b16 %v1651, %v1633
    %v2804 = vpack.c.b16 %v1652, %v1634
    %v2805 = vpack.c.b16 %v1653, %v1635
    %v2806 = vpack.c.b16 %v1654, %v1636
    %v2807 = vpack.c.b16 %v1655, %v1637
    %v2808 = vpack.c.b16 %v1656, %v1638
    %v2809 = vpack.c.b16 %v1657, %v1639
    %v2810 = vpack.c.b16 %v1658, %v1640
    %v2811 = vpack.c.b16 %v1659, %v1641
    %v2812 = vpack.c.b16 %v1660, %v1642
    %v2813 = vpack.c.b16 %v1661, %v1643
    %v2814 = vpack.c.b16 %v1662, %v1644
    %v2815 = vpack.c.b16 %v1681, %v1663
    %v2816 = vpack.c.b16 %v1682, %v1664
    %v2817 = vpack.c.b16 %v1683, %v1665
    %v2818 = vpack.c.b16 %v1684, %v1666
    %v2819 = vpack.c.b16 %v1685, %v1667
    %v2820 = vpack.c.b16 %v1686, %v1668
    %v2821 = vpack.c.b16 %v1687, %v1669
    %v2822 = vpack.c.b16 %v1688, %v1670
    %v2823 = vpack.c.b16 %v1689, %v1671
    %v2824 = vpack.c.b16 %v1690, %v1672
    %v2825 = vpack.c.b16 %v1691, %v1673
    %v2826 = vpack.c.b16 %v1692, %v1674
    %v2827 = vpack.c.b16 %v1693, %v1675
    %v2828 = vpack.c.b16 %v1694, %v1676
    %v2829 = vpack.c.b16 %v1695, %v1677
    %v2830 = vpack.c.b16 %v1696, %v1678
    %v2831 = vpack.c.b16 %v1697, %v1679
    %v2832 = vpack.c.b16 %v1698, %v1680
    %v2833 = vpack.c.b16 %v1717, %v1699
    %v2834 = vpack.c.b16 %v1718, %v1700
    %v2835 = vpack.c.b16 %v1719, %v1701
    %v2836 = vpack.c.b16 %v1720, %v1702
    %v2837 = vpack.c.b16 %v1721, %v1703
    %v2838 = vpack.c.b16 %v1722, %v1704
    %v2839 = vpack.c.b16 %v1723, %v1705
    %v2840 = vpack.c.b16 %v1724, %v1706
    %v2841 = vpack.c.b16 %v1725, %v1707
    %v2842 = vpack.c.b16 %v1726, %v1708
    %v2843 = vpack.c.b16 %v1727, %v1709
    %v2844 = vpack.c.b16 %v1728, %v1710
    %v2845 = vpack.c.b16 %v1729, %v1711
    %v2846 = vpack.c.b16 %v1730, %v1712
    %v2847 = vpack.c.b16 %v1731, %v1713
    %v2848 = vpack.c.b16 %v1732, %v1714
    %v2849 = vpack.c.b16 %v1733, %v1715
    %v2850 = vpack.c.b16 %v1734, %v1716
    %v2851 = vpack.c.b16 %v1753, %v1735
    %v2852 = vpack.c.b16 %v1754, %v1736
    %v2853 = vpack.c.b16 %v1755, %v1737
    %v2854 = vpack.c.b16 %v1756, %v1738
    %v2855 = vpack.c.b16 %v1757, %v1739
    %v2856 = vpack.c.b16 %v1758, %v1740
    %v2857 = vpack.c.b16 %v1759, %v1741
    %v2858 = vpack.c.b16 %v1760, %v1742
    %v2859 = vpack.c.b16 %v1761, %v1743
    %v2860 = vpack.c.b16 %v1762, %v1744
    %v2861 = vpack.c.b16 %v1763, %v1745
    %v2862 = vpack.c.b16 %v1764, %v1746
    %v2863 = vpack.c.b16 %v1765, %v1747
    %v2864 = vpack.c.b16 %v1766, %v1748
    %v2865 = vpack.c.b16 %v1767, %v1749
    %v2866 = vpack.c.b16 %v1768, %v1750
    %v2867 = vpack.c.b16 %v1769, %v1751
    %v2868 = vpack.c.b16 %v1770, %v1752
    %v2869 = vpack.c.b16 %v1789, %v1771
    %v2870 = vpack.c.b16 %v1790, %v1772
    %v2871 = vpack.c.b16 %v1791, %v1773
    %v2872 = vpack.c.b16 %v1792, %v1774
    %v2873 = vpack.c.b16 %v1793, %v1775
    %v2874 = vpack.c.b16 %v1794, %v1776
    %v2875 = vpack.c.b16 %v1795, %v1777
    %v2876 = vpack.c.b16 %v1796, %v1778
    %v2877 = vpack.c.b16 %v1797, %v1779
    %v2878 = vpack.c.b16 %v1798, %v1780
    %v2879 = vpack.c.b16 %v1799, %v1781
    %v2880 = vpack.c.b16 %v1800, %v1782
    %v2881 = vpack.c.b16 %v1801, %v1783
    %v2882 = vpack.c.b16 %v1802, %v1784
    %v2883 = vpack.c.b16 %v1803, %v1785
    %v2884 = vpack.c.b16 %v1804, %v1786
    %v2885 = vpack.c.b16 %v1805, %v1787
    %v2886 = vpack.c.b16 %v1806, %v1788
    %v2887 = vpack.c.b16 %v1825, %v1807
    %v2888 = vpack.c.b16 %v1826, %v1808
    %v2889 = vpack.c.b16 %v1827, %v1809
    %v2890 = vpack.c.b16 %v1828, %v1810
    %v2891 = vpack.c.b16 %v1829, %v1811
    %v2892 = vpack.c.b16 %v1830, %v1812
    %v2893 = vpack.c.b16 %v1831, %v1813
    %v2894 = vpack.c.b16 %v1832, %v1814
    %v2895 = vpack.c.b16 %v1833, %v1815
    %v2896 = vpack.c.b16 %v1834, %v1816
    %v2897 = vpack.c.b16 %v1835, %v1817
    %v2898 = vpack.c.b16 %v1836, %v1818
    %v2899 = vpack.c.b16 %v1837, %v1819
    %v2900 = vpack.c.b16 %v1838, %v1820
    %v2901 = vpack.c.b16 %v1839, %v1821
    %v2902 = vpack.c.b16 %v1840, %v1822
    %v2903 = vpack.c.b16 %v1841, %v1823
    %v2904 = vpack.c.b16 %v1842, %v1824
    %v2905 = vpack.c.b16 %v1861, %v1843
    %v2906 = vpack.c.b16 %v1862, %v1844
    %v2907 = vpack.c.b16 %v1863, %v1845
    %v2908 = vpack.c.b16 %v1864, %v1846
    %v2909 = vpack.c.b16 %v1865, %v1847
    %v2910 = vpack.c.b16 %v1866, %v1848
    %v2911 = vpack.c.b16 %v1867, %v1849
    %v2912 = vpack.c.b16 %v1868, %v1850
    %v2913 = vpack.c.b16 %v1869, %v1851
    %v2914 = vpack.c.b16 %v1870, %v1852
    %v2915 = vpack.c.b16 %v1871, %v1853
    %v2916 = vpack.c.b16 %v1872, %v1854
    %v2917 = vpack.c.b16 %v1873, %v1855
    %v2918 = vpack.c.b16 %v1874, %v1856
    %v2919 = vpack.c.b16 %v1875, %v1857
    %v2920 = vpack.c.b16 %v1876, %v1858
    %v2921 = vpack.c.b16 %v1877, %v1859
    %v2922 = vpack.c.b16 %v1878, %v1860
    %v2923 = vpack.c.b16 %v1897, %v1879
    %v2924 = vpack.c.b16 %v1898, %v1880
    %v2925 = vpack.c.b16 %v1899, %v1881
    %v2926 = vpack.c.b16 %v1900, %v1882
    %v2927 = vpack.c.b16 %v1901, %v1883
    %v2928 = vpack.c.b16 %v1902, %v1884
    %v2929 = vpack.c.b16 %v1903, %v1885
    %v2930 = vpack.c.b16 %v1904, %v1886
    %v2931 = vpack.c.b16 %v1905, %v1887
    %v2932 = vpack.c.b16 %v1906, %v1888
    %v2933 = vpack.c.b16 %v1907, %v1889
    %v2934 = vpack.c.b16 %v1908, %v1890
    %v2935 = vpack.c.b16 %v1909, %v1891
    %v2936 = vpack.c.b16 %v1910, %v1892
    %v2937 = vpack.c.b16 %v1911, %v1893
    %v2938 = vpack.c.b16 %v1912, %v1894
    %v2939 = vpack.c.b16 %v1913, %v1895
    %v2940 = vpack.c.b16 %v1914, %v1896
    %v2941 = vpack.c.b16 %v1933, %v1915
    %v2942 = vpack.c.b16 %v1934, %v1916
    %v2943 = vpack.c.b16 %v1935, %v1917
    %v2944 = vpack.c.b16 %v1936, %v1918
    %v2945 = vpack.c.b16 %v1937, %v1919
    %v2946 = vpack.c.b16 %v1938, %v1920
    %v2947 = vpack.c.b16 %v1939, %v1921
    %v2948 = vpack.c.b16 %v1940, %v1922
    %v2949 = vpack.c.b16 %v1941, %v1923
    %v2950 = vpack.c.b16 %v1942, %v1924
    %v2951 = vpack.c.b16 %v1943, %v1925
    %v2952 = vpack.c.b16 %v1944, %v1926
    %v2953 = vpack.c.b16 %v1945, %v1927
    %v2954 = vpack.c.b16 %v1946, %v1928
    %v2955 = vpack.c.b16 %v1947, %v1929
    %v2956 = vpack.c.b16 %v1948, %v1930
    %v2957 = vpack.c.b16 %v1949, %v1931
    %v2958 = vpack.c.b16 %v1950, %v1932
    %v2959 = vpack.c.b16 %v1969, %v1951
    %v2960 = vpack.c.b16 %v1970, %v1952
    %v2961 = vpack.c.b16 %v1971, %v1953
    %v2962 = vpack.c.b16 %v1972, %v1954
    %v2963 = vpack.c.b16 %v1973, %v1955
    %v2964 = vpack.c.b16 %v1974, %v1956
    %v2965 = vpack.c.b16 %v1975, %v1957
    %v2966 = vpack.c.b16 %v1976, %v1958
    %v2967 = vpack.c.b16 %v1977, %v1959
    %v2968 = vpack.c.b16 %v1978, %v1960
    %v2969 = vpack.c.b16 %v1979, %v1961
    %v2970 = vpack.c.b16 %v1980, %v1962
    %v2971 = vpack.c.b16 %v1981, %v1963
    %v2972 = vpack.c.b16 %v1982, %v1964
    %v2973 = vpack.c.b16 %v1983, %v1965
    %v2974 = vpack.c.b16 %v1984, %v1966
    %v2975 = vpack.c.b16 %v1985, %v1967
    %v2976 = vpack.c.b16 %v1986, %v1968
    %v2977 = vpack.c.b16 %v2005, %v1987
    %v2978 = vpack.c.b16 %v2006, %v1988
    %v2979 = vpack.c.b16 %v2007, %v1989
    %v2980 = vpack.c.b16 %v2008, %v1990
    %v2981 = vpack.c.b16 %v2009, %v1991
    %v2982 = vpack.c.b16 %v2010, %v1992
    %v2983 = vpack.c.b16 %v2011, %v1993
    %v2984 = vpack.c.b16 %v2012, %v1994
    %v2985 = vpack.c.b16 %v2013, %v1995
    %v2986 = vpack.c.b16 %v2014, %v1996
    %v2987 = vpack.c.b16 %v2015, %v1997
    %v2988 = vpack.c.b16 %v2016, %v1998
    %v2989 = vpack.c.b16 %v2017, %v1999
    %v2990 = vpack.c.b16 %v2018, %v2000
    %v2991 = vpack.c.b16 %v2019, %v2001
    %v2992 = vpack.c.b16 %v2020, %v2002
    %v2993 = vpack.c.b16 %v2021, %v2003
    %v2994 = vpack.c.b16 %v2022, %v2004
    %v2995 = vpack.c.b16 %v2041, %v2023
    %v2996 = vpack.c.b16 %v2042, %v2024
    %v2997 = vpack.c.b16 %v2043, %v2025
    %v2998 = vpack.c.b16 %v2044, %v2026
    %v2999 = vpack.c.b16 %v2045, %v2027
    %v3000 = vpack.c.b16 %v2046, %v2028
    %v3001 = vpack.c.b16 %v2047, %v2029
    %v3002 = vpack.c.b16 %v2048, %v2030
    %v3003 = vpack.c.b16 %v2049, %v2031
    %v3004 = vpack.c.b16 %v2050, %v2032
    %v3005 = vpack.c.b16 %v2051, %v2033
    %v3006 = vpack.c.b16 %v2052, %v2034
    %v3007 = vpack.c.b16 %v2053, %v2035
    %v3008 = vpack.c.b16 %v2054, %v2036
    %v3009 = vpack.c.b16 %v2055, %v2037
    %v3010 = vpack.c.b16 %v2056, %v2038
    %v3011 = vpack.c.b16 %v2057, %v2039
    %v3012 = vpack.c.b16 %v2058, %v2040
    %v3013 = vpack.c.b16 %v2077, %v2059
    %v3014 = vpack.c.b16 %v2078, %v2060
    %v3015 = vpack.c.b16 %v2079, %v2061
    %v3016 = vpack.c.b16 %v2080, %v2062
    %v3017 = vpack.c.b16 %v2081, %v2063
    %v3018 = vpack.c.b16 %v2082, %v2064
    %v3019 = vpack.c.b16 %v2083, %v2065
    %v3020 = vpack.c.b16 %v2084, %v2066
    %v3021 = vpack.c.b16 %v2085, %v2067
    %v3022 = vpack.c.b16 %v2086, %v2068
    %v3023 = vpack.c.b16 %v2087, %v2069
    %v3024 = vpack.c.b16 %v2088, %v2070
    %v3025 = vpack.c.b16 %v2089, %v2071
    %v3026 = vpack.c.b16 %v2090, %v2072
    %v3027 = vpack.c.b16 %v2091, %v2073
    %v3028 = vpack.c.b16 %v2092, %v2074
    %v3029 = vpack.c.b16 %v2093, %v2075
    %v3030 = vpack.c.b16 %v2094, %v2076
    %v3031 = vpack.c.b16 %v2113, %v2095
    %v3032 = vpack.c.b16 %v2114, %v2096
    %v3033 = vpack.c.b16 %v2115, %v2097
    %v3034 = vpack.c.b16 %v2116, %v2098
    %v3035 = vpack.c.b16 %v2117, %v2099
    %v3036 = vpack.c.b16 %v2118, %v2100
    %v3037 = vpack.c.b16 %v2119, %v2101
    %v3038 = vpack.c.b16 %v2120, %v2102
    %v3039 = vpack.c.b16 %v2121, %v2103
    %v3040 = vpack.c.b16 %v2122, %v2104
    %v3041 = vpack.c.b16 %v2123, %v2105
    %v3042 = vpack.c.b16 %v2124, %v2106
    %v3043 = vpack.c.b16 %v2125, %v2107
    %v3044 = vpack.c.b16 %v2126, %v2108
    %v3045 = vpack.c.b16 %v2127, %v2109
    %v3046 = vpack.c.b16 %v2128, %v2110
    %v3047 = vpack.c.b16 %v2129, %v2111
    %v3048 = vpack.c.b16 %v2130, %v2112
    %v3049 = vpack.c.b16 %v2149, %v2131
    %v3050 = vpack.c.b16 %v2150, %v2132
    %v3051 = vpack.c.b16 %v2151, %v2133
    %v3052 = vpack.c.b16 %v2152, %v2134
    %v3053 = vpack.c.b16 %v2153, %v2135
    %v3054 = vpack.c.b16 %v2154, %v2136
    %v3055 = vpack.c.b16 %v2155, %v2137
    %v3056 = vpack.c.b16 %v2156, %v2138
    %v3057 = vpack.c.b16 %v2157, %v2139
    %v3058 = vpack.c.b16 %v2158, %v2140
    %v3059 = vpack.c.b16 %v2159, %v2141
    %v3060 = vpack.c.b16 %v2160, %v2142
    %v3061 = vpack.c.b16 %v2161, %v2143
    %v3062 = vpack.c.b16 %v2162, %v2144
    %v3063 = vpack.c.b16 %v2163, %v2145
    %v3064 = vpack.c.b16 %v2164, %v2146
    %v3065 = vpack.c.b16 %v2165, %v2147
    %v3066 = vpack.c.b16 %v2166, %v2148
    %v3067 = vpack.c.b16 %v2185, %v2167
    %v3068 = vpack.c.b16 %v2186, %v2168
    %v3069 = vpack.c.b16 %v2187, %v2169
    %v3070 = vpack.c.b16 %v2188, %v2170
    %v3071 = vpack.c.b16 %v2189, %v2171
    %v3072 = vpack.c.b16 %v2190, %v2172
    %v3073 = vpack.c.b16 %v2191, %v2173
    %v3074 = vpack.c.b16 %v2192, %v2174
    %v3075 = vpack.c.b16 %v2193, %v2175
    %v3076 = vpack.c.b16 %v2194, %v2176
    %v3077 = vpack.c.b16 %v2195, %v2177
    %v3078 = vpack.c.b16 %v2196, %v2178
    %v3079 = vpack.c.b16 %v2197, %v2179
    %v3080 = vpack.c.b16 %v2198, %v2180
    %v3081 = vpack.c.b16 %v2199, %v2181
    %v3082 = vpack.c.b16 %v2200, %v2182
    %v3083 = vpack.c.b16 %v2201, %v2183
    %v3084 = vpack.c.b16 %v2202, %v2184
    %v3085 = vpack.c.b16 %v2221, %v2203
    %v3086 = vpack.c.b16 %v2222, %v2204
    %v3087 = vpack.c.b16 %v2223, %v2205
    %v3088 = vpack.c.b16 %v2224, %v2206
    %v3089 = vpack.c.b16 %v2225, %v2207
    %v3090 = vpack.c.b16 %v2226, %v2208
    %v3091 = vpack.c.b16 %v2227, %v2209
    %v3092 = vpack.c.b16 %v2228, %v2210
    %v3093 = vpack.c.b16 %v2229, %v2211
    %v3094 = vpack.c.b16 %v2230, %v2212
    %v3095 = vpack.c.b16 %v2231, %v2213
    %v3096 = vpack.c.b16 %v2232, %v2214
    %v3097 = vpack.c.b16 %v2233, %v2215
    %v3098 = vpack.c.b16 %v2234, %v2216
    %v3099 = vpack.c.b16 %v2235, %v2217
    %v3100 = vpack.c.b16 %v2236, %v2218
    %v3101 = vpack.c.b16 %v2237, %v2219
    %v3102 = vpack.c.b16 %v2238, %v2220
    %v3103 = vpack.c.b16 %v2257, %v2239
    %v3104 = vpack.c.b16 %v2258, %v2240
    %v3105 = vpack.c.b16 %v2259, %v2241
    %v3106 = vpack.c.b16 %v2260, %v2242
    %v3107 = vpack.c.b16 %v2261, %v2243
    %v3108 = vpack.c.b16 %v2262, %v2244
    %v3109 = vpack.c.b16 %v2263, %v2245
    %v3110 = vpack.c.b16 %v2264, %v2246
    %v3111 = vpack.c.b16 %v2265, %v2247
    %v3112 = vpack.c.b16 %v2266, %v2248
    %v3113 = vpack.c.b16 %v2267, %v2249
    %v3114 = vpack.c.b16 %v2268, %v2250
    %v3115 = vpack.c.b16 %v2269, %v2251
    %v3116 = vpack.c.b16 %v2270, %v2252
    %v3117 = vpack.c.b16 %v2271, %v2253
    %v3118 = vpack.c.b16 %v2272, %v2254
    %v3119 = vpack.c.b16 %v2273, %v2255
    %v3120 = vpack.c.b16 %v2274, %v2256
    %v3121 = vpack.c.b16 %v2293, %v2275
    %v3122 = vpack.c.b16 %v2294, %v2276
    %v3123 = vpack.c.b16 %v2295, %v2277
    %v3124 = vpack.c.b16 %v2296, %v2278
    %v3125 = vpack.c.b16 %v2297, %v2279
    %v3126 = vpack.c.b16 %v2298, %v2280
    %v3127 = vpack.c.b16 %v2299, %v2281
    %v3128 = vpack.c.b16 %v2300, %v2282
    %v3129 = vpack.c.b16 %v2301, %v2283
    %v3130 = vpack.c.b16 %v2302, %v2284
    %v3131 = vpack.c.b16 %v2303, %v2285
    %v3132 = vpack.c.b16 %v2304, %v2286
    %v3133 = vpack.c.b16 %v2305, %v2287
    %v3134 = vpack.c.b16 %v2306, %v2288
    %v3135 = vpack.c.b16 %v2307, %v2289
    %v3136 = vpack.c.b16 %v2308, %v2290
    %v3137 = vpack.c.b16 %v2309, %v2291
    %v3138 = vpack.c.b16 %v2310, %v2292
    %v3139 = vpack.c.b16 %v2329, %v2311
    %v3140 = vpack.c.b16 %v2330, %v2312
    %v3141 = vpack.c.b16 %v2331, %v2313
    %v3142 = vpack.c.b16 %v2332, %v2314
    %v3143 = vpack.c.b16 %v2333, %v2315
    %v3144 = vpack.c.b16 %v2334, %v2316
    %v3145 = vpack.c.b16 %v2335, %v2317
    %v3146 = vpack.c.b16 %v2336, %v2318
    %v3147 = vpack.c.b16 %v2337, %v2319
    %v3148 = vpack.c.b16 %v2338, %v2320
    %v3149 = vpack.c.b16 %v2339, %v2321
    %v3150 = vpack.c.b16 %v2340, %v2322
    %v3151 = vpack.c.b16 %v2341, %v2323
    %v3152 = vpack.c.b16 %v2342, %v2324
    %v3153 = vpack.c.b16 %v2343, %v2325
    %v3154 = vpack.c.b16 %v2344, %v2326
    %v3155 = vpack.c.b16 %v2345, %v2327
    %v3156 = vpack.c.b16 %v2346, %v2328
    %v3157 = vpack.c.b16 %v2365, %v2347
    %v3158 = vpack.c.b16 %v2366, %v2348
    %v3159 = vpack.c.b16 %v2367, %v2349
    %v3160 = vpack.c.b16 %v2368, %v2350
    %v3161 = vpack.c.b16 %v2369, %v2351
    %v3162 = vpack.c.b16 %v2370, %v2352
    %v3163 = vpack.c.b16 %v2371, %v2353
    %v3164 = vpack.c.b16 %v2372, %v2354
    %v3165 = vpack.c.b16 %v2373, %v2355
    %v3166 = vpack.c.b16 %v2374, %v2356
    %v3167 = vpack.c.b16 %v2375, %v2357
    %v3168 = vpack.c.b16 %v2376, %v2358
    %v3169 = vpack.c.b16 %v2377, %v2359
    %v3170 = vpack.c.b16 %v2378, %v2360
    %v3171 = vpack.c.b16 %v2379, %v2361
    %v3172 = vpack.c.b16 %v2380, %v2362
    %v3173 = vpack.c.b16 %v2381, %v2363
    %v3174 = vpack.c.b16 %v2382, %v2364
    %v3175 = vpack.c.b16 %v2401, %v2383
    %v3176 = vpack.c.b16 %v2402, %v2384
    %v3177 = vpack.c.b16 %v2403, %v2385
    %v3178 = vpack.c.b16 %v2404, %v2386
    %v3179 = vpack.c.b16 %v2405, %v2387
    %v3180 = vpack.c.b16 %v2406, %v2388
    %v3181 = vpack.c.b16 %v2407, %v2389
    %v3182 = vpack.c.b16 %v2408, %v2390
    %v3183 = vpack.c.b16 %v2409, %v2391
    %v3184 = vpack.c.b16 %v2410, %v2392
    %v3185 = vpack.c.b16 %v2411, %v2393
    %v3186 = vpack.c.b16 %v2412, %v2394
    %v3187 = vpack.c.b16 %v2413, %v2395
    %v3188 = vpack.c.b16 %v2414, %v2396
    %v3189 = vpack.c.b16 %v2415, %v2397
    %v3190 = vpack.c.b16 %v2416, %v2398
    %v3191 = vpack.c.b16 %v2417, %v2399
    %v3192 = vpack.c.b16 %v2418, %v2400
    %v3193 = vpack.c.b16 %v2437, %v2419
    %v3194 = vpack.c.b16 %v2438, %v2420
    %v3195 = vpack.c.b16 %v2439, %v2421
    %v3196 = vpack.c.b16 %v2440, %v2422
    %v3197 = vpack.c.b16 %v2441, %v2423
    %v3198 = vpack.c.b16 %v2442, %v2424
    %v3199 = vpack.c.b16 %v2443, %v2425
    %v3200 = vpack.c.b16 %v2444, %v2426
    %v3201 = vpack.c.b16 %v2445, %v2427
    %v3202 = vpack.c.b16 %v2446, %v2428
    %v3203 = vpack.c.b16 %v2447, %v2429
    %v3204 = vpack.c.b16 %v2448, %v2430
    %v3205 = vpack.c.b16 %v2449, %v2431
    %v3206 = vpack.c.b16 %v2450, %v2432
    %v3207 = vpack.c.b16 %v2451, %v2433
    %v3208 = vpack.c.b16 %v2452, %v2434
    %v3209 = vpack.c.b16 %v2453, %v2435
    %v3210 = vpack.c.b16 %v2454, %v2436
    %v3211 = vpack.c.b16 %v2473, %v2455
    %v3212 = vpack.c.b16 %v2474, %v2456
    %v3213 = vpack.c.b16 %v2475, %v2457
    %v3214 = vpack.c.b16 %v2476, %v2458
    %v3215 = vpack.c.b16 %v2477, %v2459
    %v3216 = vpack.c.b16 %v2478, %v2460
    %v3217 = vpack.c.b16 %v2479, %v2461
    %v3218 = vpack.c.b16 %v2480, %v2462
    %v3219 = vpack.c.b16 %v2481, %v2463
    %v3220 = vpack.c.b16 %v2482, %v2464
    %v3221 = vpack.c.b16 %v2483, %v2465
    %v3222 = vpack.c.b16 %v2484, %v2466
    %v3223 = vpack.c.b16 %v2485, %v2467
    %v3224 = vpack.c.b16 %v2486, %v2468
    %v3225 = vpack.c.b16 %v2487, %v2469
    %v3226 = vpack.c.b16 %v2488, %v2470
    %v3227 = vpack.c.b16 %v2489, %v2471
    %v3228 = vpack.c.b16 %v2490, %v2472
    %v3229 = vpack.c.b16 %v2509, %v2491
    %v3230 = vpack.c.b16 %v2510, %v2492
    %v3231 = vpack.c.b16 %v2511, %v2493
    %v3232 = vpack.c.b16 %v2512, %v2494
    %v3233 = vpack.c.b16 %v2513, %v2495
    %v3234 = vpack.c.b16 %v2514, %v2496
    %v3235 = vpack.c.b16 %v2515, %v2497
    %v3236 = vpack.c.b16 %v2516, %v2498
    %v3237 = vpack.c.b16 %v2517, %v2499
    %v3238 = vpack.c.b16 %v2518, %v2500
    %v3239 = vpack.c.b16 %v2519, %v2501
    %v3240 = vpack.c.b16 %v2520, %v2502
    %v3241 = vpack.c.b16 %v2521, %v2503
    %v3242 = vpack.c.b16 %v2522, %v2504
    %v3243 = vpack.c.b16 %v2523, %v2505
    %v3244 = vpack.c.b16 %v2524, %v2506
    %v3245 = vpack.c.b16 %v2525, %v2507
    %v3246 = vpack.c.b16 %v2526, %v2508
    %v3247 = vpack.c.b16 %v2545, %v2527
    %v3248 = vpack.c.b16 %v2546, %v2528
    %v3249 = vpack.c.b16 %v2547, %v2529
    %v3250 = vpack.c.b16 %v2548, %v2530
    %v3251 = vpack.c.b16 %v2549, %v2531
    %v3252 = vpack.c.b16 %v2550, %v2532
    %v3253 = vpack.c.b16 %v2551, %v2533
    %v3254 = vpack.c.b16 %v2552, %v2534
    %v3255 = vpack.c.b16 %v2553, %v2535
    %v3256 = vpack.c.b16 %v2554, %v2536
    %v3257 = vpack.c.b16 %v2555, %v2537
    %v3258 = vpack.c.b16 %v2556, %v2538
    %v3259 = vpack.c.b16 %v2557, %v2539
    %v3260 = vpack.c.b16 %v2558, %v2540
    %v3261 = vpack.c.b16 %v2559, %v2541
    %v3262 = vpack.c.b16 %v2560, %v2542
    %v3263 = vpack.c.b16 %v2561, %v2543
    %v3264 = vpack.c.b16 %v2562, %v2544
    %v3265 = vpack.c.b16 %v2581, %v2563
    %v3266 = vpack.c.b16 %v2582, %v2564
    %v3267 = vpack.c.b16 %v2583, %v2565
    %v3268 = vpack.c.b16 %v2584, %v2566
    %v3269 = vpack.c.b16 %v2585, %v2567
    %v3270 = vpack.c.b16 %v2586, %v2568
    %v3271 = vpack.c.b16 %v2587, %v2569
    %v3272 = vpack.c.b16 %v2588, %v2570
    %v3273 = vpack.c.b16 %v2589, %v2571
    %v3274 = vpack.c.b16 %v2590, %v2572
    %v3275 = vpack.c.b16 %v2591, %v2573
    %v3276 = vpack.c.b16 %v2592, %v2574
    %v3277 = vpack.c.b16 %v2593, %v2575
    %v3278 = vpack.c.b16 %v2594, %v2576
    %v3279 = vpack.c.b16 %v2595, %v2577
    %v3280 = vpack.c.b16 %v2596, %v2578
    %v3281 = vpack.c.b16 %v2597, %v2579
    %v3282 = vpack.c.b16 %v2598, %v2580
    %v3283 = vpack.c.b16 %v2617, %v2599
    %v3284 = vpack.c.b16 %v2618, %v2600
    %v3285 = vpack.c.b16 %v2619, %v2601
    %v3286 = vpack.c.b16 %v2620, %v2602
    %v3287 = vpack.c.b16 %v2621, %v2603
    %v3288 = vpack.c.b16 %v2622, %v2604
    %v3289 = vpack.c.b16 %v2623, %v2605
    %v3290 = vpack.c.b16 %v2624, %v2606
    %v3291 = vpack.c.b16 %v2625, %v2607
    %v3292 = vpack.c.b16 %v2626, %v2608
    %v3293 = vpack.c.b16 %v2627, %v2609
    %v3294 = vpack.c.b16 %v2628, %v2610
    %v3295 = vpack.c.b16 %v2629, %v2611
    %v3296 = vpack.c.b16 %v2630, %v2612
    %v3297 = vpack.c.b16 %v2631, %v2613
    %v3298 = vpack.c.b16 %v2632, %v2614
    %v3299 = vpack.c.b16 %v2633, %v2615
    %v3300 = vpack.c.b16 %v2634, %v2616
    %v3301 = vpack.c.b16 %v2653, %v2635
    %v3302 = vpack.c.b16 %v2654, %v2636
    %v3303 = vpack.c.b16 %v2655, %v2637
    %v3304 = vpack.c.b16 %v2656, %v2638
    %v3305 = vpack.c.b16 %v2657, %v2639
    %v3306 = vpack.c.b16 %v2658, %v2640
    %v3307 = vpack.c.b16 %v2659, %v2641
    %v3308 = vpack.c.b16 %v2660, %v2642
    %v3309 = vpack.c.b16 %v2661, %v2643
    %v3310 = vpack.c.b16 %v2662, %v2644
    %v3311 = vpack.c.b16 %v2663, %v2645
    %v3312 = vpack.c.b16 %v2664, %v2646
    %v3313 = vpack.c.b16 %v2665, %v2647
    %v3314 = vpack.c.b16 %v2666, %v2648
    %v3315 = vpack.c.b16 %v2667, %v2649
    %v3316 = vpack.c.b16 %v2668, %v2650
    %v3317 = vpack.c.b16 %v2669, %v2651
    %v3318 = vpack.c.b16 %v2670, %v2652
    %vm3967 = vcmask 523264
    %v3969 = vsel %vm3967, %v36, 0
    %3971 = vmatpush.bf16.msra.mxu0 %v2797
    %3972 = vmatpush.bf16.msra.mxu0 %v2779
    %3973 = vmatpush.bf16.msra.mxu0 %v2761
    %3974 = vmatpush.bf16.msra.mxu0 %v2743
    %3975 = vmatpush.bf16.msra.mxu0 %v2725
    %3976 = vmatpush.bf16.msra.mxu0 %v2707
    %3977 = vmatpush.bf16.msra.mxu0 %v2689
    %3978 = vmatpush.bf16.msra.mxu0 %v2671
    %3979 = vmatmul.bf16.gmra.mxu0 %v32
    %v3980 = vpop.f32.mrf.mxu0
    %v3981 = vadd.f32 %v691, %v3980
    %v3982 = vpop.f32.mrf.mxu0
    %v3983 = vadd.f32 %v691, %v3982
    %3984 = vdwg.mxu0
    %3985 = vmatpush.bf16.msra.mxu0 %v2941
    %3986 = vmatpush.bf16.msra.mxu0 %v2923
    %3987 = vmatpush.bf16.msra.mxu0 %v2905
    %3988 = vmatpush.bf16.msra.mxu0 %v2887
    %3989 = vmatpush.bf16.msra.mxu0 %v2869
    %3990 = vmatpush.bf16.msra.mxu0 %v2851
    %3991 = vmatpush.bf16.msra.mxu0 %v2833
    %3992 = vmatpush.bf16.msra.mxu0 %v2815
    %3993 = vmatmul.bf16.gmra.mxu0 %v33
    %v3994 = vpop.f32.mrf.mxu0
    %v3995 = vadd.f32 %v3981, %v3994
    %v3996 = vpop.f32.mrf.mxu0
    %v3997 = vadd.f32 %v3983, %v3996
    %3998 = vdwg.mxu0
    %3999 = vmatpush.bf16.msra.mxu0 %v3085
    %4000 = vmatpush.bf16.msra.mxu0 %v3067
    %4001 = vmatpush.bf16.msra.mxu0 %v3049
    %4002 = vmatpush.bf16.msra.mxu0 %v3031
    %4003 = vmatpush.bf16.msra.mxu0 %v3013
    %4004 = vmatpush.bf16.msra.mxu0 %v2995
    %4005 = vmatpush.bf16.msra.mxu0 %v2977
    %4006 = vmatpush.bf16.msra.mxu0 %v2959
    %4007 = vmatmul.bf16.gmra.mxu0 %v34
    %v4008 = vpop.f32.mrf.mxu0
    %v4009 = vadd.f32 %v3995, %v4008
    %v4010 = vpop.f32.mrf.mxu0
    %v4011 = vadd.f32 %v3997, %v4010
    %4012 = vdwg.mxu0
    %4013 = vmatpush.bf16.msra.mxu0 %v3229
    %4014 = vmatpush.bf16.msra.mxu0 %v3211
    %4015 = vmatpush.bf16.msra.mxu0 %v3193
    %4016 = vmatpush.bf16.msra.mxu0 %v3175
    %4017 = vmatpush.bf16.msra.mxu0 %v3157
    %4018 = vmatpush.bf16.msra.mxu0 %v3139
    %4019 = vmatpush.bf16.msra.mxu0 %v3121
    %4020 = vmatpush.bf16.msra.mxu0 %v3103
    %4021 = vmatmul.bf16.gmra.mxu0 %v35
    %v4022 = vpop.f32.mrf.mxu0
    %v4023 = vadd.f32 %v4009, %v4022
    %v4024 = vpop.f32.mrf.mxu0
    %v4025 = vadd.f32 %v4011, %v4024
    %4026 = vdwg.mxu0
    %4027 = vmatpush.bf16.msra.mxu0 0
    %4028 = vmatpush.bf16.msra.mxu0 0
    %4029 = vmatpush.bf16.msra.mxu0 0
    %4030 = vmatpush.bf16.msra.mxu0 0
    %4031 = vmatpush.bf16.msra.mxu0 %v3301
    %4032 = vmatpush.bf16.msra.mxu0 %v3283
    %4033 = vmatpush.bf16.msra.mxu0 %v3265
    %4034 = vmatpush.bf16.msra.mxu0 %v3247
    %4035 = vmatmul.bf16.gmra.mxu0 %v3969
    %v4036 = vpop.f32.mrf.mxu0
    %v4037 = vadd.f32 %v4023, %v4036
    %v4038 = vpop.f32.mrf.mxu0
    %v4039 = vadd.f32 %v4025, %v4038
    %4040 = vdwg.mxu0
    %4041 = vmatpush.bf16.msra.mxu0 %v2798
    %4042 = vmatpush.bf16.msra.mxu0 %v2780
    %4043 = vmatpush.bf16.msra.mxu0 %v2762
    %4044 = vmatpush.bf16.msra.mxu0 %v2744
    %4045 = vmatpush.bf16.msra.mxu0 %v2726
    %4046 = vmatpush.bf16.msra.mxu0 %v2708
    %4047 = vmatpush.bf16.msra.mxu0 %v2690
    %4048 = vmatpush.bf16.msra.mxu0 %v2672
    %4049 = vmatmul.bf16.gmra.mxu0 %v32
    %v4050 = vpop.f32.mrf.mxu0
    %v4051 = vadd.f32 %v692, %v4050
    %v4052 = vpop.f32.mrf.mxu0
    %v4053 = vadd.f32 %v692, %v4052
    %4054 = vdwg.mxu0
    %4055 = vmatpush.bf16.msra.mxu0 %v2942
    %4056 = vmatpush.bf16.msra.mxu0 %v2924
    %4057 = vmatpush.bf16.msra.mxu0 %v2906
    %4058 = vmatpush.bf16.msra.mxu0 %v2888
    %4059 = vmatpush.bf16.msra.mxu0 %v2870
    %4060 = vmatpush.bf16.msra.mxu0 %v2852
    %4061 = vmatpush.bf16.msra.mxu0 %v2834
    %4062 = vmatpush.bf16.msra.mxu0 %v2816
    %4063 = vmatmul.bf16.gmra.mxu0 %v33
    %v4064 = vpop.f32.mrf.mxu0
    %v4065 = vadd.f32 %v4051, %v4064
    %v4066 = vpop.f32.mrf.mxu0
    %v4067 = vadd.f32 %v4053, %v4066
    %4068 = vdwg.mxu0
    %4069 = vmatpush.bf16.msra.mxu0 %v3086
    %4070 = vmatpush.bf16.msra.mxu0 %v3068
    %4071 = vmatpush.bf16.msra.mxu0 %v3050
    %4072 = vmatpush.bf16.msra.mxu0 %v3032
    %4073 = vmatpush.bf16.msra.mxu0 %v3014
    %4074 = vmatpush.bf16.msra.mxu0 %v2996
    %4075 = vmatpush.bf16.msra.mxu0 %v2978
    %4076 = vmatpush.bf16.msra.mxu0 %v2960
    %4077 = vmatmul.bf16.gmra.mxu0 %v34
    %v4078 = vpop.f32.mrf.mxu0
    %v4079 = vadd.f32 %v4065, %v4078
    %v4080 = vpop.f32.mrf.mxu0
    %v4081 = vadd.f32 %v4067, %v4080
    %4082 = vdwg.mxu0
    %4083 = vmatpush.bf16.msra.mxu0 %v3230
    %4084 = vmatpush.bf16.msra.mxu0 %v3212
    %4085 = vmatpush.bf16.msra.mxu0 %v3194
    %4086 = vmatpush.bf16.msra.mxu0 %v3176
    %4087 = vmatpush.bf16.msra.mxu0 %v3158
    %4088 = vmatpush.bf16.msra.mxu0 %v3140
    %4089 = vmatpush.bf16.msra.mxu0 %v3122
    %4090 = vmatpush.bf16.msra.mxu0 %v3104
    %4091 = vmatmul.bf16.gmra.mxu0 %v35
    %v4092 = vpop.f32.mrf.mxu0
    %v4093 = vadd.f32 %v4079, %v4092
    %v4094 = vpop.f32.mrf.mxu0
    %v4095 = vadd.f32 %v4081, %v4094
    %4096 = vdwg.mxu0
    %4097 = vmatpush.bf16.msra.mxu0 0
    %4098 = vmatpush.bf16.msra.mxu0 0
    %4099 = vmatpush.bf16.msra.mxu0 0
    %4100 = vmatpush.bf16.msra.mxu0 0
    %4101 = vmatpush.bf16.msra.mxu0 %v3302
    %4102 = vmatpush.bf16.msra.mxu0 %v3284
    %4103 = vmatpush.bf16.msra.mxu0 %v3266
    %4104 = vmatpush.bf16.msra.mxu0 %v3248
    %4105 = vmatmul.bf16.gmra.mxu0 %v3969
    %v4106 = vpop.f32.mrf.mxu0
    %v4107 = vadd.f32 %v4093, %v4106
    %v4108 = vpop.f32.mrf.mxu0
    %v4109 = vadd.f32 %v4095, %v4108
    %4110 = vdwg.mxu0
    %4111 = vmatpush.bf16.msra.mxu0 %v2799
    %4112 = vmatpush.bf16.msra.mxu0 %v2781
    %4113 = vmatpush.bf16.msra.mxu0 %v2763
    %4114 = vmatpush.bf16.msra.mxu0 %v2745
    %4115 = vmatpush.bf16.msra.mxu0 %v2727
    %4116 = vmatpush.bf16.msra.mxu0 %v2709
    %4117 = vmatpush.bf16.msra.mxu0 %v2691
    %4118 = vmatpush.bf16.msra.mxu0 %v2673
    %4119 = vmatmul.bf16.gmra.mxu0 %v32
    %v4120 = vpop.f32.mrf.mxu0
    %v4121 = vadd.f32 %v693, %v4120
    %v4122 = vpop.f32.mrf.mxu0
    %v4123 = vadd.f32 %v693, %v4122
    %4124 = vdwg.mxu0
    %4125 = vmatpush.bf16.msra.mxu0 %v2943
    %4126 = vmatpush.bf16.msra.mxu0 %v2925
    %4127 = vmatpush.bf16.msra.mxu0 %v2907
    %4128 = vmatpush.bf16.msra.mxu0 %v2889
    %4129 = vmatpush.bf16.msra.mxu0 %v2871
    %4130 = vmatpush.bf16.msra.mxu0 %v2853
    %4131 = vmatpush.bf16.msra.mxu0 %v2835
    %4132 = vmatpush.bf16.msra.mxu0 %v2817
    %4133 = vmatmul.bf16.gmra.mxu0 %v33
    %v4134 = vpop.f32.mrf.mxu0
    %v4135 = vadd.f32 %v4121, %v4134
    %v4136 = vpop.f32.mrf.mxu0
    %v4137 = vadd.f32 %v4123, %v4136
    %4138 = vdwg.mxu0
    %4139 = vmatpush.bf16.msra.mxu0 %v3087
    %4140 = vmatpush.bf16.msra.mxu0 %v3069
    %4141 = vmatpush.bf16.msra.mxu0 %v3051
    %4142 = vmatpush.bf16.msra.mxu0 %v3033
    %4143 = vmatpush.bf16.msra.mxu0 %v3015
    %4144 = vmatpush.bf16.msra.mxu0 %v2997
    %4145 = vmatpush.bf16.msra.mxu0 %v2979
    %4146 = vmatpush.bf16.msra.mxu0 %v2961
    %4147 = vmatmul.bf16.gmra.mxu0 %v34
    %v4148 = vpop.f32.mrf.mxu0
    %v4149 = vadd.f32 %v4135, %v4148
    %v4150 = vpop.f32.mrf.mxu0
    %v4151 = vadd.f32 %v4137, %v4150
    %4152 = vdwg.mxu0
    %4153 = vmatpush.bf16.msra.mxu0 %v3231
    %4154 = vmatpush.bf16.msra.mxu0 %v3213
    %4155 = vmatpush.bf16.msra.mxu0 %v3195
    %4156 = vmatpush.bf16.msra.mxu0 %v3177
    %4157 = vmatpush.bf16.msra.mxu0 %v3159
    %4158 = vmatpush.bf16.msra.mxu0 %v3141
    %4159 = vmatpush.bf16.msra.mxu0 %v3123
    %4160 = vmatpush.bf16.msra.mxu0 %v3105
    %4161 = vmatmul.bf16.gmra.mxu0 %v35
    %v4162 = vpop.f32.mrf.mxu0
    %v4163 = vadd.f32 %v4149, %v4162
    %v4164 = vpop.f32.mrf.mxu0
    %v4165 = vadd.f32 %v4151, %v4164
    %4166 = vdwg.mxu0
    %4167 = vmatpush.bf16.msra.mxu0 0
    %4168 = vmatpush.bf16.msra.mxu0 0
    %4169 = vmatpush.bf16.msra.mxu0 0
    %4170 = vmatpush.bf16.msra.mxu0 0
    %4171 = vmatpush.bf16.msra.mxu0 %v3303
    %4172 = vmatpush.bf16.msra.mxu0 %v3285
    %4173 = vmatpush.bf16.msra.mxu0 %v3267
    %4174 = vmatpush.bf16.msra.mxu0 %v3249
    %4175 = vmatmul.bf16.gmra.mxu0 %v3969
    %v4176 = vpop.f32.mrf.mxu0
    %v4177 = vadd.f32 %v4163, %v4176
    %v4178 = vpop.f32.mrf.mxu0
    %v4179 = vadd.f32 %v4165, %v4178
    %4180 = vdwg.mxu0
    %4181 = vmatpush.bf16.msra.mxu0 %v2800
    %4182 = vmatpush.bf16.msra.mxu0 %v2782
    %4183 = vmatpush.bf16.msra.mxu0 %v2764
    %4184 = vmatpush.bf16.msra.mxu0 %v2746
    %4185 = vmatpush.bf16.msra.mxu0 %v2728
    %4186 = vmatpush.bf16.msra.mxu0 %v2710
    %4187 = vmatpush.bf16.msra.mxu0 %v2692
    %4188 = vmatpush.bf16.msra.mxu0 %v2674
    %4189 = vmatmul.bf16.gmra.mxu0 %v32
    %v4190 = vpop.f32.mrf.mxu0
    %v4191 = vadd.f32 %v694, %v4190
    %v4192 = vpop.f32.mrf.mxu0
    %v4193 = vadd.f32 %v694, %v4192
    %4194 = vdwg.mxu0
    %4195 = vmatpush.bf16.msra.mxu0 %v2944
    %4196 = vmatpush.bf16.msra.mxu0 %v2926
    %4197 = vmatpush.bf16.msra.mxu0 %v2908
    %4198 = vmatpush.bf16.msra.mxu0 %v2890
    %4199 = vmatpush.bf16.msra.mxu0 %v2872
    %4200 = vmatpush.bf16.msra.mxu0 %v2854
    %4201 = vmatpush.bf16.msra.mxu0 %v2836
    %4202 = vmatpush.bf16.msra.mxu0 %v2818
    %4203 = vmatmul.bf16.gmra.mxu0 %v33
    %v4204 = vpop.f32.mrf.mxu0
    %v4205 = vadd.f32 %v4191, %v4204
    %v4206 = vpop.f32.mrf.mxu0
    %v4207 = vadd.f32 %v4193, %v4206
    %4208 = vdwg.mxu0
    %4209 = vmatpush.bf16.msra.mxu0 %v3088
    %4210 = vmatpush.bf16.msra.mxu0 %v3070
    %4211 = vmatpush.bf16.msra.mxu0 %v3052
    %4212 = vmatpush.bf16.msra.mxu0 %v3034
    %4213 = vmatpush.bf16.msra.mxu0 %v3016
    %4214 = vmatpush.bf16.msra.mxu0 %v2998
    %4215 = vmatpush.bf16.msra.mxu0 %v2980
    %4216 = vmatpush.bf16.msra.mxu0 %v2962
    %4217 = vmatmul.bf16.gmra.mxu0 %v34
    %v4218 = vpop.f32.mrf.mxu0
    %v4219 = vadd.f32 %v4205, %v4218
    %v4220 = vpop.f32.mrf.mxu0
    %v4221 = vadd.f32 %v4207, %v4220
    %4222 = vdwg.mxu0
    %4223 = vmatpush.bf16.msra.mxu0 %v3232
    %4224 = vmatpush.bf16.msra.mxu0 %v3214
    %4225 = vmatpush.bf16.msra.mxu0 %v3196
    %4226 = vmatpush.bf16.msra.mxu0 %v3178
    %4227 = vmatpush.bf16.msra.mxu0 %v3160
    %4228 = vmatpush.bf16.msra.mxu0 %v3142
    %4229 = vmatpush.bf16.msra.mxu0 %v3124
    %4230 = vmatpush.bf16.msra.mxu0 %v3106
    %4231 = vmatmul.bf16.gmra.mxu0 %v35
    %v4232 = vpop.f32.mrf.mxu0
    %v4233 = vadd.f32 %v4219, %v4232
    %v4234 = vpop.f32.mrf.mxu0
    %v4235 = vadd.f32 %v4221, %v4234
    %4236 = vdwg.mxu0
    %4237 = vmatpush.bf16.msra.mxu0 0
    %4238 = vmatpush.bf16.msra.mxu0 0
    %4239 = vmatpush.bf16.msra.mxu0 0
    %4240 = vmatpush.bf16.msra.mxu0 0
    %4241 = vmatpush.bf16.msra.mxu0 %v3304
    %4242 = vmatpush.bf16.msra.mxu0 %v3286
    %4243 = vmatpush.bf16.msra.mxu0 %v3268
    %4244 = vmatpush.bf16.msra.mxu0 %v3250
    %4245 = vmatmul.bf16.gmra.mxu0 %v3969
    %v4246 = vpop.f32.mrf.mxu0
    %v4247 = vadd.f32 %v4233, %v4246
    %v4248 = vpop.f32.mrf.mxu0
    %v4249 = vadd.f32 %v4235, %v4248
    %4250 = vdwg.mxu0
    %4251 = vmatpush.bf16.msra.mxu0 %v2801
    %4252 = vmatpush.bf16.msra.mxu0 %v2783
    %4253 = vmatpush.bf16.msra.mxu0 %v2765
    %4254 = vmatpush.bf16.msra.mxu0 %v2747
    %4255 = vmatpush.bf16.msra.mxu0 %v2729
    %4256 = vmatpush.bf16.msra.mxu0 %v2711
    %4257 = vmatpush.bf16.msra.mxu0 %v2693
    %4258 = vmatpush.bf16.msra.mxu0 %v2675
    %4259 = vmatmul.bf16.gmra.mxu0 %v32
    %v4260 = vpop.f32.mrf.mxu0
    %v4261 = vadd.f32 %v695, %v4260
    %v4262 = vpop.f32.mrf.mxu0
    %v4263 = vadd.f32 %v695, %v4262
    %4264 = vdwg.mxu0
    %4265 = vmatpush.bf16.msra.mxu0 %v2945
    %4266 = vmatpush.bf16.msra.mxu0 %v2927
    %4267 = vmatpush.bf16.msra.mxu0 %v2909
    %4268 = vmatpush.bf16.msra.mxu0 %v2891
    %4269 = vmatpush.bf16.msra.mxu0 %v2873
    %4270 = vmatpush.bf16.msra.mxu0 %v2855
    %4271 = vmatpush.bf16.msra.mxu0 %v2837
    %4272 = vmatpush.bf16.msra.mxu0 %v2819
    %4273 = vmatmul.bf16.gmra.mxu0 %v33
    %v4274 = vpop.f32.mrf.mxu0
    %v4275 = vadd.f32 %v4261, %v4274
    %v4276 = vpop.f32.mrf.mxu0
    %v4277 = vadd.f32 %v4263, %v4276
    %4278 = vdwg.mxu0
    %4279 = vmatpush.bf16.msra.mxu0 %v3089
    %4280 = vmatpush.bf16.msra.mxu0 %v3071
    %4281 = vmatpush.bf16.msra.mxu0 %v3053
    %4282 = vmatpush.bf16.msra.mxu0 %v3035
    %4283 = vmatpush.bf16.msra.mxu0 %v3017
    %4284 = vmatpush.bf16.msra.mxu0 %v2999
    %4285 = vmatpush.bf16.msra.mxu0 %v2981
    %4286 = vmatpush.bf16.msra.mxu0 %v2963
    %4287 = vmatmul.bf16.gmra.mxu0 %v34
    %v4288 = vpop.f32.mrf.mxu0
    %v4289 = vadd.f32 %v4275, %v4288
    %v4290 = vpop.f32.mrf.mxu0
    %v4291 = vadd.f32 %v4277, %v4290
    %4292 = vdwg.mxu0
    %4293 = vmatpush.bf16.msra.mxu0 %v3233
    %4294 = vmatpush.bf16.msra.mxu0 %v3215
    %4295 = vmatpush.bf16.msra.mxu0 %v3197
    %4296 = vmatpush.bf16.msra.mxu0 %v3179
    %4297 = vmatpush.bf16.msra.mxu0 %v3161
    %4298 = vmatpush.bf16.msra.mxu0 %v3143
    %4299 = vmatpush.bf16.msra.mxu0 %v3125
    %4300 = vmatpush.bf16.msra.mxu0 %v3107
    %4301 = vmatmul.bf16.gmra.mxu0 %v35
    %v4302 = vpop.f32.mrf.mxu0
    %v4303 = vadd.f32 %v4289, %v4302
    %v4304 = vpop.f32.mrf.mxu0
    %v4305 = vadd.f32 %v4291, %v4304
    %4306 = vdwg.mxu0
    %4307 = vmatpush.bf16.msra.mxu0 0
    %4308 = vmatpush.bf16.msra.mxu0 0
    %4309 = vmatpush.bf16.msra.mxu0 0
    %4310 = vmatpush.bf16.msra.mxu0 0
    %4311 = vmatpush.bf16.msra.mxu0 %v3305
    %4312 = vmatpush.bf16.msra.mxu0 %v3287
    %4313 = vmatpush.bf16.msra.mxu0 %v3269
    %4314 = vmatpush.bf16.msra.mxu0 %v3251
    %4315 = vmatmul.bf16.gmra.mxu0 %v3969
    %v4316 = vpop.f32.mrf.mxu0
    %v4317 = vadd.f32 %v4303, %v4316
    %v4318 = vpop.f32.mrf.mxu0
    %v4319 = vadd.f32 %v4305, %v4318
    %4320 = vdwg.mxu0
    %4321 = vmatpush.bf16.msra.mxu0 %v2802
    %4322 = vmatpush.bf16.msra.mxu0 %v2784
    %4323 = vmatpush.bf16.msra.mxu0 %v2766
    %4324 = vmatpush.bf16.msra.mxu0 %v2748
    %4325 = vmatpush.bf16.msra.mxu0 %v2730
    %4326 = vmatpush.bf16.msra.mxu0 %v2712
    %4327 = vmatpush.bf16.msra.mxu0 %v2694
    %4328 = vmatpush.bf16.msra.mxu0 %v2676
    %4329 = vmatmul.bf16.gmra.mxu0 %v32
    %v4330 = vpop.f32.mrf.mxu0
    %v4331 = vadd.f32 %v696, %v4330
    %v4332 = vpop.f32.mrf.mxu0
    %v4333 = vadd.f32 %v696, %v4332
    %4334 = vdwg.mxu0
    %4335 = vmatpush.bf16.msra.mxu0 %v2946
    %4336 = vmatpush.bf16.msra.mxu0 %v2928
    %4337 = vmatpush.bf16.msra.mxu0 %v2910
    %4338 = vmatpush.bf16.msra.mxu0 %v2892
    %4339 = vmatpush.bf16.msra.mxu0 %v2874
    %4340 = vmatpush.bf16.msra.mxu0 %v2856
    %4341 = vmatpush.bf16.msra.mxu0 %v2838
    %4342 = vmatpush.bf16.msra.mxu0 %v2820
    %4343 = vmatmul.bf16.gmra.mxu0 %v33
    %v4344 = vpop.f32.mrf.mxu0
    %v4345 = vadd.f32 %v4331, %v4344
    %v4346 = vpop.f32.mrf.mxu0
    %v4347 = vadd.f32 %v4333, %v4346
    %4348 = vdwg.mxu0
    %4349 = vmatpush.bf16.msra.mxu0 %v3090
    %4350 = vmatpush.bf16.msra.mxu0 %v3072
    %4351 = vmatpush.bf16.msra.mxu0 %v3054
    %4352 = vmatpush.bf16.msra.mxu0 %v3036
    %4353 = vmatpush.bf16.msra.mxu0 %v3018
    %4354 = vmatpush.bf16.msra.mxu0 %v3000
    %4355 = vmatpush.bf16.msra.mxu0 %v2982
    %4356 = vmatpush.bf16.msra.mxu0 %v2964
    %4357 = vmatmul.bf16.gmra.mxu0 %v34
    %v4358 = vpop.f32.mrf.mxu0
    %v4359 = vadd.f32 %v4345, %v4358
    %v4360 = vpop.f32.mrf.mxu0
    %v4361 = vadd.f32 %v4347, %v4360
    %4362 = vdwg.mxu0
    %4363 = vmatpush.bf16.msra.mxu0 %v3234
    %4364 = vmatpush.bf16.msra.mxu0 %v3216
    %4365 = vmatpush.bf16.msra.mxu0 %v3198
    %4366 = vmatpush.bf16.msra.mxu0 %v3180
    %4367 = vmatpush.bf16.msra.mxu0 %v3162
    %4368 = vmatpush.bf16.msra.mxu0 %v3144
    %4369 = vmatpush.bf16.msra.mxu0 %v3126
    %4370 = vmatpush.bf16.msra.mxu0 %v3108
    %4371 = vmatmul.bf16.gmra.mxu0 %v35
    %v4372 = vpop.f32.mrf.mxu0
    %v4373 = vadd.f32 %v4359, %v4372
    %v4374 = vpop.f32.mrf.mxu0
    %v4375 = vadd.f32 %v4361, %v4374
    %4376 = vdwg.mxu0
    %4377 = vmatpush.bf16.msra.mxu0 0
    %4378 = vmatpush.bf16.msra.mxu0 0
    %4379 = vmatpush.bf16.msra.mxu0 0
    %4380 = vmatpush.bf16.msra.mxu0 0
    %4381 = vmatpush.bf16.msra.mxu0 %v3306
    %4382 = vmatpush.bf16.msra.mxu0 %v3288
    %4383 = vmatpush.bf16.msra.mxu0 %v3270
    %4384 = vmatpush.bf16.msra.mxu0 %v3252
    %4385 = vmatmul.bf16.gmra.mxu0 %v3969
    %v4386 = vpop.f32.mrf.mxu0
    %v4387 = vadd.f32 %v4373, %v4386
    %v4388 = vpop.f32.mrf.mxu0
    %v4389 = vadd.f32 %v4375, %v4388
    %4390 = vdwg.mxu0
    %4391 = vmatpush.bf16.msra.mxu0 %v2803
    %4392 = vmatpush.bf16.msra.mxu0 %v2785
    %4393 = vmatpush.bf16.msra.mxu0 %v2767
    %4394 = vmatpush.bf16.msra.mxu0 %v2749
    %4395 = vmatpush.bf16.msra.mxu0 %v2731
    %4396 = vmatpush.bf16.msra.mxu0 %v2713
    %4397 = vmatpush.bf16.msra.mxu0 %v2695
    %4398 = vmatpush.bf16.msra.mxu0 %v2677
    %4399 = vmatmul.bf16.gmra.mxu0 %v32
    %v4400 = vpop.f32.mrf.mxu0
    %v4401 = vadd.f32 %v697, %v4400
    %v4402 = vpop.f32.mrf.mxu0
    %v4403 = vadd.f32 %v697, %v4402
    %4404 = vdwg.mxu0
    %4405 = vmatpush.bf16.msra.mxu0 %v2947
    %4406 = vmatpush.bf16.msra.mxu0 %v2929
    %4407 = vmatpush.bf16.msra.mxu0 %v2911
    %4408 = vmatpush.bf16.msra.mxu0 %v2893
    %4409 = vmatpush.bf16.msra.mxu0 %v2875
    %4410 = vmatpush.bf16.msra.mxu0 %v2857
    %4411 = vmatpush.bf16.msra.mxu0 %v2839
    %4412 = vmatpush.bf16.msra.mxu0 %v2821
    %4413 = vmatmul.bf16.gmra.mxu0 %v33
    %v4414 = vpop.f32.mrf.mxu0
    %v4415 = vadd.f32 %v4401, %v4414
    %v4416 = vpop.f32.mrf.mxu0
    %v4417 = vadd.f32 %v4403, %v4416
    %4418 = vdwg.mxu0
    %4419 = vmatpush.bf16.msra.mxu0 %v3091
    %4420 = vmatpush.bf16.msra.mxu0 %v3073
    %4421 = vmatpush.bf16.msra.mxu0 %v3055
    %4422 = vmatpush.bf16.msra.mxu0 %v3037
    %4423 = vmatpush.bf16.msra.mxu0 %v3019
    %4424 = vmatpush.bf16.msra.mxu0 %v3001
    %4425 = vmatpush.bf16.msra.mxu0 %v2983
    %4426 = vmatpush.bf16.msra.mxu0 %v2965
    %4427 = vmatmul.bf16.gmra.mxu0 %v34
    %v4428 = vpop.f32.mrf.mxu0
    %v4429 = vadd.f32 %v4415, %v4428
    %v4430 = vpop.f32.mrf.mxu0
    %v4431 = vadd.f32 %v4417, %v4430
    %4432 = vdwg.mxu0
    %4433 = vmatpush.bf16.msra.mxu0 %v3235
    %4434 = vmatpush.bf16.msra.mxu0 %v3217
    %4435 = vmatpush.bf16.msra.mxu0 %v3199
    %4436 = vmatpush.bf16.msra.mxu0 %v3181
    %4437 = vmatpush.bf16.msra.mxu0 %v3163
    %4438 = vmatpush.bf16.msra.mxu0 %v3145
    %4439 = vmatpush.bf16.msra.mxu0 %v3127
    %4440 = vmatpush.bf16.msra.mxu0 %v3109
    %4441 = vmatmul.bf16.gmra.mxu0 %v35
    %v4442 = vpop.f32.mrf.mxu0
    %v4443 = vadd.f32 %v4429, %v4442
    %v4444 = vpop.f32.mrf.mxu0
    %v4445 = vadd.f32 %v4431, %v4444
    %4446 = vdwg.mxu0
    %4447 = vmatpush.bf16.msra.mxu0 0
    %4448 = vmatpush.bf16.msra.mxu0 0
    %4449 = vmatpush.bf16.msra.mxu0 0
    %4450 = vmatpush.bf16.msra.mxu0 0
    %4451 = vmatpush.bf16.msra.mxu0 %v3307
    %4452 = vmatpush.bf16.msra.mxu0 %v3289
    %4453 = vmatpush.bf16.msra.mxu0 %v3271
    %4454 = vmatpush.bf16.msra.mxu0 %v3253
    %4455 = vmatmul.bf16.gmra.mxu0 %v3969
    %v4456 = vpop.f32.mrf.mxu0
    %v4457 = vadd.f32 %v4443, %v4456
    %v4458 = vpop.f32.mrf.mxu0
    %v4459 = vadd.f32 %v4445, %v4458
    %4460 = vdwg.mxu0
    %4461 = vmatpush.bf16.msra.mxu0 %v2804
    %4462 = vmatpush.bf16.msra.mxu0 %v2786
    %4463 = vmatpush.bf16.msra.mxu0 %v2768
    %4464 = vmatpush.bf16.msra.mxu0 %v2750
    %4465 = vmatpush.bf16.msra.mxu0 %v2732
    %4466 = vmatpush.bf16.msra.mxu0 %v2714
    %4467 = vmatpush.bf16.msra.mxu0 %v2696
    %4468 = vmatpush.bf16.msra.mxu0 %v2678
    %4469 = vmatmul.bf16.gmra.mxu0 %v32
    %v4470 = vpop.f32.mrf.mxu0
    %v4471 = vadd.f32 %v698, %v4470
    %v4472 = vpop.f32.mrf.mxu0
    %v4473 = vadd.f32 %v698, %v4472
    %4474 = vdwg.mxu0
    %4475 = vmatpush.bf16.msra.mxu0 %v2948
    %4476 = vmatpush.bf16.msra.mxu0 %v2930
    %4477 = vmatpush.bf16.msra.mxu0 %v2912
    %4478 = vmatpush.bf16.msra.mxu0 %v2894
    %4479 = vmatpush.bf16.msra.mxu0 %v2876
    %4480 = vmatpush.bf16.msra.mxu0 %v2858
    %4481 = vmatpush.bf16.msra.mxu0 %v2840
    %4482 = vmatpush.bf16.msra.mxu0 %v2822
    %4483 = vmatmul.bf16.gmra.mxu0 %v33
    %v4484 = vpop.f32.mrf.mxu0
    %v4485 = vadd.f32 %v4471, %v4484
    %v4486 = vpop.f32.mrf.mxu0
    %v4487 = vadd.f32 %v4473, %v4486
    %4488 = vdwg.mxu0
    %4489 = vmatpush.bf16.msra.mxu0 %v3092
    %4490 = vmatpush.bf16.msra.mxu0 %v3074
    %4491 = vmatpush.bf16.msra.mxu0 %v3056
    %4492 = vmatpush.bf16.msra.mxu0 %v3038
    %4493 = vmatpush.bf16.msra.mxu0 %v3020
    %4494 = vmatpush.bf16.msra.mxu0 %v3002
    %4495 = vmatpush.bf16.msra.mxu0 %v2984
    %4496 = vmatpush.bf16.msra.mxu0 %v2966
    %4497 = vmatmul.bf16.gmra.mxu0 %v34
    %v4498 = vpop.f32.mrf.mxu0
    %v4499 = vadd.f32 %v4485, %v4498
    %v4500 = vpop.f32.mrf.mxu0
    %v4501 = vadd.f32 %v4487, %v4500
    %4502 = vdwg.mxu0
    %4503 = vmatpush.bf16.msra.mxu0 %v3236
    %4504 = vmatpush.bf16.msra.mxu0 %v3218
    %4505 = vmatpush.bf16.msra.mxu0 %v3200
    %4506 = vmatpush.bf16.msra.mxu0 %v3182
    %4507 = vmatpush.bf16.msra.mxu0 %v3164
    %4508 = vmatpush.bf16.msra.mxu0 %v3146
    %4509 = vmatpush.bf16.msra.mxu0 %v3128
    %4510 = vmatpush.bf16.msra.mxu0 %v3110
    %4511 = vmatmul.bf16.gmra.mxu0 %v35
    %v4512 = vpop.f32.mrf.mxu0
    %v4513 = vadd.f32 %v4499, %v4512
    %v4514 = vpop.f32.mrf.mxu0
    %v4515 = vadd.f32 %v4501, %v4514
    %4516 = vdwg.mxu0
    %4517 = vmatpush.bf16.msra.mxu0 0
    %4518 = vmatpush.bf16.msra.mxu0 0
    %4519 = vmatpush.bf16.msra.mxu0 0
    %4520 = vmatpush.bf16.msra.mxu0 0
    %4521 = vmatpush.bf16.msra.mxu0 %v3308
    %4522 = vmatpush.bf16.msra.mxu0 %v3290
    %4523 = vmatpush.bf16.msra.mxu0 %v3272
    %4524 = vmatpush.bf16.msra.mxu0 %v3254
    %4525 = vmatmul.bf16.gmra.mxu0 %v3969
    %v4526 = vpop.f32.mrf.mxu0
    %v4527 = vadd.f32 %v4513, %v4526
    %v4528 = vpop.f32.mrf.mxu0
    %v4529 = vadd.f32 %v4515, %v4528
    %4530 = vdwg.mxu0
    %4531 = vmatpush.bf16.msra.mxu0 %v2805
    %4532 = vmatpush.bf16.msra.mxu0 %v2787
    %4533 = vmatpush.bf16.msra.mxu0 %v2769
    %4534 = vmatpush.bf16.msra.mxu0 %v2751
    %4535 = vmatpush.bf16.msra.mxu0 %v2733
    %4536 = vmatpush.bf16.msra.mxu0 %v2715
    %4537 = vmatpush.bf16.msra.mxu0 %v2697
    %4538 = vmatpush.bf16.msra.mxu0 %v2679
    %4539 = vmatmul.bf16.gmra.mxu0 %v32
    %v4540 = vpop.f32.mrf.mxu0
    %v4541 = vadd.f32 %v699, %v4540
    %v4542 = vpop.f32.mrf.mxu0
    %v4543 = vadd.f32 %v699, %v4542
    %4544 = vdwg.mxu0
    %4545 = vmatpush.bf16.msra.mxu0 %v2949
    %4546 = vmatpush.bf16.msra.mxu0 %v2931
    %4547 = vmatpush.bf16.msra.mxu0 %v2913
    %4548 = vmatpush.bf16.msra.mxu0 %v2895
    %4549 = vmatpush.bf16.msra.mxu0 %v2877
    %4550 = vmatpush.bf16.msra.mxu0 %v2859
    %4551 = vmatpush.bf16.msra.mxu0 %v2841
    %4552 = vmatpush.bf16.msra.mxu0 %v2823
    %4553 = vmatmul.bf16.gmra.mxu0 %v33
    %v4554 = vpop.f32.mrf.mxu0
    %v4555 = vadd.f32 %v4541, %v4554
    %v4556 = vpop.f32.mrf.mxu0
    %v4557 = vadd.f32 %v4543, %v4556
    %4558 = vdwg.mxu0
    %4559 = vmatpush.bf16.msra.mxu0 %v3093
    %4560 = vmatpush.bf16.msra.mxu0 %v3075
    %4561 = vmatpush.bf16.msra.mxu0 %v3057
    %4562 = vmatpush.bf16.msra.mxu0 %v3039
    %4563 = vmatpush.bf16.msra.mxu0 %v3021
    %4564 = vmatpush.bf16.msra.mxu0 %v3003
    %4565 = vmatpush.bf16.msra.mxu0 %v2985
    %4566 = vmatpush.bf16.msra.mxu0 %v2967
    %4567 = vmatmul.bf16.gmra.mxu0 %v34
    %v4568 = vpop.f32.mrf.mxu0
    %v4569 = vadd.f32 %v4555, %v4568
    %v4570 = vpop.f32.mrf.mxu0
    %v4571 = vadd.f32 %v4557, %v4570
    %4572 = vdwg.mxu0
    %4573 = vmatpush.bf16.msra.mxu0 %v3237
    %4574 = vmatpush.bf16.msra.mxu0 %v3219
    %4575 = vmatpush.bf16.msra.mxu0 %v3201
    %4576 = vmatpush.bf16.msra.mxu0 %v3183
    %4577 = vmatpush.bf16.msra.mxu0 %v3165
    %4578 = vmatpush.bf16.msra.mxu0 %v3147
    %4579 = vmatpush.bf16.msra.mxu0 %v3129
    %4580 = vmatpush.bf16.msra.mxu0 %v3111
    %4581 = vmatmul.bf16.gmra.mxu0 %v35
    %v4582 = vpop.f32.mrf.mxu0
    %v4583 = vadd.f32 %v4569, %v4582
    %v4584 = vpop.f32.mrf.mxu0
    %v4585 = vadd.f32 %v4571, %v4584
    %4586 = vdwg.mxu0
    %4587 = vmatpush.bf16.msra.mxu0 0
    %4588 = vmatpush.bf16.msra.mxu0 0
    %4589 = vmatpush.bf16.msra.mxu0 0
    %4590 = vmatpush.bf16.msra.mxu0 0
    %4591 = vmatpush.bf16.msra.mxu0 %v3309
    %4592 = vmatpush.bf16.msra.mxu0 %v3291
    %4593 = vmatpush.bf16.msra.mxu0 %v3273
    %4594 = vmatpush.bf16.msra.mxu0 %v3255
    %4595 = vmatmul.bf16.gmra.mxu0 %v3969
    %v4596 = vpop.f32.mrf.mxu0
    %v4597 = vadd.f32 %v4583, %v4596
    %v4598 = vpop.f32.mrf.mxu0
    %v4599 = vadd.f32 %v4585, %v4598
    %4600 = vdwg.mxu0
    %4601 = vmatpush.bf16.msra.mxu0 %v2806
    %4602 = vmatpush.bf16.msra.mxu0 %v2788
    %4603 = vmatpush.bf16.msra.mxu0 %v2770
    %4604 = vmatpush.bf16.msra.mxu0 %v2752
    %4605 = vmatpush.bf16.msra.mxu0 %v2734
    %4606 = vmatpush.bf16.msra.mxu0 %v2716
    %4607 = vmatpush.bf16.msra.mxu0 %v2698
    %4608 = vmatpush.bf16.msra.mxu0 %v2680
    %4609 = vmatmul.bf16.gmra.mxu0 %v32
    %v4610 = vpop.f32.mrf.mxu0
    %v4611 = vadd.f32 %v700, %v4610
    %v4612 = vpop.f32.mrf.mxu0
    %v4613 = vadd.f32 %v700, %v4612
    %4614 = vdwg.mxu0
    %4615 = vmatpush.bf16.msra.mxu0 %v2950
    %4616 = vmatpush.bf16.msra.mxu0 %v2932
    %4617 = vmatpush.bf16.msra.mxu0 %v2914
    %4618 = vmatpush.bf16.msra.mxu0 %v2896
    %4619 = vmatpush.bf16.msra.mxu0 %v2878
    %4620 = vmatpush.bf16.msra.mxu0 %v2860
    %4621 = vmatpush.bf16.msra.mxu0 %v2842
    %4622 = vmatpush.bf16.msra.mxu0 %v2824
    %4623 = vmatmul.bf16.gmra.mxu0 %v33
    %v4624 = vpop.f32.mrf.mxu0
    %v4625 = vadd.f32 %v4611, %v4624
    %v4626 = vpop.f32.mrf.mxu0
    %v4627 = vadd.f32 %v4613, %v4626
    %4628 = vdwg.mxu0
    %4629 = vmatpush.bf16.msra.mxu0 %v3094
    %4630 = vmatpush.bf16.msra.mxu0 %v3076
    %4631 = vmatpush.bf16.msra.mxu0 %v3058
    %4632 = vmatpush.bf16.msra.mxu0 %v3040
    %4633 = vmatpush.bf16.msra.mxu0 %v3022
    %4634 = vmatpush.bf16.msra.mxu0 %v3004
    %4635 = vmatpush.bf16.msra.mxu0 %v2986
    %4636 = vmatpush.bf16.msra.mxu0 %v2968
    %4637 = vmatmul.bf16.gmra.mxu0 %v34
    %v4638 = vpop.f32.mrf.mxu0
    %v4639 = vadd.f32 %v4625, %v4638
    %v4640 = vpop.f32.mrf.mxu0
    %v4641 = vadd.f32 %v4627, %v4640
    %4642 = vdwg.mxu0
    %4643 = vmatpush.bf16.msra.mxu0 %v3238
    %4644 = vmatpush.bf16.msra.mxu0 %v3220
    %4645 = vmatpush.bf16.msra.mxu0 %v3202
    %4646 = vmatpush.bf16.msra.mxu0 %v3184
    %4647 = vmatpush.bf16.msra.mxu0 %v3166
    %4648 = vmatpush.bf16.msra.mxu0 %v3148
    %4649 = vmatpush.bf16.msra.mxu0 %v3130
    %4650 = vmatpush.bf16.msra.mxu0 %v3112
    %4651 = vmatmul.bf16.gmra.mxu0 %v35
    %v4652 = vpop.f32.mrf.mxu0
    %v4653 = vadd.f32 %v4639, %v4652
    %v4654 = vpop.f32.mrf.mxu0
    %v4655 = vadd.f32 %v4641, %v4654
    %4656 = vdwg.mxu0
    %4657 = vmatpush.bf16.msra.mxu0 0
    %4658 = vmatpush.bf16.msra.mxu0 0
    %4659 = vmatpush.bf16.msra.mxu0 0
    %4660 = vmatpush.bf16.msra.mxu0 0
    %4661 = vmatpush.bf16.msra.mxu0 %v3310
    %4662 = vmatpush.bf16.msra.mxu0 %v3292
    %4663 = vmatpush.bf16.msra.mxu0 %v3274
    %4664 = vmatpush.bf16.msra.mxu0 %v3256
    %4665 = vmatmul.bf16.gmra.mxu0 %v3969
    %v4666 = vpop.f32.mrf.mxu0
    %v4667 = vadd.f32 %v4653, %v4666
    %v4668 = vpop.f32.mrf.mxu0
    %v4669 = vadd.f32 %v4655, %v4668
    %4670 = vdwg.mxu0
    %4671 = vmatpush.bf16.msra.mxu0 %v2807
    %4672 = vmatpush.bf16.msra.mxu0 %v2789
    %4673 = vmatpush.bf16.msra.mxu0 %v2771
    %4674 = vmatpush.bf16.msra.mxu0 %v2753
    %4675 = vmatpush.bf16.msra.mxu0 %v2735
    %4676 = vmatpush.bf16.msra.mxu0 %v2717
    %4677 = vmatpush.bf16.msra.mxu0 %v2699
    %4678 = vmatpush.bf16.msra.mxu0 %v2681
    %4679 = vmatmul.bf16.gmra.mxu0 %v32
    %v4680 = vpop.f32.mrf.mxu0
    %v4681 = vadd.f32 %v701, %v4680
    %v4682 = vpop.f32.mrf.mxu0
    %v4683 = vadd.f32 %v701, %v4682
    %4684 = vdwg.mxu0
    %4685 = vmatpush.bf16.msra.mxu0 %v2951
    %4686 = vmatpush.bf16.msra.mxu0 %v2933
    %4687 = vmatpush.bf16.msra.mxu0 %v2915
    %4688 = vmatpush.bf16.msra.mxu0 %v2897
    %4689 = vmatpush.bf16.msra.mxu0 %v2879
    %4690 = vmatpush.bf16.msra.mxu0 %v2861
    %4691 = vmatpush.bf16.msra.mxu0 %v2843
    %4692 = vmatpush.bf16.msra.mxu0 %v2825
    %4693 = vmatmul.bf16.gmra.mxu0 %v33
    %v4694 = vpop.f32.mrf.mxu0
    %v4695 = vadd.f32 %v4681, %v4694
    %v4696 = vpop.f32.mrf.mxu0
    %v4697 = vadd.f32 %v4683, %v4696
    %4698 = vdwg.mxu0
    %4699 = vmatpush.bf16.msra.mxu0 %v3095
    %4700 = vmatpush.bf16.msra.mxu0 %v3077
    %4701 = vmatpush.bf16.msra.mxu0 %v3059
    %4702 = vmatpush.bf16.msra.mxu0 %v3041
    %4703 = vmatpush.bf16.msra.mxu0 %v3023
    %4704 = vmatpush.bf16.msra.mxu0 %v3005
    %4705 = vmatpush.bf16.msra.mxu0 %v2987
    %4706 = vmatpush.bf16.msra.mxu0 %v2969
    %4707 = vmatmul.bf16.gmra.mxu0 %v34
    %v4708 = vpop.f32.mrf.mxu0
    %v4709 = vadd.f32 %v4695, %v4708
    %v4710 = vpop.f32.mrf.mxu0
    %v4711 = vadd.f32 %v4697, %v4710
    %4712 = vdwg.mxu0
    %4713 = vmatpush.bf16.msra.mxu0 %v3239
    %4714 = vmatpush.bf16.msra.mxu0 %v3221
    %4715 = vmatpush.bf16.msra.mxu0 %v3203
    %4716 = vmatpush.bf16.msra.mxu0 %v3185
    %4717 = vmatpush.bf16.msra.mxu0 %v3167
    %4718 = vmatpush.bf16.msra.mxu0 %v3149
    %4719 = vmatpush.bf16.msra.mxu0 %v3131
    %4720 = vmatpush.bf16.msra.mxu0 %v3113
    %4721 = vmatmul.bf16.gmra.mxu0 %v35
    %v4722 = vpop.f32.mrf.mxu0
    %v4723 = vadd.f32 %v4709, %v4722
    %v4724 = vpop.f32.mrf.mxu0
    %v4725 = vadd.f32 %v4711, %v4724
    %4726 = vdwg.mxu0
    %4727 = vmatpush.bf16.msra.mxu0 0
    %4728 = vmatpush.bf16.msra.mxu0 0
    %4729 = vmatpush.bf16.msra.mxu0 0
    %4730 = vmatpush.bf16.msra.mxu0 0
    %4731 = vmatpush.bf16.msra.mxu0 %v3311
    %4732 = vmatpush.bf16.msra.mxu0 %v3293
    %4733 = vmatpush.bf16.msra.mxu0 %v3275
    %4734 = vmatpush.bf16.msra.mxu0 %v3257
    %4735 = vmatmul.bf16.gmra.mxu0 %v3969
    %v4736 = vpop.f32.mrf.mxu0
    %v4737 = vadd.f32 %v4723, %v4736
    %v4738 = vpop.f32.mrf.mxu0
    %v4739 = vadd.f32 %v4725, %v4738
    %4740 = vdwg.mxu0
    %4741 = vmatpush.bf16.msra.mxu0 %v2808
    %4742 = vmatpush.bf16.msra.mxu0 %v2790
    %4743 = vmatpush.bf16.msra.mxu0 %v2772
    %4744 = vmatpush.bf16.msra.mxu0 %v2754
    %4745 = vmatpush.bf16.msra.mxu0 %v2736
    %4746 = vmatpush.bf16.msra.mxu0 %v2718
    %4747 = vmatpush.bf16.msra.mxu0 %v2700
    %4748 = vmatpush.bf16.msra.mxu0 %v2682
    %4749 = vmatmul.bf16.gmra.mxu0 %v32
    %v4750 = vpop.f32.mrf.mxu0
    %v4751 = vadd.f32 %v702, %v4750
    %v4752 = vpop.f32.mrf.mxu0
    %v4753 = vadd.f32 %v702, %v4752
    %4754 = vdwg.mxu0
    %4755 = vmatpush.bf16.msra.mxu0 %v2952
    %4756 = vmatpush.bf16.msra.mxu0 %v2934
    %4757 = vmatpush.bf16.msra.mxu0 %v2916
    %4758 = vmatpush.bf16.msra.mxu0 %v2898
    %4759 = vmatpush.bf16.msra.mxu0 %v2880
    %4760 = vmatpush.bf16.msra.mxu0 %v2862
    %4761 = vmatpush.bf16.msra.mxu0 %v2844
    %4762 = vmatpush.bf16.msra.mxu0 %v2826
    %4763 = vmatmul.bf16.gmra.mxu0 %v33
    %v4764 = vpop.f32.mrf.mxu0
    %v4765 = vadd.f32 %v4751, %v4764
    %v4766 = vpop.f32.mrf.mxu0
    %v4767 = vadd.f32 %v4753, %v4766
    %4768 = vdwg.mxu0
    %4769 = vmatpush.bf16.msra.mxu0 %v3096
    %4770 = vmatpush.bf16.msra.mxu0 %v3078
    %4771 = vmatpush.bf16.msra.mxu0 %v3060
    %4772 = vmatpush.bf16.msra.mxu0 %v3042
    %4773 = vmatpush.bf16.msra.mxu0 %v3024
    %4774 = vmatpush.bf16.msra.mxu0 %v3006
    %4775 = vmatpush.bf16.msra.mxu0 %v2988
    %4776 = vmatpush.bf16.msra.mxu0 %v2970
    %4777 = vmatmul.bf16.gmra.mxu0 %v34
    %v4778 = vpop.f32.mrf.mxu0
    %v4779 = vadd.f32 %v4765, %v4778
    %v4780 = vpop.f32.mrf.mxu0
    %v4781 = vadd.f32 %v4767, %v4780
    %4782 = vdwg.mxu0
    %4783 = vmatpush.bf16.msra.mxu0 %v3240
    %4784 = vmatpush.bf16.msra.mxu0 %v3222
    %4785 = vmatpush.bf16.msra.mxu0 %v3204
    %4786 = vmatpush.bf16.msra.mxu0 %v3186
    %4787 = vmatpush.bf16.msra.mxu0 %v3168
    %4788 = vmatpush.bf16.msra.mxu0 %v3150
    %4789 = vmatpush.bf16.msra.mxu0 %v3132
    %4790 = vmatpush.bf16.msra.mxu0 %v3114
    %4791 = vmatmul.bf16.gmra.mxu0 %v35
    %v4792 = vpop.f32.mrf.mxu0
    %v4793 = vadd.f32 %v4779, %v4792
    %v4794 = vpop.f32.mrf.mxu0
    %v4795 = vadd.f32 %v4781, %v4794
    %4796 = vdwg.mxu0
    %4797 = vmatpush.bf16.msra.mxu0 0
    %4798 = vmatpush.bf16.msra.mxu0 0
    %4799 = vmatpush.bf16.msra.mxu0 0
    %4800 = vmatpush.bf16.msra.mxu0 0
    %4801 = vmatpush.bf16.msra.mxu0 %v3312
    %4802 = vmatpush.bf16.msra.mxu0 %v3294
    %4803 = vmatpush.bf16.msra.mxu0 %v3276
    %4804 = vmatpush.bf16.msra.mxu0 %v3258
    %4805 = vmatmul.bf16.gmra.mxu0 %v3969
    %v4806 = vpop.f32.mrf.mxu0
    %v4807 = vadd.f32 %v4793, %v4806
    %v4808 = vpop.f32.mrf.mxu0
    %v4809 = vadd.f32 %v4795, %v4808
    %4810 = vdwg.mxu0
    %4811 = vmatpush.bf16.msra.mxu0 %v2809
    %4812 = vmatpush.bf16.msra.mxu0 %v2791
    %4813 = vmatpush.bf16.msra.mxu0 %v2773
    %4814 = vmatpush.bf16.msra.mxu0 %v2755
    %4815 = vmatpush.bf16.msra.mxu0 %v2737
    %4816 = vmatpush.bf16.msra.mxu0 %v2719
    %4817 = vmatpush.bf16.msra.mxu0 %v2701
    %4818 = vmatpush.bf16.msra.mxu0 %v2683
    %4819 = vmatmul.bf16.gmra.mxu0 %v32
    %v4820 = vpop.f32.mrf.mxu0
    %v4821 = vadd.f32 %v703, %v4820
    %v4822 = vpop.f32.mrf.mxu0
    %v4823 = vadd.f32 %v703, %v4822
    %4824 = vdwg.mxu0
    %4825 = vmatpush.bf16.msra.mxu0 %v2953
    %4826 = vmatpush.bf16.msra.mxu0 %v2935
    %4827 = vmatpush.bf16.msra.mxu0 %v2917
    %4828 = vmatpush.bf16.msra.mxu0 %v2899
    %4829 = vmatpush.bf16.msra.mxu0 %v2881
    %4830 = vmatpush.bf16.msra.mxu0 %v2863
    %4831 = vmatpush.bf16.msra.mxu0 %v2845
    %4832 = vmatpush.bf16.msra.mxu0 %v2827
    %4833 = vmatmul.bf16.gmra.mxu0 %v33
    %v4834 = vpop.f32.mrf.mxu0
    %v4835 = vadd.f32 %v4821, %v4834
    %v4836 = vpop.f32.mrf.mxu0
    %v4837 = vadd.f32 %v4823, %v4836
    %4838 = vdwg.mxu0
    %4839 = vmatpush.bf16.msra.mxu0 %v3097
    %4840 = vmatpush.bf16.msra.mxu0 %v3079
    %4841 = vmatpush.bf16.msra.mxu0 %v3061
    %4842 = vmatpush.bf16.msra.mxu0 %v3043
    %4843 = vmatpush.bf16.msra.mxu0 %v3025
    %4844 = vmatpush.bf16.msra.mxu0 %v3007
    %4845 = vmatpush.bf16.msra.mxu0 %v2989
    %4846 = vmatpush.bf16.msra.mxu0 %v2971
    %4847 = vmatmul.bf16.gmra.mxu0 %v34
    %v4848 = vpop.f32.mrf.mxu0
    %v4849 = vadd.f32 %v4835, %v4848
    %v4850 = vpop.f32.mrf.mxu0
    %v4851 = vadd.f32 %v4837, %v4850
    %4852 = vdwg.mxu0
    %4853 = vmatpush.bf16.msra.mxu0 %v3241
    %4854 = vmatpush.bf16.msra.mxu0 %v3223
    %4855 = vmatpush.bf16.msra.mxu0 %v3205
    %4856 = vmatpush.bf16.msra.mxu0 %v3187
    %4857 = vmatpush.bf16.msra.mxu0 %v3169
    %4858 = vmatpush.bf16.msra.mxu0 %v3151
    %4859 = vmatpush.bf16.msra.mxu0 %v3133
    %4860 = vmatpush.bf16.msra.mxu0 %v3115
    %4861 = vmatmul.bf16.gmra.mxu0 %v35
    %v4862 = vpop.f32.mrf.mxu0
    %v4863 = vadd.f32 %v4849, %v4862
    %v4864 = vpop.f32.mrf.mxu0
    %v4865 = vadd.f32 %v4851, %v4864
    %4866 = vdwg.mxu0
    %4867 = vmatpush.bf16.msra.mxu0 0
    %4868 = vmatpush.bf16.msra.mxu0 0
    %4869 = vmatpush.bf16.msra.mxu0 0
    %4870 = vmatpush.bf16.msra.mxu0 0
    %4871 = vmatpush.bf16.msra.mxu0 %v3313
    %4872 = vmatpush.bf16.msra.mxu0 %v3295
    %4873 = vmatpush.bf16.msra.mxu0 %v3277
    %4874 = vmatpush.bf16.msra.mxu0 %v3259
    %4875 = vmatmul.bf16.gmra.mxu0 %v3969
    %v4876 = vpop.f32.mrf.mxu0
    %v4877 = vadd.f32 %v4863, %v4876
    %v4878 = vpop.f32.mrf.mxu0
    %v4879 = vadd.f32 %v4865, %v4878
    %4880 = vdwg.mxu0
    %4881 = vmatpush.bf16.msra.mxu0 %v2810
    %4882 = vmatpush.bf16.msra.mxu0 %v2792
    %4883 = vmatpush.bf16.msra.mxu0 %v2774
    %4884 = vmatpush.bf16.msra.mxu0 %v2756
    %4885 = vmatpush.bf16.msra.mxu0 %v2738
    %4886 = vmatpush.bf16.msra.mxu0 %v2720
    %4887 = vmatpush.bf16.msra.mxu0 %v2702
    %4888 = vmatpush.bf16.msra.mxu0 %v2684
    %4889 = vmatmul.bf16.gmra.mxu0 %v32
    %v4890 = vpop.f32.mrf.mxu0
    %v4891 = vadd.f32 %v704, %v4890
    %v4892 = vpop.f32.mrf.mxu0
    %v4893 = vadd.f32 %v704, %v4892
    %4894 = vdwg.mxu0
    %4895 = vmatpush.bf16.msra.mxu0 %v2954
    %4896 = vmatpush.bf16.msra.mxu0 %v2936
    %4897 = vmatpush.bf16.msra.mxu0 %v2918
    %4898 = vmatpush.bf16.msra.mxu0 %v2900
    %4899 = vmatpush.bf16.msra.mxu0 %v2882
    %4900 = vmatpush.bf16.msra.mxu0 %v2864
    %4901 = vmatpush.bf16.msra.mxu0 %v2846
    %4902 = vmatpush.bf16.msra.mxu0 %v2828
    %4903 = vmatmul.bf16.gmra.mxu0 %v33
    %v4904 = vpop.f32.mrf.mxu0
    %v4905 = vadd.f32 %v4891, %v4904
    %v4906 = vpop.f32.mrf.mxu0
    %v4907 = vadd.f32 %v4893, %v4906
    %4908 = vdwg.mxu0
    %4909 = vmatpush.bf16.msra.mxu0 %v3098
    %4910 = vmatpush.bf16.msra.mxu0 %v3080
    %4911 = vmatpush.bf16.msra.mxu0 %v3062
    %4912 = vmatpush.bf16.msra.mxu0 %v3044
    %4913 = vmatpush.bf16.msra.mxu0 %v3026
    %4914 = vmatpush.bf16.msra.mxu0 %v3008
    %4915 = vmatpush.bf16.msra.mxu0 %v2990
    %4916 = vmatpush.bf16.msra.mxu0 %v2972
    %4917 = vmatmul.bf16.gmra.mxu0 %v34
    %v4918 = vpop.f32.mrf.mxu0
    %v4919 = vadd.f32 %v4905, %v4918
    %v4920 = vpop.f32.mrf.mxu0
    %v4921 = vadd.f32 %v4907, %v4920
    %4922 = vdwg.mxu0
    %4923 = vmatpush.bf16.msra.mxu0 %v3242
    %4924 = vmatpush.bf16.msra.mxu0 %v3224
    %4925 = vmatpush.bf16.msra.mxu0 %v3206
    %4926 = vmatpush.bf16.msra.mxu0 %v3188
    %4927 = vmatpush.bf16.msra.mxu0 %v3170
    %4928 = vmatpush.bf16.msra.mxu0 %v3152
    %4929 = vmatpush.bf16.msra.mxu0 %v3134
    %4930 = vmatpush.bf16.msra.mxu0 %v3116
    %4931 = vmatmul.bf16.gmra.mxu0 %v35
    %v4932 = vpop.f32.mrf.mxu0
    %v4933 = vadd.f32 %v4919, %v4932
    %v4934 = vpop.f32.mrf.mxu0
    %v4935 = vadd.f32 %v4921, %v4934
    %4936 = vdwg.mxu0
    %4937 = vmatpush.bf16.msra.mxu0 0
    %4938 = vmatpush.bf16.msra.mxu0 0
    %4939 = vmatpush.bf16.msra.mxu0 0
    %4940 = vmatpush.bf16.msra.mxu0 0
    %4941 = vmatpush.bf16.msra.mxu0 %v3314
    %4942 = vmatpush.bf16.msra.mxu0 %v3296
    %4943 = vmatpush.bf16.msra.mxu0 %v3278
    %4944 = vmatpush.bf16.msra.mxu0 %v3260
    %4945 = vmatmul.bf16.gmra.mxu0 %v3969
    %v4946 = vpop.f32.mrf.mxu0
    %v4947 = vadd.f32 %v4933, %v4946
    %v4948 = vpop.f32.mrf.mxu0
    %v4949 = vadd.f32 %v4935, %v4948
    %4950 = vdwg.mxu0
    %4951 = vmatpush.bf16.msra.mxu0 %v2811
    %4952 = vmatpush.bf16.msra.mxu0 %v2793
    %4953 = vmatpush.bf16.msra.mxu0 %v2775
    %4954 = vmatpush.bf16.msra.mxu0 %v2757
    %4955 = vmatpush.bf16.msra.mxu0 %v2739
    %4956 = vmatpush.bf16.msra.mxu0 %v2721
    %4957 = vmatpush.bf16.msra.mxu0 %v2703
    %4958 = vmatpush.bf16.msra.mxu0 %v2685
    %4959 = vmatmul.bf16.gmra.mxu0 %v32
    %v4960 = vpop.f32.mrf.mxu0
    %v4961 = vadd.f32 %v705, %v4960
    %v4962 = vpop.f32.mrf.mxu0
    %v4963 = vadd.f32 %v705, %v4962
    %4964 = vdwg.mxu0
    %4965 = vmatpush.bf16.msra.mxu0 %v2955
    %4966 = vmatpush.bf16.msra.mxu0 %v2937
    %4967 = vmatpush.bf16.msra.mxu0 %v2919
    %4968 = vmatpush.bf16.msra.mxu0 %v2901
    %4969 = vmatpush.bf16.msra.mxu0 %v2883
    %4970 = vmatpush.bf16.msra.mxu0 %v2865
    %4971 = vmatpush.bf16.msra.mxu0 %v2847
    %4972 = vmatpush.bf16.msra.mxu0 %v2829
    %4973 = vmatmul.bf16.gmra.mxu0 %v33
    %v4974 = vpop.f32.mrf.mxu0
    %v4975 = vadd.f32 %v4961, %v4974
    %v4976 = vpop.f32.mrf.mxu0
    %v4977 = vadd.f32 %v4963, %v4976
    %4978 = vdwg.mxu0
    %4979 = vmatpush.bf16.msra.mxu0 %v3099
    %4980 = vmatpush.bf16.msra.mxu0 %v3081
    %4981 = vmatpush.bf16.msra.mxu0 %v3063
    %4982 = vmatpush.bf16.msra.mxu0 %v3045
    %4983 = vmatpush.bf16.msra.mxu0 %v3027
    %4984 = vmatpush.bf16.msra.mxu0 %v3009
    %4985 = vmatpush.bf16.msra.mxu0 %v2991
    %4986 = vmatpush.bf16.msra.mxu0 %v2973
    %4987 = vmatmul.bf16.gmra.mxu0 %v34
    %v4988 = vpop.f32.mrf.mxu0
    %v4989 = vadd.f32 %v4975, %v4988
    %v4990 = vpop.f32.mrf.mxu0
    %v4991 = vadd.f32 %v4977, %v4990
    %4992 = vdwg.mxu0
    %4993 = vmatpush.bf16.msra.mxu0 %v3243
    %4994 = vmatpush.bf16.msra.mxu0 %v3225
    %4995 = vmatpush.bf16.msra.mxu0 %v3207
    %4996 = vmatpush.bf16.msra.mxu0 %v3189
    %4997 = vmatpush.bf16.msra.mxu0 %v3171
    %4998 = vmatpush.bf16.msra.mxu0 %v3153
    %4999 = vmatpush.bf16.msra.mxu0 %v3135
    %5000 = vmatpush.bf16.msra.mxu0 %v3117
    %5001 = vmatmul.bf16.gmra.mxu0 %v35
    %v5002 = vpop.f32.mrf.mxu0
    %v5003 = vadd.f32 %v4989, %v5002
    %v5004 = vpop.f32.mrf.mxu0
    %v5005 = vadd.f32 %v4991, %v5004
    %5006 = vdwg.mxu0
    %5007 = vmatpush.bf16.msra.mxu0 0
    %5008 = vmatpush.bf16.msra.mxu0 0
    %5009 = vmatpush.bf16.msra.mxu0 0
    %5010 = vmatpush.bf16.msra.mxu0 0
    %5011 = vmatpush.bf16.msra.mxu0 %v3315
    %5012 = vmatpush.bf16.msra.mxu0 %v3297
    %5013 = vmatpush.bf16.msra.mxu0 %v3279
    %5014 = vmatpush.bf16.msra.mxu0 %v3261
    %5015 = vmatmul.bf16.gmra.mxu0 %v3969
    %v5016 = vpop.f32.mrf.mxu0
    %v5017 = vadd.f32 %v5003, %v5016
    %v5018 = vpop.f32.mrf.mxu0
    %v5019 = vadd.f32 %v5005, %v5018
    %5020 = vdwg.mxu0
    %5021 = vmatpush.bf16.msra.mxu0 %v2812
    %5022 = vmatpush.bf16.msra.mxu0 %v2794
    %5023 = vmatpush.bf16.msra.mxu0 %v2776
    %5024 = vmatpush.bf16.msra.mxu0 %v2758
    %5025 = vmatpush.bf16.msra.mxu0 %v2740
    %5026 = vmatpush.bf16.msra.mxu0 %v2722
    %5027 = vmatpush.bf16.msra.mxu0 %v2704
    %5028 = vmatpush.bf16.msra.mxu0 %v2686
    %5029 = vmatmul.bf16.gmra.mxu0 %v32
    %v5030 = vpop.f32.mrf.mxu0
    %v5031 = vadd.f32 %v706, %v5030
    %v5032 = vpop.f32.mrf.mxu0
    %v5033 = vadd.f32 %v706, %v5032
    %5034 = vdwg.mxu0
    %5035 = vmatpush.bf16.msra.mxu0 %v2956
    %5036 = vmatpush.bf16.msra.mxu0 %v2938
    %5037 = vmatpush.bf16.msra.mxu0 %v2920
    %5038 = vmatpush.bf16.msra.mxu0 %v2902
    %5039 = vmatpush.bf16.msra.mxu0 %v2884
    %5040 = vmatpush.bf16.msra.mxu0 %v2866
    %5041 = vmatpush.bf16.msra.mxu0 %v2848
    %5042 = vmatpush.bf16.msra.mxu0 %v2830
    %5043 = vmatmul.bf16.gmra.mxu0 %v33
    %v5044 = vpop.f32.mrf.mxu0
    %v5045 = vadd.f32 %v5031, %v5044
    %v5046 = vpop.f32.mrf.mxu0
    %v5047 = vadd.f32 %v5033, %v5046
    %5048 = vdwg.mxu0
    %5049 = vmatpush.bf16.msra.mxu0 %v3100
    %5050 = vmatpush.bf16.msra.mxu0 %v3082
    %5051 = vmatpush.bf16.msra.mxu0 %v3064
    %5052 = vmatpush.bf16.msra.mxu0 %v3046
    %5053 = vmatpush.bf16.msra.mxu0 %v3028
    %5054 = vmatpush.bf16.msra.mxu0 %v3010
    %5055 = vmatpush.bf16.msra.mxu0 %v2992
    %5056 = vmatpush.bf16.msra.mxu0 %v2974
    %5057 = vmatmul.bf16.gmra.mxu0 %v34
    %v5058 = vpop.f32.mrf.mxu0
    %v5059 = vadd.f32 %v5045, %v5058
    %v5060 = vpop.f32.mrf.mxu0
    %v5061 = vadd.f32 %v5047, %v5060
    %5062 = vdwg.mxu0
    %5063 = vmatpush.bf16.msra.mxu0 %v3244
    %5064 = vmatpush.bf16.msra.mxu0 %v3226
    %5065 = vmatpush.bf16.msra.mxu0 %v3208
    %5066 = vmatpush.bf16.msra.mxu0 %v3190
    %5067 = vmatpush.bf16.msra.mxu0 %v3172
    %5068 = vmatpush.bf16.msra.mxu0 %v3154
    %5069 = vmatpush.bf16.msra.mxu0 %v3136
    %5070 = vmatpush.bf16.msra.mxu0 %v3118
    %5071 = vmatmul.bf16.gmra.mxu0 %v35
    %v5072 = vpop.f32.mrf.mxu0
    %v5073 = vadd.f32 %v5059, %v5072
    %v5074 = vpop.f32.mrf.mxu0
    %v5075 = vadd.f32 %v5061, %v5074
    %5076 = vdwg.mxu0
    %5077 = vmatpush.bf16.msra.mxu0 0
    %5078 = vmatpush.bf16.msra.mxu0 0
    %5079 = vmatpush.bf16.msra.mxu0 0
    %5080 = vmatpush.bf16.msra.mxu0 0
    %5081 = vmatpush.bf16.msra.mxu0 %v3316
    %5082 = vmatpush.bf16.msra.mxu0 %v3298
    %5083 = vmatpush.bf16.msra.mxu0 %v3280
    %5084 = vmatpush.bf16.msra.mxu0 %v3262
    %5085 = vmatmul.bf16.gmra.mxu0 %v3969
    %v5086 = vpop.f32.mrf.mxu0
    %v5087 = vadd.f32 %v5073, %v5086
    %v5088 = vpop.f32.mrf.mxu0
    %v5089 = vadd.f32 %v5075, %v5088
    %5090 = vdwg.mxu0
    %5091 = vmatpush.bf16.msra.mxu0 %v2813
    %5092 = vmatpush.bf16.msra.mxu0 %v2795
    %5093 = vmatpush.bf16.msra.mxu0 %v2777
    %5094 = vmatpush.bf16.msra.mxu0 %v2759
    %5095 = vmatpush.bf16.msra.mxu0 %v2741
    %5096 = vmatpush.bf16.msra.mxu0 %v2723
    %5097 = vmatpush.bf16.msra.mxu0 %v2705
    %5098 = vmatpush.bf16.msra.mxu0 %v2687
    %5099 = vmatmul.bf16.gmra.mxu0 %v32
    %v5100 = vpop.f32.mrf.mxu0
    %v5101 = vadd.f32 %v707, %v5100
    %v5102 = vpop.f32.mrf.mxu0
    %v5103 = vadd.f32 %v707, %v5102
    %5104 = vdwg.mxu0
    %5105 = vmatpush.bf16.msra.mxu0 %v2957
    %5106 = vmatpush.bf16.msra.mxu0 %v2939
    %5107 = vmatpush.bf16.msra.mxu0 %v2921
    %5108 = vmatpush.bf16.msra.mxu0 %v2903
    %5109 = vmatpush.bf16.msra.mxu0 %v2885
    %5110 = vmatpush.bf16.msra.mxu0 %v2867
    %5111 = vmatpush.bf16.msra.mxu0 %v2849
    %5112 = vmatpush.bf16.msra.mxu0 %v2831
    %5113 = vmatmul.bf16.gmra.mxu0 %v33
    %v5114 = vpop.f32.mrf.mxu0
    %v5115 = vadd.f32 %v5101, %v5114
    %v5116 = vpop.f32.mrf.mxu0
    %v5117 = vadd.f32 %v5103, %v5116
    %5118 = vdwg.mxu0
    %5119 = vmatpush.bf16.msra.mxu0 %v3101
    %5120 = vmatpush.bf16.msra.mxu0 %v3083
    %5121 = vmatpush.bf16.msra.mxu0 %v3065
    %5122 = vmatpush.bf16.msra.mxu0 %v3047
    %5123 = vmatpush.bf16.msra.mxu0 %v3029
    %5124 = vmatpush.bf16.msra.mxu0 %v3011
    %5125 = vmatpush.bf16.msra.mxu0 %v2993
    %5126 = vmatpush.bf16.msra.mxu0 %v2975
    %5127 = vmatmul.bf16.gmra.mxu0 %v34
    %v5128 = vpop.f32.mrf.mxu0
    %v5129 = vadd.f32 %v5115, %v5128
    %v5130 = vpop.f32.mrf.mxu0
    %v5131 = vadd.f32 %v5117, %v5130
    %5132 = vdwg.mxu0
    %5133 = vmatpush.bf16.msra.mxu0 %v3245
    %5134 = vmatpush.bf16.msra.mxu0 %v3227
    %5135 = vmatpush.bf16.msra.mxu0 %v3209
    %5136 = vmatpush.bf16.msra.mxu0 %v3191
    %5137 = vmatpush.bf16.msra.mxu0 %v3173
    %5138 = vmatpush.bf16.msra.mxu0 %v3155
    %5139 = vmatpush.bf16.msra.mxu0 %v3137
    %5140 = vmatpush.bf16.msra.mxu0 %v3119
    %5141 = vmatmul.bf16.gmra.mxu0 %v35
    %v5142 = vpop.f32.mrf.mxu0
    %v5143 = vadd.f32 %v5129, %v5142
    %v5144 = vpop.f32.mrf.mxu0
    %v5145 = vadd.f32 %v5131, %v5144
    %5146 = vdwg.mxu0
    %5147 = vmatpush.bf16.msra.mxu0 0
    %5148 = vmatpush.bf16.msra.mxu0 0
    %5149 = vmatpush.bf16.msra.mxu0 0
    %5150 = vmatpush.bf16.msra.mxu0 0
    %5151 = vmatpush.bf16.msra.mxu0 %v3317
    %5152 = vmatpush.bf16.msra.mxu0 %v3299
    %5153 = vmatpush.bf16.msra.mxu0 %v3281
    %5154 = vmatpush.bf16.msra.mxu0 %v3263
    %5155 = vmatmul.bf16.gmra.mxu0 %v3969
    %v5156 = vpop.f32.mrf.mxu0
    %v5157 = vadd.f32 %v5143, %v5156
    %v5158 = vpop.f32.mrf.mxu0
    %v5159 = vadd.f32 %v5145, %v5158
    %5160 = vdwg.mxu0
    %5161 = vmatpush.bf16.msra.mxu0 %v2814
    %5162 = vmatpush.bf16.msra.mxu0 %v2796
    %5163 = vmatpush.bf16.msra.mxu0 %v2778
    %5164 = vmatpush.bf16.msra.mxu0 %v2760
    %5165 = vmatpush.bf16.msra.mxu0 %v2742
    %5166 = vmatpush.bf16.msra.mxu0 %v2724
    %5167 = vmatpush.bf16.msra.mxu0 %v2706
    %5168 = vmatpush.bf16.msra.mxu0 %v2688
    %5169 = vmatmul.bf16.gmra.mxu0 %v32
    %v5170 = vpop.f32.mrf.mxu0
    %v5171 = vadd.f32 %v708, %v5170
    %v5172 = vpop.f32.mrf.mxu0
    %v5173 = vadd.f32 %v708, %v5172
    %5174 = vdwg.mxu0
    %5175 = vmatpush.bf16.msra.mxu0 %v2958
    %5176 = vmatpush.bf16.msra.mxu0 %v2940
    %5177 = vmatpush.bf16.msra.mxu0 %v2922
    %5178 = vmatpush.bf16.msra.mxu0 %v2904
    %5179 = vmatpush.bf16.msra.mxu0 %v2886
    %5180 = vmatpush.bf16.msra.mxu0 %v2868
    %5181 = vmatpush.bf16.msra.mxu0 %v2850
    %5182 = vmatpush.bf16.msra.mxu0 %v2832
    %5183 = vmatmul.bf16.gmra.mxu0 %v33
    %v5184 = vpop.f32.mrf.mxu0
    %v5185 = vadd.f32 %v5171, %v5184
    %v5186 = vpop.f32.mrf.mxu0
    %v5187 = vadd.f32 %v5173, %v5186
    %5188 = vdwg.mxu0
    %5189 = vmatpush.bf16.msra.mxu0 %v3102
    %5190 = vmatpush.bf16.msra.mxu0 %v3084
    %5191 = vmatpush.bf16.msra.mxu0 %v3066
    %5192 = vmatpush.bf16.msra.mxu0 %v3048
    %5193 = vmatpush.bf16.msra.mxu0 %v3030
    %5194 = vmatpush.bf16.msra.mxu0 %v3012
    %5195 = vmatpush.bf16.msra.mxu0 %v2994
    %5196 = vmatpush.bf16.msra.mxu0 %v2976
    %5197 = vmatmul.bf16.gmra.mxu0 %v34
    %v5198 = vpop.f32.mrf.mxu0
    %v5199 = vadd.f32 %v5185, %v5198
    %v5200 = vpop.f32.mrf.mxu0
    %v5201 = vadd.f32 %v5187, %v5200
    %5202 = vdwg.mxu0
    %5203 = vmatpush.bf16.msra.mxu0 %v3246
    %5204 = vmatpush.bf16.msra.mxu0 %v3228
    %5205 = vmatpush.bf16.msra.mxu0 %v3210
    %5206 = vmatpush.bf16.msra.mxu0 %v3192
    %5207 = vmatpush.bf16.msra.mxu0 %v3174
    %5208 = vmatpush.bf16.msra.mxu0 %v3156
    %5209 = vmatpush.bf16.msra.mxu0 %v3138
    %5210 = vmatpush.bf16.msra.mxu0 %v3120
    %5211 = vmatmul.bf16.gmra.mxu0 %v35
    %v5212 = vpop.f32.mrf.mxu0
    %v5213 = vadd.f32 %v5199, %v5212
    %v5214 = vpop.f32.mrf.mxu0
    %v5215 = vadd.f32 %v5201, %v5214
    %5216 = vdwg.mxu0
    %5217 = vmatpush.bf16.msra.mxu0 0
    %5218 = vmatpush.bf16.msra.mxu0 0
    %5219 = vmatpush.bf16.msra.mxu0 0
    %5220 = vmatpush.bf16.msra.mxu0 0
    %5221 = vmatpush.bf16.msra.mxu0 %v3318
    %5222 = vmatpush.bf16.msra.mxu0 %v3300
    %5223 = vmatpush.bf16.msra.mxu0 %v3282
    %5224 = vmatpush.bf16.msra.mxu0 %v3264
    %5225 = vmatmul.bf16.gmra.mxu0 %v3969
    %v5226 = vpop.f32.mrf.mxu0
    %v5227 = vadd.f32 %v5213, %v5226
    %v5228 = vpop.f32.mrf.mxu0
    %v5229 = vadd.f32 %v5215, %v5228
    %5230 = vdwg.mxu0
    %v5231 = vmax.f32 %v4037, 0.0
    %v5232 = vmax.f32 %v4107, 0.0
    %v5233 = vmax.f32 %v4177, 0.0
    %v5234 = vmax.f32 %v4247, 0.0
    %v5235 = vmax.f32 %v4317, 0.0
    %v5236 = vmax.f32 %v4387, 0.0
    %v5237 = vmax.f32 %v4457, 0.0
    %v5238 = vmax.f32 %v4527, 0.0
    %v5239 = vmax.f32 %v4597, 0.0
    %v5240 = vmax.f32 %v4667, 0.0
    %v5241 = vmax.f32 %v4737, 0.0
    %v5242 = vmax.f32 %v4807, 0.0
    %v5243 = vmax.f32 %v4877, 0.0
    %v5244 = vmax.f32 %v4947, 0.0
    %v5245 = vmax.f32 %v5017, 0.0
    %v5246 = vmax.f32 %v5087, 0.0
    %v5247 = vmax.f32 %v5157, 0.0
    %v5248 = vmax.f32 %v5227, 0.0
    %v5249 = vmax.f32 %v4039, 0.0
    %v5250 = vmax.f32 %v4109, 0.0
    %v5251 = vmax.f32 %v4179, 0.0
    %v5252 = vmax.f32 %v4249, 0.0
    %v5253 = vmax.f32 %v4319, 0.0
    %v5254 = vmax.f32 %v4389, 0.0
    %v5255 = vmax.f32 %v4459, 0.0
    %v5256 = vmax.f32 %v4529, 0.0
    %v5257 = vmax.f32 %v4599, 0.0
    %v5258 = vmax.f32 %v4669, 0.0
    %v5259 = vmax.f32 %v4739, 0.0
    %v5260 = vmax.f32 %v4809, 0.0
    %v5261 = vmax.f32 %v4879, 0.0
    %v5262 = vmax.f32 %v4949, 0.0
    %v5263 = vmax.f32 %v5019, 0.0
    %v5264 = vmax.f32 %v5089, 0.0
    %v5265 = vmax.f32 %v5159, 0.0
    %v5266 = vmax.f32 %v5229, 0.0
    %v5267 = vpack.c.bf16 %v5249, %v5231
    %v5268 = vpack.c.bf16 %v5250, %v5232
    %v5269 = vpack.c.bf16 %v5251, %v5233
    %v5270 = vpack.c.bf16 %v5252, %v5234
    %v5271 = vpack.c.bf16 %v5253, %v5235
    %v5272 = vpack.c.bf16 %v5254, %v5236
    %v5273 = vpack.c.bf16 %v5255, %v5237
    %v5274 = vpack.c.bf16 %v5256, %v5238
    %v5275 = vpack.c.bf16 %v5257, %v5239
    %v5276 = vpack.c.bf16 %v5258, %v5240
    %v5277 = vpack.c.bf16 %v5259, %v5241
    %v5278 = vpack.c.bf16 %v5260, %v5242
    %v5279 = vpack.c.bf16 %v5261, %v5243
    %v5280 = vpack.c.bf16 %v5262, %v5244
    %v5281 = vpack.c.bf16 %v5263, %v5245
    %v5282 = vpack.c.bf16 %v5264, %v5246
    %v5283 = vpack.c.bf16 %v5265, %v5247
    %v5284 = vpack.c.bf16 %v5266, %v5248
    %v5285 = vld [vmem:[%s3] sm:$0xff]
    %v5286 = vld [vmem:[%s3 + $0x8] sm:$0xff]
    %v5287 = vld [vmem:[%s3 + $0x10] sm:$0xf]
    %v5288 = vld [vmem:[%s3 + $0x14] sm:$0xff]
    %v5289 = vld [vmem:[%s3 + $0x1c] sm:$0xff]
    %v5290 = vld [vmem:[%s3 + $0x24] sm:$0xf]
    %v5291 = vld [vmem:[%s3 + $0x28] sm:$0xff]
    %v5292 = vld [vmem:[%s3 + $0x30] sm:$0xff]
    %v5293 = vld [vmem:[%s3 + $0x38] sm:$0xf]
    %v5294 = vld [vmem:[%s3 + $0x3c] sm:$0xff]
    %v5295 = vld [vmem:[%s3 + $0x44] sm:$0xff]
    %v5296 = vld [vmem:[%s3 + $0x4c] sm:$0xf]
    %v5297 = vld [vmem:[%s3 + $0x50] sm:$0xff]
    %v5298 = vld [vmem:[%s3 + $0x58] sm:$0xff]
    %v5299 = vld [vmem:[%s3 + $0x60] sm:$0xf]
    %v5300 = vld [vmem:[%s3 + $0x64] sm:$0xff]
    %v5301 = vld [vmem:[%s3 + $0x6c] sm:$0xff]
    %v5302 = vld [vmem:[%s3 + $0x74] sm:$0xf]
    %v5303 = vld [vmem:[%s3 + $0x78] sm:$0xff]
    %v5304 = vld [vmem:[%s3 + $0x80] sm:$0xff]
    %v5305 = vld [vmem:[%s3 + $0x88] sm:$0xf]
    %v5306 = vld [vmem:[%s3 + $0x8c] sm:$0xff]
    %v5307 = vld [vmem:[%s3 + $0x94] sm:$0xff]
    %v5308 = vld [vmem:[%s3 + $0x9c] sm:$0xf]
    %v5309 = vld [vmem:[%s3 + $0xa0] sm:$0xff]
    %v5310 = vld [vmem:[%s3 + $0xa8] sm:$0xff]
    %v5311 = vld [vmem:[%s3 + $0xb0] sm:$0xf]
    %v5312 = vld [vmem:[%s3 + $0xb4] sm:$0xff]
    %v5313 = vld [vmem:[%s3 + $0xbc] sm:$0xff]
    %v5314 = vld [vmem:[%s3 + $0xc4] sm:$0xf]
    %v5315 = vld [vmem:[%s3 + $0xc8] sm:$0xff]
    %v5316 = vld [vmem:[%s3 + $0xd0] sm:$0xff]
    %v5317 = vld [vmem:[%s3 + $0xd8] sm:$0xf]
    %v5318 = vld [vmem:[%s3 + $0xdc] sm:$0xff]
    %v5319 = vld [vmem:[%s3 + $0xe4] sm:$0xff]
    %v5320 = vld [vmem:[%s3 + $0xec] sm:$0xf]
    %v5321 = vld [vmem:[%s3 + $0xf0] sm:$0xff]
    %v5322 = vld [vmem:[%s3 + $0xf8] sm:$0xff]
    %v5323 = vld [vmem:[%s3 + $0x100] sm:$0xf]
    %v5324 = vld [vmem:[%s3 + $0x104] sm:$0xff]
    %v5325 = vld [vmem:[%s3 + $0x10c] sm:$0xff]
    %v5326 = vld [vmem:[%s3 + $0x114] sm:$0xf]
    %v5327 = vld [vmem:[%s3 + $0x118] sm:$0xff]
    %v5328 = vld [vmem:[%s3 + $0x120] sm:$0xff]
    %v5329 = vld [vmem:[%s3 + $0x128] sm:$0xf]
    %v5330 = vld [vmem:[%s3 + $0x12c] sm:$0xff]
    %v5331 = vld [vmem:[%s3 + $0x134] sm:$0xff]
    %v5332 = vld [vmem:[%s3 + $0x13c] sm:$0xf]
    %v5333 = vld [vmem:[%s3 + $0x140] sm:$0xff]
    %v5334 = vld [vmem:[%s3 + $0x148] sm:$0xff]
    %v5335 = vld [vmem:[%s3 + $0x150] sm:$0xf]
    %v5336 = vld [vmem:[%s3 + $0x154] sm:$0xff]
    %v5337 = vld [vmem:[%s3 + $0x15c] sm:$0xff]
    %v5338 = vld [vmem:[%s3 + $0x164] sm:$0xf]
    %v5339 = vld [vmem:[%s3 + $0x168] sm:$0xff]
    %v5340 = vld [vmem:[%s3 + $0x170] sm:$0xff]
    %v5341 = vld [vmem:[%s3 + $0x178] sm:$0xf]
    %v5342 = vld [vmem:[%s3 + $0x17c] sm:$0xff]
    %v5343 = vld [vmem:[%s3 + $0x184] sm:$0xff]
    %v5344 = vld [vmem:[%s3 + $0x18c] sm:$0xf]
    %v5345 = vld [vmem:[%s3 + $0x190] sm:$0xff]
    %v5346 = vld [vmem:[%s3 + $0x198] sm:$0xff]
    %v5347 = vld [vmem:[%s3 + $0x1a0] sm:$0xf]
    %v5348 = vld [vmem:[%s3 + $0x1a4] sm:$0xff]
    %v5349 = vld [vmem:[%s3 + $0x1ac] sm:$0xff]
    %v5350 = vld [vmem:[%s3 + $0x1b4] sm:$0xf]
    %v5351 = vld [vmem:[%s3 + $0x1b8] sm:$0xff]
    %v5352 = vld [vmem:[%s3 + $0x1c0] sm:$0xff]
    %v5353 = vld [vmem:[%s3 + $0x1c8] sm:$0xf]
    %v5354 = vld [vmem:[%s3 + $0x1cc] sm:$0xff]
    %v5355 = vld [vmem:[%s3 + $0x1d4] sm:$0xff]
    %v5356 = vld [vmem:[%s3 + $0x1dc] sm:$0xf]
    %v5357 = vld [vmem:[%s3 + $0x1e0] sm:$0xff]
    %v5358 = vld [vmem:[%s3 + $0x1e8] sm:$0xff]
    %v5359 = vld [vmem:[%s3 + $0x1f0] sm:$0xf]
    %v5360 = vld [vmem:[%s3 + $0x1f4] sm:$0xff]
    %v5361 = vld [vmem:[%s3 + $0x1fc] sm:$0xff]
    %v5362 = vld [vmem:[%s3 + $0x204] sm:$0xf]
    %v5363 = vld [vmem:[%s3 + $0x208] sm:$0xff]
    %v5364 = vld [vmem:[%s3 + $0x210] sm:$0xff]
    %v5365 = vld [vmem:[%s3 + $0x218] sm:$0xf]
    %v5366 = vld [vmem:[%s3 + $0x21c] sm:$0xff]
    %v5367 = vld [vmem:[%s3 + $0x224] sm:$0xff]
    %v5368 = vld [vmem:[%s3 + $0x22c] sm:$0xf]
    %v5369 = vld [vmem:[%s3 + $0x230] sm:$0xff]
    %v5370 = vld [vmem:[%s3 + $0x238] sm:$0xff]
    %v5371 = vld [vmem:[%s3 + $0x240] sm:$0xf]
    %v5372 = vld [vmem:[%s3 + $0x244] sm:$0xff]
    %v5373 = vld [vmem:[%s3 + $0x24c] sm:$0xff]
    %v5374 = vld [vmem:[%s3 + $0x254] sm:$0xf]
    %v5375 = vld [vmem:[%s3 + $0x258] sm:$0xff]
    %v5376 = vld [vmem:[%s3 + $0x260] sm:$0xff]
    %v5377 = vld [vmem:[%s3 + $0x268] sm:$0xf]
    %v5378 = vld [vmem:[%s3 + $0x26c] sm:$0xff]
    %v5379 = vld [vmem:[%s3 + $0x274] sm:$0xff]
    %v5380 = vld [vmem:[%s3 + $0x27c] sm:$0xf]
    %v5381 = vld [vmem:[%s3 + $0x280] sm:$0xff]
    %v5382 = vld [vmem:[%s3 + $0x288] sm:$0xff]
    %v5383 = vld [vmem:[%s3 + $0x290] sm:$0xf]
    %v5384 = vld [vmem:[%s3 + $0x294] sm:$0xff]
    %v5385 = vld [vmem:[%s3 + $0x29c] sm:$0xff]
    %v5386 = vld [vmem:[%s3 + $0x2a4] sm:$0xf]
    %v5387 = vld [vmem:[%s3 + $0x2a8] sm:$0xff]
    %v5388 = vld [vmem:[%s3 + $0x2b0] sm:$0xff]
    %v5389 = vld [vmem:[%s3 + $0x2b8] sm:$0xf]
    %v5390 = vld [vmem:[%s3 + $0x2bc] sm:$0xff]
    %v5391 = vld [vmem:[%s3 + $0x2c4] sm:$0xff]
    %v5392 = vld [vmem:[%s3 + $0x2cc] sm:$0xf]
    %v5393 = vld [vmem:[%s3 + $0x2d0] sm:$0xff]
    %v5394 = vld [vmem:[%s3 + $0x2d8] sm:$0xff]
    %v5395 = vld [vmem:[%s3 + $0x2e0] sm:$0xf]
    %v5396 = vld [vmem:[%s3 + $0x2e4] sm:$0xff]
    %v5397 = vld [vmem:[%s3 + $0x2ec] sm:$0xff]
    %v5398 = vld [vmem:[%s3 + $0x2f4] sm:$0xf]
    %v5399 = vld [vmem:[%s3 + $0x2f8] sm:$0xff]
    %v5400 = vld [vmem:[%s3 + $0x300] sm:$0xff]
    %v5401 = vld [vmem:[%s3 + $0x308] sm:$0xf]
    %v5402 = vld [vmem:[%s3 + $0x30c] sm:$0xff]
    %v5403 = vld [vmem:[%s3 + $0x314] sm:$0xff]
    %v5404 = vld [vmem:[%s3 + $0x31c] sm:$0xf]
    %v5405 = vld [vmem:[%s3 + $0x320] sm:$0xff]
    %v5406 = vld [vmem:[%s3 + $0x328] sm:$0xff]
    %v5407 = vld [vmem:[%s3 + $0x330] sm:$0xf]
    %v5408 = vld [vmem:[%s3 + $0x334] sm:$0xff]
    %v5409 = vld [vmem:[%s3 + $0x33c] sm:$0xff]
    %v5410 = vld [vmem:[%s3 + $0x344] sm:$0xf]
    %v5411 = vld [vmem:[%s3 + $0x348] sm:$0xff]
    %v5412 = vld [vmem:[%s3 + $0x350] sm:$0xff]
    %v5413 = vld [vmem:[%s3 + $0x358] sm:$0xf]
    %v5414 = vld [vmem:[%s3 + $0x35c] sm:$0xff]
    %v5415 = vld [vmem:[%s3 + $0x364] sm:$0xff]
    %v5416 = vld [vmem:[%s3 + $0x36c] sm:$0xf]
    %v5417 = vld [vmem:[%s3 + $0x370] sm:$0xff]
    %v5418 = vld [vmem:[%s3 + $0x378] sm:$0xff]
    %v5419 = vld [vmem:[%s3 + $0x380] sm:$0xf]
    %v5420 = vld [vmem:[%s3 + $0x384] sm:$0xff]
    %v5421 = vld [vmem:[%s3 + $0x38c] sm:$0xff]
    %v5422 = vld [vmem:[%s3 + $0x394] sm:$0xf]
    %v5423 = vld [vmem:[%s3 + $0x398] sm:$0xff]
    %v5424 = vld [vmem:[%s3 + $0x3a0] sm:$0xff]
    %v5425 = vld [vmem:[%s3 + $0x3a8] sm:$0xf]
    %v5426 = vld [vmem:[%s3 + $0x3ac] sm:$0xff]
    %v5427 = vld [vmem:[%s3 + $0x3b4] sm:$0xff]
    %v5428 = vld [vmem:[%s3 + $0x3bc] sm:$0xf]
    %v5429 = vld [vmem:[%s3 + $0x3c0] sm:$0xff]
    %v5430 = vld [vmem:[%s3 + $0x3c8] sm:$0xff]
    %v5431 = vld [vmem:[%s3 + $0x3d0] sm:$0xf]
    %v5432 = vld [vmem:[%s3 + $0x3d4] sm:$0xff]
    %v5433 = vld [vmem:[%s3 + $0x3dc] sm:$0xff]
    %v5434 = vld [vmem:[%s3 + $0x3e4] sm:$0xf]
    %v5435 = vld [vmem:[%s3 + $0x3e8] sm:$0xff]
    %v5436 = vld [vmem:[%s3 + $0x3f0] sm:$0xff]
    %v5437 = vld [vmem:[%s3 + $0x3f8] sm:$0xf]
    %v5438 = vld [vmem:[%s3 + $0x3fc] sm:$0xff]
    %v5439 = vld [vmem:[%s3 + $0x404] sm:$0xff]
    %v5440 = vld [vmem:[%s3 + $0x40c] sm:$0xf]
    %v5441 = vld [vmem:[%s3 + $0x410] sm:$0xff]
    %v5442 = vld [vmem:[%s3 + $0x418] sm:$0xff]
    %v5443 = vld [vmem:[%s3 + $0x420] sm:$0xf]
    %v5444 = vld [vmem:[%s3 + $0x424] sm:$0xff]
    %v5445 = vld [vmem:[%s3 + $0x42c] sm:$0xff]
    %v5446 = vld [vmem:[%s3 + $0x434] sm:$0xf]
    %v5447 = vld [vmem:[%s3 + $0x438] sm:$0xff]
    %v5448 = vld [vmem:[%s3 + $0x440] sm:$0xff]
    %v5449 = vld [vmem:[%s3 + $0x448] sm:$0xf]
    %v5450 = vld [vmem:[%s3 + $0x44c] sm:$0xff]
    %v5451 = vld [vmem:[%s3 + $0x454] sm:$0xff]
    %v5452 = vld [vmem:[%s3 + $0x45c] sm:$0xf]
    %v5453 = vld [vmem:[%s3 + $0x460] sm:$0xff]
    %v5454 = vld [vmem:[%s3 + $0x468] sm:$0xff]
    %v5455 = vld [vmem:[%s3 + $0x470] sm:$0xf]
    %v5456 = vld [vmem:[%s3 + $0x474] sm:$0xff]
    %v5457 = vld [vmem:[%s3 + $0x47c] sm:$0xff]
    %v5458 = vld [vmem:[%s3 + $0x484] sm:$0xf]
    %v5459 = vld [vmem:[%s3 + $0x488] sm:$0xff]
    %v5460 = vld [vmem:[%s3 + $0x490] sm:$0xff]
    %v5461 = vld [vmem:[%s3 + $0x498] sm:$0xf]
    %v5462 = vld [vmem:[%s3 + $0x49c] sm:$0xff]
    %v5463 = vld [vmem:[%s3 + $0x4a4] sm:$0xff]
    %v5464 = vld [vmem:[%s3 + $0x4ac] sm:$0xf]
    %v5465 = vld [vmem:[%s3 + $0x4b0] sm:$0xff]
    %v5466 = vld [vmem:[%s3 + $0x4b8] sm:$0xff]
    %v5467 = vld [vmem:[%s3 + $0x4c0] sm:$0xf]
    %v5468 = vld [vmem:[%s3 + $0x4c4] sm:$0xff]
    %v5469 = vld [vmem:[%s3 + $0x4cc] sm:$0xff]
    %v5470 = vld [vmem:[%s3 + $0x4d4] sm:$0xf]
    %v5471 = vld [vmem:[%s3 + $0x4d8] sm:$0xff]
    %v5472 = vld [vmem:[%s3 + $0x4e0] sm:$0xff]
    %v5473 = vld [vmem:[%s3 + $0x4e8] sm:$0xf]
    %v5474 = vld [vmem:[%s3 + $0x4ec] sm:$0xff]
    %v5475 = vld [vmem:[%s3 + $0x4f4] sm:$0xff]
    %v5476 = vld [vmem:[%s3 + $0x4fc] sm:$0xf]
    %v5477 = vld [vmem:[%s3 + $0x500] sm:$0xff]
    %v5478 = vld [vmem:[%s3 + $0x508] sm:$0xff]
    %v5479 = vld [vmem:[%s3 + $0x510] sm:$0xf]
    %v5480 = vld [vmem:[%s3 + $0x514] sm:$0xff]
    %v5481 = vld [vmem:[%s3 + $0x51c] sm:$0xff]
    %v5482 = vld [vmem:[%s3 + $0x524] sm:$0xf]
    %v5483 = vld [vmem:[%s3 + $0x528] sm:$0xff]
    %v5484 = vld [vmem:[%s3 + $0x530] sm:$0xff]
    %v5485 = vld [vmem:[%s3 + $0x538] sm:$0xf]
    %v5486 = vld [vmem:[%s3 + $0x53c] sm:$0xff]
    %v5487 = vld [vmem:[%s3 + $0x544] sm:$0xff]
    %v5488 = vld [vmem:[%s3 + $0x54c] sm:$0xf]
    %v5489 = vld [vmem:[%s3 + $0x550] sm:$0xff]
    %v5490 = vld [vmem:[%s3 + $0x558] sm:$0xff]
    %v5491 = vld [vmem:[%s3 + $0x560] sm:$0xf]
    %v5492 = vld [vmem:[%s3 + $0x564] sm:$0xff]
    %v5493 = vld [vmem:[%s3 + $0x56c] sm:$0xff]
    %v5494 = vld [vmem:[%s3 + $0x574] sm:$0xf]
    %v5495 = vld [vmem:[%s3 + $0x578] sm:$0xff]
    %v5496 = vld [vmem:[%s3 + $0x580] sm:$0xff]
    %v5497 = vld [vmem:[%s3 + $0x588] sm:$0xf]
    %v5498 = vld [vmem:[%s3 + $0x58c] sm:$0xff]
    %v5499 = vld [vmem:[%s3 + $0x594] sm:$0xff]
    %v5500 = vld [vmem:[%s3 + $0x59c] sm:$0xf]
    %v5501 = vld [vmem:[%s3 + $0x5a0] sm:$0xff]
    %v5502 = vld [vmem:[%s3 + $0x5a8] sm:$0xff]
    %v5503 = vld [vmem:[%s3 + $0x5b0] sm:$0xf]
    %v5504 = vld [vmem:[%s3 + $0x5b4] sm:$0xff]
    %v5505 = vld [vmem:[%s3 + $0x5bc] sm:$0xff]
    %v5506 = vld [vmem:[%s3 + $0x5c4] sm:$0xf]
    %v5507 = vld [vmem:[%s3 + $0x5c8] sm:$0xff]
    %v5508 = vld [vmem:[%s3 + $0x5d0] sm:$0xff]
    %v5509 = vld [vmem:[%s3 + $0x5d8] sm:$0xf]
    %v5510 = vld [vmem:[%s3 + $0x5dc] sm:$0xff]
    %v5511 = vld [vmem:[%s3 + $0x5e4] sm:$0xff]
    %v5512 = vld [vmem:[%s3 + $0x5ec] sm:$0xf]
    %v5513 = vld [vmem:[%s3 + $0x5f0] sm:$0xff]
    %v5514 = vld [vmem:[%s3 + $0x5f8] sm:$0xff]
    %v5515 = vld [vmem:[%s3 + $0x600] sm:$0xf]
    %v5516 = vld [vmem:[%s3 + $0x604] sm:$0xff]
    %v5517 = vld [vmem:[%s3 + $0x60c] sm:$0xff]
    %v5518 = vld [vmem:[%s3 + $0x614] sm:$0xf]
    %v5519 = vld [vmem:[%s3 + $0x618] sm:$0xff]
    %v5520 = vld [vmem:[%s3 + $0x620] sm:$0xff]
    %v5521 = vld [vmem:[%s3 + $0x628] sm:$0xf]
    %v5522 = vld [vmem:[%s3 + $0x62c] sm:$0xff]
    %v5523 = vld [vmem:[%s3 + $0x634] sm:$0xff]
    %v5524 = vld [vmem:[%s3 + $0x63c] sm:$0xf]
    %v5525 = vld [vmem:[%s3 + $0x640] sm:$0xff]
    %v5526 = vld [vmem:[%s3 + $0x648] sm:$0xff]
    %v5527 = vld [vmem:[%s3 + $0x650] sm:$0xf]
    %v5528 = vld [vmem:[%s3 + $0x654] sm:$0xff]
    %v5529 = vld [vmem:[%s3 + $0x65c] sm:$0xff]
    %v5530 = vld [vmem:[%s3 + $0x664] sm:$0xf]
    %v5531 = vld [vmem:[%s3 + $0x668] sm:$0xff]
    %v5532 = vld [vmem:[%s3 + $0x670] sm:$0xff]
    %v5533 = vld [vmem:[%s3 + $0x678] sm:$0xf]
    %v5534 = vld [vmem:[%s3 + $0x67c] sm:$0xff]
    %v5535 = vld [vmem:[%s3 + $0x684] sm:$0xff]
    %v5536 = vld [vmem:[%s3 + $0x68c] sm:$0xf]
    %v5537 = vld [vmem:[%s3 + $0x690] sm:$0xff]
    %v5538 = vld [vmem:[%s3 + $0x698] sm:$0xff]
    %v5539 = vld [vmem:[%s3 + $0x6a0] sm:$0xf]
    %v5540 = vld [vmem:[%s3 + $0x6a4] sm:$0xff]
    %v5541 = vld [vmem:[%s3 + $0x6ac] sm:$0xff]
    %v5542 = vld [vmem:[%s3 + $0x6b4] sm:$0xf]
    %v5543 = vld [vmem:[%s3 + $0x6b8] sm:$0xff]
    %v5544 = vld [vmem:[%s3 + $0x6c0] sm:$0xff]
    %v5545 = vld [vmem:[%s3 + $0x6c8] sm:$0xf]
    %v5546 = vld [vmem:[%s3 + $0x6cc] sm:$0xff]
    %v5547 = vld [vmem:[%s3 + $0x6d4] sm:$0xff]
    %v5548 = vld [vmem:[%s3 + $0x6dc] sm:$0xf]
    %v5549 = vld [vmem:[%s3 + $0x6e0] sm:$0xff]
    %v5550 = vld [vmem:[%s3 + $0x6e8] sm:$0xff]
    %v5551 = vld [vmem:[%s3 + $0x6f0] sm:$0xf]
    %v5552 = vld [vmem:[%s3 + $0x6f4] sm:$0xff]
    %v5553 = vld [vmem:[%s3 + $0x6fc] sm:$0xff]
    %v5554 = vld [vmem:[%s3 + $0x704] sm:$0xf]
    %v5555 = vld [vmem:[%s3 + $0x708] sm:$0xff]
    %v5556 = vld [vmem:[%s3 + $0x710] sm:$0xff]
    %v5557 = vld [vmem:[%s3 + $0x718] sm:$0xf]
    %v5558 = vld [vmem:[%s3 + $0x71c] sm:$0xff]
    %v5559 = vld [vmem:[%s3 + $0x724] sm:$0xff]
    %v5560 = vld [vmem:[%s3 + $0x72c] sm:$0xf]
    %v5561 = vld [vmem:[%s3 + $0x730] sm:$0xff]
    %v5562 = vld [vmem:[%s3 + $0x738] sm:$0xff]
    %v5563 = vld [vmem:[%s3 + $0x740] sm:$0xf]
    %v5564 = vld [vmem:[%s3 + $0x744] sm:$0xff]
    %v5565 = vld [vmem:[%s3 + $0x74c] sm:$0xff]
    %v5566 = vld [vmem:[%s3 + $0x754] sm:$0xf]
    %v5567 = vld [vmem:[%s3 + $0x758] sm:$0xff]
    %v5568 = vld [vmem:[%s3 + $0x760] sm:$0xff]
    %v5569 = vld [vmem:[%s3 + $0x768] sm:$0xf]
    %v5570 = vld [vmem:[%s3 + $0x76c] sm:$0xff]
    %v5571 = vld [vmem:[%s3 + $0x774] sm:$0xff]
    %v5572 = vld [vmem:[%s3 + $0x77c] sm:$0xf]
    %v5573 = vld [vmem:[%s3 + $0x780] sm:$0xff]
    %v5574 = vld [vmem:[%s3 + $0x788] sm:$0xff]
    %v5575 = vld [vmem:[%s3 + $0x790] sm:$0xf]
    %v5576 = vld [vmem:[%s3 + $0x794] sm:$0xff]
    %v5577 = vld [vmem:[%s3 + $0x79c] sm:$0xff]
    %v5578 = vld [vmem:[%s3 + $0x7a4] sm:$0xf]
    %v5579 = vld [vmem:[%s3 + $0x7a8] sm:$0xff]
    %v5580 = vld [vmem:[%s3 + $0x7b0] sm:$0xff]
    %v5581 = vld [vmem:[%s3 + $0x7b8] sm:$0xf]
    %v5582 = vld [vmem:[%s3 + $0x7bc] sm:$0xff]
    %v5583 = vld [vmem:[%s3 + $0x7c4] sm:$0xff]
    %v5584 = vld [vmem:[%s3 + $0x7cc] sm:$0xf]
    %v5585 = vld [vmem:[%s3 + $0x7d0] sm:$0xff]
    %v5586 = vld [vmem:[%s3 + $0x7d8] sm:$0xff]
    %v5587 = vld [vmem:[%s3 + $0x7e0] sm:$0xf]
    %v5588 = vld [vmem:[%s3 + $0x7e4] sm:$0xff]
    %v5589 = vld [vmem:[%s3 + $0x7ec] sm:$0xff]
    %v5590 = vld [vmem:[%s3 + $0x7f4] sm:$0xf]
    %v5591 = vld [vmem:[%s3 + $0x7f8] sm:$0xff]
    %v5592 = vld [vmem:[%s3 + $0x800] sm:$0xff]
    %v5593 = vld [vmem:[%s3 + $0x808] sm:$0xf]
    %v5594 = vld [vmem:[%s3 + $0x80c] sm:$0xff]
    %v5595 = vld [vmem:[%s3 + $0x814] sm:$0xff]
    %v5596 = vld [vmem:[%s3 + $0x81c] sm:$0xf]
    %v5597 = vld [vmem:[%s3 + $0x820] sm:$0xff]
    %v5598 = vld [vmem:[%s3 + $0x828] sm:$0xff]
    %v5599 = vld [vmem:[%s3 + $0x830] sm:$0xf]
    %v5600 = vld [vmem:[%s3 + $0x834] sm:$0xff]
    %v5601 = vld [vmem:[%s3 + $0x83c] sm:$0xff]
    %v5602 = vld [vmem:[%s3 + $0x844] sm:$0xf]
    %v5603 = vld [vmem:[%s3 + $0x848] sm:$0xff]
    %v5604 = vld [vmem:[%s3 + $0x850] sm:$0xff]
    %v5605 = vld [vmem:[%s3 + $0x858] sm:$0xf]
    %v5606 = vld [vmem:[%s3 + $0x85c] sm:$0xff]
    %v5607 = vld [vmem:[%s3 + $0x864] sm:$0xff]
    %v5608 = vld [vmem:[%s3 + $0x86c] sm:$0xf]
    %v5609 = vld [vmem:[%s3 + $0x870] sm:$0xff]
    %v5610 = vld [vmem:[%s3 + $0x878] sm:$0xff]
    %v5611 = vld [vmem:[%s3 + $0x880] sm:$0xf]
    %v5612 = vld [vmem:[%s3 + $0x884] sm:$0xff]
    %v5613 = vld [vmem:[%s3 + $0x88c] sm:$0xff]
    %v5614 = vld [vmem:[%s3 + $0x894] sm:$0xf]
    %v5615 = vld [vmem:[%s3 + $0x898] sm:$0xff]
    %v5616 = vld [vmem:[%s3 + $0x8a0] sm:$0xff]
    %v5617 = vld [vmem:[%s3 + $0x8a8] sm:$0xf]
    %v5618 = vld [vmem:[%s3 + $0x8ac] sm:$0xff]
    %v5619 = vld [vmem:[%s3 + $0x8b4] sm:$0xff]
    %v5620 = vld [vmem:[%s3 + $0x8bc] sm:$0xf]
    %v5621 = vld [vmem:[%s3 + $0x8c0] sm:$0xff]
    %v5622 = vld [vmem:[%s3 + $0x8c8] sm:$0xff]
    %v5623 = vld [vmem:[%s3 + $0x8d0] sm:$0xf]
    %v5624 = vld [vmem:[%s3 + $0x8d4] sm:$0xff]
    %v5625 = vld [vmem:[%s3 + $0x8dc] sm:$0xff]
    %v5626 = vld [vmem:[%s3 + $0x8e4] sm:$0xf]
    %v5627 = vld [vmem:[%s3 + $0x8e8] sm:$0xff]
    %v5628 = vld [vmem:[%s3 + $0x8f0] sm:$0xff]
    %v5629 = vld [vmem:[%s3 + $0x8f8] sm:$0xf]
    %v5630 = vld [vmem:[%s3 + $0x8fc] sm:$0xff]
    %v5631 = vld [vmem:[%s3 + $0x904] sm:$0xff]
    %v5632 = vld [vmem:[%s3 + $0x90c] sm:$0xf]
    %v5633 = vld [vmem:[%s3 + $0x910] sm:$0xff]
    %v5634 = vld [vmem:[%s3 + $0x918] sm:$0xff]
    %v5635 = vld [vmem:[%s3 + $0x920] sm:$0xf]
    %v5636 = vld [vmem:[%s3 + $0x924] sm:$0xff]
    %v5637 = vld [vmem:[%s3 + $0x92c] sm:$0xff]
    %v5638 = vld [vmem:[%s3 + $0x934] sm:$0xf]
    %v5639 = vld [vmem:[%s3 + $0x938] sm:$0xff]
    %v5640 = vld [vmem:[%s3 + $0x940] sm:$0xff]
    %v5641 = vld [vmem:[%s3 + $0x948] sm:$0xf]
    %v5642 = vld [vmem:[%s3 + $0x94c] sm:$0xff]
    %v5643 = vld [vmem:[%s3 + $0x954] sm:$0xff]
    %v5644 = vld [vmem:[%s3 + $0x95c] sm:$0xf]
    %v5645 = vld [vmem:[%s3 + $0x960] sm:$0xff]
    %v5646 = vld [vmem:[%s3 + $0x968] sm:$0xff]
    %v5647 = vld [vmem:[%s3 + $0x970] sm:$0xf]
    %v5648 = vld [vmem:[%s3 + $0x974] sm:$0xff]
    %v5649 = vld [vmem:[%s3 + $0x97c] sm:$0xff]
    %v5650 = vld [vmem:[%s3 + $0x984] sm:$0xf]
    %v5651 = vld [vmem:[%s3 + $0x988] sm:$0xff]
    %v5652 = vld [vmem:[%s3 + $0x990] sm:$0xff]
    %v5653 = vld [vmem:[%s3 + $0x998] sm:$0xf]
    %v5654 = vld [vmem:[%s3 + $0x99c] sm:$0xff]
    %v5655 = vld [vmem:[%s3 + $0x9a4] sm:$0xff]
    %v5656 = vld [vmem:[%s3 + $0x9ac] sm:$0xf]
    %v5657 = vld [vmem:[%s3 + $0x9b0] sm:$0xff]
    %v5658 = vld [vmem:[%s3 + $0x9b8] sm:$0xff]
    %v5659 = vld [vmem:[%s3 + $0x9c0] sm:$0xf]
    %v5660 = vld [vmem:[%s3 + $0x9c4] sm:$0xff]
    %v5661 = vld [vmem:[%s3 + $0x9cc] sm:$0xff]
    %v5662 = vld [vmem:[%s3 + $0x9d4] sm:$0xf]
    %v5663 = vld [vmem:[%s3 + $0x9d8] sm:$0xff]
    %v5664 = vld [vmem:[%s3 + $0x9e0] sm:$0xff]
    %v5665 = vld [vmem:[%s3 + $0x9e8] sm:$0xf]
    %v5666 = vld [vmem:[%s3 + $0x9ec] sm:$0xff]
    %v5667 = vld [vmem:[%s3 + $0x9f4] sm:$0xff]
    %v5668 = vld [vmem:[%s3 + $0x9fc] sm:$0xf]
    %v5669 = vld [vmem:[%s3 + $0xa00] sm:$0xff]
    %v5670 = vld [vmem:[%s3 + $0xa08] sm:$0xff]
    %v5671 = vld [vmem:[%s3 + $0xa10] sm:$0xf]
    %v5672 = vld [vmem:[%s3 + $0xa14] sm:$0xff]
    %v5673 = vld [vmem:[%s3 + $0xa1c] sm:$0xff]
    %v5674 = vld [vmem:[%s3 + $0xa24] sm:$0xf]
    %v5675 = vld [vmem:[%s3 + $0xa28] sm:$0xff]
    %v5676 = vld [vmem:[%s3 + $0xa30] sm:$0xff]
    %v5677 = vld [vmem:[%s3 + $0xa38] sm:$0xf]
    %v5678 = vld [vmem:[%s3 + $0xa3c] sm:$0xff]
    %v5679 = vld [vmem:[%s3 + $0xa44] sm:$0xff]
    %v5680 = vld [vmem:[%s3 + $0xa4c] sm:$0xf]
    %v5681 = vld [vmem:[%s3 + $0xa50] sm:$0xff]
    %v5682 = vld [vmem:[%s3 + $0xa58] sm:$0xff]
    %v5683 = vld [vmem:[%s3 + $0xa60] sm:$0xf]
    %v5684 = vld [vmem:[%s3 + $0xa64] sm:$0xff]
    %v5685 = vld [vmem:[%s3 + $0xa6c] sm:$0xff]
    %v5686 = vld [vmem:[%s3 + $0xa74] sm:$0xf]
    %v5687 = vld [vmem:[%s3 + $0xa78] sm:$0xff]
    %v5688 = vld [vmem:[%s3 + $0xa80] sm:$0xff]
    %v5689 = vld [vmem:[%s3 + $0xa88] sm:$0xf]
    %v5690 = vld [vmem:[%s3 + $0xa8c] sm:$0xff]
    %v5691 = vld [vmem:[%s3 + $0xa94] sm:$0xff]
    %v5692 = vld [vmem:[%s3 + $0xa9c] sm:$0xf]
    %v5693 = vld [vmem:[%s3 + $0xaa0] sm:$0xff]
    %v5694 = vld [vmem:[%s3 + $0xaa8] sm:$0xff]
    %v5695 = vld [vmem:[%s3 + $0xab0] sm:$0xf]
    %v5696 = vld [vmem:[%s3 + $0xab4] sm:$0xff]
    %v5697 = vld [vmem:[%s3 + $0xabc] sm:$0xff]
    %v5698 = vld [vmem:[%s3 + $0xac4] sm:$0xf]
    %v5699 = vld [vmem:[%s3 + $0xac8] sm:$0xff]
    %v5700 = vld [vmem:[%s3 + $0xad0] sm:$0xff]
    %v5701 = vld [vmem:[%s3 + $0xad8] sm:$0xf]
    %v5702 = vld [vmem:[%s3 + $0xadc] sm:$0xff]
    %v5703 = vld [vmem:[%s3 + $0xae4] sm:$0xff]
    %v5704 = vld [vmem:[%s3 + $0xaec] sm:$0xf]
    %v5705 = vld [vmem:[%s3 + $0xaf0] sm:$0xff]
    %v5706 = vld [vmem:[%s3 + $0xaf8] sm:$0xff]
    %v5707 = vld [vmem:[%s3 + $0xb00] sm:$0xf]
    %v5708 = vld [vmem:[%s3 + $0xb04] sm:$0xff]
    %v5709 = vld [vmem:[%s3 + $0xb0c] sm:$0xff]
    %v5710 = vld [vmem:[%s3 + $0xb14] sm:$0xf]
    %v5711 = vld [vmem:[%s3 + $0xb18] sm:$0xff]
    %v5712 = vld [vmem:[%s3 + $0xb20] sm:$0xff]
    %v5713 = vld [vmem:[%s3 + $0xb28] sm:$0xf]
    %v5714 = vld [vmem:[%s3 + $0xb2c] sm:$0xff]
    %v5715 = vld [vmem:[%s3 + $0xb34] sm:$0xff]
    %v5716 = vld [vmem:[%s3 + $0xb3c] sm:$0xf]
    %v5717 = vld [vmem:[%s3 + $0xb40] sm:$0xff]
    %v5718 = vld [vmem:[%s3 + $0xb48] sm:$0xff]
    %v5719 = vld [vmem:[%s3 + $0xb50] sm:$0xf]
    %v5720 = vld [vmem:[%s3 + $0xb54] sm:$0xff]
    %v5721 = vld [vmem:[%s3 + $0xb5c] sm:$0xff]
    %v5722 = vld [vmem:[%s3 + $0xb64] sm:$0xf]
    %v5723 = vld [vmem:[%s3 + $0xb68] sm:$0xff]
    %v5724 = vld [vmem:[%s3 + $0xb70] sm:$0xff]
    %v5725 = vld [vmem:[%s3 + $0xb78] sm:$0xf]
    %v5726 = vld [vmem:[%s3 + $0xb7c] sm:$0xff]
    %v5727 = vld [vmem:[%s3 + $0xb84] sm:$0xff]
    %v5728 = vld [vmem:[%s3 + $0xb8c] sm:$0xf]
    %v5729 = vld [vmem:[%s3 + $0xb90] sm:$0xff]
    %v5730 = vld [vmem:[%s3 + $0xb98] sm:$0xff]
    %v5731 = vld [vmem:[%s3 + $0xba0] sm:$0xf]
    %v5732 = vld [vmem:[%s3 + $0xba4] sm:$0xff]
    %v5733 = vld [vmem:[%s3 + $0xbac] sm:$0xff]
    %v5734 = vld [vmem:[%s3 + $0xbb4] sm:$0xf]
    %v5735 = vld [vmem:[%s3 + $0xbb8] sm:$0xff]
    %v5736 = vld [vmem:[%s3 + $0xbc0] sm:$0xff]
    %v5737 = vld [vmem:[%s3 + $0xbc8] sm:$0xf]
    %v5738 = vld [vmem:[%s3 + $0xbcc] sm:$0xff]
    %v5739 = vld [vmem:[%s3 + $0xbd4] sm:$0xff]
    %v5740 = vld [vmem:[%s3 + $0xbdc] sm:$0xf]
    %v5741 = vld [vmem:[%s3 + $0xbe0] sm:$0xff]
    %v5742 = vld [vmem:[%s3 + $0xbe8] sm:$0xff]
    %v5743 = vld [vmem:[%s3 + $0xbf0] sm:$0xf]
    %v5744 = vld [vmem:[%s3 + $0xbf4] sm:$0xff]
    %v5745 = vld [vmem:[%s3 + $0xbfc] sm:$0xff]
    %v5746 = vld [vmem:[%s3 + $0xc04] sm:$0xf]
    %v5747 = vld [vmem:[%s3 + $0xc08] sm:$0xff]
    %v5748 = vld [vmem:[%s3 + $0xc10] sm:$0xff]
    %v5749 = vld [vmem:[%s3 + $0xc18] sm:$0xf]
    %v5750 = vld [vmem:[%s3 + $0xc1c] sm:$0xff]
    %v5751 = vld [vmem:[%s3 + $0xc24] sm:$0xff]
    %v5752 = vld [vmem:[%s3 + $0xc2c] sm:$0xf]
    %v5753 = vld [vmem:[%s3 + $0xc30] sm:$0xff]
    %v5754 = vld [vmem:[%s3 + $0xc38] sm:$0xff]
    %v5755 = vld [vmem:[%s3 + $0xc40] sm:$0xf]
    %v5756 = vld [vmem:[%s3 + $0xc44] sm:$0xff]
    %v5757 = vld [vmem:[%s3 + $0xc4c] sm:$0xff]
    %v5758 = vld [vmem:[%s3 + $0xc54] sm:$0xf]
    %v5759 = vld [vmem:[%s3 + $0xc58] sm:$0xff]
    %v5760 = vld [vmem:[%s3 + $0xc60] sm:$0xff]
    %v5761 = vld [vmem:[%s3 + $0xc68] sm:$0xf]
    %v5762 = vld [vmem:[%s3 + $0xc6c] sm:$0xff]
    %v5763 = vld [vmem:[%s3 + $0xc74] sm:$0xff]
    %v5764 = vld [vmem:[%s3 + $0xc7c] sm:$0xf]
    %v5765 = vld [vmem:[%s3 + $0xc80] sm:$0xff]
    %v5766 = vld [vmem:[%s3 + $0xc88] sm:$0xff]
    %v5767 = vld [vmem:[%s3 + $0xc90] sm:$0xf]
    %v5768 = vld [vmem:[%s3 + $0xc94] sm:$0xff]
    %v5769 = vld [vmem:[%s3 + $0xc9c] sm:$0xff]
    %v5770 = vld [vmem:[%s3 + $0xca4] sm:$0xf]
    %v5771 = vld [vmem:[%s3 + $0xca8] sm:$0xff]
    %v5772 = vld [vmem:[%s3 + $0xcb0] sm:$0xff]
    %v5773 = vld [vmem:[%s3 + $0xcb8] sm:$0xf]
    %v5774 = vld [vmem:[%s3 + $0xcbc] sm:$0xff]
    %v5775 = vld [vmem:[%s3 + $0xcc4] sm:$0xff]
    %v5776 = vld [vmem:[%s3 + $0xccc] sm:$0xf]
    %v5777 = vld [vmem:[%s3 + $0xcd0] sm:$0xff]
    %v5778 = vld [vmem:[%s3 + $0xcd8] sm:$0xff]
    %v5779 = vld [vmem:[%s3 + $0xce0] sm:$0xf]
    %v5780 = vld [vmem:[%s3 + $0xce4] sm:$0xff]
    %v5781 = vld [vmem:[%s3 + $0xcec] sm:$0xff]
    %v5782 = vld [vmem:[%s3 + $0xcf4] sm:$0xf]
    %v5783 = vld [vmem:[%s3 + $0xcf8] sm:$0xff]
    %v5784 = vld [vmem:[%s3 + $0xd00] sm:$0xff]
    %v5785 = vld [vmem:[%s3 + $0xd08] sm:$0xf]
    %v5786 = vld [vmem:[%s3 + $0xd0c] sm:$0xff]
    %v5787 = vld [vmem:[%s3 + $0xd14] sm:$0xff]
    %v5788 = vld [vmem:[%s3 + $0xd1c] sm:$0xf]
    %v5789 = vld [vmem:[%s3 + $0xd20] sm:$0xff]
    %v5790 = vld [vmem:[%s3 + $0xd28] sm:$0xff]
    %v5791 = vld [vmem:[%s3 + $0xd30] sm:$0xf]
    %v5792 = vld [vmem:[%s3 + $0xd34] sm:$0xff]
    %v5793 = vld [vmem:[%s3 + $0xd3c] sm:$0xff]
    %v5794 = vld [vmem:[%s3 + $0xd44] sm:$0xf]
    %v5795 = vld [vmem:[%s3 + $0xd48] sm:$0xff]
    %v5796 = vld [vmem:[%s3 + $0xd50] sm:$0xff]
    %v5797 = vld [vmem:[%s3 + $0xd58] sm:$0xf]
    %v5798 = vld [vmem:[%s3 + $0xd5c] sm:$0xff]
    %v5799 = vld [vmem:[%s3 + $0xd64] sm:$0xff]
    %v5800 = vld [vmem:[%s3 + $0xd6c] sm:$0xf]
    %v5801 = vld [vmem:[%s3 + $0xd70] sm:$0xff]
    %v5802 = vld [vmem:[%s3 + $0xd78] sm:$0xff]
    %v5803 = vld [vmem:[%s3 + $0xd80] sm:$0xf]
    %v5804 = vld [vmem:[%s3 + $0xd84] sm:$0xff]
    %v5805 = vld [vmem:[%s3 + $0xd8c] sm:$0xff]
    %v5806 = vld [vmem:[%s3 + $0xd94] sm:$0xf]
    %v5807 = vld [vmem:[%s3 + $0xd98] sm:$0xff]
    %v5808 = vld [vmem:[%s3 + $0xda0] sm:$0xff]
    %v5809 = vld [vmem:[%s3 + $0xda8] sm:$0xf]
    %v5810 = vld [vmem:[%s3 + $0xdac] sm:$0xff]
    %v5811 = vld [vmem:[%s3 + $0xdb4] sm:$0xff]
    %v5812 = vld [vmem:[%s3 + $0xdbc] sm:$0xf]
    %v5813 = vld [vmem:[%s3 + $0xdc0] sm:$0xff]
    %v5814 = vld [vmem:[%s3 + $0xdc8] sm:$0xff]
    %v5815 = vld [vmem:[%s3 + $0xdd0] sm:$0xf]
    %v5816 = vld [vmem:[%s3 + $0xdd4] sm:$0xff]
    %v5817 = vld [vmem:[%s3 + $0xddc] sm:$0xff]
    %v5818 = vld [vmem:[%s3 + $0xde4] sm:$0xf]
    %v5819 = vld [vmem:[%s3 + $0xde8] sm:$0xff]
    %v5820 = vld [vmem:[%s3 + $0xdf0] sm:$0xff]
    %v5821 = vld [vmem:[%s3 + $0xdf8] sm:$0xf]
    %v5822 = vld [vmem:[%s3 + $0xdfc] sm:$0xff]
    %v5823 = vld [vmem:[%s3 + $0xe04] sm:$0xff]
    %v5824 = vld [vmem:[%s3 + $0xe0c] sm:$0xf]
    %v5825 = vld [vmem:[%s3 + $0xe10] sm:$0xff]
    %v5826 = vld [vmem:[%s3 + $0xe18] sm:$0xff]
    %v5827 = vld [vmem:[%s3 + $0xe20] sm:$0xf]
    %v5828 = vld [vmem:[%s3 + $0xe24] sm:$0xff]
    %v5829 = vld [vmem:[%s3 + $0xe2c] sm:$0xff]
    %v5830 = vld [vmem:[%s3 + $0xe34] sm:$0xf]
    %v5831 = vld [vmem:[%s3 + $0xe38] sm:$0xff]
    %v5832 = vld [vmem:[%s3 + $0xe40] sm:$0xff]
    %v5833 = vld [vmem:[%s3 + $0xe48] sm:$0xf]
    %v5834 = vld [vmem:[%s3 + $0xe4c] sm:$0xff]
    %v5835 = vld [vmem:[%s3 + $0xe54] sm:$0xff]
    %v5836 = vld [vmem:[%s3 + $0xe5c] sm:$0xf]
    %v5837 = vld [vmem:[%s3 + $0xe60] sm:$0xff]
    %v5838 = vld [vmem:[%s3 + $0xe68] sm:$0xff]
    %v5839 = vld [vmem:[%s3 + $0xe70] sm:$0xf]
    %v5840 = vld [vmem:[%s3 + $0xe74] sm:$0xff]
    %v5841 = vld [vmem:[%s3 + $0xe7c] sm:$0xff]
    %v5842 = vld [vmem:[%s3 + $0xe84] sm:$0xf]
    %v5843 = vld [vmem:[%s3 + $0xe88] sm:$0xff]
    %v5844 = vld [vmem:[%s3 + $0xe90] sm:$0xff]
    %v5845 = vld [vmem:[%s3 + $0xe98] sm:$0xf]
    %v5846 = vld [vmem:[%s3 + $0xe9c] sm:$0xff]
    %v5847 = vld [vmem:[%s3 + $0xea4] sm:$0xff]
    %v5848 = vld [vmem:[%s3 + $0xeac] sm:$0xf]
    %v5849 = vld [vmem:[%s3 + $0xeb0] sm:$0xff]
    %v5850 = vld [vmem:[%s3 + $0xeb8] sm:$0xff]
    %v5851 = vld [vmem:[%s3 + $0xec0] sm:$0xf]
    %v5852 = vld [vmem:[%s3 + $0xec4] sm:$0xff]
    %v5853 = vld [vmem:[%s3 + $0xecc] sm:$0xff]
    %v5854 = vld [vmem:[%s3 + $0xed4] sm:$0xf]
    %v5855 = vld [vmem:[%s3 + $0xed8] sm:$0xff]
    %v5856 = vld [vmem:[%s3 + $0xee0] sm:$0xff]
    %v5857 = vld [vmem:[%s3 + $0xee8] sm:$0xf]
    %v5858 = vld [vmem:[%s3 + $0xeec] sm:$0xff]
    %v5859 = vld [vmem:[%s3 + $0xef4] sm:$0xff]
    %v5860 = vld [vmem:[%s3 + $0xefc] sm:$0xf]
    %v5861 = vld [vmem:[%s3 + $0xf00] sm:$0xff]
    %v5862 = vld [vmem:[%s3 + $0xf08] sm:$0xff]
    %v5863 = vld [vmem:[%s3 + $0xf10] sm:$0xf]
    %v5864 = vld [vmem:[%s3 + $0xf14] sm:$0xff]
    %v5865 = vld [vmem:[%s3 + $0xf1c] sm:$0xff]
    %v5866 = vld [vmem:[%s3 + $0xf24] sm:$0xf]
    %v5867 = vld [vmem:[%s3 + $0xf28] sm:$0xff]
    %v5868 = vld [vmem:[%s3 + $0xf30] sm:$0xff]
    %v5869 = vld [vmem:[%s3 + $0xf38] sm:$0xf]
    %v5870 = vld [vmem:[%s3 + $0xf3c] sm:$0xff]
    %v5871 = vld [vmem:[%s3 + $0xf44] sm:$0xff]
    %v5872 = vld [vmem:[%s3 + $0xf4c] sm:$0xf]
    %v5873 = vld [vmem:[%s3 + $0xf50] sm:$0xff]
    %v5874 = vld [vmem:[%s3 + $0xf58] sm:$0xff]
    %v5875 = vld [vmem:[%s3 + $0xf60] sm:$0xf]
    %v5876 = vld [vmem:[%s3 + $0xf64] sm:$0xff]
    %v5877 = vld [vmem:[%s3 + $0xf6c] sm:$0xff]
    %v5878 = vld [vmem:[%s3 + $0xf74] sm:$0xf]
    %v5879 = vld [vmem:[%s3 + $0xf78] sm:$0xff]
    %v5880 = vld [vmem:[%s3 + $0xf80] sm:$0xff]
    %v5881 = vld [vmem:[%s3 + $0xf88] sm:$0xf]
    %v5882 = vld [vmem:[%s3 + $0xf8c] sm:$0xff]
    %v5883 = vld [vmem:[%s3 + $0xf94] sm:$0xff]
    %v5884 = vld [vmem:[%s3 + $0xf9c] sm:$0xf]
    %v5885 = vld [vmem:[%s3 + $0xfa0] sm:$0xff]
    %v5886 = vld [vmem:[%s3 + $0xfa8] sm:$0xff]
    %v5887 = vld [vmem:[%s3 + $0xfb0] sm:$0xf]
    %v5888 = vld [vmem:[%s3 + $0xfb4] sm:$0xff]
    %v5889 = vld [vmem:[%s3 + $0xfbc] sm:$0xff]
    %v5890 = vld [vmem:[%s3 + $0xfc4] sm:$0xf]
    %v5891 = vld [vmem:[%s3 + $0xfc8] sm:$0xff]
    %v5892 = vld [vmem:[%s3 + $0xfd0] sm:$0xff]
    %v5893 = vld [vmem:[%s3 + $0xfd8] sm:$0xf]
    %v5894 = vld [vmem:[%s3 + $0xfdc] sm:$0xff]
    %v5895 = vld [vmem:[%s3 + $0xfe4] sm:$0xff]
    %v5896 = vld [vmem:[%s3 + $0xfec] sm:$0xf]
    %v5897 = vld [vmem:[%s3 + $0xff0] sm:$0xff]
    %v5898 = vld [vmem:[%s3 + $0xff8] sm:$0xff]
    %v5899 = vld [vmem:[%s3 + $0x1000] sm:$0xf]
    %v5900 = vld [vmem:[%s3 + $0x1004] sm:$0xff]
    %v5901 = vld [vmem:[%s3 + $0x100c] sm:$0xff]
    %v5902 = vld [vmem:[%s3 + $0x1014] sm:$0xf]
    %v5903 = vld [vmem:[%s3 + $0x1018] sm:$0xff]
    %v5904 = vld [vmem:[%s3 + $0x1020] sm:$0xff]
    %v5905 = vld [vmem:[%s3 + $0x1028] sm:$0xf]
    %v5906 = vld [vmem:[%s3 + $0x102c] sm:$0xff]
    %v5907 = vld [vmem:[%s3 + $0x1034] sm:$0xff]
    %v5908 = vld [vmem:[%s3 + $0x103c] sm:$0xf]
    %v5909 = vld [vmem:[%s3 + $0x1040] sm:$0xff]
    %v5910 = vld [vmem:[%s3 + $0x1048] sm:$0xff]
    %v5911 = vld [vmem:[%s3 + $0x1050] sm:$0xf]
    %v5912 = vld [vmem:[%s3 + $0x1054] sm:$0xff]
    %v5913 = vld [vmem:[%s3 + $0x105c] sm:$0xff]
    %v5914 = vld [vmem:[%s3 + $0x1064] sm:$0xf]
    %v5915 = vld [vmem:[%s3 + $0x1068] sm:$0xff]
    %v5916 = vld [vmem:[%s3 + $0x1070] sm:$0xff]
    %v5917 = vld [vmem:[%s3 + $0x1078] sm:$0xf]
    %v5918 = vld [vmem:[%s3 + $0x107c] sm:$0xff]
    %v5919 = vld [vmem:[%s3 + $0x1084] sm:$0xff]
    %v5920 = vld [vmem:[%s3 + $0x108c] sm:$0xf]
    %v5921 = vld [vmem:[%s3 + $0x1090] sm:$0xff]
    %v5922 = vld [vmem:[%s3 + $0x1098] sm:$0xff]
    %v5923 = vld [vmem:[%s3 + $0x10a0] sm:$0xf]
    %v5924 = vld [vmem:[%s3 + $0x10a4] sm:$0xff]
    %v5925 = vld [vmem:[%s3 + $0x10ac] sm:$0xff]
    %v5926 = vld [vmem:[%s3 + $0x10b4] sm:$0xf]
    %v5927 = vld [vmem:[%s3 + $0x10b8] sm:$0xff]
    %v5928 = vld [vmem:[%s3 + $0x10c0] sm:$0xff]
    %v5929 = vld [vmem:[%s3 + $0x10c8] sm:$0xf]
    %v5930 = vld [vmem:[%s3 + $0x10cc] sm:$0xff]
    %v5931 = vld [vmem:[%s3 + $0x10d4] sm:$0xff]
    %v5932 = vld [vmem:[%s3 + $0x10dc] sm:$0xf]
    %v5933 = vld [vmem:[%s3 + $0x10e0] sm:$0xff]
    %v5934 = vld [vmem:[%s3 + $0x10e8] sm:$0xff]
    %v5935 = vld [vmem:[%s3 + $0x10f0] sm:$0xf]
    %v5936 = vld [vmem:[%s3 + $0x10f4] sm:$0xff]
    %v5937 = vld [vmem:[%s3 + $0x10fc] sm:$0xff]
    %v5938 = vld [vmem:[%s3 + $0x1104] sm:$0xf]
    %v5939 = vld [vmem:[%s3 + $0x1108] sm:$0xff]
    %v5940 = vld [vmem:[%s3 + $0x1110] sm:$0xff]
    %v5941 = vld [vmem:[%s3 + $0x1118] sm:$0xf]
    %v5942 = vld [vmem:[%s3 + $0x111c] sm:$0xff]
    %v5943 = vld [vmem:[%s3 + $0x1124] sm:$0xff]
    %v5944 = vld [vmem:[%s3 + $0x112c] sm:$0xf]
    %v5945 = vld [vmem:[%s3 + $0x1130] sm:$0xff]
    %v5946 = vld [vmem:[%s3 + $0x1138] sm:$0xff]
    %v5947 = vld [vmem:[%s3 + $0x1140] sm:$0xf]
    %v5948 = vld [vmem:[%s3 + $0x1144] sm:$0xff]
    %v5949 = vld [vmem:[%s3 + $0x114c] sm:$0xff]
    %v5950 = vld [vmem:[%s3 + $0x1154] sm:$0xf]
    %v5951 = vld [vmem:[%s3 + $0x1158] sm:$0xff]
    %v5952 = vld [vmem:[%s3 + $0x1160] sm:$0xff]
    %v5953 = vld [vmem:[%s3 + $0x1168] sm:$0xf]
    %v5954 = vld [vmem:[%s3 + $0x116c] sm:$0xff]
    %v5955 = vld [vmem:[%s3 + $0x1174] sm:$0xff]
    %v5956 = vld [vmem:[%s3 + $0x117c] sm:$0xf]
    %v5957 = vld [vmem:[%s3 + $0x1180] sm:$0xff]
    %v5958 = vld [vmem:[%s3 + $0x1188] sm:$0xff]
    %v5959 = vld [vmem:[%s3 + $0x1190] sm:$0xf]
    %v5960 = vld [vmem:[%s3 + $0x1194] sm:$0xff]
    %v5961 = vld [vmem:[%s3 + $0x119c] sm:$0xff]
    %v5962 = vld [vmem:[%s3 + $0x11a4] sm:$0xf]
    %v5963 = vld [vmem:[%s3 + $0x11a8] sm:$0xff]
    %v5964 = vld [vmem:[%s3 + $0x11b0] sm:$0xff]
    %v5965 = vld [vmem:[%s3 + $0x11b8] sm:$0xf]
    %v5966 = vld [vmem:[%s3 + $0x11bc] sm:$0xff]
    %v5967 = vld [vmem:[%s3 + $0x11c4] sm:$0xff]
    %v5968 = vld [vmem:[%s3 + $0x11cc] sm:$0xf]
    %v5969 = vld [vmem:[%s3 + $0x11d0] sm:$0xff]
    %v5970 = vld [vmem:[%s3 + $0x11d8] sm:$0xff]
    %v5971 = vld [vmem:[%s3 + $0x11e0] sm:$0xf]
    %v5972 = vld [vmem:[%s3 + $0x11e4] sm:$0xff]
    %v5973 = vld [vmem:[%s3 + $0x11ec] sm:$0xff]
    %v5974 = vld [vmem:[%s3 + $0x11f4] sm:$0xf]
    %v5975 = vld [vmem:[%s3 + $0x11f8] sm:$0xff]
    %v5976 = vld [vmem:[%s3 + $0x1200] sm:$0xff]
    %v5977 = vld [vmem:[%s3 + $0x1208] sm:$0xf]
    %v5978 = vld [vmem:[%s3 + $0x120c] sm:$0xff]
    %v5979 = vld [vmem:[%s3 + $0x1214] sm:$0xff]
    %v5980 = vld [vmem:[%s3 + $0x121c] sm:$0xf]
    %v5981 = vld [vmem:[%s3 + $0x1220] sm:$0xff]
    %v5982 = vld [vmem:[%s3 + $0x1228] sm:$0xff]
    %v5983 = vld [vmem:[%s3 + $0x1230] sm:$0xf]
    %v5984 = vld [vmem:[%s3 + $0x1234] sm:$0xff]
    %v5985 = vld [vmem:[%s3 + $0x123c] sm:$0xff]
    %v5986 = vld [vmem:[%s3 + $0x1244] sm:$0xf]
    %v5987 = vld [vmem:[%s3 + $0x1248] sm:$0xff]
    %v5988 = vld [vmem:[%s3 + $0x1250] sm:$0xff]
    %v5989 = vld [vmem:[%s3 + $0x1258] sm:$0xf]
    %v5990 = vld [vmem:[%s3 + $0x125c] sm:$0xff]
    %v5991 = vld [vmem:[%s3 + $0x1264] sm:$0xff]
    %v5992 = vld [vmem:[%s3 + $0x126c] sm:$0xf]
    %v5993 = vld [vmem:[%s3 + $0x1270] sm:$0xff]
    %v5994 = vld [vmem:[%s3 + $0x1278] sm:$0xff]
    %v5995 = vld [vmem:[%s3 + $0x1280] sm:$0xf]
    %v5996 = vld [vmem:[%s3 + $0x1284] sm:$0xff]
    %v5997 = vld [vmem:[%s3 + $0x128c] sm:$0xff]
    %v5998 = vld [vmem:[%s3 + $0x1294] sm:$0xf]
    %v5999 = vld [vmem:[%s3 + $0x1298] sm:$0xff]
    %v6000 = vld [vmem:[%s3 + $0x12a0] sm:$0xff]
    %v6001 = vld [vmem:[%s3 + $0x12a8] sm:$0xf]
    %v6002 = vld [vmem:[%s3 + $0x12ac] sm:$0xff]
    %v6003 = vld [vmem:[%s3 + $0x12b4] sm:$0xff]
    %v6004 = vld [vmem:[%s3 + $0x12bc] sm:$0xf]
    %v6005 = vld [vmem:[%s3 + $0x12c0] sm:$0xff]
    %v6006 = vld [vmem:[%s3 + $0x12c8] sm:$0xff]
    %v6007 = vld [vmem:[%s3 + $0x12d0] sm:$0xf]
    %v6008 = vld [vmem:[%s3 + $0x12d4] sm:$0xff]
    %v6009 = vld [vmem:[%s3 + $0x12dc] sm:$0xff]
    %v6010 = vld [vmem:[%s3 + $0x12e4] sm:$0xf]
    %v6011 = vld [vmem:[%s3 + $0x12e8] sm:$0xff]
    %v6012 = vld [vmem:[%s3 + $0x12f0] sm:$0xff]
    %v6013 = vld [vmem:[%s3 + $0x12f8] sm:$0xf]
    %v6014 = vld [vmem:[%s3 + $0x12fc] sm:$0xff]
    %v6015 = vld [vmem:[%s3 + $0x1304] sm:$0xff]
    %v6016 = vld [vmem:[%s3 + $0x130c] sm:$0xf]
    %v6017 = vld [vmem:[%s3 + $0x1310] sm:$0xff]
    %v6018 = vld [vmem:[%s3 + $0x1318] sm:$0xff]
    %v6019 = vld [vmem:[%s3 + $0x1320] sm:$0xf]
    %v6020 = vld [vmem:[%s3 + $0x1324] sm:$0xff]
    %v6021 = vld [vmem:[%s3 + $0x132c] sm:$0xff]
    %v6022 = vld [vmem:[%s3 + $0x1334] sm:$0xf]
    %v6023 = vld [vmem:[%s3 + $0x1338] sm:$0xff]
    %v6024 = vld [vmem:[%s3 + $0x1340] sm:$0xff]
    %v6025 = vld [vmem:[%s3 + $0x1348] sm:$0xf]
    %v6026 = vld [vmem:[%s3 + $0x134c] sm:$0xff]
    %v6027 = vld [vmem:[%s3 + $0x1354] sm:$0xff]
    %v6028 = vld [vmem:[%s3 + $0x135c] sm:$0xf]
    %v6029 = vld [vmem:[%s3 + $0x1360] sm:$0xff]
    %v6030 = vld [vmem:[%s3 + $0x1368] sm:$0xff]
    %v6031 = vld [vmem:[%s3 + $0x1370] sm:$0xf]
    %v6032 = vld [vmem:[%s3 + $0x1374] sm:$0xff]
    %v6033 = vld [vmem:[%s3 + $0x137c] sm:$0xff]
    %v6034 = vld [vmem:[%s3 + $0x1384] sm:$0xf]
    %v6035 = vld [vmem:[%s3 + $0x1388] sm:$0xff]
    %v6036 = vld [vmem:[%s3 + $0x1390] sm:$0xff]
    %v6037 = vld [vmem:[%s3 + $0x1398] sm:$0xf]
    %v6038 = vld [vmem:[%s3 + $0x139c] sm:$0xff]
    %v6039 = vld [vmem:[%s3 + $0x13a4] sm:$0xff]
    %v6040 = vld [vmem:[%s3 + $0x13ac] sm:$0xf]
    %v6041 = vld [vmem:[%s3 + $0x13b0] sm:$0xff]
    %v6042 = vld [vmem:[%s3 + $0x13b8] sm:$0xff]
    %v6043 = vld [vmem:[%s3 + $0x13c0] sm:$0xf]
    %v6044 = vld [vmem:[%s3 + $0x13c4] sm:$0xff]
    %v6045 = vld [vmem:[%s3 + $0x13cc] sm:$0xff]
    %v6046 = vld [vmem:[%s3 + $0x13d4] sm:$0xf]
    %v6047 = vld [vmem:[%s3 + $0x13d8] sm:$0xff]
    %v6048 = vld [vmem:[%s3 + $0x13e0] sm:$0xff]
    %v6049 = vld [vmem:[%s3 + $0x13e8] sm:$0xf]
    %v6050 = vld [vmem:[%s3 + $0x13ec] sm:$0xff]
    %v6051 = vld [vmem:[%s3 + $0x13f4] sm:$0xff]
    %v6052 = vld [vmem:[%s3 + $0x13fc] sm:$0xf]
    %v6053 = vld [vmem:[%s3 + $0x1400] sm:$0xff]
    %v6054 = vld [vmem:[%s3 + $0x1408] sm:$0xff]
    %v6055 = vld [vmem:[%s3 + $0x1410] sm:$0xf]
    %v6056 = vld [vmem:[%s3 + $0x1414] sm:$0xff]
    %v6057 = vld [vmem:[%s3 + $0x141c] sm:$0xff]
    %v6058 = vld [vmem:[%s3 + $0x1424] sm:$0xf]
    %v6059 = vld [vmem:[%s3 + $0x1428] sm:$0xff]
    %v6060 = vld [vmem:[%s3 + $0x1430] sm:$0xff]
    %v6061 = vld [vmem:[%s3 + $0x1438] sm:$0xf]
    %v6062 = vld [vmem:[%s3 + $0x143c] sm:$0xff]
    %v6063 = vld [vmem:[%s3 + $0x1444] sm:$0xff]
    %v6064 = vld [vmem:[%s3 + $0x144c] sm:$0xf]
    %v6065 = vld [vmem:[%s3 + $0x1450] sm:$0xff]
    %v6066 = vld [vmem:[%s3 + $0x1458] sm:$0xff]
    %v6067 = vld [vmem:[%s3 + $0x1460] sm:$0xf]
    %v6068 = vld [vmem:[%s3 + $0x1464] sm:$0xff]
    %v6069 = vld [vmem:[%s3 + $0x146c] sm:$0xff]
    %v6070 = vld [vmem:[%s3 + $0x1474] sm:$0xf]
    %v6071 = vld [vmem:[%s3 + $0x1478] sm:$0xff]
    %v6072 = vld [vmem:[%s3 + $0x1480] sm:$0xff]
    %v6073 = vld [vmem:[%s3 + $0x1488] sm:$0xf]
    %v6074 = vld [vmem:[%s3 + $0x148c] sm:$0xff]
    %v6075 = vld [vmem:[%s3 + $0x1494] sm:$0xff]
    %v6076 = vld [vmem:[%s3 + $0x149c] sm:$0xf]
    %v6077 = vld [vmem:[%s3 + $0x14a0] sm:$0xff]
    %v6078 = vld [vmem:[%s3 + $0x14a8] sm:$0xff]
    %v6079 = vld [vmem:[%s3 + $0x14b0] sm:$0xf]
    %v6080 = vld [vmem:[%s3 + $0x14b4] sm:$0xff]
    %v6081 = vld [vmem:[%s3 + $0x14bc] sm:$0xff]
    %v6082 = vld [vmem:[%s3 + $0x14c4] sm:$0xf]
    %v6083 = vld [vmem:[%s3 + $0x14c8] sm:$0xff]
    %v6084 = vld [vmem:[%s3 + $0x14d0] sm:$0xff]
    %v6085 = vld [vmem:[%s3 + $0x14d8] sm:$0xf]
    %v6086 = vld [vmem:[%s3 + $0x14dc] sm:$0xff]
    %v6087 = vld [vmem:[%s3 + $0x14e4] sm:$0xff]
    %v6088 = vld [vmem:[%s3 + $0x14ec] sm:$0xf]
    %v6089 = vld [vmem:[%s3 + $0x14f0] sm:$0xff]
    %v6090 = vld [vmem:[%s3 + $0x14f8] sm:$0xff]
    %v6091 = vld [vmem:[%s3 + $0x1500] sm:$0xf]
    %v6092 = vld [vmem:[%s3 + $0x1504] sm:$0xff]
    %v6093 = vld [vmem:[%s3 + $0x150c] sm:$0xff]
    %v6094 = vld [vmem:[%s3 + $0x1514] sm:$0xf]
    %v6095 = vld [vmem:[%s3 + $0x1518] sm:$0xff]
    %v6096 = vld [vmem:[%s3 + $0x1520] sm:$0xff]
    %v6097 = vld [vmem:[%s3 + $0x1528] sm:$0xf]
    %v6098 = vld [vmem:[%s3 + $0x152c] sm:$0xff]
    %v6099 = vld [vmem:[%s3 + $0x1534] sm:$0xff]
    %v6100 = vld [vmem:[%s3 + $0x153c] sm:$0xf]
    %v6101 = vld [vmem:[%s3 + $0x1540] sm:$0xff]
    %v6102 = vld [vmem:[%s3 + $0x1548] sm:$0xff]
    %v6103 = vld [vmem:[%s3 + $0x1550] sm:$0xf]
    %v6104 = vld [vmem:[%s3 + $0x1554] sm:$0xff]
    %v6105 = vld [vmem:[%s3 + $0x155c] sm:$0xff]
    %v6106 = vld [vmem:[%s3 + $0x1564] sm:$0xf]
    %v6107 = vld [vmem:[%s3 + $0x1568] sm:$0xff]
    %v6108 = vld [vmem:[%s3 + $0x1570] sm:$0xff]
    %v6109 = vld [vmem:[%s3 + $0x1578] sm:$0xf]
    %v6110 = vld [vmem:[%s3 + $0x157c] sm:$0xff]
    %v6111 = vld [vmem:[%s3 + $0x1584] sm:$0xff]
    %v6112 = vld [vmem:[%s3 + $0x158c] sm:$0xf]
    %v6113 = vld [vmem:[%s3 + $0x1590] sm:$0xff]
    %v6114 = vld [vmem:[%s3 + $0x1598] sm:$0xff]
    %v6115 = vld [vmem:[%s3 + $0x15a0] sm:$0xf]
    %v6116 = vld [vmem:[%s3 + $0x15a4] sm:$0xff]
    %v6117 = vld [vmem:[%s3 + $0x15ac] sm:$0xff]
    %v6118 = vld [vmem:[%s3 + $0x15b4] sm:$0xf]
    %v6119 = vld [vmem:[%s3 + $0x15b8] sm:$0xff]
    %v6120 = vld [vmem:[%s3 + $0x15c0] sm:$0xff]
    %v6121 = vld [vmem:[%s3 + $0x15c8] sm:$0xf]
    %v6122 = vld [vmem:[%s3 + $0x15cc] sm:$0xff]
    %v6123 = vld [vmem:[%s3 + $0x15d4] sm:$0xff]
    %v6124 = vld [vmem:[%s3 + $0x15dc] sm:$0xf]
    %v6125 = vld [vmem:[%s3 + $0x15e0] sm:$0xff]
    %v6126 = vld [vmem:[%s3 + $0x15e8] sm:$0xff]
    %v6127 = vld [vmem:[%s3 + $0x15f0] sm:$0xf]
    %v6128 = vld [vmem:[%s3 + $0x15f4] sm:$0xff]
    %v6129 = vld [vmem:[%s3 + $0x15fc] sm:$0xff]
    %v6130 = vld [vmem:[%s3 + $0x1604] sm:$0xf]
    %v6131 = vld [vmem:[%s3 + $0x1608] sm:$0xff]
    %v6132 = vld [vmem:[%s3 + $0x1610] sm:$0xff]
    %v6133 = vld [vmem:[%s3 + $0x1618] sm:$0xf]
    %v6134 = vld [vmem:[%s3 + $0x161c] sm:$0xff]
    %v6135 = vld [vmem:[%s3 + $0x1624] sm:$0xff]
    %v6136 = vld [vmem:[%s3 + $0x162c] sm:$0xf]
    %v6137 = vld [vmem:[%s3 + $0x1630] sm:$0xff]
    %v6138 = vld [vmem:[%s3 + $0x1638] sm:$0xff]
    %v6139 = vld [vmem:[%s3 + $0x1640] sm:$0xf]
    %v6140 = vld [vmem:[%s3 + $0x1644] sm:$0xff]
    %v6141 = vld [vmem:[%s3 + $0x164c] sm:$0xff]
    %v6142 = vld [vmem:[%s3 + $0x1654] sm:$0xf]
    %v6143 = vld [vmem:[%s3 + $0x1658] sm:$0xff]
    %v6144 = vld [vmem:[%s3 + $0x1660] sm:$0xff]
    %v6145 = vld [vmem:[%s3 + $0x1668] sm:$0xf]
    %v6146 = vld [vmem:[%s3 + $0x166c] sm:$0xff]
    %v6147 = vld [vmem:[%s3 + $0x1674] sm:$0xff]
    %v6148 = vld [vmem:[%s3 + $0x167c] sm:$0xf]
    %v6149 = vld [vmem:[%s4] sm:$0x1f]
    %v6151 = vperm.slane %v6149, 0
    %v6152 = vperm.slane %v6149, 1
    %v6153 = vperm.slane %v6149, 2
    %v6154 = vperm.slane %v6149, 3
    %v6155 = vperm.slane %v6149, 4
    %v7025 = vunpack.c.l.b16 %v5285
    %v7026 = vunpack.c.h.b16 %v5285
    %v7027 = vunpack.c.l.b16 %v5286
    %v7028 = vunpack.c.h.b16 %v5286
    %v7029 = vunpack.c.l.b16 %v5287
    %v7030 = vunpack.c.l.b16 %v5288
    %v7031 = vunpack.c.h.b16 %v5288
    %v7032 = vunpack.c.l.b16 %v5289
    %v7033 = vunpack.c.h.b16 %v5289
    %v7034 = vunpack.c.l.b16 %v5290
    %v7035 = vunpack.c.l.b16 %v5291
    %v7036 = vunpack.c.h.b16 %v5291
    %v7037 = vunpack.c.l.b16 %v5292
    %v7038 = vunpack.c.h.b16 %v5292
    %v7039 = vunpack.c.l.b16 %v5293
    %v7040 = vunpack.c.l.b16 %v5294
    %v7041 = vunpack.c.h.b16 %v5294
    %v7042 = vunpack.c.l.b16 %v5295
    %v7043 = vunpack.c.h.b16 %v5295
    %v7044 = vunpack.c.l.b16 %v5296
    %v7045 = vunpack.c.l.b16 %v5297
    %v7046 = vunpack.c.h.b16 %v5297
    %v7047 = vunpack.c.l.b16 %v5298
    %v7048 = vunpack.c.h.b16 %v5298
    %v7049 = vunpack.c.l.b16 %v5299
    %v7050 = vunpack.c.l.b16 %v5300
    %v7051 = vunpack.c.h.b16 %v5300
    %v7052 = vunpack.c.l.b16 %v5301
    %v7053 = vunpack.c.h.b16 %v5301
    %v7054 = vunpack.c.l.b16 %v5302
    %v7055 = vunpack.c.l.b16 %v5303
    %v7056 = vunpack.c.h.b16 %v5303
    %v7057 = vunpack.c.l.b16 %v5304
    %v7058 = vunpack.c.h.b16 %v5304
    %v7059 = vunpack.c.l.b16 %v5305
    %v7060 = vunpack.c.l.b16 %v5306
    %v7061 = vunpack.c.h.b16 %v5306
    %v7062 = vunpack.c.l.b16 %v5307
    %v7063 = vunpack.c.h.b16 %v5307
    %v7064 = vunpack.c.l.b16 %v5308
    %v7065 = vunpack.c.l.b16 %v5309
    %v7066 = vunpack.c.h.b16 %v5309
    %v7067 = vunpack.c.l.b16 %v5310
    %v7068 = vunpack.c.h.b16 %v5310
    %v7069 = vunpack.c.l.b16 %v5311
    %v7070 = vunpack.c.l.b16 %v5312
    %v7071 = vunpack.c.h.b16 %v5312
    %v7072 = vunpack.c.l.b16 %v5313
    %v7073 = vunpack.c.h.b16 %v5313
    %v7074 = vunpack.c.l.b16 %v5314
    %v7075 = vunpack.c.l.b16 %v5315
    %v7076 = vunpack.c.h.b16 %v5315
    %v7077 = vunpack.c.l.b16 %v5316
    %v7078 = vunpack.c.h.b16 %v5316
    %v7079 = vunpack.c.l.b16 %v5317
    %v7080 = vunpack.c.l.b16 %v5318
    %v7081 = vunpack.c.h.b16 %v5318
    %v7082 = vunpack.c.l.b16 %v5319
    %v7083 = vunpack.c.h.b16 %v5319
    %v7084 = vunpack.c.l.b16 %v5320
    %v7085 = vunpack.c.l.b16 %v5321
    %v7086 = vunpack.c.h.b16 %v5321
    %v7087 = vunpack.c.l.b16 %v5322
    %v7088 = vunpack.c.h.b16 %v5322
    %v7089 = vunpack.c.l.b16 %v5323
    %v7090 = vunpack.c.l.b16 %v5324
    %v7091 = vunpack.c.h.b16 %v5324
    %v7092 = vunpack.c.l.b16 %v5325
    %v7093 = vunpack.c.h.b16 %v5325
    %v7094 = vunpack.c.l.b16 %v5326
    %v7095 = vunpack.c.l.b16 %v5327
    %v7096 = vunpack.c.h.b16 %v5327
    %v7097 = vunpack.c.l.b16 %v5328
    %v7098 = vunpack.c.h.b16 %v5328
    %v7099 = vunpack.c.l.b16 %v5329
    %v7100 = vunpack.c.l.b16 %v5330
    %v7101 = vunpack.c.h.b16 %v5330
    %v7102 = vunpack.c.l.b16 %v5331
    %v7103 = vunpack.c.h.b16 %v5331
    %v7104 = vunpack.c.l.b16 %v5332
    %v7105 = vunpack.c.l.b16 %v5333
    %v7106 = vunpack.c.h.b16 %v5333
    %v7107 = vunpack.c.l.b16 %v5334
    %v7108 = vunpack.c.h.b16 %v5334
    %v7109 = vunpack.c.l.b16 %v5335
    %v7110 = vunpack.c.l.b16 %v5336
    %v7111 = vunpack.c.h.b16 %v5336
    %v7112 = vunpack.c.l.b16 %v5337
    %v7113 = vunpack.c.h.b16 %v5337
    %v7114 = vunpack.c.l.b16 %v5338
    %v7115 = vunpack.c.l.b16 %v5339
    %v7116 = vunpack.c.h.b16 %v5339
    %v7117 = vunpack.c.l.b16 %v5340
    %v7118 = vunpack.c.h.b16 %v5340
    %v7119 = vunpack.c.l.b16 %v5341
    %v7120 = vunpack.c.l.b16 %v5342
    %v7121 = vunpack.c.h.b16 %v5342
    %v7122 = vunpack.c.l.b16 %v5343
    %v7123 = vunpack.c.h.b16 %v5343
    %v7124 = vunpack.c.l.b16 %v5344
    %v7125 = vunpack.c.l.b16 %v5345
    %v7126 = vunpack.c.h.b16 %v5345
    %v7127 = vunpack.c.l.b16 %v5346
    %v7128 = vunpack.c.h.b16 %v5346
    %v7129 = vunpack.c.l.b16 %v5347
    %v7130 = vunpack.c.l.b16 %v5348
    %v7131 = vunpack.c.h.b16 %v5348
    %v7132 = vunpack.c.l.b16 %v5349
    %v7133 = vunpack.c.h.b16 %v5349
    %v7134 = vunpack.c.l.b16 %v5350
    %v7135 = vunpack.c.l.b16 %v5351
    %v7136 = vunpack.c.h.b16 %v5351
    %v7137 = vunpack.c.l.b16 %v5352
    %v7138 = vunpack.c.h.b16 %v5352
    %v7139 = vunpack.c.l.b16 %v5353
    %v7140 = vunpack.c.l.b16 %v5354
    %v7141 = vunpack.c.h.b16 %v5354
    %v7142 = vunpack.c.l.b16 %v5355
    %v7143 = vunpack.c.h.b16 %v5355
    %v7144 = vunpack.c.l.b16 %v5356
    %v7145 = vunpack.c.l.b16 %v5357
    %v7146 = vunpack.c.h.b16 %v5357
    %v7147 = vunpack.c.l.b16 %v5358
    %v7148 = vunpack.c.h.b16 %v5358
    %v7149 = vunpack.c.l.b16 %v5359
    %v7150 = vunpack.c.l.b16 %v5360
    %v7151 = vunpack.c.h.b16 %v5360
    %v7152 = vunpack.c.l.b16 %v5361
    %v7153 = vunpack.c.h.b16 %v5361
    %v7154 = vunpack.c.l.b16 %v5362
    %v7155 = vunpack.c.l.b16 %v5363
    %v7156 = vunpack.c.h.b16 %v5363
    %v7157 = vunpack.c.l.b16 %v5364
    %v7158 = vunpack.c.h.b16 %v5364
    %v7159 = vunpack.c.l.b16 %v5365
    %v7160 = vunpack.c.l.b16 %v5366
    %v7161 = vunpack.c.h.b16 %v5366
    %v7162 = vunpack.c.l.b16 %v5367
    %v7163 = vunpack.c.h.b16 %v5367
    %v7164 = vunpack.c.l.b16 %v5368
    %v7165 = vunpack.c.l.b16 %v5369
    %v7166 = vunpack.c.h.b16 %v5369
    %v7167 = vunpack.c.l.b16 %v5370
    %v7168 = vunpack.c.h.b16 %v5370
    %v7169 = vunpack.c.l.b16 %v5371
    %v7170 = vunpack.c.l.b16 %v5372
    %v7171 = vunpack.c.h.b16 %v5372
    %v7172 = vunpack.c.l.b16 %v5373
    %v7173 = vunpack.c.h.b16 %v5373
    %v7174 = vunpack.c.l.b16 %v5374
    %v7175 = vunpack.c.l.b16 %v5375
    %v7176 = vunpack.c.h.b16 %v5375
    %v7177 = vunpack.c.l.b16 %v5376
    %v7178 = vunpack.c.h.b16 %v5376
    %v7179 = vunpack.c.l.b16 %v5377
    %v7180 = vunpack.c.l.b16 %v5378
    %v7181 = vunpack.c.h.b16 %v5378
    %v7182 = vunpack.c.l.b16 %v5379
    %v7183 = vunpack.c.h.b16 %v5379
    %v7184 = vunpack.c.l.b16 %v5380
    %v7185 = vunpack.c.l.b16 %v5381
    %v7186 = vunpack.c.h.b16 %v5381
    %v7187 = vunpack.c.l.b16 %v5382
    %v7188 = vunpack.c.h.b16 %v5382
    %v7189 = vunpack.c.l.b16 %v5383
    %v7190 = vunpack.c.l.b16 %v5384
    %v7191 = vunpack.c.h.b16 %v5384
    %v7192 = vunpack.c.l.b16 %v5385
    %v7193 = vunpack.c.h.b16 %v5385
    %v7194 = vunpack.c.l.b16 %v5386
    %v7195 = vunpack.c.l.b16 %v5387
    %v7196 = vunpack.c.h.b16 %v5387
    %v7197 = vunpack.c.l.b16 %v5388
    %v7198 = vunpack.c.h.b16 %v5388
    %v7199 = vunpack.c.l.b16 %v5389
    %v7200 = vunpack.c.l.b16 %v5390
    %v7201 = vunpack.c.h.b16 %v5390
    %v7202 = vunpack.c.l.b16 %v5391
    %v7203 = vunpack.c.h.b16 %v5391
    %v7204 = vunpack.c.l.b16 %v5392
    %v7205 = vunpack.c.l.b16 %v5393
    %v7206 = vunpack.c.h.b16 %v5393
    %v7207 = vunpack.c.l.b16 %v5394
    %v7208 = vunpack.c.h.b16 %v5394
    %v7209 = vunpack.c.l.b16 %v5395
    %v7210 = vunpack.c.l.b16 %v5396
    %v7211 = vunpack.c.h.b16 %v5396
    %v7212 = vunpack.c.l.b16 %v5397
    %v7213 = vunpack.c.h.b16 %v5397
    %v7214 = vunpack.c.l.b16 %v5398
    %v7215 = vunpack.c.l.b16 %v5399
    %v7216 = vunpack.c.h.b16 %v5399
    %v7217 = vunpack.c.l.b16 %v5400
    %v7218 = vunpack.c.h.b16 %v5400
    %v7219 = vunpack.c.l.b16 %v5401
    %v7220 = vunpack.c.l.b16 %v5402
    %v7221 = vunpack.c.h.b16 %v5402
    %v7222 = vunpack.c.l.b16 %v5403
    %v7223 = vunpack.c.h.b16 %v5403
    %v7224 = vunpack.c.l.b16 %v5404
    %v7225 = vunpack.c.l.b16 %v5405
    %v7226 = vunpack.c.h.b16 %v5405
    %v7227 = vunpack.c.l.b16 %v5406
    %v7228 = vunpack.c.h.b16 %v5406
    %v7229 = vunpack.c.l.b16 %v5407
    %v7230 = vunpack.c.l.b16 %v5408
    %v7231 = vunpack.c.h.b16 %v5408
    %v7232 = vunpack.c.l.b16 %v5409
    %v7233 = vunpack.c.h.b16 %v5409
    %v7234 = vunpack.c.l.b16 %v5410
    %v7235 = vunpack.c.l.b16 %v5411
    %v7236 = vunpack.c.h.b16 %v5411
    %v7237 = vunpack.c.l.b16 %v5412
    %v7238 = vunpack.c.h.b16 %v5412
    %v7239 = vunpack.c.l.b16 %v5413
    %v7240 = vunpack.c.l.b16 %v5414
    %v7241 = vunpack.c.h.b16 %v5414
    %v7242 = vunpack.c.l.b16 %v5415
    %v7243 = vunpack.c.h.b16 %v5415
    %v7244 = vunpack.c.l.b16 %v5416
    %v7245 = vunpack.c.l.b16 %v5417
    %v7246 = vunpack.c.h.b16 %v5417
    %v7247 = vunpack.c.l.b16 %v5418
    %v7248 = vunpack.c.h.b16 %v5418
    %v7249 = vunpack.c.l.b16 %v5419
    %v7250 = vunpack.c.l.b16 %v5420
    %v7251 = vunpack.c.h.b16 %v5420
    %v7252 = vunpack.c.l.b16 %v5421
    %v7253 = vunpack.c.h.b16 %v5421
    %v7254 = vunpack.c.l.b16 %v5422
    %v7255 = vunpack.c.l.b16 %v5423
    %v7256 = vunpack.c.h.b16 %v5423
    %v7257 = vunpack.c.l.b16 %v5424
    %v7258 = vunpack.c.h.b16 %v5424
    %v7259 = vunpack.c.l.b16 %v5425
    %v7260 = vunpack.c.l.b16 %v5426
    %v7261 = vunpack.c.h.b16 %v5426
    %v7262 = vunpack.c.l.b16 %v5427
    %v7263 = vunpack.c.h.b16 %v5427
    %v7264 = vunpack.c.l.b16 %v5428
    %v7265 = vunpack.c.l.b16 %v5429
    %v7266 = vunpack.c.h.b16 %v5429
    %v7267 = vunpack.c.l.b16 %v5430
    %v7268 = vunpack.c.h.b16 %v5430
    %v7269 = vunpack.c.l.b16 %v5431
    %v7270 = vunpack.c.l.b16 %v5432
    %v7271 = vunpack.c.h.b16 %v5432
    %v7272 = vunpack.c.l.b16 %v5433
    %v7273 = vunpack.c.h.b16 %v5433
    %v7274 = vunpack.c.l.b16 %v5434
    %v7275 = vunpack.c.l.b16 %v5435
    %v7276 = vunpack.c.h.b16 %v5435
    %v7277 = vunpack.c.l.b16 %v5436
    %v7278 = vunpack.c.h.b16 %v5436
    %v7279 = vunpack.c.l.b16 %v5437
    %v7280 = vunpack.c.l.b16 %v5438
    %v7281 = vunpack.c.h.b16 %v5438
    %v7282 = vunpack.c.l.b16 %v5439
    %v7283 = vunpack.c.h.b16 %v5439
    %v7284 = vunpack.c.l.b16 %v5440
    %v7285 = vunpack.c.l.b16 %v5441
    %v7286 = vunpack.c.h.b16 %v5441
    %v7287 = vunpack.c.l.b16 %v5442
    %v7288 = vunpack.c.h.b16 %v5442
    %v7289 = vunpack.c.l.b16 %v5443
    %v7290 = vunpack.c.l.b16 %v5444
    %v7291 = vunpack.c.h.b16 %v5444
    %v7292 = vunpack.c.l.b16 %v5445
    %v7293 = vunpack.c.h.b16 %v5445
    %v7294 = vunpack.c.l.b16 %v5446
    %v7295 = vunpack.c.l.b16 %v5447
    %v7296 = vunpack.c.h.b16 %v5447
    %v7297 = vunpack.c.l.b16 %v5448
    %v7298 = vunpack.c.h.b16 %v5448
    %v7299 = vunpack.c.l.b16 %v5449
    %v7300 = vunpack.c.l.b16 %v5450
    %v7301 = vunpack.c.h.b16 %v5450
    %v7302 = vunpack.c.l.b16 %v5451
    %v7303 = vunpack.c.h.b16 %v5451
    %v7304 = vunpack.c.l.b16 %v5452
    %v7305 = vunpack.c.l.b16 %v5453
    %v7306 = vunpack.c.h.b16 %v5453
    %v7307 = vunpack.c.l.b16 %v5454
    %v7308 = vunpack.c.h.b16 %v5454
    %v7309 = vunpack.c.l.b16 %v5455
    %v7310 = vunpack.c.l.b16 %v5456
    %v7311 = vunpack.c.h.b16 %v5456
    %v7312 = vunpack.c.l.b16 %v5457
    %v7313 = vunpack.c.h.b16 %v5457
    %v7314 = vunpack.c.l.b16 %v5458
    %v7315 = vunpack.c.l.b16 %v5459
    %v7316 = vunpack.c.h.b16 %v5459
    %v7317 = vunpack.c.l.b16 %v5460
    %v7318 = vunpack.c.h.b16 %v5460
    %v7319 = vunpack.c.l.b16 %v5461
    %v7320 = vunpack.c.l.b16 %v5462
    %v7321 = vunpack.c.h.b16 %v5462
    %v7322 = vunpack.c.l.b16 %v5463
    %v7323 = vunpack.c.h.b16 %v5463
    %v7324 = vunpack.c.l.b16 %v5464
    %v7325 = vunpack.c.l.b16 %v5465
    %v7326 = vunpack.c.h.b16 %v5465
    %v7327 = vunpack.c.l.b16 %v5466
    %v7328 = vunpack.c.h.b16 %v5466
    %v7329 = vunpack.c.l.b16 %v5467
    %v7330 = vunpack.c.l.b16 %v5468
    %v7331 = vunpack.c.h.b16 %v5468
    %v7332 = vunpack.c.l.b16 %v5469
    %v7333 = vunpack.c.h.b16 %v5469
    %v7334 = vunpack.c.l.b16 %v5470
    %v7335 = vunpack.c.l.b16 %v5471
    %v7336 = vunpack.c.h.b16 %v5471
    %v7337 = vunpack.c.l.b16 %v5472
    %v7338 = vunpack.c.h.b16 %v5472
    %v7339 = vunpack.c.l.b16 %v5473
    %v7340 = vunpack.c.l.b16 %v5474
    %v7341 = vunpack.c.h.b16 %v5474
    %v7342 = vunpack.c.l.b16 %v5475
    %v7343 = vunpack.c.h.b16 %v5475
    %v7344 = vunpack.c.l.b16 %v5476
    %v7345 = vunpack.c.l.b16 %v5477
    %v7346 = vunpack.c.h.b16 %v5477
    %v7347 = vunpack.c.l.b16 %v5478
    %v7348 = vunpack.c.h.b16 %v5478
    %v7349 = vunpack.c.l.b16 %v5479
    %v7350 = vunpack.c.l.b16 %v5480
    %v7351 = vunpack.c.h.b16 %v5480
    %v7352 = vunpack.c.l.b16 %v5481
    %v7353 = vunpack.c.h.b16 %v5481
    %v7354 = vunpack.c.l.b16 %v5482
    %v7355 = vunpack.c.l.b16 %v5483
    %v7356 = vunpack.c.h.b16 %v5483
    %v7357 = vunpack.c.l.b16 %v5484
    %v7358 = vunpack.c.h.b16 %v5484
    %v7359 = vunpack.c.l.b16 %v5485
    %v7360 = vunpack.c.l.b16 %v5486
    %v7361 = vunpack.c.h.b16 %v5486
    %v7362 = vunpack.c.l.b16 %v5487
    %v7363 = vunpack.c.h.b16 %v5487
    %v7364 = vunpack.c.l.b16 %v5488
    %v7365 = vunpack.c.l.b16 %v5489
    %v7366 = vunpack.c.h.b16 %v5489
    %v7367 = vunpack.c.l.b16 %v5490
    %v7368 = vunpack.c.h.b16 %v5490
    %v7369 = vunpack.c.l.b16 %v5491
    %v7370 = vunpack.c.l.b16 %v5492
    %v7371 = vunpack.c.h.b16 %v5492
    %v7372 = vunpack.c.l.b16 %v5493
    %v7373 = vunpack.c.h.b16 %v5493
    %v7374 = vunpack.c.l.b16 %v5494
    %v7375 = vunpack.c.l.b16 %v5495
    %v7376 = vunpack.c.h.b16 %v5495
    %v7377 = vunpack.c.l.b16 %v5496
    %v7378 = vunpack.c.h.b16 %v5496
    %v7379 = vunpack.c.l.b16 %v5497
    %v7380 = vunpack.c.l.b16 %v5498
    %v7381 = vunpack.c.h.b16 %v5498
    %v7382 = vunpack.c.l.b16 %v5499
    %v7383 = vunpack.c.h.b16 %v5499
    %v7384 = vunpack.c.l.b16 %v5500
    %v7385 = vunpack.c.l.b16 %v5501
    %v7386 = vunpack.c.h.b16 %v5501
    %v7387 = vunpack.c.l.b16 %v5502
    %v7388 = vunpack.c.h.b16 %v5502
    %v7389 = vunpack.c.l.b16 %v5503
    %v7390 = vunpack.c.l.b16 %v5504
    %v7391 = vunpack.c.h.b16 %v5504
    %v7392 = vunpack.c.l.b16 %v5505
    %v7393 = vunpack.c.h.b16 %v5505
    %v7394 = vunpack.c.l.b16 %v5506
    %v7395 = vunpack.c.l.b16 %v5507
    %v7396 = vunpack.c.h.b16 %v5507
    %v7397 = vunpack.c.l.b16 %v5508
    %v7398 = vunpack.c.h.b16 %v5508
    %v7399 = vunpack.c.l.b16 %v5509
    %v7400 = vunpack.c.l.b16 %v5510
    %v7401 = vunpack.c.h.b16 %v5510
    %v7402 = vunpack.c.l.b16 %v5511
    %v7403 = vunpack.c.h.b16 %v5511
    %v7404 = vunpack.c.l.b16 %v5512
    %v7405 = vunpack.c.l.b16 %v5513
    %v7406 = vunpack.c.h.b16 %v5513
    %v7407 = vunpack.c.l.b16 %v5514
    %v7408 = vunpack.c.h.b16 %v5514
    %v7409 = vunpack.c.l.b16 %v5515
    %v7410 = vunpack.c.l.b16 %v5516
    %v7411 = vunpack.c.h.b16 %v5516
    %v7412 = vunpack.c.l.b16 %v5517
    %v7413 = vunpack.c.h.b16 %v5517
    %v7414 = vunpack.c.l.b16 %v5518
    %v7415 = vunpack.c.l.b16 %v5519
    %v7416 = vunpack.c.h.b16 %v5519
    %v7417 = vunpack.c.l.b16 %v5520
    %v7418 = vunpack.c.h.b16 %v5520
    %v7419 = vunpack.c.l.b16 %v5521
    %v7420 = vunpack.c.l.b16 %v5522
    %v7421 = vunpack.c.h.b16 %v5522
    %v7422 = vunpack.c.l.b16 %v5523
    %v7423 = vunpack.c.h.b16 %v5523
    %v7424 = vunpack.c.l.b16 %v5524
    %v7425 = vunpack.c.l.b16 %v5525
    %v7426 = vunpack.c.h.b16 %v5525
    %v7427 = vunpack.c.l.b16 %v5526
    %v7428 = vunpack.c.h.b16 %v5526
    %v7429 = vunpack.c.l.b16 %v5527
    %v7430 = vunpack.c.l.b16 %v5528
    %v7431 = vunpack.c.h.b16 %v5528
    %v7432 = vunpack.c.l.b16 %v5529
    %v7433 = vunpack.c.h.b16 %v5529
    %v7434 = vunpack.c.l.b16 %v5530
    %v7435 = vunpack.c.l.b16 %v5531
    %v7436 = vunpack.c.h.b16 %v5531
    %v7437 = vunpack.c.l.b16 %v5532
    %v7438 = vunpack.c.h.b16 %v5532
    %v7439 = vunpack.c.l.b16 %v5533
    %v7440 = vunpack.c.l.b16 %v5534
    %v7441 = vunpack.c.h.b16 %v5534
    %v7442 = vunpack.c.l.b16 %v5535
    %v7443 = vunpack.c.h.b16 %v5535
    %v7444 = vunpack.c.l.b16 %v5536
    %v7445 = vunpack.c.l.b16 %v5537
    %v7446 = vunpack.c.h.b16 %v5537
    %v7447 = vunpack.c.l.b16 %v5538
    %v7448 = vunpack.c.h.b16 %v5538
    %v7449 = vunpack.c.l.b16 %v5539
    %v7450 = vunpack.c.l.b16 %v5540
    %v7451 = vunpack.c.h.b16 %v5540
    %v7452 = vunpack.c.l.b16 %v5541
    %v7453 = vunpack.c.h.b16 %v5541
    %v7454 = vunpack.c.l.b16 %v5542
    %v7455 = vunpack.c.l.b16 %v5543
    %v7456 = vunpack.c.h.b16 %v5543
    %v7457 = vunpack.c.l.b16 %v5544
    %v7458 = vunpack.c.h.b16 %v5544
    %v7459 = vunpack.c.l.b16 %v5545
    %v7460 = vunpack.c.l.b16 %v5546
    %v7461 = vunpack.c.h.b16 %v5546
    %v7462 = vunpack.c.l.b16 %v5547
    %v7463 = vunpack.c.h.b16 %v5547
    %v7464 = vunpack.c.l.b16 %v5548
    %v7465 = vunpack.c.l.b16 %v5549
    %v7466 = vunpack.c.h.b16 %v5549
    %v7467 = vunpack.c.l.b16 %v5550
    %v7468 = vunpack.c.h.b16 %v5550
    %v7469 = vunpack.c.l.b16 %v5551
    %v7470 = vunpack.c.l.b16 %v5552
    %v7471 = vunpack.c.h.b16 %v5552
    %v7472 = vunpack.c.l.b16 %v5553
    %v7473 = vunpack.c.h.b16 %v5553
    %v7474 = vunpack.c.l.b16 %v5554
    %v7475 = vunpack.c.l.b16 %v5555
    %v7476 = vunpack.c.h.b16 %v5555
    %v7477 = vunpack.c.l.b16 %v5556
    %v7478 = vunpack.c.h.b16 %v5556
    %v7479 = vunpack.c.l.b16 %v5557
    %v7480 = vunpack.c.l.b16 %v5558
    %v7481 = vunpack.c.h.b16 %v5558
    %v7482 = vunpack.c.l.b16 %v5559
    %v7483 = vunpack.c.h.b16 %v5559
    %v7484 = vunpack.c.l.b16 %v5560
    %v7485 = vunpack.c.l.b16 %v5561
    %v7486 = vunpack.c.h.b16 %v5561
    %v7487 = vunpack.c.l.b16 %v5562
    %v7488 = vunpack.c.h.b16 %v5562
    %v7489 = vunpack.c.l.b16 %v5563
    %v7490 = vunpack.c.l.b16 %v5564
    %v7491 = vunpack.c.h.b16 %v5564
    %v7492 = vunpack.c.l.b16 %v5565
    %v7493 = vunpack.c.h.b16 %v5565
    %v7494 = vunpack.c.l.b16 %v5566
    %v7495 = vunpack.c.l.b16 %v5567
    %v7496 = vunpack.c.h.b16 %v5567
    %v7497 = vunpack.c.l.b16 %v5568
    %v7498 = vunpack.c.h.b16 %v5568
    %v7499 = vunpack.c.l.b16 %v5569
    %v7500 = vunpack.c.l.b16 %v5570
    %v7501 = vunpack.c.h.b16 %v5570
    %v7502 = vunpack.c.l.b16 %v5571
    %v7503 = vunpack.c.h.b16 %v5571
    %v7504 = vunpack.c.l.b16 %v5572
    %v7505 = vunpack.c.l.b16 %v5573
    %v7506 = vunpack.c.h.b16 %v5573
    %v7507 = vunpack.c.l.b16 %v5574
    %v7508 = vunpack.c.h.b16 %v5574
    %v7509 = vunpack.c.l.b16 %v5575
    %v7510 = vunpack.c.l.b16 %v5576
    %v7511 = vunpack.c.h.b16 %v5576
    %v7512 = vunpack.c.l.b16 %v5577
    %v7513 = vunpack.c.h.b16 %v5577
    %v7514 = vunpack.c.l.b16 %v5578
    %v7515 = vunpack.c.l.b16 %v5579
    %v7516 = vunpack.c.h.b16 %v5579
    %v7517 = vunpack.c.l.b16 %v5580
    %v7518 = vunpack.c.h.b16 %v5580
    %v7519 = vunpack.c.l.b16 %v5581
    %v7520 = vunpack.c.l.b16 %v5582
    %v7521 = vunpack.c.h.b16 %v5582
    %v7522 = vunpack.c.l.b16 %v5583
    %v7523 = vunpack.c.h.b16 %v5583
    %v7524 = vunpack.c.l.b16 %v5584
    %v7525 = vunpack.c.l.b16 %v5585
    %v7526 = vunpack.c.h.b16 %v5585
    %v7527 = vunpack.c.l.b16 %v5586
    %v7528 = vunpack.c.h.b16 %v5586
    %v7529 = vunpack.c.l.b16 %v5587
    %v7530 = vunpack.c.l.b16 %v5588
    %v7531 = vunpack.c.h.b16 %v5588
    %v7532 = vunpack.c.l.b16 %v5589
    %v7533 = vunpack.c.h.b16 %v5589
    %v7534 = vunpack.c.l.b16 %v5590
    %v7535 = vunpack.c.l.b16 %v5591
    %v7536 = vunpack.c.h.b16 %v5591
    %v7537 = vunpack.c.l.b16 %v5592
    %v7538 = vunpack.c.h.b16 %v5592
    %v7539 = vunpack.c.l.b16 %v5593
    %v7540 = vunpack.c.l.b16 %v5594
    %v7541 = vunpack.c.h.b16 %v5594
    %v7542 = vunpack.c.l.b16 %v5595
    %v7543 = vunpack.c.h.b16 %v5595
    %v7544 = vunpack.c.l.b16 %v5596
    %v7545 = vunpack.c.l.b16 %v5597
    %v7546 = vunpack.c.h.b16 %v5597
    %v7547 = vunpack.c.l.b16 %v5598
    %v7548 = vunpack.c.h.b16 %v5598
    %v7549 = vunpack.c.l.b16 %v5599
    %v7550 = vunpack.c.l.b16 %v5600
    %v7551 = vunpack.c.h.b16 %v5600
    %v7552 = vunpack.c.l.b16 %v5601
    %v7553 = vunpack.c.h.b16 %v5601
    %v7554 = vunpack.c.l.b16 %v5602
    %v7555 = vunpack.c.l.b16 %v5603
    %v7556 = vunpack.c.h.b16 %v5603
    %v7557 = vunpack.c.l.b16 %v5604
    %v7558 = vunpack.c.h.b16 %v5604
    %v7559 = vunpack.c.l.b16 %v5605
    %v7560 = vunpack.c.l.b16 %v5606
    %v7561 = vunpack.c.h.b16 %v5606
    %v7562 = vunpack.c.l.b16 %v5607
    %v7563 = vunpack.c.h.b16 %v5607
    %v7564 = vunpack.c.l.b16 %v5608
    %v7565 = vunpack.c.l.b16 %v5609
    %v7566 = vunpack.c.h.b16 %v5609
    %v7567 = vunpack.c.l.b16 %v5610
    %v7568 = vunpack.c.h.b16 %v5610
    %v7569 = vunpack.c.l.b16 %v5611
    %v7570 = vunpack.c.l.b16 %v5612
    %v7571 = vunpack.c.h.b16 %v5612
    %v7572 = vunpack.c.l.b16 %v5613
    %v7573 = vunpack.c.h.b16 %v5613
    %v7574 = vunpack.c.l.b16 %v5614
    %v7575 = vunpack.c.l.b16 %v5615
    %v7576 = vunpack.c.h.b16 %v5615
    %v7577 = vunpack.c.l.b16 %v5616
    %v7578 = vunpack.c.h.b16 %v5616
    %v7579 = vunpack.c.l.b16 %v5617
    %v7580 = vunpack.c.l.b16 %v5618
    %v7581 = vunpack.c.h.b16 %v5618
    %v7582 = vunpack.c.l.b16 %v5619
    %v7583 = vunpack.c.h.b16 %v5619
    %v7584 = vunpack.c.l.b16 %v5620
    %v7585 = vunpack.c.l.b16 %v5621
    %v7586 = vunpack.c.h.b16 %v5621
    %v7587 = vunpack.c.l.b16 %v5622
    %v7588 = vunpack.c.h.b16 %v5622
    %v7589 = vunpack.c.l.b16 %v5623
    %v7590 = vunpack.c.l.b16 %v5624
    %v7591 = vunpack.c.h.b16 %v5624
    %v7592 = vunpack.c.l.b16 %v5625
    %v7593 = vunpack.c.h.b16 %v5625
    %v7594 = vunpack.c.l.b16 %v5626
    %v7595 = vunpack.c.l.b16 %v5627
    %v7596 = vunpack.c.h.b16 %v5627
    %v7597 = vunpack.c.l.b16 %v5628
    %v7598 = vunpack.c.h.b16 %v5628
    %v7599 = vunpack.c.l.b16 %v5629
    %v7600 = vunpack.c.l.b16 %v5630
    %v7601 = vunpack.c.h.b16 %v5630
    %v7602 = vunpack.c.l.b16 %v5631
    %v7603 = vunpack.c.h.b16 %v5631
    %v7604 = vunpack.c.l.b16 %v5632
    %v7605 = vunpack.c.l.b16 %v5633
    %v7606 = vunpack.c.h.b16 %v5633
    %v7607 = vunpack.c.l.b16 %v5634
    %v7608 = vunpack.c.h.b16 %v5634
    %v7609 = vunpack.c.l.b16 %v5635
    %v7610 = vunpack.c.l.b16 %v5636
    %v7611 = vunpack.c.h.b16 %v5636
    %v7612 = vunpack.c.l.b16 %v5637
    %v7613 = vunpack.c.h.b16 %v5637
    %v7614 = vunpack.c.l.b16 %v5638
    %v7615 = vunpack.c.l.b16 %v5639
    %v7616 = vunpack.c.h.b16 %v5639
    %v7617 = vunpack.c.l.b16 %v5640
    %v7618 = vunpack.c.h.b16 %v5640
    %v7619 = vunpack.c.l.b16 %v5641
    %v7620 = vunpack.c.l.b16 %v5642
    %v7621 = vunpack.c.h.b16 %v5642
    %v7622 = vunpack.c.l.b16 %v5643
    %v7623 = vunpack.c.h.b16 %v5643
    %v7624 = vunpack.c.l.b16 %v5644
    %v7625 = vunpack.c.l.b16 %v5645
    %v7626 = vunpack.c.h.b16 %v5645
    %v7627 = vunpack.c.l.b16 %v5646
    %v7628 = vunpack.c.h.b16 %v5646
    %v7629 = vunpack.c.l.b16 %v5647
    %v7630 = vunpack.c.l.b16 %v5648
    %v7631 = vunpack.c.h.b16 %v5648
    %v7632 = vunpack.c.l.b16 %v5649
    %v7633 = vunpack.c.h.b16 %v5649
    %v7634 = vunpack.c.l.b16 %v5650
    %v7635 = vunpack.c.l.b16 %v5651
    %v7636 = vunpack.c.h.b16 %v5651
    %v7637 = vunpack.c.l.b16 %v5652
    %v7638 = vunpack.c.h.b16 %v5652
    %v7639 = vunpack.c.l.b16 %v5653
    %v7640 = vunpack.c.l.b16 %v5654
    %v7641 = vunpack.c.h.b16 %v5654
    %v7642 = vunpack.c.l.b16 %v5655
    %v7643 = vunpack.c.h.b16 %v5655
    %v7644 = vunpack.c.l.b16 %v5656
    %v7645 = vunpack.c.l.b16 %v5657
    %v7646 = vunpack.c.h.b16 %v5657
    %v7647 = vunpack.c.l.b16 %v5658
    %v7648 = vunpack.c.h.b16 %v5658
    %v7649 = vunpack.c.l.b16 %v5659
    %v7650 = vunpack.c.l.b16 %v5660
    %v7651 = vunpack.c.h.b16 %v5660
    %v7652 = vunpack.c.l.b16 %v5661
    %v7653 = vunpack.c.h.b16 %v5661
    %v7654 = vunpack.c.l.b16 %v5662
    %v7655 = vunpack.c.l.b16 %v5663
    %v7656 = vunpack.c.h.b16 %v5663
    %v7657 = vunpack.c.l.b16 %v5664
    %v7658 = vunpack.c.h.b16 %v5664
    %v7659 = vunpack.c.l.b16 %v5665
    %v7660 = vunpack.c.l.b16 %v5666
    %v7661 = vunpack.c.h.b16 %v5666
    %v7662 = vunpack.c.l.b16 %v5667
    %v7663 = vunpack.c.h.b16 %v5667
    %v7664 = vunpack.c.l.b16 %v5668
    %v7665 = vunpack.c.l.b16 %v5669
    %v7666 = vunpack.c.h.b16 %v5669
    %v7667 = vunpack.c.l.b16 %v5670
    %v7668 = vunpack.c.h.b16 %v5670
    %v7669 = vunpack.c.l.b16 %v5671
    %v7670 = vunpack.c.l.b16 %v5672
    %v7671 = vunpack.c.h.b16 %v5672
    %v7672 = vunpack.c.l.b16 %v5673
    %v7673 = vunpack.c.h.b16 %v5673
    %v7674 = vunpack.c.l.b16 %v5674
    %v7675 = vunpack.c.l.b16 %v5675
    %v7676 = vunpack.c.h.b16 %v5675
    %v7677 = vunpack.c.l.b16 %v5676
    %v7678 = vunpack.c.h.b16 %v5676
    %v7679 = vunpack.c.l.b16 %v5677
    %v7680 = vunpack.c.l.b16 %v5678
    %v7681 = vunpack.c.h.b16 %v5678
    %v7682 = vunpack.c.l.b16 %v5679
    %v7683 = vunpack.c.h.b16 %v5679
    %v7684 = vunpack.c.l.b16 %v5680
    %v7685 = vunpack.c.l.b16 %v5681
    %v7686 = vunpack.c.h.b16 %v5681
    %v7687 = vunpack.c.l.b16 %v5682
    %v7688 = vunpack.c.h.b16 %v5682
    %v7689 = vunpack.c.l.b16 %v5683
    %v7690 = vunpack.c.l.b16 %v5684
    %v7691 = vunpack.c.h.b16 %v5684
    %v7692 = vunpack.c.l.b16 %v5685
    %v7693 = vunpack.c.h.b16 %v5685
    %v7694 = vunpack.c.l.b16 %v5686
    %v7695 = vunpack.c.l.b16 %v5687
    %v7696 = vunpack.c.h.b16 %v5687
    %v7697 = vunpack.c.l.b16 %v5688
    %v7698 = vunpack.c.h.b16 %v5688
    %v7699 = vunpack.c.l.b16 %v5689
    %v7700 = vunpack.c.l.b16 %v5690
    %v7701 = vunpack.c.h.b16 %v5690
    %v7702 = vunpack.c.l.b16 %v5691
    %v7703 = vunpack.c.h.b16 %v5691
    %v7704 = vunpack.c.l.b16 %v5692
    %v7705 = vunpack.c.l.b16 %v5693
    %v7706 = vunpack.c.h.b16 %v5693
    %v7707 = vunpack.c.l.b16 %v5694
    %v7708 = vunpack.c.h.b16 %v5694
    %v7709 = vunpack.c.l.b16 %v5695
    %v7710 = vunpack.c.l.b16 %v5696
    %v7711 = vunpack.c.h.b16 %v5696
    %v7712 = vunpack.c.l.b16 %v5697
    %v7713 = vunpack.c.h.b16 %v5697
    %v7714 = vunpack.c.l.b16 %v5698
    %v7715 = vunpack.c.l.b16 %v5699
    %v7716 = vunpack.c.h.b16 %v5699
    %v7717 = vunpack.c.l.b16 %v5700
    %v7718 = vunpack.c.h.b16 %v5700
    %v7719 = vunpack.c.l.b16 %v5701
    %v7720 = vunpack.c.l.b16 %v5702
    %v7721 = vunpack.c.h.b16 %v5702
    %v7722 = vunpack.c.l.b16 %v5703
    %v7723 = vunpack.c.h.b16 %v5703
    %v7724 = vunpack.c.l.b16 %v5704
    %v7725 = vunpack.c.l.b16 %v5705
    %v7726 = vunpack.c.h.b16 %v5705
    %v7727 = vunpack.c.l.b16 %v5706
    %v7728 = vunpack.c.h.b16 %v5706
    %v7729 = vunpack.c.l.b16 %v5707
    %v7730 = vunpack.c.l.b16 %v5708
    %v7731 = vunpack.c.h.b16 %v5708
    %v7732 = vunpack.c.l.b16 %v5709
    %v7733 = vunpack.c.h.b16 %v5709
    %v7734 = vunpack.c.l.b16 %v5710
    %v7735 = vunpack.c.l.b16 %v5711
    %v7736 = vunpack.c.h.b16 %v5711
    %v7737 = vunpack.c.l.b16 %v5712
    %v7738 = vunpack.c.h.b16 %v5712
    %v7739 = vunpack.c.l.b16 %v5713
    %v7740 = vunpack.c.l.b16 %v5714
    %v7741 = vunpack.c.h.b16 %v5714
    %v7742 = vunpack.c.l.b16 %v5715
    %v7743 = vunpack.c.h.b16 %v5715
    %v7744 = vunpack.c.l.b16 %v5716
    %v7745 = vunpack.c.l.b16 %v5717
    %v7746 = vunpack.c.h.b16 %v5717
    %v7747 = vunpack.c.l.b16 %v5718
    %v7748 = vunpack.c.h.b16 %v5718
    %v7749 = vunpack.c.l.b16 %v5719
    %v7750 = vunpack.c.l.b16 %v5720
    %v7751 = vunpack.c.h.b16 %v5720
    %v7752 = vunpack.c.l.b16 %v5721
    %v7753 = vunpack.c.h.b16 %v5721
    %v7754 = vunpack.c.l.b16 %v5722
    %v7755 = vunpack.c.l.b16 %v5723
    %v7756 = vunpack.c.h.b16 %v5723
    %v7757 = vunpack.c.l.b16 %v5724
    %v7758 = vunpack.c.h.b16 %v5724
    %v7759 = vunpack.c.l.b16 %v5725
    %v7760 = vunpack.c.l.b16 %v5726
    %v7761 = vunpack.c.h.b16 %v5726
    %v7762 = vunpack.c.l.b16 %v5727
    %v7763 = vunpack.c.h.b16 %v5727
    %v7764 = vunpack.c.l.b16 %v5728
    %v7765 = vunpack.c.l.b16 %v5729
    %v7766 = vunpack.c.h.b16 %v5729
    %v7767 = vunpack.c.l.b16 %v5730
    %v7768 = vunpack.c.h.b16 %v5730
    %v7769 = vunpack.c.l.b16 %v5731
    %v7770 = vunpack.c.l.b16 %v5732
    %v7771 = vunpack.c.h.b16 %v5732
    %v7772 = vunpack.c.l.b16 %v5733
    %v7773 = vunpack.c.h.b16 %v5733
    %v7774 = vunpack.c.l.b16 %v5734
    %v7775 = vunpack.c.l.b16 %v5735
    %v7776 = vunpack.c.h.b16 %v5735
    %v7777 = vunpack.c.l.b16 %v5736
    %v7778 = vunpack.c.h.b16 %v5736
    %v7779 = vunpack.c.l.b16 %v5737
    %v7780 = vunpack.c.l.b16 %v5738
    %v7781 = vunpack.c.h.b16 %v5738
    %v7782 = vunpack.c.l.b16 %v5739
    %v7783 = vunpack.c.h.b16 %v5739
    %v7784 = vunpack.c.l.b16 %v5740
    %v7785 = vunpack.c.l.b16 %v5741
    %v7786 = vunpack.c.h.b16 %v5741
    %v7787 = vunpack.c.l.b16 %v5742
    %v7788 = vunpack.c.h.b16 %v5742
    %v7789 = vunpack.c.l.b16 %v5743
    %v7790 = vunpack.c.l.b16 %v5744
    %v7791 = vunpack.c.h.b16 %v5744
    %v7792 = vunpack.c.l.b16 %v5745
    %v7793 = vunpack.c.h.b16 %v5745
    %v7794 = vunpack.c.l.b16 %v5746
    %v7795 = vunpack.c.l.b16 %v5747
    %v7796 = vunpack.c.h.b16 %v5747
    %v7797 = vunpack.c.l.b16 %v5748
    %v7798 = vunpack.c.h.b16 %v5748
    %v7799 = vunpack.c.l.b16 %v5749
    %v7800 = vunpack.c.l.b16 %v5750
    %v7801 = vunpack.c.h.b16 %v5750
    %v7802 = vunpack.c.l.b16 %v5751
    %v7803 = vunpack.c.h.b16 %v5751
    %v7804 = vunpack.c.l.b16 %v5752
    %v7805 = vunpack.c.l.b16 %v5753
    %v7806 = vunpack.c.h.b16 %v5753
    %v7807 = vunpack.c.l.b16 %v5754
    %v7808 = vunpack.c.h.b16 %v5754
    %v7809 = vunpack.c.l.b16 %v5755
    %v7810 = vunpack.c.l.b16 %v5756
    %v7811 = vunpack.c.h.b16 %v5756
    %v7812 = vunpack.c.l.b16 %v5757
    %v7813 = vunpack.c.h.b16 %v5757
    %v7814 = vunpack.c.l.b16 %v5758
    %v7815 = vunpack.c.l.b16 %v5759
    %v7816 = vunpack.c.h.b16 %v5759
    %v7817 = vunpack.c.l.b16 %v5760
    %v7818 = vunpack.c.h.b16 %v5760
    %v7819 = vunpack.c.l.b16 %v5761
    %v7820 = vunpack.c.l.b16 %v5762
    %v7821 = vunpack.c.h.b16 %v5762
    %v7822 = vunpack.c.l.b16 %v5763
    %v7823 = vunpack.c.h.b16 %v5763
    %v7824 = vunpack.c.l.b16 %v5764
    %v7825 = vunpack.c.l.b16 %v5765
    %v7826 = vunpack.c.h.b16 %v5765
    %v7827 = vunpack.c.l.b16 %v5766
    %v7828 = vunpack.c.h.b16 %v5766
    %v7829 = vunpack.c.l.b16 %v5767
    %v7830 = vunpack.c.l.b16 %v5768
    %v7831 = vunpack.c.h.b16 %v5768
    %v7832 = vunpack.c.l.b16 %v5769
    %v7833 = vunpack.c.h.b16 %v5769
    %v7834 = vunpack.c.l.b16 %v5770
    %v7835 = vunpack.c.l.b16 %v5771
    %v7836 = vunpack.c.h.b16 %v5771
    %v7837 = vunpack.c.l.b16 %v5772
    %v7838 = vunpack.c.h.b16 %v5772
    %v7839 = vunpack.c.l.b16 %v5773
    %v7840 = vunpack.c.l.b16 %v5774
    %v7841 = vunpack.c.h.b16 %v5774
    %v7842 = vunpack.c.l.b16 %v5775
    %v7843 = vunpack.c.h.b16 %v5775
    %v7844 = vunpack.c.l.b16 %v5776
    %v7845 = vunpack.c.l.b16 %v5777
    %v7846 = vunpack.c.h.b16 %v5777
    %v7847 = vunpack.c.l.b16 %v5778
    %v7848 = vunpack.c.h.b16 %v5778
    %v7849 = vunpack.c.l.b16 %v5779
    %v7850 = vunpack.c.l.b16 %v5780
    %v7851 = vunpack.c.h.b16 %v5780
    %v7852 = vunpack.c.l.b16 %v5781
    %v7853 = vunpack.c.h.b16 %v5781
    %v7854 = vunpack.c.l.b16 %v5782
    %v7855 = vunpack.c.l.b16 %v5783
    %v7856 = vunpack.c.h.b16 %v5783
    %v7857 = vunpack.c.l.b16 %v5784
    %v7858 = vunpack.c.h.b16 %v5784
    %v7859 = vunpack.c.l.b16 %v5785
    %v7860 = vunpack.c.l.b16 %v5786
    %v7861 = vunpack.c.h.b16 %v5786
    %v7862 = vunpack.c.l.b16 %v5787
    %v7863 = vunpack.c.h.b16 %v5787
    %v7864 = vunpack.c.l.b16 %v5788
    %v7865 = vunpack.c.l.b16 %v5789
    %v7866 = vunpack.c.h.b16 %v5789
    %v7867 = vunpack.c.l.b16 %v5790
    %v7868 = vunpack.c.h.b16 %v5790
    %v7869 = vunpack.c.l.b16 %v5791
    %v7870 = vunpack.c.l.b16 %v5792
    %v7871 = vunpack.c.h.b16 %v5792
    %v7872 = vunpack.c.l.b16 %v5793
    %v7873 = vunpack.c.h.b16 %v5793
    %v7874 = vunpack.c.l.b16 %v5794
    %v7875 = vunpack.c.l.b16 %v5795
    %v7876 = vunpack.c.h.b16 %v5795
    %v7877 = vunpack.c.l.b16 %v5796
    %v7878 = vunpack.c.h.b16 %v5796
    %v7879 = vunpack.c.l.b16 %v5797
    %v7880 = vunpack.c.l.b16 %v5798
    %v7881 = vunpack.c.h.b16 %v5798
    %v7882 = vunpack.c.l.b16 %v5799
    %v7883 = vunpack.c.h.b16 %v5799
    %v7884 = vunpack.c.l.b16 %v5800
    %v7885 = vunpack.c.l.b16 %v5801
    %v7886 = vunpack.c.h.b16 %v5801
    %v7887 = vunpack.c.l.b16 %v5802
    %v7888 = vunpack.c.h.b16 %v5802
    %v7889 = vunpack.c.l.b16 %v5803
    %v7890 = vunpack.c.l.b16 %v5804
    %v7891 = vunpack.c.h.b16 %v5804
    %v7892 = vunpack.c.l.b16 %v5805
    %v7893 = vunpack.c.h.b16 %v5805
    %v7894 = vunpack.c.l.b16 %v5806
    %v7895 = vunpack.c.l.b16 %v5807
    %v7896 = vunpack.c.h.b16 %v5807
    %v7897 = vunpack.c.l.b16 %v5808
    %v7898 = vunpack.c.h.b16 %v5808
    %v7899 = vunpack.c.l.b16 %v5809
    %v7900 = vunpack.c.l.b16 %v5810
    %v7901 = vunpack.c.h.b16 %v5810
    %v7902 = vunpack.c.l.b16 %v5811
    %v7903 = vunpack.c.h.b16 %v5811
    %v7904 = vunpack.c.l.b16 %v5812
    %v7905 = vunpack.c.l.b16 %v5813
    %v7906 = vunpack.c.h.b16 %v5813
    %v7907 = vunpack.c.l.b16 %v5814
    %v7908 = vunpack.c.h.b16 %v5814
    %v7909 = vunpack.c.l.b16 %v5815
    %v7910 = vunpack.c.l.b16 %v5816
    %v7911 = vunpack.c.h.b16 %v5816
    %v7912 = vunpack.c.l.b16 %v5817
    %v7913 = vunpack.c.h.b16 %v5817
    %v7914 = vunpack.c.l.b16 %v5818
    %v7915 = vunpack.c.l.b16 %v5819
    %v7916 = vunpack.c.h.b16 %v5819
    %v7917 = vunpack.c.l.b16 %v5820
    %v7918 = vunpack.c.h.b16 %v5820
    %v7919 = vunpack.c.l.b16 %v5821
    %v7920 = vunpack.c.l.b16 %v5822
    %v7921 = vunpack.c.h.b16 %v5822
    %v7922 = vunpack.c.l.b16 %v5823
    %v7923 = vunpack.c.h.b16 %v5823
    %v7924 = vunpack.c.l.b16 %v5824
    %v7925 = vunpack.c.l.b16 %v5825
    %v7926 = vunpack.c.h.b16 %v5825
    %v7927 = vunpack.c.l.b16 %v5826
    %v7928 = vunpack.c.h.b16 %v5826
    %v7929 = vunpack.c.l.b16 %v5827
    %v7930 = vunpack.c.l.b16 %v5828
    %v7931 = vunpack.c.h.b16 %v5828
    %v7932 = vunpack.c.l.b16 %v5829
    %v7933 = vunpack.c.h.b16 %v5829
    %v7934 = vunpack.c.l.b16 %v5830
    %v7935 = vunpack.c.l.b16 %v5831
    %v7936 = vunpack.c.h.b16 %v5831
    %v7937 = vunpack.c.l.b16 %v5832
    %v7938 = vunpack.c.h.b16 %v5832
    %v7939 = vunpack.c.l.b16 %v5833
    %v7940 = vunpack.c.l.b16 %v5834
    %v7941 = vunpack.c.h.b16 %v5834
    %v7942 = vunpack.c.l.b16 %v5835
    %v7943 = vunpack.c.h.b16 %v5835
    %v7944 = vunpack.c.l.b16 %v5836
    %v7945 = vunpack.c.l.b16 %v5837
    %v7946 = vunpack.c.h.b16 %v5837
    %v7947 = vunpack.c.l.b16 %v5838
    %v7948 = vunpack.c.h.b16 %v5838
    %v7949 = vunpack.c.l.b16 %v5839
    %v7950 = vunpack.c.l.b16 %v5840
    %v7951 = vunpack.c.h.b16 %v5840
    %v7952 = vunpack.c.l.b16 %v5841
    %v7953 = vunpack.c.h.b16 %v5841
    %v7954 = vunpack.c.l.b16 %v5842
    %v7955 = vunpack.c.l.b16 %v5843
    %v7956 = vunpack.c.h.b16 %v5843
    %v7957 = vunpack.c.l.b16 %v5844
    %v7958 = vunpack.c.h.b16 %v5844
    %v7959 = vunpack.c.l.b16 %v5845
    %v7960 = vunpack.c.l.b16 %v5846
    %v7961 = vunpack.c.h.b16 %v5846
    %v7962 = vunpack.c.l.b16 %v5847
    %v7963 = vunpack.c.h.b16 %v5847
    %v7964 = vunpack.c.l.b16 %v5848
    %v7965 = vunpack.c.l.b16 %v5849
    %v7966 = vunpack.c.h.b16 %v5849
    %v7967 = vunpack.c.l.b16 %v5850
    %v7968 = vunpack.c.h.b16 %v5850
    %v7969 = vunpack.c.l.b16 %v5851
    %v7970 = vunpack.c.l.b16 %v5852
    %v7971 = vunpack.c.h.b16 %v5852
    %v7972 = vunpack.c.l.b16 %v5853
    %v7973 = vunpack.c.h.b16 %v5853
    %v7974 = vunpack.c.l.b16 %v5854
    %v7975 = vunpack.c.l.b16 %v5855
    %v7976 = vunpack.c.h.b16 %v5855
    %v7977 = vunpack.c.l.b16 %v5856
    %v7978 = vunpack.c.h.b16 %v5856
    %v7979 = vunpack.c.l.b16 %v5857
    %v7980 = vunpack.c.l.b16 %v5858
    %v7981 = vunpack.c.h.b16 %v5858
    %v7982 = vunpack.c.l.b16 %v5859
    %v7983 = vunpack.c.h.b16 %v5859
    %v7984 = vunpack.c.l.b16 %v5860
    %v7985 = vunpack.c.l.b16 %v5861
    %v7986 = vunpack.c.h.b16 %v5861
    %v7987 = vunpack.c.l.b16 %v5862
    %v7988 = vunpack.c.h.b16 %v5862
    %v7989 = vunpack.c.l.b16 %v5863
    %v7990 = vunpack.c.l.b16 %v5864
    %v7991 = vunpack.c.h.b16 %v5864
    %v7992 = vunpack.c.l.b16 %v5865
    %v7993 = vunpack.c.h.b16 %v5865
    %v7994 = vunpack.c.l.b16 %v5866
    %v7995 = vunpack.c.l.b16 %v5867
    %v7996 = vunpack.c.h.b16 %v5867
    %v7997 = vunpack.c.l.b16 %v5868
    %v7998 = vunpack.c.h.b16 %v5868
    %v7999 = vunpack.c.l.b16 %v5869
    %v8000 = vunpack.c.l.b16 %v5870
    %v8001 = vunpack.c.h.b16 %v5870
    %v8002 = vunpack.c.l.b16 %v5871
    %v8003 = vunpack.c.h.b16 %v5871
    %v8004 = vunpack.c.l.b16 %v5872
    %v8005 = vunpack.c.l.b16 %v5873
    %v8006 = vunpack.c.h.b16 %v5873
    %v8007 = vunpack.c.l.b16 %v5874
    %v8008 = vunpack.c.h.b16 %v5874
    %v8009 = vunpack.c.l.b16 %v5875
    %v8010 = vunpack.c.l.b16 %v5876
    %v8011 = vunpack.c.h.b16 %v5876
    %v8012 = vunpack.c.l.b16 %v5877
    %v8013 = vunpack.c.h.b16 %v5877
    %v8014 = vunpack.c.l.b16 %v5878
    %v8015 = vunpack.c.l.b16 %v5879
    %v8016 = vunpack.c.h.b16 %v5879
    %v8017 = vunpack.c.l.b16 %v5880
    %v8018 = vunpack.c.h.b16 %v5880
    %v8019 = vunpack.c.l.b16 %v5881
    %v8020 = vunpack.c.l.b16 %v5882
    %v8021 = vunpack.c.h.b16 %v5882
    %v8022 = vunpack.c.l.b16 %v5883
    %v8023 = vunpack.c.h.b16 %v5883
    %v8024 = vunpack.c.l.b16 %v5884
    %v8025 = vunpack.c.l.b16 %v5885
    %v8026 = vunpack.c.h.b16 %v5885
    %v8027 = vunpack.c.l.b16 %v5886
    %v8028 = vunpack.c.h.b16 %v5886
    %v8029 = vunpack.c.l.b16 %v5887
    %v8030 = vunpack.c.l.b16 %v5888
    %v8031 = vunpack.c.h.b16 %v5888
    %v8032 = vunpack.c.l.b16 %v5889
    %v8033 = vunpack.c.h.b16 %v5889
    %v8034 = vunpack.c.l.b16 %v5890
    %v8035 = vunpack.c.l.b16 %v5891
    %v8036 = vunpack.c.h.b16 %v5891
    %v8037 = vunpack.c.l.b16 %v5892
    %v8038 = vunpack.c.h.b16 %v5892
    %v8039 = vunpack.c.l.b16 %v5893
    %v8040 = vunpack.c.l.b16 %v5894
    %v8041 = vunpack.c.h.b16 %v5894
    %v8042 = vunpack.c.l.b16 %v5895
    %v8043 = vunpack.c.h.b16 %v5895
    %v8044 = vunpack.c.l.b16 %v5896
    %v8045 = vunpack.c.l.b16 %v5897
    %v8046 = vunpack.c.h.b16 %v5897
    %v8047 = vunpack.c.l.b16 %v5898
    %v8048 = vunpack.c.h.b16 %v5898
    %v8049 = vunpack.c.l.b16 %v5899
    %v8050 = vunpack.c.l.b16 %v5900
    %v8051 = vunpack.c.h.b16 %v5900
    %v8052 = vunpack.c.l.b16 %v5901
    %v8053 = vunpack.c.h.b16 %v5901
    %v8054 = vunpack.c.l.b16 %v5902
    %v8055 = vunpack.c.l.b16 %v5903
    %v8056 = vunpack.c.h.b16 %v5903
    %v8057 = vunpack.c.l.b16 %v5904
    %v8058 = vunpack.c.h.b16 %v5904
    %v8059 = vunpack.c.l.b16 %v5905
    %v8060 = vunpack.c.l.b16 %v5906
    %v8061 = vunpack.c.h.b16 %v5906
    %v8062 = vunpack.c.l.b16 %v5907
    %v8063 = vunpack.c.h.b16 %v5907
    %v8064 = vunpack.c.l.b16 %v5908
    %v8065 = vunpack.c.l.b16 %v5909
    %v8066 = vunpack.c.h.b16 %v5909
    %v8067 = vunpack.c.l.b16 %v5910
    %v8068 = vunpack.c.h.b16 %v5910
    %v8069 = vunpack.c.l.b16 %v5911
    %v8070 = vunpack.c.l.b16 %v5912
    %v8071 = vunpack.c.h.b16 %v5912
    %v8072 = vunpack.c.l.b16 %v5913
    %v8073 = vunpack.c.h.b16 %v5913
    %v8074 = vunpack.c.l.b16 %v5914
    %v8075 = vunpack.c.l.b16 %v5915
    %v8076 = vunpack.c.h.b16 %v5915
    %v8077 = vunpack.c.l.b16 %v5916
    %v8078 = vunpack.c.h.b16 %v5916
    %v8079 = vunpack.c.l.b16 %v5917
    %v8080 = vunpack.c.l.b16 %v5918
    %v8081 = vunpack.c.h.b16 %v5918
    %v8082 = vunpack.c.l.b16 %v5919
    %v8083 = vunpack.c.h.b16 %v5919
    %v8084 = vunpack.c.l.b16 %v5920
    %v8085 = vunpack.c.l.b16 %v5921
    %v8086 = vunpack.c.h.b16 %v5921
    %v8087 = vunpack.c.l.b16 %v5922
    %v8088 = vunpack.c.h.b16 %v5922
    %v8089 = vunpack.c.l.b16 %v5923
    %v8090 = vunpack.c.l.b16 %v5924
    %v8091 = vunpack.c.h.b16 %v5924
    %v8092 = vunpack.c.l.b16 %v5925
    %v8093 = vunpack.c.h.b16 %v5925
    %v8094 = vunpack.c.l.b16 %v5926
    %v8095 = vunpack.c.l.b16 %v5927
    %v8096 = vunpack.c.h.b16 %v5927
    %v8097 = vunpack.c.l.b16 %v5928
    %v8098 = vunpack.c.h.b16 %v5928
    %v8099 = vunpack.c.l.b16 %v5929
    %v8100 = vunpack.c.l.b16 %v5930
    %v8101 = vunpack.c.h.b16 %v5930
    %v8102 = vunpack.c.l.b16 %v5931
    %v8103 = vunpack.c.h.b16 %v5931
    %v8104 = vunpack.c.l.b16 %v5932
    %v8105 = vunpack.c.l.b16 %v5933
    %v8106 = vunpack.c.h.b16 %v5933
    %v8107 = vunpack.c.l.b16 %v5934
    %v8108 = vunpack.c.h.b16 %v5934
    %v8109 = vunpack.c.l.b16 %v5935
    %v8110 = vunpack.c.l.b16 %v5936
    %v8111 = vunpack.c.h.b16 %v5936
    %v8112 = vunpack.c.l.b16 %v5937
    %v8113 = vunpack.c.h.b16 %v5937
    %v8114 = vunpack.c.l.b16 %v5938
    %v8115 = vunpack.c.l.b16 %v5939
    %v8116 = vunpack.c.h.b16 %v5939
    %v8117 = vunpack.c.l.b16 %v5940
    %v8118 = vunpack.c.h.b16 %v5940
    %v8119 = vunpack.c.l.b16 %v5941
    %v8120 = vunpack.c.l.b16 %v5942
    %v8121 = vunpack.c.h.b16 %v5942
    %v8122 = vunpack.c.l.b16 %v5943
    %v8123 = vunpack.c.h.b16 %v5943
    %v8124 = vunpack.c.l.b16 %v5944
    %v8125 = vunpack.c.l.b16 %v5945
    %v8126 = vunpack.c.h.b16 %v5945
    %v8127 = vunpack.c.l.b16 %v5946
    %v8128 = vunpack.c.h.b16 %v5946
    %v8129 = vunpack.c.l.b16 %v5947
    %v8130 = vunpack.c.l.b16 %v5948
    %v8131 = vunpack.c.h.b16 %v5948
    %v8132 = vunpack.c.l.b16 %v5949
    %v8133 = vunpack.c.h.b16 %v5949
    %v8134 = vunpack.c.l.b16 %v5950
    %v8135 = vunpack.c.l.b16 %v5951
    %v8136 = vunpack.c.h.b16 %v5951
    %v8137 = vunpack.c.l.b16 %v5952
    %v8138 = vunpack.c.h.b16 %v5952
    %v8139 = vunpack.c.l.b16 %v5953
    %v8140 = vunpack.c.l.b16 %v5954
    %v8141 = vunpack.c.h.b16 %v5954
    %v8142 = vunpack.c.l.b16 %v5955
    %v8143 = vunpack.c.h.b16 %v5955
    %v8144 = vunpack.c.l.b16 %v5956
    %v8145 = vunpack.c.l.b16 %v5957
    %v8146 = vunpack.c.h.b16 %v5957
    %v8147 = vunpack.c.l.b16 %v5958
    %v8148 = vunpack.c.h.b16 %v5958
    %v8149 = vunpack.c.l.b16 %v5959
    %v8150 = vunpack.c.l.b16 %v5960
    %v8151 = vunpack.c.h.b16 %v5960
    %v8152 = vunpack.c.l.b16 %v5961
    %v8153 = vunpack.c.h.b16 %v5961
    %v8154 = vunpack.c.l.b16 %v5962
    %v8155 = vunpack.c.l.b16 %v5963
    %v8156 = vunpack.c.h.b16 %v5963
    %v8157 = vunpack.c.l.b16 %v5964
    %v8158 = vunpack.c.h.b16 %v5964
    %v8159 = vunpack.c.l.b16 %v5965
    %v8160 = vunpack.c.l.b16 %v5966
    %v8161 = vunpack.c.h.b16 %v5966
    %v8162 = vunpack.c.l.b16 %v5967
    %v8163 = vunpack.c.h.b16 %v5967
    %v8164 = vunpack.c.l.b16 %v5968
    %v8165 = vunpack.c.l.b16 %v5969
    %v8166 = vunpack.c.h.b16 %v5969
    %v8167 = vunpack.c.l.b16 %v5970
    %v8168 = vunpack.c.h.b16 %v5970
    %v8169 = vunpack.c.l.b16 %v5971
    %v8170 = vunpack.c.l.b16 %v5972
    %v8171 = vunpack.c.h.b16 %v5972
    %v8172 = vunpack.c.l.b16 %v5973
    %v8173 = vunpack.c.h.b16 %v5973
    %v8174 = vunpack.c.l.b16 %v5974
    %v8175 = vunpack.c.l.b16 %v5975
    %v8176 = vunpack.c.h.b16 %v5975
    %v8177 = vunpack.c.l.b16 %v5976
    %v8178 = vunpack.c.h.b16 %v5976
    %v8179 = vunpack.c.l.b16 %v5977
    %v8180 = vunpack.c.l.b16 %v5978
    %v8181 = vunpack.c.h.b16 %v5978
    %v8182 = vunpack.c.l.b16 %v5979
    %v8183 = vunpack.c.h.b16 %v5979
    %v8184 = vunpack.c.l.b16 %v5980
    %v8185 = vunpack.c.l.b16 %v5981
    %v8186 = vunpack.c.h.b16 %v5981
    %v8187 = vunpack.c.l.b16 %v5982
    %v8188 = vunpack.c.h.b16 %v5982
    %v8189 = vunpack.c.l.b16 %v5983
    %v8190 = vunpack.c.l.b16 %v5984
    %v8191 = vunpack.c.h.b16 %v5984
    %v8192 = vunpack.c.l.b16 %v5985
    %v8193 = vunpack.c.h.b16 %v5985
    %v8194 = vunpack.c.l.b16 %v5986
    %v8195 = vunpack.c.l.b16 %v5987
    %v8196 = vunpack.c.h.b16 %v5987
    %v8197 = vunpack.c.l.b16 %v5988
    %v8198 = vunpack.c.h.b16 %v5988
    %v8199 = vunpack.c.l.b16 %v5989
    %v8200 = vunpack.c.l.b16 %v5990
    %v8201 = vunpack.c.h.b16 %v5990
    %v8202 = vunpack.c.l.b16 %v5991
    %v8203 = vunpack.c.h.b16 %v5991
    %v8204 = vunpack.c.l.b16 %v5992
    %v8205 = vunpack.c.l.b16 %v5993
    %v8206 = vunpack.c.h.b16 %v5993
    %v8207 = vunpack.c.l.b16 %v5994
    %v8208 = vunpack.c.h.b16 %v5994
    %v8209 = vunpack.c.l.b16 %v5995
    %v8210 = vunpack.c.l.b16 %v5996
    %v8211 = vunpack.c.h.b16 %v5996
    %v8212 = vunpack.c.l.b16 %v5997
    %v8213 = vunpack.c.h.b16 %v5997
    %v8214 = vunpack.c.l.b16 %v5998
    %v8215 = vunpack.c.l.b16 %v5999
    %v8216 = vunpack.c.h.b16 %v5999
    %v8217 = vunpack.c.l.b16 %v6000
    %v8218 = vunpack.c.h.b16 %v6000
    %v8219 = vunpack.c.l.b16 %v6001
    %v8220 = vunpack.c.l.b16 %v6002
    %v8221 = vunpack.c.h.b16 %v6002
    %v8222 = vunpack.c.l.b16 %v6003
    %v8223 = vunpack.c.h.b16 %v6003
    %v8224 = vunpack.c.l.b16 %v6004
    %v8225 = vunpack.c.l.b16 %v6005
    %v8226 = vunpack.c.h.b16 %v6005
    %v8227 = vunpack.c.l.b16 %v6006
    %v8228 = vunpack.c.h.b16 %v6006
    %v8229 = vunpack.c.l.b16 %v6007
    %v8230 = vunpack.c.l.b16 %v6008
    %v8231 = vunpack.c.h.b16 %v6008
    %v8232 = vunpack.c.l.b16 %v6009
    %v8233 = vunpack.c.h.b16 %v6009
    %v8234 = vunpack.c.l.b16 %v6010
    %v8235 = vunpack.c.l.b16 %v6011
    %v8236 = vunpack.c.h.b16 %v6011
    %v8237 = vunpack.c.l.b16 %v6012
    %v8238 = vunpack.c.h.b16 %v6012
    %v8239 = vunpack.c.l.b16 %v6013
    %v8240 = vunpack.c.l.b16 %v6014
    %v8241 = vunpack.c.h.b16 %v6014
    %v8242 = vunpack.c.l.b16 %v6015
    %v8243 = vunpack.c.h.b16 %v6015
    %v8244 = vunpack.c.l.b16 %v6016
    %v8245 = vunpack.c.l.b16 %v6017
    %v8246 = vunpack.c.h.b16 %v6017
    %v8247 = vunpack.c.l.b16 %v6018
    %v8248 = vunpack.c.h.b16 %v6018
    %v8249 = vunpack.c.l.b16 %v6019
    %v8250 = vunpack.c.l.b16 %v6020
    %v8251 = vunpack.c.h.b16 %v6020
    %v8252 = vunpack.c.l.b16 %v6021
    %v8253 = vunpack.c.h.b16 %v6021
    %v8254 = vunpack.c.l.b16 %v6022
    %v8255 = vunpack.c.l.b16 %v6023
    %v8256 = vunpack.c.h.b16 %v6023
    %v8257 = vunpack.c.l.b16 %v6024
    %v8258 = vunpack.c.h.b16 %v6024
    %v8259 = vunpack.c.l.b16 %v6025
    %v8260 = vunpack.c.l.b16 %v6026
    %v8261 = vunpack.c.h.b16 %v6026
    %v8262 = vunpack.c.l.b16 %v6027
    %v8263 = vunpack.c.h.b16 %v6027
    %v8264 = vunpack.c.l.b16 %v6028
    %v8265 = vunpack.c.l.b16 %v6029
    %v8266 = vunpack.c.h.b16 %v6029
    %v8267 = vunpack.c.l.b16 %v6030
    %v8268 = vunpack.c.h.b16 %v6030
    %v8269 = vunpack.c.l.b16 %v6031
    %v8270 = vunpack.c.l.b16 %v6032
    %v8271 = vunpack.c.h.b16 %v6032
    %v8272 = vunpack.c.l.b16 %v6033
    %v8273 = vunpack.c.h.b16 %v6033
    %v8274 = vunpack.c.l.b16 %v6034
    %v8275 = vunpack.c.l.b16 %v6035
    %v8276 = vunpack.c.h.b16 %v6035
    %v8277 = vunpack.c.l.b16 %v6036
    %v8278 = vunpack.c.h.b16 %v6036
    %v8279 = vunpack.c.l.b16 %v6037
    %v8280 = vunpack.c.l.b16 %v6038
    %v8281 = vunpack.c.h.b16 %v6038
    %v8282 = vunpack.c.l.b16 %v6039
    %v8283 = vunpack.c.h.b16 %v6039
    %v8284 = vunpack.c.l.b16 %v6040
    %v8285 = vunpack.c.l.b16 %v6041
    %v8286 = vunpack.c.h.b16 %v6041
    %v8287 = vunpack.c.l.b16 %v6042
    %v8288 = vunpack.c.h.b16 %v6042
    %v8289 = vunpack.c.l.b16 %v6043
    %v8290 = vunpack.c.l.b16 %v6044
    %v8291 = vunpack.c.h.b16 %v6044
    %v8292 = vunpack.c.l.b16 %v6045
    %v8293 = vunpack.c.h.b16 %v6045
    %v8294 = vunpack.c.l.b16 %v6046
    %v8295 = vunpack.c.l.b16 %v6047
    %v8296 = vunpack.c.h.b16 %v6047
    %v8297 = vunpack.c.l.b16 %v6048
    %v8298 = vunpack.c.h.b16 %v6048
    %v8299 = vunpack.c.l.b16 %v6049
    %v8300 = vunpack.c.l.b16 %v6050
    %v8301 = vunpack.c.h.b16 %v6050
    %v8302 = vunpack.c.l.b16 %v6051
    %v8303 = vunpack.c.h.b16 %v6051
    %v8304 = vunpack.c.l.b16 %v6052
    %v8305 = vunpack.c.l.b16 %v6053
    %v8306 = vunpack.c.h.b16 %v6053
    %v8307 = vunpack.c.l.b16 %v6054
    %v8308 = vunpack.c.h.b16 %v6054
    %v8309 = vunpack.c.l.b16 %v6055
    %v8310 = vunpack.c.l.b16 %v6056
    %v8311 = vunpack.c.h.b16 %v6056
    %v8312 = vunpack.c.l.b16 %v6057
    %v8313 = vunpack.c.h.b16 %v6057
    %v8314 = vunpack.c.l.b16 %v6058
    %v8315 = vunpack.c.l.b16 %v6059
    %v8316 = vunpack.c.h.b16 %v6059
    %v8317 = vunpack.c.l.b16 %v6060
    %v8318 = vunpack.c.h.b16 %v6060
    %v8319 = vunpack.c.l.b16 %v6061
    %v8320 = vunpack.c.l.b16 %v6062
    %v8321 = vunpack.c.h.b16 %v6062
    %v8322 = vunpack.c.l.b16 %v6063
    %v8323 = vunpack.c.h.b16 %v6063
    %v8324 = vunpack.c.l.b16 %v6064
    %v8325 = vunpack.c.l.b16 %v6065
    %v8326 = vunpack.c.h.b16 %v6065
    %v8327 = vunpack.c.l.b16 %v6066
    %v8328 = vunpack.c.h.b16 %v6066
    %v8329 = vunpack.c.l.b16 %v6067
    %v8330 = vunpack.c.l.b16 %v6068
    %v8331 = vunpack.c.h.b16 %v6068
    %v8332 = vunpack.c.l.b16 %v6069
    %v8333 = vunpack.c.h.b16 %v6069
    %v8334 = vunpack.c.l.b16 %v6070
    %v8335 = vunpack.c.l.b16 %v6071
    %v8336 = vunpack.c.h.b16 %v6071
    %v8337 = vunpack.c.l.b16 %v6072
    %v8338 = vunpack.c.h.b16 %v6072
    %v8339 = vunpack.c.l.b16 %v6073
    %v8340 = vunpack.c.l.b16 %v6074
    %v8341 = vunpack.c.h.b16 %v6074
    %v8342 = vunpack.c.l.b16 %v6075
    %v8343 = vunpack.c.h.b16 %v6075
    %v8344 = vunpack.c.l.b16 %v6076
    %v8345 = vunpack.c.l.b16 %v6077
    %v8346 = vunpack.c.h.b16 %v6077
    %v8347 = vunpack.c.l.b16 %v6078
    %v8348 = vunpack.c.h.b16 %v6078
    %v8349 = vunpack.c.l.b16 %v6079
    %v8350 = vunpack.c.l.b16 %v6080
    %v8351 = vunpack.c.h.b16 %v6080
    %v8352 = vunpack.c.l.b16 %v6081
    %v8353 = vunpack.c.h.b16 %v6081
    %v8354 = vunpack.c.l.b16 %v6082
    %v8355 = vunpack.c.l.b16 %v6083
    %v8356 = vunpack.c.h.b16 %v6083
    %v8357 = vunpack.c.l.b16 %v6084
    %v8358 = vunpack.c.h.b16 %v6084
    %v8359 = vunpack.c.l.b16 %v6085
    %v8360 = vunpack.c.l.b16 %v6086
    %v8361 = vunpack.c.h.b16 %v6086
    %v8362 = vunpack.c.l.b16 %v6087
    %v8363 = vunpack.c.h.b16 %v6087
    %v8364 = vunpack.c.l.b16 %v6088
    %v8365 = vunpack.c.l.b16 %v6089
    %v8366 = vunpack.c.h.b16 %v6089
    %v8367 = vunpack.c.l.b16 %v6090
    %v8368 = vunpack.c.h.b16 %v6090
    %v8369 = vunpack.c.l.b16 %v6091
    %v8370 = vunpack.c.l.b16 %v6092
    %v8371 = vunpack.c.h.b16 %v6092
    %v8372 = vunpack.c.l.b16 %v6093
    %v8373 = vunpack.c.h.b16 %v6093
    %v8374 = vunpack.c.l.b16 %v6094
    %v8375 = vunpack.c.l.b16 %v6095
    %v8376 = vunpack.c.h.b16 %v6095
    %v8377 = vunpack.c.l.b16 %v6096
    %v8378 = vunpack.c.h.b16 %v6096
    %v8379 = vunpack.c.l.b16 %v6097
    %v8380 = vunpack.c.l.b16 %v6098
    %v8381 = vunpack.c.h.b16 %v6098
    %v8382 = vunpack.c.l.b16 %v6099
    %v8383 = vunpack.c.h.b16 %v6099
    %v8384 = vunpack.c.l.b16 %v6100
    %v8385 = vunpack.c.l.b16 %v6101
    %v8386 = vunpack.c.h.b16 %v6101
    %v8387 = vunpack.c.l.b16 %v6102
    %v8388 = vunpack.c.h.b16 %v6102
    %v8389 = vunpack.c.l.b16 %v6103
    %v8390 = vunpack.c.l.b16 %v6104
    %v8391 = vunpack.c.h.b16 %v6104
    %v8392 = vunpack.c.l.b16 %v6105
    %v8393 = vunpack.c.h.b16 %v6105
    %v8394 = vunpack.c.l.b16 %v6106
    %v8395 = vunpack.c.l.b16 %v6107
    %v8396 = vunpack.c.h.b16 %v6107
    %v8397 = vunpack.c.l.b16 %v6108
    %v8398 = vunpack.c.h.b16 %v6108
    %v8399 = vunpack.c.l.b16 %v6109
    %v8400 = vunpack.c.l.b16 %v6110
    %v8401 = vunpack.c.h.b16 %v6110
    %v8402 = vunpack.c.l.b16 %v6111
    %v8403 = vunpack.c.h.b16 %v6111
    %v8404 = vunpack.c.l.b16 %v6112
    %v8405 = vunpack.c.l.b16 %v6113
    %v8406 = vunpack.c.h.b16 %v6113
    %v8407 = vunpack.c.l.b16 %v6114
    %v8408 = vunpack.c.h.b16 %v6114
    %v8409 = vunpack.c.l.b16 %v6115
    %v8410 = vunpack.c.l.b16 %v6116
    %v8411 = vunpack.c.h.b16 %v6116
    %v8412 = vunpack.c.l.b16 %v6117
    %v8413 = vunpack.c.h.b16 %v6117
    %v8414 = vunpack.c.l.b16 %v6118
    %v8415 = vunpack.c.l.b16 %v6119
    %v8416 = vunpack.c.h.b16 %v6119
    %v8417 = vunpack.c.l.b16 %v6120
    %v8418 = vunpack.c.h.b16 %v6120
    %v8419 = vunpack.c.l.b16 %v6121
    %v8420 = vunpack.c.l.b16 %v6122
    %v8421 = vunpack.c.h.b16 %v6122
    %v8422 = vunpack.c.l.b16 %v6123
    %v8423 = vunpack.c.h.b16 %v6123
    %v8424 = vunpack.c.l.b16 %v6124
    %v8425 = vunpack.c.l.b16 %v6125
    %v8426 = vunpack.c.h.b16 %v6125
    %v8427 = vunpack.c.l.b16 %v6126
    %v8428 = vunpack.c.h.b16 %v6126
    %v8429 = vunpack.c.l.b16 %v6127
    %v8430 = vunpack.c.l.b16 %v6128
    %v8431 = vunpack.c.h.b16 %v6128
    %v8432 = vunpack.c.l.b16 %v6129
    %v8433 = vunpack.c.h.b16 %v6129
    %v8434 = vunpack.c.l.b16 %v6130
    %v8435 = vunpack.c.l.b16 %v6131
    %v8436 = vunpack.c.h.b16 %v6131
    %v8437 = vunpack.c.l.b16 %v6132
    %v8438 = vunpack.c.h.b16 %v6132
    %v8439 = vunpack.c.l.b16 %v6133
    %v8440 = vunpack.c.l.b16 %v6134
    %v8441 = vunpack.c.h.b16 %v6134
    %v8442 = vunpack.c.l.b16 %v6135
    %v8443 = vunpack.c.h.b16 %v6135
    %v8444 = vunpack.c.l.b16 %v6136
    %v8445 = vunpack.c.l.b16 %v6137
    %v8446 = vunpack.c.h.b16 %v6137
    %v8447 = vunpack.c.l.b16 %v6138
    %v8448 = vunpack.c.h.b16 %v6138
    %v8449 = vunpack.c.l.b16 %v6139
    %v8450 = vunpack.c.l.b16 %v6140
    %v8451 = vunpack.c.h.b16 %v6140
    %v8452 = vunpack.c.l.b16 %v6141
    %v8453 = vunpack.c.h.b16 %v6141
    %v8454 = vunpack.c.l.b16 %v6142
    %v8455 = vunpack.c.l.b16 %v6143
    %v8456 = vunpack.c.h.b16 %v6143
    %v8457 = vunpack.c.l.b16 %v6144
    %v8458 = vunpack.c.h.b16 %v6144
    %v8459 = vunpack.c.l.b16 %v6145
    %v8460 = vunpack.c.l.b16 %v6146
    %v8461 = vunpack.c.h.b16 %v6146
    %v8462 = vunpack.c.l.b16 %v6147
    %v8463 = vunpack.c.h.b16 %v6147
    %v8464 = vunpack.c.l.b16 %v6148
    %v8465 = vpack.c.b16 %v7030, %v7025
    %v8466 = vpack.c.b16 %v7031, %v7026
    %v8467 = vpack.c.b16 %v7032, %v7027
    %v8468 = vpack.c.b16 %v7033, %v7028
    %v8469 = vpack.c.b16 %v7034, %v7029
    %v8470 = vpack.c.b16 %v7040, %v7035
    %v8471 = vpack.c.b16 %v7041, %v7036
    %v8472 = vpack.c.b16 %v7042, %v7037
    %v8473 = vpack.c.b16 %v7043, %v7038
    %v8474 = vpack.c.b16 %v7044, %v7039
    %v8475 = vpack.c.b16 %v7050, %v7045
    %v8476 = vpack.c.b16 %v7051, %v7046
    %v8477 = vpack.c.b16 %v7052, %v7047
    %v8478 = vpack.c.b16 %v7053, %v7048
    %v8479 = vpack.c.b16 %v7054, %v7049
    %v8480 = vpack.c.b16 %v7060, %v7055
    %v8481 = vpack.c.b16 %v7061, %v7056
    %v8482 = vpack.c.b16 %v7062, %v7057
    %v8483 = vpack.c.b16 %v7063, %v7058
    %v8484 = vpack.c.b16 %v7064, %v7059
    %v8485 = vpack.c.b16 %v7070, %v7065
    %v8486 = vpack.c.b16 %v7071, %v7066
    %v8487 = vpack.c.b16 %v7072, %v7067
    %v8488 = vpack.c.b16 %v7073, %v7068
    %v8489 = vpack.c.b16 %v7074, %v7069
    %v8490 = vpack.c.b16 %v7080, %v7075
    %v8491 = vpack.c.b16 %v7081, %v7076
    %v8492 = vpack.c.b16 %v7082, %v7077
    %v8493 = vpack.c.b16 %v7083, %v7078
    %v8494 = vpack.c.b16 %v7084, %v7079
    %v8495 = vpack.c.b16 %v7090, %v7085
    %v8496 = vpack.c.b16 %v7091, %v7086
    %v8497 = vpack.c.b16 %v7092, %v7087
    %v8498 = vpack.c.b16 %v7093, %v7088
    %v8499 = vpack.c.b16 %v7094, %v7089
    %v8500 = vpack.c.b16 %v7100, %v7095
    %v8501 = vpack.c.b16 %v7101, %v7096
    %v8502 = vpack.c.b16 %v7102, %v7097
    %v8503 = vpack.c.b16 %v7103, %v7098
    %v8504 = vpack.c.b16 %v7104, %v7099
    %v8505 = vpack.c.b16 %v7110, %v7105
    %v8506 = vpack.c.b16 %v7111, %v7106
    %v8507 = vpack.c.b16 %v7112, %v7107
    %v8508 = vpack.c.b16 %v7113, %v7108
    %v8509 = vpack.c.b16 %v7114, %v7109
    %v8510 = vpack.c.b16 %v7120, %v7115
    %v8511 = vpack.c.b16 %v7121, %v7116
    %v8512 = vpack.c.b16 %v7122, %v7117
    %v8513 = vpack.c.b16 %v7123, %v7118
    %v8514 = vpack.c.b16 %v7124, %v7119
    %v8515 = vpack.c.b16 %v7130, %v7125
    %v8516 = vpack.c.b16 %v7131, %v7126
    %v8517 = vpack.c.b16 %v7132, %v7127
    %v8518 = vpack.c.b16 %v7133, %v7128
    %v8519 = vpack.c.b16 %v7134, %v7129
    %v8520 = vpack.c.b16 %v7140, %v7135
    %v8521 = vpack.c.b16 %v7141, %v7136
    %v8522 = vpack.c.b16 %v7142, %v7137
    %v8523 = vpack.c.b16 %v7143, %v7138
    %v8524 = vpack.c.b16 %v7144, %v7139
    %v8525 = vpack.c.b16 %v7150, %v7145
    %v8526 = vpack.c.b16 %v7151, %v7146
    %v8527 = vpack.c.b16 %v7152, %v7147
    %v8528 = vpack.c.b16 %v7153, %v7148
    %v8529 = vpack.c.b16 %v7154, %v7149
    %v8530 = vpack.c.b16 %v7160, %v7155
    %v8531 = vpack.c.b16 %v7161, %v7156
    %v8532 = vpack.c.b16 %v7162, %v7157
    %v8533 = vpack.c.b16 %v7163, %v7158
    %v8534 = vpack.c.b16 %v7164, %v7159
    %v8535 = vpack.c.b16 %v7170, %v7165
    %v8536 = vpack.c.b16 %v7171, %v7166
    %v8537 = vpack.c.b16 %v7172, %v7167
    %v8538 = vpack.c.b16 %v7173, %v7168
    %v8539 = vpack.c.b16 %v7174, %v7169
    %v8540 = vpack.c.b16 %v7180, %v7175
    %v8541 = vpack.c.b16 %v7181, %v7176
    %v8542 = vpack.c.b16 %v7182, %v7177
    %v8543 = vpack.c.b16 %v7183, %v7178
    %v8544 = vpack.c.b16 %v7184, %v7179
    %v8545 = vpack.c.b16 %v7190, %v7185
    %v8546 = vpack.c.b16 %v7191, %v7186
    %v8547 = vpack.c.b16 %v7192, %v7187
    %v8548 = vpack.c.b16 %v7193, %v7188
    %v8549 = vpack.c.b16 %v7194, %v7189
    %v8550 = vpack.c.b16 %v7200, %v7195
    %v8551 = vpack.c.b16 %v7201, %v7196
    %v8552 = vpack.c.b16 %v7202, %v7197
    %v8553 = vpack.c.b16 %v7203, %v7198
    %v8554 = vpack.c.b16 %v7204, %v7199
    %v8555 = vpack.c.b16 %v7210, %v7205
    %v8556 = vpack.c.b16 %v7211, %v7206
    %v8557 = vpack.c.b16 %v7212, %v7207
    %v8558 = vpack.c.b16 %v7213, %v7208
    %v8559 = vpack.c.b16 %v7214, %v7209
    %v8560 = vpack.c.b16 %v7220, %v7215
    %v8561 = vpack.c.b16 %v7221, %v7216
    %v8562 = vpack.c.b16 %v7222, %v7217
    %v8563 = vpack.c.b16 %v7223, %v7218
    %v8564 = vpack.c.b16 %v7224, %v7219
    %v8565 = vpack.c.b16 %v7230, %v7225
    %v8566 = vpack.c.b16 %v7231, %v7226
    %v8567 = vpack.c.b16 %v7232, %v7227
    %v8568 = vpack.c.b16 %v7233, %v7228
    %v8569 = vpack.c.b16 %v7234, %v7229
    %v8570 = vpack.c.b16 %v7240, %v7235
    %v8571 = vpack.c.b16 %v7241, %v7236
    %v8572 = vpack.c.b16 %v7242, %v7237
    %v8573 = vpack.c.b16 %v7243, %v7238
    %v8574 = vpack.c.b16 %v7244, %v7239
    %v8575 = vpack.c.b16 %v7250, %v7245
    %v8576 = vpack.c.b16 %v7251, %v7246
    %v8577 = vpack.c.b16 %v7252, %v7247
    %v8578 = vpack.c.b16 %v7253, %v7248
    %v8579 = vpack.c.b16 %v7254, %v7249
    %v8580 = vpack.c.b16 %v7260, %v7255
    %v8581 = vpack.c.b16 %v7261, %v7256
    %v8582 = vpack.c.b16 %v7262, %v7257
    %v8583 = vpack.c.b16 %v7263, %v7258
    %v8584 = vpack.c.b16 %v7264, %v7259
    %v8585 = vpack.c.b16 %v7270, %v7265
    %v8586 = vpack.c.b16 %v7271, %v7266
    %v8587 = vpack.c.b16 %v7272, %v7267
    %v8588 = vpack.c.b16 %v7273, %v7268
    %v8589 = vpack.c.b16 %v7274, %v7269
    %v8590 = vpack.c.b16 %v7280, %v7275
    %v8591 = vpack.c.b16 %v7281, %v7276
    %v8592 = vpack.c.b16 %v7282, %v7277
    %v8593 = vpack.c.b16 %v7283, %v7278
    %v8594 = vpack.c.b16 %v7284, %v7279
    %v8595 = vpack.c.b16 %v7290, %v7285
    %v8596 = vpack.c.b16 %v7291, %v7286
    %v8597 = vpack.c.b16 %v7292, %v7287
    %v8598 = vpack.c.b16 %v7293, %v7288
    %v8599 = vpack.c.b16 %v7294, %v7289
    %v8600 = vpack.c.b16 %v7300, %v7295
    %v8601 = vpack.c.b16 %v7301, %v7296
    %v8602 = vpack.c.b16 %v7302, %v7297
    %v8603 = vpack.c.b16 %v7303, %v7298
    %v8604 = vpack.c.b16 %v7304, %v7299
    %v8605 = vpack.c.b16 %v7310, %v7305
    %v8606 = vpack.c.b16 %v7311, %v7306
    %v8607 = vpack.c.b16 %v7312, %v7307
    %v8608 = vpack.c.b16 %v7313, %v7308
    %v8609 = vpack.c.b16 %v7314, %v7309
    %v8610 = vpack.c.b16 %v7320, %v7315
    %v8611 = vpack.c.b16 %v7321, %v7316
    %v8612 = vpack.c.b16 %v7322, %v7317
    %v8613 = vpack.c.b16 %v7323, %v7318
    %v8614 = vpack.c.b16 %v7324, %v7319
    %v8615 = vpack.c.b16 %v7330, %v7325
    %v8616 = vpack.c.b16 %v7331, %v7326
    %v8617 = vpack.c.b16 %v7332, %v7327
    %v8618 = vpack.c.b16 %v7333, %v7328
    %v8619 = vpack.c.b16 %v7334, %v7329
    %v8620 = vpack.c.b16 %v7340, %v7335
    %v8621 = vpack.c.b16 %v7341, %v7336
    %v8622 = vpack.c.b16 %v7342, %v7337
    %v8623 = vpack.c.b16 %v7343, %v7338
    %v8624 = vpack.c.b16 %v7344, %v7339
    %v8625 = vpack.c.b16 %v7350, %v7345
    %v8626 = vpack.c.b16 %v7351, %v7346
    %v8627 = vpack.c.b16 %v7352, %v7347
    %v8628 = vpack.c.b16 %v7353, %v7348
    %v8629 = vpack.c.b16 %v7354, %v7349
    %v8630 = vpack.c.b16 %v7360, %v7355
    %v8631 = vpack.c.b16 %v7361, %v7356
    %v8632 = vpack.c.b16 %v7362, %v7357
    %v8633 = vpack.c.b16 %v7363, %v7358
    %v8634 = vpack.c.b16 %v7364, %v7359
    %v8635 = vpack.c.b16 %v7370, %v7365
    %v8636 = vpack.c.b16 %v7371, %v7366
    %v8637 = vpack.c.b16 %v7372, %v7367
    %v8638 = vpack.c.b16 %v7373, %v7368
    %v8639 = vpack.c.b16 %v7374, %v7369
    %v8640 = vpack.c.b16 %v7380, %v7375
    %v8641 = vpack.c.b16 %v7381, %v7376
    %v8642 = vpack.c.b16 %v7382, %v7377
    %v8643 = vpack.c.b16 %v7383, %v7378
    %v8644 = vpack.c.b16 %v7384, %v7379
    %v8645 = vpack.c.b16 %v7390, %v7385
    %v8646 = vpack.c.b16 %v7391, %v7386
    %v8647 = vpack.c.b16 %v7392, %v7387
    %v8648 = vpack.c.b16 %v7393, %v7388
    %v8649 = vpack.c.b16 %v7394, %v7389
    %v8650 = vpack.c.b16 %v7400, %v7395
    %v8651 = vpack.c.b16 %v7401, %v7396
    %v8652 = vpack.c.b16 %v7402, %v7397
    %v8653 = vpack.c.b16 %v7403, %v7398
    %v8654 = vpack.c.b16 %v7404, %v7399
    %v8655 = vpack.c.b16 %v7410, %v7405
    %v8656 = vpack.c.b16 %v7411, %v7406
    %v8657 = vpack.c.b16 %v7412, %v7407
    %v8658 = vpack.c.b16 %v7413, %v7408
    %v8659 = vpack.c.b16 %v7414, %v7409
    %v8660 = vpack.c.b16 %v7420, %v7415
    %v8661 = vpack.c.b16 %v7421, %v7416
    %v8662 = vpack.c.b16 %v7422, %v7417
    %v8663 = vpack.c.b16 %v7423, %v7418
    %v8664 = vpack.c.b16 %v7424, %v7419
    %v8665 = vpack.c.b16 %v7430, %v7425
    %v8666 = vpack.c.b16 %v7431, %v7426
    %v8667 = vpack.c.b16 %v7432, %v7427
    %v8668 = vpack.c.b16 %v7433, %v7428
    %v8669 = vpack.c.b16 %v7434, %v7429
    %v8670 = vpack.c.b16 %v7440, %v7435
    %v8671 = vpack.c.b16 %v7441, %v7436
    %v8672 = vpack.c.b16 %v7442, %v7437
    %v8673 = vpack.c.b16 %v7443, %v7438
    %v8674 = vpack.c.b16 %v7444, %v7439
    %v8675 = vpack.c.b16 %v7450, %v7445
    %v8676 = vpack.c.b16 %v7451, %v7446
    %v8677 = vpack.c.b16 %v7452, %v7447
    %v8678 = vpack.c.b16 %v7453, %v7448
    %v8679 = vpack.c.b16 %v7454, %v7449
    %v8680 = vpack.c.b16 %v7460, %v7455
    %v8681 = vpack.c.b16 %v7461, %v7456
    %v8682 = vpack.c.b16 %v7462, %v7457
    %v8683 = vpack.c.b16 %v7463, %v7458
    %v8684 = vpack.c.b16 %v7464, %v7459
    %v8685 = vpack.c.b16 %v7470, %v7465
    %v8686 = vpack.c.b16 %v7471, %v7466
    %v8687 = vpack.c.b16 %v7472, %v7467
    %v8688 = vpack.c.b16 %v7473, %v7468
    %v8689 = vpack.c.b16 %v7474, %v7469
    %v8690 = vpack.c.b16 %v7480, %v7475
    %v8691 = vpack.c.b16 %v7481, %v7476
    %v8692 = vpack.c.b16 %v7482, %v7477
    %v8693 = vpack.c.b16 %v7483, %v7478
    %v8694 = vpack.c.b16 %v7484, %v7479
    %v8695 = vpack.c.b16 %v7490, %v7485
    %v8696 = vpack.c.b16 %v7491, %v7486
    %v8697 = vpack.c.b16 %v7492, %v7487
    %v8698 = vpack.c.b16 %v7493, %v7488
    %v8699 = vpack.c.b16 %v7494, %v7489
    %v8700 = vpack.c.b16 %v7500, %v7495
    %v8701 = vpack.c.b16 %v7501, %v7496
    %v8702 = vpack.c.b16 %v7502, %v7497
    %v8703 = vpack.c.b16 %v7503, %v7498
    %v8704 = vpack.c.b16 %v7504, %v7499
    %v8705 = vpack.c.b16 %v7510, %v7505
    %v8706 = vpack.c.b16 %v7511, %v7506
    %v8707 = vpack.c.b16 %v7512, %v7507
    %v8708 = vpack.c.b16 %v7513, %v7508
    %v8709 = vpack.c.b16 %v7514, %v7509
    %v8710 = vpack.c.b16 %v7520, %v7515
    %v8711 = vpack.c.b16 %v7521, %v7516
    %v8712 = vpack.c.b16 %v7522, %v7517
    %v8713 = vpack.c.b16 %v7523, %v7518
    %v8714 = vpack.c.b16 %v7524, %v7519
    %v8715 = vpack.c.b16 %v7530, %v7525
    %v8716 = vpack.c.b16 %v7531, %v7526
    %v8717 = vpack.c.b16 %v7532, %v7527
    %v8718 = vpack.c.b16 %v7533, %v7528
    %v8719 = vpack.c.b16 %v7534, %v7529
    %v8720 = vpack.c.b16 %v7540, %v7535
    %v8721 = vpack.c.b16 %v7541, %v7536
    %v8722 = vpack.c.b16 %v7542, %v7537
    %v8723 = vpack.c.b16 %v7543, %v7538
    %v8724 = vpack.c.b16 %v7544, %v7539
    %v8725 = vpack.c.b16 %v7550, %v7545
    %v8726 = vpack.c.b16 %v7551, %v7546
    %v8727 = vpack.c.b16 %v7552, %v7547
    %v8728 = vpack.c.b16 %v7553, %v7548
    %v8729 = vpack.c.b16 %v7554, %v7549
    %v8730 = vpack.c.b16 %v7560, %v7555
    %v8731 = vpack.c.b16 %v7561, %v7556
    %v8732 = vpack.c.b16 %v7562, %v7557
    %v8733 = vpack.c.b16 %v7563, %v7558
    %v8734 = vpack.c.b16 %v7564, %v7559
    %v8735 = vpack.c.b16 %v7570, %v7565
    %v8736 = vpack.c.b16 %v7571, %v7566
    %v8737 = vpack.c.b16 %v7572, %v7567
    %v8738 = vpack.c.b16 %v7573, %v7568
    %v8739 = vpack.c.b16 %v7574, %v7569
    %v8740 = vpack.c.b16 %v7580, %v7575
    %v8741 = vpack.c.b16 %v7581, %v7576
    %v8742 = vpack.c.b16 %v7582, %v7577
    %v8743 = vpack.c.b16 %v7583, %v7578
    %v8744 = vpack.c.b16 %v7584, %v7579
    %v8745 = vpack.c.b16 %v7590, %v7585
    %v8746 = vpack.c.b16 %v7591, %v7586
    %v8747 = vpack.c.b16 %v7592, %v7587
    %v8748 = vpack.c.b16 %v7593, %v7588
    %v8749 = vpack.c.b16 %v7594, %v7589
    %v8750 = vpack.c.b16 %v7600, %v7595
    %v8751 = vpack.c.b16 %v7601, %v7596
    %v8752 = vpack.c.b16 %v7602, %v7597
    %v8753 = vpack.c.b16 %v7603, %v7598
    %v8754 = vpack.c.b16 %v7604, %v7599
    %v8755 = vpack.c.b16 %v7610, %v7605
    %v8756 = vpack.c.b16 %v7611, %v7606
    %v8757 = vpack.c.b16 %v7612, %v7607
    %v8758 = vpack.c.b16 %v7613, %v7608
    %v8759 = vpack.c.b16 %v7614, %v7609
    %v8760 = vpack.c.b16 %v7620, %v7615
    %v8761 = vpack.c.b16 %v7621, %v7616
    %v8762 = vpack.c.b16 %v7622, %v7617
    %v8763 = vpack.c.b16 %v7623, %v7618
    %v8764 = vpack.c.b16 %v7624, %v7619
    %v8765 = vpack.c.b16 %v7630, %v7625
    %v8766 = vpack.c.b16 %v7631, %v7626
    %v8767 = vpack.c.b16 %v7632, %v7627
    %v8768 = vpack.c.b16 %v7633, %v7628
    %v8769 = vpack.c.b16 %v7634, %v7629
    %v8770 = vpack.c.b16 %v7640, %v7635
    %v8771 = vpack.c.b16 %v7641, %v7636
    %v8772 = vpack.c.b16 %v7642, %v7637
    %v8773 = vpack.c.b16 %v7643, %v7638
    %v8774 = vpack.c.b16 %v7644, %v7639
    %v8775 = vpack.c.b16 %v7650, %v7645
    %v8776 = vpack.c.b16 %v7651, %v7646
    %v8777 = vpack.c.b16 %v7652, %v7647
    %v8778 = vpack.c.b16 %v7653, %v7648
    %v8779 = vpack.c.b16 %v7654, %v7649
    %v8780 = vpack.c.b16 %v7660, %v7655
    %v8781 = vpack.c.b16 %v7661, %v7656
    %v8782 = vpack.c.b16 %v7662, %v7657
    %v8783 = vpack.c.b16 %v7663, %v7658
    %v8784 = vpack.c.b16 %v7664, %v7659
    %v8785 = vpack.c.b16 %v7670, %v7665
    %v8786 = vpack.c.b16 %v7671, %v7666
    %v8787 = vpack.c.b16 %v7672, %v7667
    %v8788 = vpack.c.b16 %v7673, %v7668
    %v8789 = vpack.c.b16 %v7674, %v7669
    %v8790 = vpack.c.b16 %v7680, %v7675
    %v8791 = vpack.c.b16 %v7681, %v7676
    %v8792 = vpack.c.b16 %v7682, %v7677
    %v8793 = vpack.c.b16 %v7683, %v7678
    %v8794 = vpack.c.b16 %v7684, %v7679
    %v8795 = vpack.c.b16 %v7690, %v7685
    %v8796 = vpack.c.b16 %v7691, %v7686
    %v8797 = vpack.c.b16 %v7692, %v7687
    %v8798 = vpack.c.b16 %v7693, %v7688
    %v8799 = vpack.c.b16 %v7694, %v7689
    %v8800 = vpack.c.b16 %v7700, %v7695
    %v8801 = vpack.c.b16 %v7701, %v7696
    %v8802 = vpack.c.b16 %v7702, %v7697
    %v8803 = vpack.c.b16 %v7703, %v7698
    %v8804 = vpack.c.b16 %v7704, %v7699
    %v8805 = vpack.c.b16 %v7710, %v7705
    %v8806 = vpack.c.b16 %v7711, %v7706
    %v8807 = vpack.c.b16 %v7712, %v7707
    %v8808 = vpack.c.b16 %v7713, %v7708
    %v8809 = vpack.c.b16 %v7714, %v7709
    %v8810 = vpack.c.b16 %v7720, %v7715
    %v8811 = vpack.c.b16 %v7721, %v7716
    %v8812 = vpack.c.b16 %v7722, %v7717
    %v8813 = vpack.c.b16 %v7723, %v7718
    %v8814 = vpack.c.b16 %v7724, %v7719
    %v8815 = vpack.c.b16 %v7730, %v7725
    %v8816 = vpack.c.b16 %v7731, %v7726
    %v8817 = vpack.c.b16 %v7732, %v7727
    %v8818 = vpack.c.b16 %v7733, %v7728
    %v8819 = vpack.c.b16 %v7734, %v7729
    %v8820 = vpack.c.b16 %v7740, %v7735
    %v8821 = vpack.c.b16 %v7741, %v7736
    %v8822 = vpack.c.b16 %v7742, %v7737
    %v8823 = vpack.c.b16 %v7743, %v7738
    %v8824 = vpack.c.b16 %v7744, %v7739
    %v8825 = vpack.c.b16 %v7750, %v7745
    %v8826 = vpack.c.b16 %v7751, %v7746
    %v8827 = vpack.c.b16 %v7752, %v7747
    %v8828 = vpack.c.b16 %v7753, %v7748
    %v8829 = vpack.c.b16 %v7754, %v7749
    %v8830 = vpack.c.b16 %v7760, %v7755
    %v8831 = vpack.c.b16 %v7761, %v7756
    %v8832 = vpack.c.b16 %v7762, %v7757
    %v8833 = vpack.c.b16 %v7763, %v7758
    %v8834 = vpack.c.b16 %v7764, %v7759
    %v8835 = vpack.c.b16 %v7770, %v7765
    %v8836 = vpack.c.b16 %v7771, %v7766
    %v8837 = vpack.c.b16 %v7772, %v7767
    %v8838 = vpack.c.b16 %v7773, %v7768
    %v8839 = vpack.c.b16 %v7774, %v7769
    %v8840 = vpack.c.b16 %v7780, %v7775
    %v8841 = vpack.c.b16 %v7781, %v7776
    %v8842 = vpack.c.b16 %v7782, %v7777
    %v8843 = vpack.c.b16 %v7783, %v7778
    %v8844 = vpack.c.b16 %v7784, %v7779
    %v8845 = vpack.c.b16 %v7790, %v7785
    %v8846 = vpack.c.b16 %v7791, %v7786
    %v8847 = vpack.c.b16 %v7792, %v7787
    %v8848 = vpack.c.b16 %v7793, %v7788
    %v8849 = vpack.c.b16 %v7794, %v7789
    %v8850 = vpack.c.b16 %v7800, %v7795
    %v8851 = vpack.c.b16 %v7801, %v7796
    %v8852 = vpack.c.b16 %v7802, %v7797
    %v8853 = vpack.c.b16 %v7803, %v7798
    %v8854 = vpack.c.b16 %v7804, %v7799
    %v8855 = vpack.c.b16 %v7810, %v7805
    %v8856 = vpack.c.b16 %v7811, %v7806
    %v8857 = vpack.c.b16 %v7812, %v7807
    %v8858 = vpack.c.b16 %v7813, %v7808
    %v8859 = vpack.c.b16 %v7814, %v7809
    %v8860 = vpack.c.b16 %v7820, %v7815
    %v8861 = vpack.c.b16 %v7821, %v7816
    %v8862 = vpack.c.b16 %v7822, %v7817
    %v8863 = vpack.c.b16 %v7823, %v7818
    %v8864 = vpack.c.b16 %v7824, %v7819
    %v8865 = vpack.c.b16 %v7830, %v7825
    %v8866 = vpack.c.b16 %v7831, %v7826
    %v8867 = vpack.c.b16 %v7832, %v7827
    %v8868 = vpack.c.b16 %v7833, %v7828
    %v8869 = vpack.c.b16 %v7834, %v7829
    %v8870 = vpack.c.b16 %v7840, %v7835
    %v8871 = vpack.c.b16 %v7841, %v7836
    %v8872 = vpack.c.b16 %v7842, %v7837
    %v8873 = vpack.c.b16 %v7843, %v7838
    %v8874 = vpack.c.b16 %v7844, %v7839
    %v8875 = vpack.c.b16 %v7850, %v7845
    %v8876 = vpack.c.b16 %v7851, %v7846
    %v8877 = vpack.c.b16 %v7852, %v7847
    %v8878 = vpack.c.b16 %v7853, %v7848
    %v8879 = vpack.c.b16 %v7854, %v7849
    %v8880 = vpack.c.b16 %v7860, %v7855
    %v8881 = vpack.c.b16 %v7861, %v7856
    %v8882 = vpack.c.b16 %v7862, %v7857
    %v8883 = vpack.c.b16 %v7863, %v7858
    %v8884 = vpack.c.b16 %v7864, %v7859
    %v8885 = vpack.c.b16 %v7870, %v7865
    %v8886 = vpack.c.b16 %v7871, %v7866
    %v8887 = vpack.c.b16 %v7872, %v7867
    %v8888 = vpack.c.b16 %v7873, %v7868
    %v8889 = vpack.c.b16 %v7874, %v7869
    %v8890 = vpack.c.b16 %v7880, %v7875
    %v8891 = vpack.c.b16 %v7881, %v7876
    %v8892 = vpack.c.b16 %v7882, %v7877
    %v8893 = vpack.c.b16 %v7883, %v7878
    %v8894 = vpack.c.b16 %v7884, %v7879
    %v8895 = vpack.c.b16 %v7890, %v7885
    %v8896 = vpack.c.b16 %v7891, %v7886
    %v8897 = vpack.c.b16 %v7892, %v7887
    %v8898 = vpack.c.b16 %v7893, %v7888
    %v8899 = vpack.c.b16 %v7894, %v7889
    %v8900 = vpack.c.b16 %v7900, %v7895
    %v8901 = vpack.c.b16 %v7901, %v7896
    %v8902 = vpack.c.b16 %v7902, %v7897
    %v8903 = vpack.c.b16 %v7903, %v7898
    %v8904 = vpack.c.b16 %v7904, %v7899
    %v8905 = vpack.c.b16 %v7910, %v7905
    %v8906 = vpack.c.b16 %v7911, %v7906
    %v8907 = vpack.c.b16 %v7912, %v7907
    %v8908 = vpack.c.b16 %v7913, %v7908
    %v8909 = vpack.c.b16 %v7914, %v7909
    %v8910 = vpack.c.b16 %v7920, %v7915
    %v8911 = vpack.c.b16 %v7921, %v7916
    %v8912 = vpack.c.b16 %v7922, %v7917
    %v8913 = vpack.c.b16 %v7923, %v7918
    %v8914 = vpack.c.b16 %v7924, %v7919
    %v8915 = vpack.c.b16 %v7930, %v7925
    %v8916 = vpack.c.b16 %v7931, %v7926
    %v8917 = vpack.c.b16 %v7932, %v7927
    %v8918 = vpack.c.b16 %v7933, %v7928
    %v8919 = vpack.c.b16 %v7934, %v7929
    %v8920 = vpack.c.b16 %v7940, %v7935
    %v8921 = vpack.c.b16 %v7941, %v7936
    %v8922 = vpack.c.b16 %v7942, %v7937
    %v8923 = vpack.c.b16 %v7943, %v7938
    %v8924 = vpack.c.b16 %v7944, %v7939
    %v8925 = vpack.c.b16 %v7950, %v7945
    %v8926 = vpack.c.b16 %v7951, %v7946
    %v8927 = vpack.c.b16 %v7952, %v7947
    %v8928 = vpack.c.b16 %v7953, %v7948
    %v8929 = vpack.c.b16 %v7954, %v7949
    %v8930 = vpack.c.b16 %v7960, %v7955
    %v8931 = vpack.c.b16 %v7961, %v7956
    %v8932 = vpack.c.b16 %v7962, %v7957
    %v8933 = vpack.c.b16 %v7963, %v7958
    %v8934 = vpack.c.b16 %v7964, %v7959
    %v8935 = vpack.c.b16 %v7970, %v7965
    %v8936 = vpack.c.b16 %v7971, %v7966
    %v8937 = vpack.c.b16 %v7972, %v7967
    %v8938 = vpack.c.b16 %v7973, %v7968
    %v8939 = vpack.c.b16 %v7974, %v7969
    %v8940 = vpack.c.b16 %v7980, %v7975
    %v8941 = vpack.c.b16 %v7981, %v7976
    %v8942 = vpack.c.b16 %v7982, %v7977
    %v8943 = vpack.c.b16 %v7983, %v7978
    %v8944 = vpack.c.b16 %v7984, %v7979
    %v8945 = vpack.c.b16 %v7990, %v7985
    %v8946 = vpack.c.b16 %v7991, %v7986
    %v8947 = vpack.c.b16 %v7992, %v7987
    %v8948 = vpack.c.b16 %v7993, %v7988
    %v8949 = vpack.c.b16 %v7994, %v7989
    %v8950 = vpack.c.b16 %v8000, %v7995
    %v8951 = vpack.c.b16 %v8001, %v7996
    %v8952 = vpack.c.b16 %v8002, %v7997
    %v8953 = vpack.c.b16 %v8003, %v7998
    %v8954 = vpack.c.b16 %v8004, %v7999
    %v8955 = vpack.c.b16 %v8010, %v8005
    %v8956 = vpack.c.b16 %v8011, %v8006
    %v8957 = vpack.c.b16 %v8012, %v8007
    %v8958 = vpack.c.b16 %v8013, %v8008
    %v8959 = vpack.c.b16 %v8014, %v8009
    %v8960 = vpack.c.b16 %v8020, %v8015
    %v8961 = vpack.c.b16 %v8021, %v8016
    %v8962 = vpack.c.b16 %v8022, %v8017
    %v8963 = vpack.c.b16 %v8023, %v8018
    %v8964 = vpack.c.b16 %v8024, %v8019
    %v8965 = vpack.c.b16 %v8030, %v8025
    %v8966 = vpack.c.b16 %v8031, %v8026
    %v8967 = vpack.c.b16 %v8032, %v8027
    %v8968 = vpack.c.b16 %v8033, %v8028
    %v8969 = vpack.c.b16 %v8034, %v8029
    %v8970 = vpack.c.b16 %v8040, %v8035
    %v8971 = vpack.c.b16 %v8041, %v8036
    %v8972 = vpack.c.b16 %v8042, %v8037
    %v8973 = vpack.c.b16 %v8043, %v8038
    %v8974 = vpack.c.b16 %v8044, %v8039
    %v8975 = vpack.c.b16 %v8050, %v8045
    %v8976 = vpack.c.b16 %v8051, %v8046
    %v8977 = vpack.c.b16 %v8052, %v8047
    %v8978 = vpack.c.b16 %v8053, %v8048
    %v8979 = vpack.c.b16 %v8054, %v8049
    %v8980 = vpack.c.b16 %v8060, %v8055
    %v8981 = vpack.c.b16 %v8061, %v8056
    %v8982 = vpack.c.b16 %v8062, %v8057
    %v8983 = vpack.c.b16 %v8063, %v8058
    %v8984 = vpack.c.b16 %v8064, %v8059
    %v8985 = vpack.c.b16 %v8070, %v8065
    %v8986 = vpack.c.b16 %v8071, %v8066
    %v8987 = vpack.c.b16 %v8072, %v8067
    %v8988 = vpack.c.b16 %v8073, %v8068
    %v8989 = vpack.c.b16 %v8074, %v8069
    %v8990 = vpack.c.b16 %v8080, %v8075
    %v8991 = vpack.c.b16 %v8081, %v8076
    %v8992 = vpack.c.b16 %v8082, %v8077
    %v8993 = vpack.c.b16 %v8083, %v8078
    %v8994 = vpack.c.b16 %v8084, %v8079
    %v8995 = vpack.c.b16 %v8090, %v8085
    %v8996 = vpack.c.b16 %v8091, %v8086
    %v8997 = vpack.c.b16 %v8092, %v8087
    %v8998 = vpack.c.b16 %v8093, %v8088
    %v8999 = vpack.c.b16 %v8094, %v8089
    %v9000 = vpack.c.b16 %v8100, %v8095
    %v9001 = vpack.c.b16 %v8101, %v8096
    %v9002 = vpack.c.b16 %v8102, %v8097
    %v9003 = vpack.c.b16 %v8103, %v8098
    %v9004 = vpack.c.b16 %v8104, %v8099
    %v9005 = vpack.c.b16 %v8110, %v8105
    %v9006 = vpack.c.b16 %v8111, %v8106
    %v9007 = vpack.c.b16 %v8112, %v8107
    %v9008 = vpack.c.b16 %v8113, %v8108
    %v9009 = vpack.c.b16 %v8114, %v8109
    %v9010 = vpack.c.b16 %v8120, %v8115
    %v9011 = vpack.c.b16 %v8121, %v8116
    %v9012 = vpack.c.b16 %v8122, %v8117
    %v9013 = vpack.c.b16 %v8123, %v8118
    %v9014 = vpack.c.b16 %v8124, %v8119
    %v9015 = vpack.c.b16 %v8130, %v8125
    %v9016 = vpack.c.b16 %v8131, %v8126
    %v9017 = vpack.c.b16 %v8132, %v8127
    %v9018 = vpack.c.b16 %v8133, %v8128
    %v9019 = vpack.c.b16 %v8134, %v8129
    %v9020 = vpack.c.b16 %v8140, %v8135
    %v9021 = vpack.c.b16 %v8141, %v8136
    %v9022 = vpack.c.b16 %v8142, %v8137
    %v9023 = vpack.c.b16 %v8143, %v8138
    %v9024 = vpack.c.b16 %v8144, %v8139
    %v9025 = vpack.c.b16 %v8150, %v8145
    %v9026 = vpack.c.b16 %v8151, %v8146
    %v9027 = vpack.c.b16 %v8152, %v8147
    %v9028 = vpack.c.b16 %v8153, %v8148
    %v9029 = vpack.c.b16 %v8154, %v8149
    %v9030 = vpack.c.b16 %v8160, %v8155
    %v9031 = vpack.c.b16 %v8161, %v8156
    %v9032 = vpack.c.b16 %v8162, %v8157
    %v9033 = vpack.c.b16 %v8163, %v8158
    %v9034 = vpack.c.b16 %v8164, %v8159
    %v9035 = vpack.c.b16 %v8170, %v8165
    %v9036 = vpack.c.b16 %v8171, %v8166
    %v9037 = vpack.c.b16 %v8172, %v8167
    %v9038 = vpack.c.b16 %v8173, %v8168
    %v9039 = vpack.c.b16 %v8174, %v8169
    %v9040 = vpack.c.b16 %v8180, %v8175
    %v9041 = vpack.c.b16 %v8181, %v8176
    %v9042 = vpack.c.b16 %v8182, %v8177
    %v9043 = vpack.c.b16 %v8183, %v8178
    %v9044 = vpack.c.b16 %v8184, %v8179
    %v9045 = vpack.c.b16 %v8190, %v8185
    %v9046 = vpack.c.b16 %v8191, %v8186
    %v9047 = vpack.c.b16 %v8192, %v8187
    %v9048 = vpack.c.b16 %v8193, %v8188
    %v9049 = vpack.c.b16 %v8194, %v8189
    %v9050 = vpack.c.b16 %v8200, %v8195
    %v9051 = vpack.c.b16 %v8201, %v8196
    %v9052 = vpack.c.b16 %v8202, %v8197
    %v9053 = vpack.c.b16 %v8203, %v8198
    %v9054 = vpack.c.b16 %v8204, %v8199
    %v9055 = vpack.c.b16 %v8210, %v8205
    %v9056 = vpack.c.b16 %v8211, %v8206
    %v9057 = vpack.c.b16 %v8212, %v8207
    %v9058 = vpack.c.b16 %v8213, %v8208
    %v9059 = vpack.c.b16 %v8214, %v8209
    %v9060 = vpack.c.b16 %v8220, %v8215
    %v9061 = vpack.c.b16 %v8221, %v8216
    %v9062 = vpack.c.b16 %v8222, %v8217
    %v9063 = vpack.c.b16 %v8223, %v8218
    %v9064 = vpack.c.b16 %v8224, %v8219
    %v9065 = vpack.c.b16 %v8230, %v8225
    %v9066 = vpack.c.b16 %v8231, %v8226
    %v9067 = vpack.c.b16 %v8232, %v8227
    %v9068 = vpack.c.b16 %v8233, %v8228
    %v9069 = vpack.c.b16 %v8234, %v8229
    %v9070 = vpack.c.b16 %v8240, %v8235
    %v9071 = vpack.c.b16 %v8241, %v8236
    %v9072 = vpack.c.b16 %v8242, %v8237
    %v9073 = vpack.c.b16 %v8243, %v8238
    %v9074 = vpack.c.b16 %v8244, %v8239
    %v9075 = vpack.c.b16 %v8250, %v8245
    %v9076 = vpack.c.b16 %v8251, %v8246
    %v9077 = vpack.c.b16 %v8252, %v8247
    %v9078 = vpack.c.b16 %v8253, %v8248
    %v9079 = vpack.c.b16 %v8254, %v8249
    %v9080 = vpack.c.b16 %v8260, %v8255
    %v9081 = vpack.c.b16 %v8261, %v8256
    %v9082 = vpack.c.b16 %v8262, %v8257
    %v9083 = vpack.c.b16 %v8263, %v8258
    %v9084 = vpack.c.b16 %v8264, %v8259
    %v9085 = vpack.c.b16 %v8270, %v8265
    %v9086 = vpack.c.b16 %v8271, %v8266
    %v9087 = vpack.c.b16 %v8272, %v8267
    %v9088 = vpack.c.b16 %v8273, %v8268
    %v9089 = vpack.c.b16 %v8274, %v8269
    %v9090 = vpack.c.b16 %v8280, %v8275
    %v9091 = vpack.c.b16 %v8281, %v8276
    %v9092 = vpack.c.b16 %v8282, %v8277
    %v9093 = vpack.c.b16 %v8283, %v8278
    %v9094 = vpack.c.b16 %v8284, %v8279
    %v9095 = vpack.c.b16 %v8290, %v8285
    %v9096 = vpack.c.b16 %v8291, %v8286
    %v9097 = vpack.c.b16 %v8292, %v8287
    %v9098 = vpack.c.b16 %v8293, %v8288
    %v9099 = vpack.c.b16 %v8294, %v8289
    %v9100 = vpack.c.b16 %v8300, %v8295
    %v9101 = vpack.c.b16 %v8301, %v8296
    %v9102 = vpack.c.b16 %v8302, %v8297
    %v9103 = vpack.c.b16 %v8303, %v8298
    %v9104 = vpack.c.b16 %v8304, %v8299
    %v9105 = vpack.c.b16 %v8310, %v8305
    %v9106 = vpack.c.b16 %v8311, %v8306
    %v9107 = vpack.c.b16 %v8312, %v8307
    %v9108 = vpack.c.b16 %v8313, %v8308
    %v9109 = vpack.c.b16 %v8314, %v8309
    %v9110 = vpack.c.b16 %v8320, %v8315
    %v9111 = vpack.c.b16 %v8321, %v8316
    %v9112 = vpack.c.b16 %v8322, %v8317
    %v9113 = vpack.c.b16 %v8323, %v8318
    %v9114 = vpack.c.b16 %v8324, %v8319
    %v9115 = vpack.c.b16 %v8330, %v8325
    %v9116 = vpack.c.b16 %v8331, %v8326
    %v9117 = vpack.c.b16 %v8332, %v8327
    %v9118 = vpack.c.b16 %v8333, %v8328
    %v9119 = vpack.c.b16 %v8334, %v8329
    %v9120 = vpack.c.b16 %v8340, %v8335
    %v9121 = vpack.c.b16 %v8341, %v8336
    %v9122 = vpack.c.b16 %v8342, %v8337
    %v9123 = vpack.c.b16 %v8343, %v8338
    %v9124 = vpack.c.b16 %v8344, %v8339
    %v9125 = vpack.c.b16 %v8350, %v8345
    %v9126 = vpack.c.b16 %v8351, %v8346
    %v9127 = vpack.c.b16 %v8352, %v8347
    %v9128 = vpack.c.b16 %v8353, %v8348
    %v9129 = vpack.c.b16 %v8354, %v8349
    %v9130 = vpack.c.b16 %v8360, %v8355
    %v9131 = vpack.c.b16 %v8361, %v8356
    %v9132 = vpack.c.b16 %v8362, %v8357
    %v9133 = vpack.c.b16 %v8363, %v8358
    %v9134 = vpack.c.b16 %v8364, %v8359
    %v9135 = vpack.c.b16 %v8370, %v8365
    %v9136 = vpack.c.b16 %v8371, %v8366
    %v9137 = vpack.c.b16 %v8372, %v8367
    %v9138 = vpack.c.b16 %v8373, %v8368
    %v9139 = vpack.c.b16 %v8374, %v8369
    %v9140 = vpack.c.b16 %v8380, %v8375
    %v9141 = vpack.c.b16 %v8381, %v8376
    %v9142 = vpack.c.b16 %v8382, %v8377
    %v9143 = vpack.c.b16 %v8383, %v8378
    %v9144 = vpack.c.b16 %v8384, %v8379
    %v9145 = vpack.c.b16 %v8390, %v8385
    %v9146 = vpack.c.b16 %v8391, %v8386
    %v9147 = vpack.c.b16 %v8392, %v8387
    %v9148 = vpack.c.b16 %v8393, %v8388
    %v9149 = vpack.c.b16 %v8394, %v8389
    %v9150 = vpack.c.b16 %v8400, %v8395
    %v9151 = vpack.c.b16 %v8401, %v8396
    %v9152 = vpack.c.b16 %v8402, %v8397
    %v9153 = vpack.c.b16 %v8403, %v8398
    %v9154 = vpack.c.b16 %v8404, %v8399
    %v9155 = vpack.c.b16 %v8410, %v8405
    %v9156 = vpack.c.b16 %v8411, %v8406
    %v9157 = vpack.c.b16 %v8412, %v8407
    %v9158 = vpack.c.b16 %v8413, %v8408
    %v9159 = vpack.c.b16 %v8414, %v8409
    %v9160 = vpack.c.b16 %v8420, %v8415
    %v9161 = vpack.c.b16 %v8421, %v8416
    %v9162 = vpack.c.b16 %v8422, %v8417
    %v9163 = vpack.c.b16 %v8423, %v8418
    %v9164 = vpack.c.b16 %v8424, %v8419
    %v9165 = vpack.c.b16 %v8430, %v8425
    %v9166 = vpack.c.b16 %v8431, %v8426
    %v9167 = vpack.c.b16 %v8432, %v8427
    %v9168 = vpack.c.b16 %v8433, %v8428
    %v9169 = vpack.c.b16 %v8434, %v8429
    %v9170 = vpack.c.b16 %v8440, %v8435
    %v9171 = vpack.c.b16 %v8441, %v8436
    %v9172 = vpack.c.b16 %v8442, %v8437
    %v9173 = vpack.c.b16 %v8443, %v8438
    %v9174 = vpack.c.b16 %v8444, %v8439
    %v9175 = vpack.c.b16 %v8450, %v8445
    %v9176 = vpack.c.b16 %v8451, %v8446
    %v9177 = vpack.c.b16 %v8452, %v8447
    %v9178 = vpack.c.b16 %v8453, %v8448
    %v9179 = vpack.c.b16 %v8454, %v8449
    %v9180 = vpack.c.b16 %v8460, %v8455
    %v9181 = vpack.c.b16 %v8461, %v8456
    %v9182 = vpack.c.b16 %v8462, %v8457
    %v9183 = vpack.c.b16 %v8463, %v8458
    %v9184 = vpack.c.b16 %v8464, %v8459
    %9905 = vmatpush.bf16.msra.mxu0 %v8500
    %9906 = vmatpush.bf16.msra.mxu0 %v8495
    %9907 = vmatpush.bf16.msra.mxu0 %v8490
    %9908 = vmatpush.bf16.msra.mxu0 %v8485
    %9909 = vmatpush.bf16.msra.mxu0 %v8480
    %9910 = vmatpush.bf16.msra.mxu0 %v8475
    %9911 = vmatpush.bf16.msra.mxu0 %v8470
    %9912 = vmatpush.bf16.msra.mxu0 %v8465
    %9913 = vmatmul.bf16.gmra.mxu0 %v5267
    %v9914 = vpop.f32.mrf.mxu0
    %v9915 = vadd.f32 %v6151, %v9914
    %v9916 = vpop.f32.mrf.mxu0
    %v9917 = vadd.f32 %v6151, %v9916
    %9918 = vdwg.mxu0
    %9919 = vmatpush.bf16.msra.mxu0 %v8540
    %9920 = vmatpush.bf16.msra.mxu0 %v8535
    %9921 = vmatpush.bf16.msra.mxu0 %v8530
    %9922 = vmatpush.bf16.msra.mxu0 %v8525
    %9923 = vmatpush.bf16.msra.mxu0 %v8520
    %9924 = vmatpush.bf16.msra.mxu0 %v8515
    %9925 = vmatpush.bf16.msra.mxu0 %v8510
    %9926 = vmatpush.bf16.msra.mxu0 %v8505
    %9927 = vmatmul.bf16.gmra.mxu0 %v5268
    %v9928 = vpop.f32.mrf.mxu0
    %v9929 = vadd.f32 %v9915, %v9928
    %v9930 = vpop.f32.mrf.mxu0
    %v9931 = vadd.f32 %v9917, %v9930
    %9932 = vdwg.mxu0
    %9933 = vmatpush.bf16.msra.mxu0 %v8580
    %9934 = vmatpush.bf16.msra.mxu0 %v8575
    %9935 = vmatpush.bf16.msra.mxu0 %v8570
    %9936 = vmatpush.bf16.msra.mxu0 %v8565
    %9937 = vmatpush.bf16.msra.mxu0 %v8560
    %9938 = vmatpush.bf16.msra.mxu0 %v8555
    %9939 = vmatpush.bf16.msra.mxu0 %v8550
    %9940 = vmatpush.bf16.msra.mxu0 %v8545
    %9941 = vmatmul.bf16.gmra.mxu0 %v5269
    %v9942 = vpop.f32.mrf.mxu0
    %v9943 = vadd.f32 %v9929, %v9942
    %v9944 = vpop.f32.mrf.mxu0
    %v9945 = vadd.f32 %v9931, %v9944
    %9946 = vdwg.mxu0
    %9947 = vmatpush.bf16.msra.mxu0 %v8620
    %9948 = vmatpush.bf16.msra.mxu0 %v8615
    %9949 = vmatpush.bf16.msra.mxu0 %v8610
    %9950 = vmatpush.bf16.msra.mxu0 %v8605
    %9951 = vmatpush.bf16.msra.mxu0 %v8600
    %9952 = vmatpush.bf16.msra.mxu0 %v8595
    %9953 = vmatpush.bf16.msra.mxu0 %v8590
    %9954 = vmatpush.bf16.msra.mxu0 %v8585
    %9955 = vmatmul.bf16.gmra.mxu0 %v5270
    %v9956 = vpop.f32.mrf.mxu0
    %v9957 = vadd.f32 %v9943, %v9956
    %v9958 = vpop.f32.mrf.mxu0
    %v9959 = vadd.f32 %v9945, %v9958
    %9960 = vdwg.mxu0
    %9961 = vmatpush.bf16.msra.mxu0 %v8660
    %9962 = vmatpush.bf16.msra.mxu0 %v8655
    %9963 = vmatpush.bf16.msra.mxu0 %v8650
    %9964 = vmatpush.bf16.msra.mxu0 %v8645
    %9965 = vmatpush.bf16.msra.mxu0 %v8640
    %9966 = vmatpush.bf16.msra.mxu0 %v8635
    %9967 = vmatpush.bf16.msra.mxu0 %v8630
    %9968 = vmatpush.bf16.msra.mxu0 %v8625
    %9969 = vmatmul.bf16.gmra.mxu0 %v5271
    %v9970 = vpop.f32.mrf.mxu0
    %v9971 = vadd.f32 %v9957, %v9970
    %v9972 = vpop.f32.mrf.mxu0
    %v9973 = vadd.f32 %v9959, %v9972
    %9974 = vdwg.mxu0
    %9975 = vmatpush.bf16.msra.mxu0 %v8700
    %9976 = vmatpush.bf16.msra.mxu0 %v8695
    %9977 = vmatpush.bf16.msra.mxu0 %v8690
    %9978 = vmatpush.bf16.msra.mxu0 %v8685
    %9979 = vmatpush.bf16.msra.mxu0 %v8680
    %9980 = vmatpush.bf16.msra.mxu0 %v8675
    %9981 = vmatpush.bf16.msra.mxu0 %v8670
    %9982 = vmatpush.bf16.msra.mxu0 %v8665
    %9983 = vmatmul.bf16.gmra.mxu0 %v5272
    %v9984 = vpop.f32.mrf.mxu0
    %v9985 = vadd.f32 %v9971, %v9984
    %v9986 = vpop.f32.mrf.mxu0
    %v9987 = vadd.f32 %v9973, %v9986
    %9988 = vdwg.mxu0
    %9989 = vmatpush.bf16.msra.mxu0 %v8740
    %9990 = vmatpush.bf16.msra.mxu0 %v8735
    %9991 = vmatpush.bf16.msra.mxu0 %v8730
    %9992 = vmatpush.bf16.msra.mxu0 %v8725
    %9993 = vmatpush.bf16.msra.mxu0 %v8720
    %9994 = vmatpush.bf16.msra.mxu0 %v8715
    %9995 = vmatpush.bf16.msra.mxu0 %v8710
    %9996 = vmatpush.bf16.msra.mxu0 %v8705
    %9997 = vmatmul.bf16.gmra.mxu0 %v5273
    %v9998 = vpop.f32.mrf.mxu0
    %v9999 = vadd.f32 %v9985, %v9998
    %v10000 = vpop.f32.mrf.mxu0
    %v10001 = vadd.f32 %v9987, %v10000
    %10002 = vdwg.mxu0
    %10003 = vmatpush.bf16.msra.mxu0 %v8780
    %10004 = vmatpush.bf16.msra.mxu0 %v8775
    %10005 = vmatpush.bf16.msra.mxu0 %v8770
    %10006 = vmatpush.bf16.msra.mxu0 %v8765
    %10007 = vmatpush.bf16.msra.mxu0 %v8760
    %10008 = vmatpush.bf16.msra.mxu0 %v8755
    %10009 = vmatpush.bf16.msra.mxu0 %v8750
    %10010 = vmatpush.bf16.msra.mxu0 %v8745
    %10011 = vmatmul.bf16.gmra.mxu0 %v5274
    %v10012 = vpop.f32.mrf.mxu0
    %v10013 = vadd.f32 %v9999, %v10012
    %v10014 = vpop.f32.mrf.mxu0
    %v10015 = vadd.f32 %v10001, %v10014
    %10016 = vdwg.mxu0
    %10017 = vmatpush.bf16.msra.mxu0 %v8820
    %10018 = vmatpush.bf16.msra.mxu0 %v8815
    %10019 = vmatpush.bf16.msra.mxu0 %v8810
    %10020 = vmatpush.bf16.msra.mxu0 %v8805
    %10021 = vmatpush.bf16.msra.mxu0 %v8800
    %10022 = vmatpush.bf16.msra.mxu0 %v8795
    %10023 = vmatpush.bf16.msra.mxu0 %v8790
    %10024 = vmatpush.bf16.msra.mxu0 %v8785
    %10025 = vmatmul.bf16.gmra.mxu0 %v5275
    %v10026 = vpop.f32.mrf.mxu0
    %v10027 = vadd.f32 %v10013, %v10026
    %v10028 = vpop.f32.mrf.mxu0
    %v10029 = vadd.f32 %v10015, %v10028
    %10030 = vdwg.mxu0
    %10031 = vmatpush.bf16.msra.mxu0 %v8860
    %10032 = vmatpush.bf16.msra.mxu0 %v8855
    %10033 = vmatpush.bf16.msra.mxu0 %v8850
    %10034 = vmatpush.bf16.msra.mxu0 %v8845
    %10035 = vmatpush.bf16.msra.mxu0 %v8840
    %10036 = vmatpush.bf16.msra.mxu0 %v8835
    %10037 = vmatpush.bf16.msra.mxu0 %v8830
    %10038 = vmatpush.bf16.msra.mxu0 %v8825
    %10039 = vmatmul.bf16.gmra.mxu0 %v5276
    %v10040 = vpop.f32.mrf.mxu0
    %v10041 = vadd.f32 %v10027, %v10040
    %v10042 = vpop.f32.mrf.mxu0
    %v10043 = vadd.f32 %v10029, %v10042
    %10044 = vdwg.mxu0
    %10045 = vmatpush.bf16.msra.mxu0 %v8900
    %10046 = vmatpush.bf16.msra.mxu0 %v8895
    %10047 = vmatpush.bf16.msra.mxu0 %v8890
    %10048 = vmatpush.bf16.msra.mxu0 %v8885
    %10049 = vmatpush.bf16.msra.mxu0 %v8880
    %10050 = vmatpush.bf16.msra.mxu0 %v8875
    %10051 = vmatpush.bf16.msra.mxu0 %v8870
    %10052 = vmatpush.bf16.msra.mxu0 %v8865
    %10053 = vmatmul.bf16.gmra.mxu0 %v5277
    %v10054 = vpop.f32.mrf.mxu0
    %v10055 = vadd.f32 %v10041, %v10054
    %v10056 = vpop.f32.mrf.mxu0
    %v10057 = vadd.f32 %v10043, %v10056
    %10058 = vdwg.mxu0
    %10059 = vmatpush.bf16.msra.mxu0 %v8940
    %10060 = vmatpush.bf16.msra.mxu0 %v8935
    %10061 = vmatpush.bf16.msra.mxu0 %v8930
    %10062 = vmatpush.bf16.msra.mxu0 %v8925
    %10063 = vmatpush.bf16.msra.mxu0 %v8920
    %10064 = vmatpush.bf16.msra.mxu0 %v8915
    %10065 = vmatpush.bf16.msra.mxu0 %v8910
    %10066 = vmatpush.bf16.msra.mxu0 %v8905
    %10067 = vmatmul.bf16.gmra.mxu0 %v5278
    %v10068 = vpop.f32.mrf.mxu0
    %v10069 = vadd.f32 %v10055, %v10068
    %v10070 = vpop.f32.mrf.mxu0
    %v10071 = vadd.f32 %v10057, %v10070
    %10072 = vdwg.mxu0
    %10073 = vmatpush.bf16.msra.mxu0 %v8980
    %10074 = vmatpush.bf16.msra.mxu0 %v8975
    %10075 = vmatpush.bf16.msra.mxu0 %v8970
    %10076 = vmatpush.bf16.msra.mxu0 %v8965
    %10077 = vmatpush.bf16.msra.mxu0 %v8960
    %10078 = vmatpush.bf16.msra.mxu0 %v8955
    %10079 = vmatpush.bf16.msra.mxu0 %v8950
    %10080 = vmatpush.bf16.msra.mxu0 %v8945
    %10081 = vmatmul.bf16.gmra.mxu0 %v5279
    %v10082 = vpop.f32.mrf.mxu0
    %v10083 = vadd.f32 %v10069, %v10082
    %v10084 = vpop.f32.mrf.mxu0
    %v10085 = vadd.f32 %v10071, %v10084
    %10086 = vdwg.mxu0
    %10087 = vmatpush.bf16.msra.mxu0 %v9020
    %10088 = vmatpush.bf16.msra.mxu0 %v9015
    %10089 = vmatpush.bf16.msra.mxu0 %v9010
    %10090 = vmatpush.bf16.msra.mxu0 %v9005
    %10091 = vmatpush.bf16.msra.mxu0 %v9000
    %10092 = vmatpush.bf16.msra.mxu0 %v8995
    %10093 = vmatpush.bf16.msra.mxu0 %v8990
    %10094 = vmatpush.bf16.msra.mxu0 %v8985
    %10095 = vmatmul.bf16.gmra.mxu0 %v5280
    %v10096 = vpop.f32.mrf.mxu0
    %v10097 = vadd.f32 %v10083, %v10096
    %v10098 = vpop.f32.mrf.mxu0
    %v10099 = vadd.f32 %v10085, %v10098
    %10100 = vdwg.mxu0
    %10101 = vmatpush.bf16.msra.mxu0 %v9060
    %10102 = vmatpush.bf16.msra.mxu0 %v9055
    %10103 = vmatpush.bf16.msra.mxu0 %v9050
    %10104 = vmatpush.bf16.msra.mxu0 %v9045
    %10105 = vmatpush.bf16.msra.mxu0 %v9040
    %10106 = vmatpush.bf16.msra.mxu0 %v9035
    %10107 = vmatpush.bf16.msra.mxu0 %v9030
    %10108 = vmatpush.bf16.msra.mxu0 %v9025
    %10109 = vmatmul.bf16.gmra.mxu0 %v5281
    %v10110 = vpop.f32.mrf.mxu0
    %v10111 = vadd.f32 %v10097, %v10110
    %v10112 = vpop.f32.mrf.mxu0
    %v10113 = vadd.f32 %v10099, %v10112
    %10114 = vdwg.mxu0
    %10115 = vmatpush.bf16.msra.mxu0 %v9100
    %10116 = vmatpush.bf16.msra.mxu0 %v9095
    %10117 = vmatpush.bf16.msra.mxu0 %v9090
    %10118 = vmatpush.bf16.msra.mxu0 %v9085
    %10119 = vmatpush.bf16.msra.mxu0 %v9080
    %10120 = vmatpush.bf16.msra.mxu0 %v9075
    %10121 = vmatpush.bf16.msra.mxu0 %v9070
    %10122 = vmatpush.bf16.msra.mxu0 %v9065
    %10123 = vmatmul.bf16.gmra.mxu0 %v5282
    %v10124 = vpop.f32.mrf.mxu0
    %v10125 = vadd.f32 %v10111, %v10124
    %v10126 = vpop.f32.mrf.mxu0
    %v10127 = vadd.f32 %v10113, %v10126
    %10128 = vdwg.mxu0
    %10129 = vmatpush.bf16.msra.mxu0 %v9140
    %10130 = vmatpush.bf16.msra.mxu0 %v9135
    %10131 = vmatpush.bf16.msra.mxu0 %v9130
    %10132 = vmatpush.bf16.msra.mxu0 %v9125
    %10133 = vmatpush.bf16.msra.mxu0 %v9120
    %10134 = vmatpush.bf16.msra.mxu0 %v9115
    %10135 = vmatpush.bf16.msra.mxu0 %v9110
    %10136 = vmatpush.bf16.msra.mxu0 %v9105
    %10137 = vmatmul.bf16.gmra.mxu0 %v5283
    %v10138 = vpop.f32.mrf.mxu0
    %v10139 = vadd.f32 %v10125, %v10138
    %v10140 = vpop.f32.mrf.mxu0
    %v10141 = vadd.f32 %v10127, %v10140
    %10142 = vdwg.mxu0
    %10143 = vmatpush.bf16.msra.mxu0 %v9180
    %10144 = vmatpush.bf16.msra.mxu0 %v9175
    %10145 = vmatpush.bf16.msra.mxu0 %v9170
    %10146 = vmatpush.bf16.msra.mxu0 %v9165
    %10147 = vmatpush.bf16.msra.mxu0 %v9160
    %10148 = vmatpush.bf16.msra.mxu0 %v9155
    %10149 = vmatpush.bf16.msra.mxu0 %v9150
    %10150 = vmatpush.bf16.msra.mxu0 %v9145
    %10151 = vmatmul.bf16.gmra.mxu0 %v5284
    %v10152 = vpop.f32.mrf.mxu0
    %v10153 = vadd.f32 %v10139, %v10152
    %v10154 = vpop.f32.mrf.mxu0
    %v10155 = vadd.f32 %v10141, %v10154
    %10156 = vdwg.mxu0
    %10157 = vmatpush.bf16.msra.mxu0 %v8501
    %10158 = vmatpush.bf16.msra.mxu0 %v8496
    %10159 = vmatpush.bf16.msra.mxu0 %v8491
    %10160 = vmatpush.bf16.msra.mxu0 %v8486
    %10161 = vmatpush.bf16.msra.mxu0 %v8481
    %10162 = vmatpush.bf16.msra.mxu0 %v8476
    %10163 = vmatpush.bf16.msra.mxu0 %v8471
    %10164 = vmatpush.bf16.msra.mxu0 %v8466
    %10165 = vmatmul.bf16.gmra.mxu0 %v5267
    %v10166 = vpop.f32.mrf.mxu0
    %v10167 = vadd.f32 %v6152, %v10166
    %v10168 = vpop.f32.mrf.mxu0
    %v10169 = vadd.f32 %v6152, %v10168
    %10170 = vdwg.mxu0
    %10171 = vmatpush.bf16.msra.mxu0 %v8541
    %10172 = vmatpush.bf16.msra.mxu0 %v8536
    %10173 = vmatpush.bf16.msra.mxu0 %v8531
    %10174 = vmatpush.bf16.msra.mxu0 %v8526
    %10175 = vmatpush.bf16.msra.mxu0 %v8521
    %10176 = vmatpush.bf16.msra.mxu0 %v8516
    %10177 = vmatpush.bf16.msra.mxu0 %v8511
    %10178 = vmatpush.bf16.msra.mxu0 %v8506
    %10179 = vmatmul.bf16.gmra.mxu0 %v5268
    %v10180 = vpop.f32.mrf.mxu0
    %v10181 = vadd.f32 %v10167, %v10180
    %v10182 = vpop.f32.mrf.mxu0
    %v10183 = vadd.f32 %v10169, %v10182
    %10184 = vdwg.mxu0
    %10185 = vmatpush.bf16.msra.mxu0 %v8581
    %10186 = vmatpush.bf16.msra.mxu0 %v8576
    %10187 = vmatpush.bf16.msra.mxu0 %v8571
    %10188 = vmatpush.bf16.msra.mxu0 %v8566
    %10189 = vmatpush.bf16.msra.mxu0 %v8561
    %10190 = vmatpush.bf16.msra.mxu0 %v8556
    %10191 = vmatpush.bf16.msra.mxu0 %v8551
    %10192 = vmatpush.bf16.msra.mxu0 %v8546
    %10193 = vmatmul.bf16.gmra.mxu0 %v5269
    %v10194 = vpop.f32.mrf.mxu0
    %v10195 = vadd.f32 %v10181, %v10194
    %v10196 = vpop.f32.mrf.mxu0
    %v10197 = vadd.f32 %v10183, %v10196
    %10198 = vdwg.mxu0
    %10199 = vmatpush.bf16.msra.mxu0 %v8621
    %10200 = vmatpush.bf16.msra.mxu0 %v8616
    %10201 = vmatpush.bf16.msra.mxu0 %v8611
    %10202 = vmatpush.bf16.msra.mxu0 %v8606
    %10203 = vmatpush.bf16.msra.mxu0 %v8601
    %10204 = vmatpush.bf16.msra.mxu0 %v8596
    %10205 = vmatpush.bf16.msra.mxu0 %v8591
    %10206 = vmatpush.bf16.msra.mxu0 %v8586
    %10207 = vmatmul.bf16.gmra.mxu0 %v5270
    %v10208 = vpop.f32.mrf.mxu0
    %v10209 = vadd.f32 %v10195, %v10208
    %v10210 = vpop.f32.mrf.mxu0
    %v10211 = vadd.f32 %v10197, %v10210
    %10212 = vdwg.mxu0
    %10213 = vmatpush.bf16.msra.mxu0 %v8661
    %10214 = vmatpush.bf16.msra.mxu0 %v8656
    %10215 = vmatpush.bf16.msra.mxu0 %v8651
    %10216 = vmatpush.bf16.msra.mxu0 %v8646
    %10217 = vmatpush.bf16.msra.mxu0 %v8641
    %10218 = vmatpush.bf16.msra.mxu0 %v8636
    %10219 = vmatpush.bf16.msra.mxu0 %v8631
    %10220 = vmatpush.bf16.msra.mxu0 %v8626
    %10221 = vmatmul.bf16.gmra.mxu0 %v5271
    %v10222 = vpop.f32.mrf.mxu0
    %v10223 = vadd.f32 %v10209, %v10222
    %v10224 = vpop.f32.mrf.mxu0
    %v10225 = vadd.f32 %v10211, %v10224
    %10226 = vdwg.mxu0
    %10227 = vmatpush.bf16.msra.mxu0 %v8701
    %10228 = vmatpush.bf16.msra.mxu0 %v8696
    %10229 = vmatpush.bf16.msra.mxu0 %v8691
    %10230 = vmatpush.bf16.msra.mxu0 %v8686
    %10231 = vmatpush.bf16.msra.mxu0 %v8681
    %10232 = vmatpush.bf16.msra.mxu0 %v8676
    %10233 = vmatpush.bf16.msra.mxu0 %v8671
    %10234 = vmatpush.bf16.msra.mxu0 %v8666
    %10235 = vmatmul.bf16.gmra.mxu0 %v5272
    %v10236 = vpop.f32.mrf.mxu0
    %v10237 = vadd.f32 %v10223, %v10236
    %v10238 = vpop.f32.mrf.mxu0
    %v10239 = vadd.f32 %v10225, %v10238
    %10240 = vdwg.mxu0
    %10241 = vmatpush.bf16.msra.mxu0 %v8741
    %10242 = vmatpush.bf16.msra.mxu0 %v8736
    %10243 = vmatpush.bf16.msra.mxu0 %v8731
    %10244 = vmatpush.bf16.msra.mxu0 %v8726
    %10245 = vmatpush.bf16.msra.mxu0 %v8721
    %10246 = vmatpush.bf16.msra.mxu0 %v8716
    %10247 = vmatpush.bf16.msra.mxu0 %v8711
    %10248 = vmatpush.bf16.msra.mxu0 %v8706
    %10249 = vmatmul.bf16.gmra.mxu0 %v5273
    %v10250 = vpop.f32.mrf.mxu0
    %v10251 = vadd.f32 %v10237, %v10250
    %v10252 = vpop.f32.mrf.mxu0
    %v10253 = vadd.f32 %v10239, %v10252
    %10254 = vdwg.mxu0
    %10255 = vmatpush.bf16.msra.mxu0 %v8781
    %10256 = vmatpush.bf16.msra.mxu0 %v8776
    %10257 = vmatpush.bf16.msra.mxu0 %v8771
    %10258 = vmatpush.bf16.msra.mxu0 %v8766
    %10259 = vmatpush.bf16.msra.mxu0 %v8761
    %10260 = vmatpush.bf16.msra.mxu0 %v8756
    %10261 = vmatpush.bf16.msra.mxu0 %v8751
    %10262 = vmatpush.bf16.msra.mxu0 %v8746
    %10263 = vmatmul.bf16.gmra.mxu0 %v5274
    %v10264 = vpop.f32.mrf.mxu0
    %v10265 = vadd.f32 %v10251, %v10264
    %v10266 = vpop.f32.mrf.mxu0
    %v10267 = vadd.f32 %v10253, %v10266
    %10268 = vdwg.mxu0
    %10269 = vmatpush.bf16.msra.mxu0 %v8821
    %10270 = vmatpush.bf16.msra.mxu0 %v8816
    %10271 = vmatpush.bf16.msra.mxu0 %v8811
    %10272 = vmatpush.bf16.msra.mxu0 %v8806
    %10273 = vmatpush.bf16.msra.mxu0 %v8801
    %10274 = vmatpush.bf16.msra.mxu0 %v8796
    %10275 = vmatpush.bf16.msra.mxu0 %v8791
    %10276 = vmatpush.bf16.msra.mxu0 %v8786
    %10277 = vmatmul.bf16.gmra.mxu0 %v5275
    %v10278 = vpop.f32.mrf.mxu0
    %v10279 = vadd.f32 %v10265, %v10278
    %v10280 = vpop.f32.mrf.mxu0
    %v10281 = vadd.f32 %v10267, %v10280
    %10282 = vdwg.mxu0
    %10283 = vmatpush.bf16.msra.mxu0 %v8861
    %10284 = vmatpush.bf16.msra.mxu0 %v8856
    %10285 = vmatpush.bf16.msra.mxu0 %v8851
    %10286 = vmatpush.bf16.msra.mxu0 %v8846
    %10287 = vmatpush.bf16.msra.mxu0 %v8841
    %10288 = vmatpush.bf16.msra.mxu0 %v8836
    %10289 = vmatpush.bf16.msra.mxu0 %v8831
    %10290 = vmatpush.bf16.msra.mxu0 %v8826
    %10291 = vmatmul.bf16.gmra.mxu0 %v5276
    %v10292 = vpop.f32.mrf.mxu0
    %v10293 = vadd.f32 %v10279, %v10292
    %v10294 = vpop.f32.mrf.mxu0
    %v10295 = vadd.f32 %v10281, %v10294
    %10296 = vdwg.mxu0
    %10297 = vmatpush.bf16.msra.mxu0 %v8901
    %10298 = vmatpush.bf16.msra.mxu0 %v8896
    %10299 = vmatpush.bf16.msra.mxu0 %v8891
    %10300 = vmatpush.bf16.msra.mxu0 %v8886
    %10301 = vmatpush.bf16.msra.mxu0 %v8881
    %10302 = vmatpush.bf16.msra.mxu0 %v8876
    %10303 = vmatpush.bf16.msra.mxu0 %v8871
    %10304 = vmatpush.bf16.msra.mxu0 %v8866
    %10305 = vmatmul.bf16.gmra.mxu0 %v5277
    %v10306 = vpop.f32.mrf.mxu0
    %v10307 = vadd.f32 %v10293, %v10306
    %v10308 = vpop.f32.mrf.mxu0
    %v10309 = vadd.f32 %v10295, %v10308
    %10310 = vdwg.mxu0
    %10311 = vmatpush.bf16.msra.mxu0 %v8941
    %10312 = vmatpush.bf16.msra.mxu0 %v8936
    %10313 = vmatpush.bf16.msra.mxu0 %v8931
    %10314 = vmatpush.bf16.msra.mxu0 %v8926
    %10315 = vmatpush.bf16.msra.mxu0 %v8921
    %10316 = vmatpush.bf16.msra.mxu0 %v8916
    %10317 = vmatpush.bf16.msra.mxu0 %v8911
    %10318 = vmatpush.bf16.msra.mxu0 %v8906
    %10319 = vmatmul.bf16.gmra.mxu0 %v5278
    %v10320 = vpop.f32.mrf.mxu0
    %v10321 = vadd.f32 %v10307, %v10320
    %v10322 = vpop.f32.mrf.mxu0
    %v10323 = vadd.f32 %v10309, %v10322
    %10324 = vdwg.mxu0
    %10325 = vmatpush.bf16.msra.mxu0 %v8981
    %10326 = vmatpush.bf16.msra.mxu0 %v8976
    %10327 = vmatpush.bf16.msra.mxu0 %v8971
    %10328 = vmatpush.bf16.msra.mxu0 %v8966
    %10329 = vmatpush.bf16.msra.mxu0 %v8961
    %10330 = vmatpush.bf16.msra.mxu0 %v8956
    %10331 = vmatpush.bf16.msra.mxu0 %v8951
    %10332 = vmatpush.bf16.msra.mxu0 %v8946
    %10333 = vmatmul.bf16.gmra.mxu0 %v5279
    %v10334 = vpop.f32.mrf.mxu0
    %v10335 = vadd.f32 %v10321, %v10334
    %v10336 = vpop.f32.mrf.mxu0
    %v10337 = vadd.f32 %v10323, %v10336
    %10338 = vdwg.mxu0
    %10339 = vmatpush.bf16.msra.mxu0 %v9021
    %10340 = vmatpush.bf16.msra.mxu0 %v9016
    %10341 = vmatpush.bf16.msra.mxu0 %v9011
    %10342 = vmatpush.bf16.msra.mxu0 %v9006
    %10343 = vmatpush.bf16.msra.mxu0 %v9001
    %10344 = vmatpush.bf16.msra.mxu0 %v8996
    %10345 = vmatpush.bf16.msra.mxu0 %v8991
    %10346 = vmatpush.bf16.msra.mxu0 %v8986
    %10347 = vmatmul.bf16.gmra.mxu0 %v5280
    %v10348 = vpop.f32.mrf.mxu0
    %v10349 = vadd.f32 %v10335, %v10348
    %v10350 = vpop.f32.mrf.mxu0
    %v10351 = vadd.f32 %v10337, %v10350
    %10352 = vdwg.mxu0
    %10353 = vmatpush.bf16.msra.mxu0 %v9061
    %10354 = vmatpush.bf16.msra.mxu0 %v9056
    %10355 = vmatpush.bf16.msra.mxu0 %v9051
    %10356 = vmatpush.bf16.msra.mxu0 %v9046
    %10357 = vmatpush.bf16.msra.mxu0 %v9041
    %10358 = vmatpush.bf16.msra.mxu0 %v9036
    %10359 = vmatpush.bf16.msra.mxu0 %v9031
    %10360 = vmatpush.bf16.msra.mxu0 %v9026
    %10361 = vmatmul.bf16.gmra.mxu0 %v5281
    %v10362 = vpop.f32.mrf.mxu0
    %v10363 = vadd.f32 %v10349, %v10362
    %v10364 = vpop.f32.mrf.mxu0
    %v10365 = vadd.f32 %v10351, %v10364
    %10366 = vdwg.mxu0
    %10367 = vmatpush.bf16.msra.mxu0 %v9101
    %10368 = vmatpush.bf16.msra.mxu0 %v9096
    %10369 = vmatpush.bf16.msra.mxu0 %v9091
    %10370 = vmatpush.bf16.msra.mxu0 %v9086
    %10371 = vmatpush.bf16.msra.mxu0 %v9081
    %10372 = vmatpush.bf16.msra.mxu0 %v9076
    %10373 = vmatpush.bf16.msra.mxu0 %v9071
    %10374 = vmatpush.bf16.msra.mxu0 %v9066
    %10375 = vmatmul.bf16.gmra.mxu0 %v5282
    %v10376 = vpop.f32.mrf.mxu0
    %v10377 = vadd.f32 %v10363, %v10376
    %v10378 = vpop.f32.mrf.mxu0
    %v10379 = vadd.f32 %v10365, %v10378
    %10380 = vdwg.mxu0
    %10381 = vmatpush.bf16.msra.mxu0 %v9141
    %10382 = vmatpush.bf16.msra.mxu0 %v9136
    %10383 = vmatpush.bf16.msra.mxu0 %v9131
    %10384 = vmatpush.bf16.msra.mxu0 %v9126
    %10385 = vmatpush.bf16.msra.mxu0 %v9121
    %10386 = vmatpush.bf16.msra.mxu0 %v9116
    %10387 = vmatpush.bf16.msra.mxu0 %v9111
    %10388 = vmatpush.bf16.msra.mxu0 %v9106
    %10389 = vmatmul.bf16.gmra.mxu0 %v5283
    %v10390 = vpop.f32.mrf.mxu0
    %v10391 = vadd.f32 %v10377, %v10390
    %v10392 = vpop.f32.mrf.mxu0
    %v10393 = vadd.f32 %v10379, %v10392
    %10394 = vdwg.mxu0
    %10395 = vmatpush.bf16.msra.mxu0 %v9181
    %10396 = vmatpush.bf16.msra.mxu0 %v9176
    %10397 = vmatpush.bf16.msra.mxu0 %v9171
    %10398 = vmatpush.bf16.msra.mxu0 %v9166
    %10399 = vmatpush.bf16.msra.mxu0 %v9161
    %10400 = vmatpush.bf16.msra.mxu0 %v9156
    %10401 = vmatpush.bf16.msra.mxu0 %v9151
    %10402 = vmatpush.bf16.msra.mxu0 %v9146
    %10403 = vmatmul.bf16.gmra.mxu0 %v5284
    %v10404 = vpop.f32.mrf.mxu0
    %v10405 = vadd.f32 %v10391, %v10404
    %v10406 = vpop.f32.mrf.mxu0
    %v10407 = vadd.f32 %v10393, %v10406
    %10408 = vdwg.mxu0
    %10409 = vmatpush.bf16.msra.mxu0 %v8502
    %10410 = vmatpush.bf16.msra.mxu0 %v8497
    %10411 = vmatpush.bf16.msra.mxu0 %v8492
    %10412 = vmatpush.bf16.msra.mxu0 %v8487
    %10413 = vmatpush.bf16.msra.mxu0 %v8482
    %10414 = vmatpush.bf16.msra.mxu0 %v8477
    %10415 = vmatpush.bf16.msra.mxu0 %v8472
    %10416 = vmatpush.bf16.msra.mxu0 %v8467
    %10417 = vmatmul.bf16.gmra.mxu0 %v5267
    %v10418 = vpop.f32.mrf.mxu0
    %v10419 = vadd.f32 %v6153, %v10418
    %v10420 = vpop.f32.mrf.mxu0
    %v10421 = vadd.f32 %v6153, %v10420
    %10422 = vdwg.mxu0
    %10423 = vmatpush.bf16.msra.mxu0 %v8542
    %10424 = vmatpush.bf16.msra.mxu0 %v8537
    %10425 = vmatpush.bf16.msra.mxu0 %v8532
    %10426 = vmatpush.bf16.msra.mxu0 %v8527
    %10427 = vmatpush.bf16.msra.mxu0 %v8522
    %10428 = vmatpush.bf16.msra.mxu0 %v8517
    %10429 = vmatpush.bf16.msra.mxu0 %v8512
    %10430 = vmatpush.bf16.msra.mxu0 %v8507
    %10431 = vmatmul.bf16.gmra.mxu0 %v5268
    %v10432 = vpop.f32.mrf.mxu0
    %v10433 = vadd.f32 %v10419, %v10432
    %v10434 = vpop.f32.mrf.mxu0
    %v10435 = vadd.f32 %v10421, %v10434
    %10436 = vdwg.mxu0
    %10437 = vmatpush.bf16.msra.mxu0 %v8582
    %10438 = vmatpush.bf16.msra.mxu0 %v8577
    %10439 = vmatpush.bf16.msra.mxu0 %v8572
    %10440 = vmatpush.bf16.msra.mxu0 %v8567
    %10441 = vmatpush.bf16.msra.mxu0 %v8562
    %10442 = vmatpush.bf16.msra.mxu0 %v8557
    %10443 = vmatpush.bf16.msra.mxu0 %v8552
    %10444 = vmatpush.bf16.msra.mxu0 %v8547
    %10445 = vmatmul.bf16.gmra.mxu0 %v5269
    %v10446 = vpop.f32.mrf.mxu0
    %v10447 = vadd.f32 %v10433, %v10446
    %v10448 = vpop.f32.mrf.mxu0
    %v10449 = vadd.f32 %v10435, %v10448
    %10450 = vdwg.mxu0
    %10451 = vmatpush.bf16.msra.mxu0 %v8622
    %10452 = vmatpush.bf16.msra.mxu0 %v8617
    %10453 = vmatpush.bf16.msra.mxu0 %v8612
    %10454 = vmatpush.bf16.msra.mxu0 %v8607
    %10455 = vmatpush.bf16.msra.mxu0 %v8602
    %10456 = vmatpush.bf16.msra.mxu0 %v8597
    %10457 = vmatpush.bf16.msra.mxu0 %v8592
    %10458 = vmatpush.bf16.msra.mxu0 %v8587
    %10459 = vmatmul.bf16.gmra.mxu0 %v5270
    %v10460 = vpop.f32.mrf.mxu0
    %v10461 = vadd.f32 %v10447, %v10460
    %v10462 = vpop.f32.mrf.mxu0
    %v10463 = vadd.f32 %v10449, %v10462
    %10464 = vdwg.mxu0
    %10465 = vmatpush.bf16.msra.mxu0 %v8662
    %10466 = vmatpush.bf16.msra.mxu0 %v8657
    %10467 = vmatpush.bf16.msra.mxu0 %v8652
    %10468 = vmatpush.bf16.msra.mxu0 %v8647
    %10469 = vmatpush.bf16.msra.mxu0 %v8642
    %10470 = vmatpush.bf16.msra.mxu0 %v8637
    %10471 = vmatpush.bf16.msra.mxu0 %v8632
    %10472 = vmatpush.bf16.msra.mxu0 %v8627
    %10473 = vmatmul.bf16.gmra.mxu0 %v5271
    %v10474 = vpop.f32.mrf.mxu0
    %v10475 = vadd.f32 %v10461, %v10474
    %v10476 = vpop.f32.mrf.mxu0
    %v10477 = vadd.f32 %v10463, %v10476
    %10478 = vdwg.mxu0
    %10479 = vmatpush.bf16.msra.mxu0 %v8702
    %10480 = vmatpush.bf16.msra.mxu0 %v8697
    %10481 = vmatpush.bf16.msra.mxu0 %v8692
    %10482 = vmatpush.bf16.msra.mxu0 %v8687
    %10483 = vmatpush.bf16.msra.mxu0 %v8682
    %10484 = vmatpush.bf16.msra.mxu0 %v8677
    %10485 = vmatpush.bf16.msra.mxu0 %v8672
    %10486 = vmatpush.bf16.msra.mxu0 %v8667
    %10487 = vmatmul.bf16.gmra.mxu0 %v5272
    %v10488 = vpop.f32.mrf.mxu0
    %v10489 = vadd.f32 %v10475, %v10488
    %v10490 = vpop.f32.mrf.mxu0
    %v10491 = vadd.f32 %v10477, %v10490
    %10492 = vdwg.mxu0
    %10493 = vmatpush.bf16.msra.mxu0 %v8742
    %10494 = vmatpush.bf16.msra.mxu0 %v8737
    %10495 = vmatpush.bf16.msra.mxu0 %v8732
    %10496 = vmatpush.bf16.msra.mxu0 %v8727
    %10497 = vmatpush.bf16.msra.mxu0 %v8722
    %10498 = vmatpush.bf16.msra.mxu0 %v8717
    %10499 = vmatpush.bf16.msra.mxu0 %v8712
    %10500 = vmatpush.bf16.msra.mxu0 %v8707
    %10501 = vmatmul.bf16.gmra.mxu0 %v5273
    %v10502 = vpop.f32.mrf.mxu0
    %v10503 = vadd.f32 %v10489, %v10502
    %v10504 = vpop.f32.mrf.mxu0
    %v10505 = vadd.f32 %v10491, %v10504
    %10506 = vdwg.mxu0
    %10507 = vmatpush.bf16.msra.mxu0 %v8782
    %10508 = vmatpush.bf16.msra.mxu0 %v8777
    %10509 = vmatpush.bf16.msra.mxu0 %v8772
    %10510 = vmatpush.bf16.msra.mxu0 %v8767
    %10511 = vmatpush.bf16.msra.mxu0 %v8762
    %10512 = vmatpush.bf16.msra.mxu0 %v8757
    %10513 = vmatpush.bf16.msra.mxu0 %v8752
    %10514 = vmatpush.bf16.msra.mxu0 %v8747
    %10515 = vmatmul.bf16.gmra.mxu0 %v5274
    %v10516 = vpop.f32.mrf.mxu0
    %v10517 = vadd.f32 %v10503, %v10516
    %v10518 = vpop.f32.mrf.mxu0
    %v10519 = vadd.f32 %v10505, %v10518
    %10520 = vdwg.mxu0
    %10521 = vmatpush.bf16.msra.mxu0 %v8822
    %10522 = vmatpush.bf16.msra.mxu0 %v8817
    %10523 = vmatpush.bf16.msra.mxu0 %v8812
    %10524 = vmatpush.bf16.msra.mxu0 %v8807
    %10525 = vmatpush.bf16.msra.mxu0 %v8802
    %10526 = vmatpush.bf16.msra.mxu0 %v8797
    %10527 = vmatpush.bf16.msra.mxu0 %v8792
    %10528 = vmatpush.bf16.msra.mxu0 %v8787
    %10529 = vmatmul.bf16.gmra.mxu0 %v5275
    %v10530 = vpop.f32.mrf.mxu0
    %v10531 = vadd.f32 %v10517, %v10530
    %v10532 = vpop.f32.mrf.mxu0
    %v10533 = vadd.f32 %v10519, %v10532
    %10534 = vdwg.mxu0
    %10535 = vmatpush.bf16.msra.mxu0 %v8862
    %10536 = vmatpush.bf16.msra.mxu0 %v8857
    %10537 = vmatpush.bf16.msra.mxu0 %v8852
    %10538 = vmatpush.bf16.msra.mxu0 %v8847
    %10539 = vmatpush.bf16.msra.mxu0 %v8842
    %10540 = vmatpush.bf16.msra.mxu0 %v8837
    %10541 = vmatpush.bf16.msra.mxu0 %v8832
    %10542 = vmatpush.bf16.msra.mxu0 %v8827
    %10543 = vmatmul.bf16.gmra.mxu0 %v5276
    %v10544 = vpop.f32.mrf.mxu0
    %v10545 = vadd.f32 %v10531, %v10544
    %v10546 = vpop.f32.mrf.mxu0
    %v10547 = vadd.f32 %v10533, %v10546
    %10548 = vdwg.mxu0
    %10549 = vmatpush.bf16.msra.mxu0 %v8902
    %10550 = vmatpush.bf16.msra.mxu0 %v8897
    %10551 = vmatpush.bf16.msra.mxu0 %v8892
    %10552 = vmatpush.bf16.msra.mxu0 %v8887
    %10553 = vmatpush.bf16.msra.mxu0 %v8882
    %10554 = vmatpush.bf16.msra.mxu0 %v8877
    %10555 = vmatpush.bf16.msra.mxu0 %v8872
    %10556 = vmatpush.bf16.msra.mxu0 %v8867
    %10557 = vmatmul.bf16.gmra.mxu0 %v5277
    %v10558 = vpop.f32.mrf.mxu0
    %v10559 = vadd.f32 %v10545, %v10558
    %v10560 = vpop.f32.mrf.mxu0
    %v10561 = vadd.f32 %v10547, %v10560
    %10562 = vdwg.mxu0
    %10563 = vmatpush.bf16.msra.mxu0 %v8942
    %10564 = vmatpush.bf16.msra.mxu0 %v8937
    %10565 = vmatpush.bf16.msra.mxu0 %v8932
    %10566 = vmatpush.bf16.msra.mxu0 %v8927
    %10567 = vmatpush.bf16.msra.mxu0 %v8922
    %10568 = vmatpush.bf16.msra.mxu0 %v8917
    %10569 = vmatpush.bf16.msra.mxu0 %v8912
    %10570 = vmatpush.bf16.msra.mxu0 %v8907
    %10571 = vmatmul.bf16.gmra.mxu0 %v5278
    %v10572 = vpop.f32.mrf.mxu0
    %v10573 = vadd.f32 %v10559, %v10572
    %v10574 = vpop.f32.mrf.mxu0
    %v10575 = vadd.f32 %v10561, %v10574
    %10576 = vdwg.mxu0
    %10577 = vmatpush.bf16.msra.mxu0 %v8982
    %10578 = vmatpush.bf16.msra.mxu0 %v8977
    %10579 = vmatpush.bf16.msra.mxu0 %v8972
    %10580 = vmatpush.bf16.msra.mxu0 %v8967
    %10581 = vmatpush.bf16.msra.mxu0 %v8962
    %10582 = vmatpush.bf16.msra.mxu0 %v8957
    %10583 = vmatpush.bf16.msra.mxu0 %v8952
    %10584 = vmatpush.bf16.msra.mxu0 %v8947
    %10585 = vmatmul.bf16.gmra.mxu0 %v5279
    %v10586 = vpop.f32.mrf.mxu0
    %v10587 = vadd.f32 %v10573, %v10586
    %v10588 = vpop.f32.mrf.mxu0
    %v10589 = vadd.f32 %v10575, %v10588
    %10590 = vdwg.mxu0
    %10591 = vmatpush.bf16.msra.mxu0 %v9022
    %10592 = vmatpush.bf16.msra.mxu0 %v9017
    %10593 = vmatpush.bf16.msra.mxu0 %v9012
    %10594 = vmatpush.bf16.msra.mxu0 %v9007
    %10595 = vmatpush.bf16.msra.mxu0 %v9002
    %10596 = vmatpush.bf16.msra.mxu0 %v8997
    %10597 = vmatpush.bf16.msra.mxu0 %v8992
    %10598 = vmatpush.bf16.msra.mxu0 %v8987
    %10599 = vmatmul.bf16.gmra.mxu0 %v5280
    %v10600 = vpop.f32.mrf.mxu0
    %v10601 = vadd.f32 %v10587, %v10600
    %v10602 = vpop.f32.mrf.mxu0
    %v10603 = vadd.f32 %v10589, %v10602
    %10604 = vdwg.mxu0
    %10605 = vmatpush.bf16.msra.mxu0 %v9062
    %10606 = vmatpush.bf16.msra.mxu0 %v9057
    %10607 = vmatpush.bf16.msra.mxu0 %v9052
    %10608 = vmatpush.bf16.msra.mxu0 %v9047
    %10609 = vmatpush.bf16.msra.mxu0 %v9042
    %10610 = vmatpush.bf16.msra.mxu0 %v9037
    %10611 = vmatpush.bf16.msra.mxu0 %v9032
    %10612 = vmatpush.bf16.msra.mxu0 %v9027
    %10613 = vmatmul.bf16.gmra.mxu0 %v5281
    %v10614 = vpop.f32.mrf.mxu0
    %v10615 = vadd.f32 %v10601, %v10614
    %v10616 = vpop.f32.mrf.mxu0
    %v10617 = vadd.f32 %v10603, %v10616
    %10618 = vdwg.mxu0
    %10619 = vmatpush.bf16.msra.mxu0 %v9102
    %10620 = vmatpush.bf16.msra.mxu0 %v9097
    %10621 = vmatpush.bf16.msra.mxu0 %v9092
    %10622 = vmatpush.bf16.msra.mxu0 %v9087
    %10623 = vmatpush.bf16.msra.mxu0 %v9082
    %10624 = vmatpush.bf16.msra.mxu0 %v9077
    %10625 = vmatpush.bf16.msra.mxu0 %v9072
    %10626 = vmatpush.bf16.msra.mxu0 %v9067
    %10627 = vmatmul.bf16.gmra.mxu0 %v5282
    %v10628 = vpop.f32.mrf.mxu0
    %v10629 = vadd.f32 %v10615, %v10628
    %v10630 = vpop.f32.mrf.mxu0
    %v10631 = vadd.f32 %v10617, %v10630
    %10632 = vdwg.mxu0
    %10633 = vmatpush.bf16.msra.mxu0 %v9142
    %10634 = vmatpush.bf16.msra.mxu0 %v9137
    %10635 = vmatpush.bf16.msra.mxu0 %v9132
    %10636 = vmatpush.bf16.msra.mxu0 %v9127
    %10637 = vmatpush.bf16.msra.mxu0 %v9122
    %10638 = vmatpush.bf16.msra.mxu0 %v9117
    %10639 = vmatpush.bf16.msra.mxu0 %v9112
    %10640 = vmatpush.bf16.msra.mxu0 %v9107
    %10641 = vmatmul.bf16.gmra.mxu0 %v5283
    %v10642 = vpop.f32.mrf.mxu0
    %v10643 = vadd.f32 %v10629, %v10642
    %v10644 = vpop.f32.mrf.mxu0
    %v10645 = vadd.f32 %v10631, %v10644
    %10646 = vdwg.mxu0
    %10647 = vmatpush.bf16.msra.mxu0 %v9182
    %10648 = vmatpush.bf16.msra.mxu0 %v9177
    %10649 = vmatpush.bf16.msra.mxu0 %v9172
    %10650 = vmatpush.bf16.msra.mxu0 %v9167
    %10651 = vmatpush.bf16.msra.mxu0 %v9162
    %10652 = vmatpush.bf16.msra.mxu0 %v9157
    %10653 = vmatpush.bf16.msra.mxu0 %v9152
    %10654 = vmatpush.bf16.msra.mxu0 %v9147
    %10655 = vmatmul.bf16.gmra.mxu0 %v5284
    %v10656 = vpop.f32.mrf.mxu0
    %v10657 = vadd.f32 %v10643, %v10656
    %v10658 = vpop.f32.mrf.mxu0
    %v10659 = vadd.f32 %v10645, %v10658
    %10660 = vdwg.mxu0
    %10661 = vmatpush.bf16.msra.mxu0 %v8503
    %10662 = vmatpush.bf16.msra.mxu0 %v8498
    %10663 = vmatpush.bf16.msra.mxu0 %v8493
    %10664 = vmatpush.bf16.msra.mxu0 %v8488
    %10665 = vmatpush.bf16.msra.mxu0 %v8483
    %10666 = vmatpush.bf16.msra.mxu0 %v8478
    %10667 = vmatpush.bf16.msra.mxu0 %v8473
    %10668 = vmatpush.bf16.msra.mxu0 %v8468
    %10669 = vmatmul.bf16.gmra.mxu0 %v5267
    %v10670 = vpop.f32.mrf.mxu0
    %v10671 = vadd.f32 %v6154, %v10670
    %v10672 = vpop.f32.mrf.mxu0
    %v10673 = vadd.f32 %v6154, %v10672
    %10674 = vdwg.mxu0
    %10675 = vmatpush.bf16.msra.mxu0 %v8543
    %10676 = vmatpush.bf16.msra.mxu0 %v8538
    %10677 = vmatpush.bf16.msra.mxu0 %v8533
    %10678 = vmatpush.bf16.msra.mxu0 %v8528
    %10679 = vmatpush.bf16.msra.mxu0 %v8523
    %10680 = vmatpush.bf16.msra.mxu0 %v8518
    %10681 = vmatpush.bf16.msra.mxu0 %v8513
    %10682 = vmatpush.bf16.msra.mxu0 %v8508
    %10683 = vmatmul.bf16.gmra.mxu0 %v5268
    %v10684 = vpop.f32.mrf.mxu0
    %v10685 = vadd.f32 %v10671, %v10684
    %v10686 = vpop.f32.mrf.mxu0
    %v10687 = vadd.f32 %v10673, %v10686
    %10688 = vdwg.mxu0
    %10689 = vmatpush.bf16.msra.mxu0 %v8583
    %10690 = vmatpush.bf16.msra.mxu0 %v8578
    %10691 = vmatpush.bf16.msra.mxu0 %v8573
    %10692 = vmatpush.bf16.msra.mxu0 %v8568
    %10693 = vmatpush.bf16.msra.mxu0 %v8563
    %10694 = vmatpush.bf16.msra.mxu0 %v8558
    %10695 = vmatpush.bf16.msra.mxu0 %v8553
    %10696 = vmatpush.bf16.msra.mxu0 %v8548
    %10697 = vmatmul.bf16.gmra.mxu0 %v5269
    %v10698 = vpop.f32.mrf.mxu0
    %v10699 = vadd.f32 %v10685, %v10698
    %v10700 = vpop.f32.mrf.mxu0
    %v10701 = vadd.f32 %v10687, %v10700
    %10702 = vdwg.mxu0
    %10703 = vmatpush.bf16.msra.mxu0 %v8623
    %10704 = vmatpush.bf16.msra.mxu0 %v8618
    %10705 = vmatpush.bf16.msra.mxu0 %v8613
    %10706 = vmatpush.bf16.msra.mxu0 %v8608
    %10707 = vmatpush.bf16.msra.mxu0 %v8603
    %10708 = vmatpush.bf16.msra.mxu0 %v8598
    %10709 = vmatpush.bf16.msra.mxu0 %v8593
    %10710 = vmatpush.bf16.msra.mxu0 %v8588
    %10711 = vmatmul.bf16.gmra.mxu0 %v5270
    %v10712 = vpop.f32.mrf.mxu0
    %v10713 = vadd.f32 %v10699, %v10712
    %v10714 = vpop.f32.mrf.mxu0
    %v10715 = vadd.f32 %v10701, %v10714
    %10716 = vdwg.mxu0
    %10717 = vmatpush.bf16.msra.mxu0 %v8663
    %10718 = vmatpush.bf16.msra.mxu0 %v8658
    %10719 = vmatpush.bf16.msra.mxu0 %v8653
    %10720 = vmatpush.bf16.msra.mxu0 %v8648
    %10721 = vmatpush.bf16.msra.mxu0 %v8643
    %10722 = vmatpush.bf16.msra.mxu0 %v8638
    %10723 = vmatpush.bf16.msra.mxu0 %v8633
    %10724 = vmatpush.bf16.msra.mxu0 %v8628
    %10725 = vmatmul.bf16.gmra.mxu0 %v5271
    %v10726 = vpop.f32.mrf.mxu0
    %v10727 = vadd.f32 %v10713, %v10726
    %v10728 = vpop.f32.mrf.mxu0
    %v10729 = vadd.f32 %v10715, %v10728
    %10730 = vdwg.mxu0
    %10731 = vmatpush.bf16.msra.mxu0 %v8703
    %10732 = vmatpush.bf16.msra.mxu0 %v8698
    %10733 = vmatpush.bf16.msra.mxu0 %v8693
    %10734 = vmatpush.bf16.msra.mxu0 %v8688
    %10735 = vmatpush.bf16.msra.mxu0 %v8683
    %10736 = vmatpush.bf16.msra.mxu0 %v8678
    %10737 = vmatpush.bf16.msra.mxu0 %v8673
    %10738 = vmatpush.bf16.msra.mxu0 %v8668
    %10739 = vmatmul.bf16.gmra.mxu0 %v5272
    %v10740 = vpop.f32.mrf.mxu0
    %v10741 = vadd.f32 %v10727, %v10740
    %v10742 = vpop.f32.mrf.mxu0
    %v10743 = vadd.f32 %v10729, %v10742
    %10744 = vdwg.mxu0
    %10745 = vmatpush.bf16.msra.mxu0 %v8743
    %10746 = vmatpush.bf16.msra.mxu0 %v8738
    %10747 = vmatpush.bf16.msra.mxu0 %v8733
    %10748 = vmatpush.bf16.msra.mxu0 %v8728
    %10749 = vmatpush.bf16.msra.mxu0 %v8723
    %10750 = vmatpush.bf16.msra.mxu0 %v8718
    %10751 = vmatpush.bf16.msra.mxu0 %v8713
    %10752 = vmatpush.bf16.msra.mxu0 %v8708
    %10753 = vmatmul.bf16.gmra.mxu0 %v5273
    %v10754 = vpop.f32.mrf.mxu0
    %v10755 = vadd.f32 %v10741, %v10754
    %v10756 = vpop.f32.mrf.mxu0
    %v10757 = vadd.f32 %v10743, %v10756
    %10758 = vdwg.mxu0
    %10759 = vmatpush.bf16.msra.mxu0 %v8783
    %10760 = vmatpush.bf16.msra.mxu0 %v8778
    %10761 = vmatpush.bf16.msra.mxu0 %v8773
    %10762 = vmatpush.bf16.msra.mxu0 %v8768
    %10763 = vmatpush.bf16.msra.mxu0 %v8763
    %10764 = vmatpush.bf16.msra.mxu0 %v8758
    %10765 = vmatpush.bf16.msra.mxu0 %v8753
    %10766 = vmatpush.bf16.msra.mxu0 %v8748
    %10767 = vmatmul.bf16.gmra.mxu0 %v5274
    %v10768 = vpop.f32.mrf.mxu0
    %v10769 = vadd.f32 %v10755, %v10768
    %v10770 = vpop.f32.mrf.mxu0
    %v10771 = vadd.f32 %v10757, %v10770
    %10772 = vdwg.mxu0
    %10773 = vmatpush.bf16.msra.mxu0 %v8823
    %10774 = vmatpush.bf16.msra.mxu0 %v8818
    %10775 = vmatpush.bf16.msra.mxu0 %v8813
    %10776 = vmatpush.bf16.msra.mxu0 %v8808
    %10777 = vmatpush.bf16.msra.mxu0 %v8803
    %10778 = vmatpush.bf16.msra.mxu0 %v8798
    %10779 = vmatpush.bf16.msra.mxu0 %v8793
    %10780 = vmatpush.bf16.msra.mxu0 %v8788
    %10781 = vmatmul.bf16.gmra.mxu0 %v5275
    %v10782 = vpop.f32.mrf.mxu0
    %v10783 = vadd.f32 %v10769, %v10782
    %v10784 = vpop.f32.mrf.mxu0
    %v10785 = vadd.f32 %v10771, %v10784
    %10786 = vdwg.mxu0
    %10787 = vmatpush.bf16.msra.mxu0 %v8863
    %10788 = vmatpush.bf16.msra.mxu0 %v8858
    %10789 = vmatpush.bf16.msra.mxu0 %v8853
    %10790 = vmatpush.bf16.msra.mxu0 %v8848
    %10791 = vmatpush.bf16.msra.mxu0 %v8843
    %10792 = vmatpush.bf16.msra.mxu0 %v8838
    %10793 = vmatpush.bf16.msra.mxu0 %v8833
    %10794 = vmatpush.bf16.msra.mxu0 %v8828
    %10795 = vmatmul.bf16.gmra.mxu0 %v5276
    %v10796 = vpop.f32.mrf.mxu0
    %v10797 = vadd.f32 %v10783, %v10796
    %v10798 = vpop.f32.mrf.mxu0
    %v10799 = vadd.f32 %v10785, %v10798
    %10800 = vdwg.mxu0
    %10801 = vmatpush.bf16.msra.mxu0 %v8903
    %10802 = vmatpush.bf16.msra.mxu0 %v8898
    %10803 = vmatpush.bf16.msra.mxu0 %v8893
    %10804 = vmatpush.bf16.msra.mxu0 %v8888
    %10805 = vmatpush.bf16.msra.mxu0 %v8883
    %10806 = vmatpush.bf16.msra.mxu0 %v8878
    %10807 = vmatpush.bf16.msra.mxu0 %v8873
    %10808 = vmatpush.bf16.msra.mxu0 %v8868
    %10809 = vmatmul.bf16.gmra.mxu0 %v5277
    %v10810 = vpop.f32.mrf.mxu0
    %v10811 = vadd.f32 %v10797, %v10810
    %v10812 = vpop.f32.mrf.mxu0
    %v10813 = vadd.f32 %v10799, %v10812
    %10814 = vdwg.mxu0
    %10815 = vmatpush.bf16.msra.mxu0 %v8943
    %10816 = vmatpush.bf16.msra.mxu0 %v8938
    %10817 = vmatpush.bf16.msra.mxu0 %v8933
    %10818 = vmatpush.bf16.msra.mxu0 %v8928
    %10819 = vmatpush.bf16.msra.mxu0 %v8923
    %10820 = vmatpush.bf16.msra.mxu0 %v8918
    %10821 = vmatpush.bf16.msra.mxu0 %v8913
    %10822 = vmatpush.bf16.msra.mxu0 %v8908
    %10823 = vmatmul.bf16.gmra.mxu0 %v5278
    %v10824 = vpop.f32.mrf.mxu0
    %v10825 = vadd.f32 %v10811, %v10824
    %v10826 = vpop.f32.mrf.mxu0
    %v10827 = vadd.f32 %v10813, %v10826
    %10828 = vdwg.mxu0
    %10829 = vmatpush.bf16.msra.mxu0 %v8983
    %10830 = vmatpush.bf16.msra.mxu0 %v8978
    %10831 = vmatpush.bf16.msra.mxu0 %v8973
    %10832 = vmatpush.bf16.msra.mxu0 %v8968
    %10833 = vmatpush.bf16.msra.mxu0 %v8963
    %10834 = vmatpush.bf16.msra.mxu0 %v8958
    %10835 = vmatpush.bf16.msra.mxu0 %v8953
    %10836 = vmatpush.bf16.msra.mxu0 %v8948
    %10837 = vmatmul.bf16.gmra.mxu0 %v5279
    %v10838 = vpop.f32.mrf.mxu0
    %v10839 = vadd.f32 %v10825, %v10838
    %v10840 = vpop.f32.mrf.mxu0
    %v10841 = vadd.f32 %v10827, %v10840
    %10842 = vdwg.mxu0
    %10843 = vmatpush.bf16.msra.mxu0 %v9023
    %10844 = vmatpush.bf16.msra.mxu0 %v9018
    %10845 = vmatpush.bf16.msra.mxu0 %v9013
    %10846 = vmatpush.bf16.msra.mxu0 %v9008
    %10847 = vmatpush.bf16.msra.mxu0 %v9003
    %10848 = vmatpush.bf16.msra.mxu0 %v8998
    %10849 = vmatpush.bf16.msra.mxu0 %v8993
    %10850 = vmatpush.bf16.msra.mxu0 %v8988
    %10851 = vmatmul.bf16.gmra.mxu0 %v5280
    %v10852 = vpop.f32.mrf.mxu0
    %v10853 = vadd.f32 %v10839, %v10852
    %v10854 = vpop.f32.mrf.mxu0
    %v10855 = vadd.f32 %v10841, %v10854
    %10856 = vdwg.mxu0
    %10857 = vmatpush.bf16.msra.mxu0 %v9063
    %10858 = vmatpush.bf16.msra.mxu0 %v9058
    %10859 = vmatpush.bf16.msra.mxu0 %v9053
    %10860 = vmatpush.bf16.msra.mxu0 %v9048
    %10861 = vmatpush.bf16.msra.mxu0 %v9043
    %10862 = vmatpush.bf16.msra.mxu0 %v9038
    %10863 = vmatpush.bf16.msra.mxu0 %v9033
    %10864 = vmatpush.bf16.msra.mxu0 %v9028
    %10865 = vmatmul.bf16.gmra.mxu0 %v5281
    %v10866 = vpop.f32.mrf.mxu0
    %v10867 = vadd.f32 %v10853, %v10866
    %v10868 = vpop.f32.mrf.mxu0
    %v10869 = vadd.f32 %v10855, %v10868
    %10870 = vdwg.mxu0
    %10871 = vmatpush.bf16.msra.mxu0 %v9103
    %10872 = vmatpush.bf16.msra.mxu0 %v9098
    %10873 = vmatpush.bf16.msra.mxu0 %v9093
    %10874 = vmatpush.bf16.msra.mxu0 %v9088
    %10875 = vmatpush.bf16.msra.mxu0 %v9083
    %10876 = vmatpush.bf16.msra.mxu0 %v9078
    %10877 = vmatpush.bf16.msra.mxu0 %v9073
    %10878 = vmatpush.bf16.msra.mxu0 %v9068
    %10879 = vmatmul.bf16.gmra.mxu0 %v5282
    %v10880 = vpop.f32.mrf.mxu0
    %v10881 = vadd.f32 %v10867, %v10880
    %v10882 = vpop.f32.mrf.mxu0
    %v10883 = vadd.f32 %v10869, %v10882
    %10884 = vdwg.mxu0
    %10885 = vmatpush.bf16.msra.mxu0 %v9143
    %10886 = vmatpush.bf16.msra.mxu0 %v9138
    %10887 = vmatpush.bf16.msra.mxu0 %v9133
    %10888 = vmatpush.bf16.msra.mxu0 %v9128
    %10889 = vmatpush.bf16.msra.mxu0 %v9123
    %10890 = vmatpush.bf16.msra.mxu0 %v9118
    %10891 = vmatpush.bf16.msra.mxu0 %v9113
    %10892 = vmatpush.bf16.msra.mxu0 %v9108
    %10893 = vmatmul.bf16.gmra.mxu0 %v5283
    %v10894 = vpop.f32.mrf.mxu0
    %v10895 = vadd.f32 %v10881, %v10894
    %v10896 = vpop.f32.mrf.mxu0
    %v10897 = vadd.f32 %v10883, %v10896
    %10898 = vdwg.mxu0
    %10899 = vmatpush.bf16.msra.mxu0 %v9183
    %10900 = vmatpush.bf16.msra.mxu0 %v9178
    %10901 = vmatpush.bf16.msra.mxu0 %v9173
    %10902 = vmatpush.bf16.msra.mxu0 %v9168
    %10903 = vmatpush.bf16.msra.mxu0 %v9163
    %10904 = vmatpush.bf16.msra.mxu0 %v9158
    %10905 = vmatpush.bf16.msra.mxu0 %v9153
    %10906 = vmatpush.bf16.msra.mxu0 %v9148
    %10907 = vmatmul.bf16.gmra.mxu0 %v5284
    %v10908 = vpop.f32.mrf.mxu0
    %v10909 = vadd.f32 %v10895, %v10908
    %v10910 = vpop.f32.mrf.mxu0
    %v10911 = vadd.f32 %v10897, %v10910
    %10912 = vdwg.mxu0
    %10913 = vmatpush.bf16.msra.mxu0 %v8504
    %10914 = vmatpush.bf16.msra.mxu0 %v8499
    %10915 = vmatpush.bf16.msra.mxu0 %v8494
    %10916 = vmatpush.bf16.msra.mxu0 %v8489
    %10917 = vmatpush.bf16.msra.mxu0 %v8484
    %10918 = vmatpush.bf16.msra.mxu0 %v8479
    %10919 = vmatpush.bf16.msra.mxu0 %v8474
    %10920 = vmatpush.bf16.msra.mxu0 %v8469
    %10921 = vmatmul.bf16.gmra.mxu0 %v5267
    %v10922 = vpop.f32.mrf.mxu0
    %v10923 = vadd.f32 %v6155, %v10922
    %v10924 = vpop.f32.mrf.mxu0
    %v10925 = vadd.f32 %v6155, %v10924
    %10926 = vdwg.mxu0
    %10927 = vmatpush.bf16.msra.mxu0 %v8544
    %10928 = vmatpush.bf16.msra.mxu0 %v8539
    %10929 = vmatpush.bf16.msra.mxu0 %v8534
    %10930 = vmatpush.bf16.msra.mxu0 %v8529
    %10931 = vmatpush.bf16.msra.mxu0 %v8524
    %10932 = vmatpush.bf16.msra.mxu0 %v8519
    %10933 = vmatpush.bf16.msra.mxu0 %v8514
    %10934 = vmatpush.bf16.msra.mxu0 %v8509
    %10935 = vmatmul.bf16.gmra.mxu0 %v5268
    %v10936 = vpop.f32.mrf.mxu0
    %v10937 = vadd.f32 %v10923, %v10936
    %v10938 = vpop.f32.mrf.mxu0
    %v10939 = vadd.f32 %v10925, %v10938
    %10940 = vdwg.mxu0
    %10941 = vmatpush.bf16.msra.mxu0 %v8584
    %10942 = vmatpush.bf16.msra.mxu0 %v8579
    %10943 = vmatpush.bf16.msra.mxu0 %v8574
    %10944 = vmatpush.bf16.msra.mxu0 %v8569
    %10945 = vmatpush.bf16.msra.mxu0 %v8564
    %10946 = vmatpush.bf16.msra.mxu0 %v8559
    %10947 = vmatpush.bf16.msra.mxu0 %v8554
    %10948 = vmatpush.bf16.msra.mxu0 %v8549
    %10949 = vmatmul.bf16.gmra.mxu0 %v5269
    %v10950 = vpop.f32.mrf.mxu0
    %v10951 = vadd.f32 %v10937, %v10950
    %v10952 = vpop.f32.mrf.mxu0
    %v10953 = vadd.f32 %v10939, %v10952
    %10954 = vdwg.mxu0
    %10955 = vmatpush.bf16.msra.mxu0 %v8624
    %10956 = vmatpush.bf16.msra.mxu0 %v8619
    %10957 = vmatpush.bf16.msra.mxu0 %v8614
    %10958 = vmatpush.bf16.msra.mxu0 %v8609
    %10959 = vmatpush.bf16.msra.mxu0 %v8604
    %10960 = vmatpush.bf16.msra.mxu0 %v8599
    %10961 = vmatpush.bf16.msra.mxu0 %v8594
    %10962 = vmatpush.bf16.msra.mxu0 %v8589
    %10963 = vmatmul.bf16.gmra.mxu0 %v5270
    %v10964 = vpop.f32.mrf.mxu0
    %v10965 = vadd.f32 %v10951, %v10964
    %v10966 = vpop.f32.mrf.mxu0
    %v10967 = vadd.f32 %v10953, %v10966
    %10968 = vdwg.mxu0
    %10969 = vmatpush.bf16.msra.mxu0 %v8664
    %10970 = vmatpush.bf16.msra.mxu0 %v8659
    %10971 = vmatpush.bf16.msra.mxu0 %v8654
    %10972 = vmatpush.bf16.msra.mxu0 %v8649
    %10973 = vmatpush.bf16.msra.mxu0 %v8644
    %10974 = vmatpush.bf16.msra.mxu0 %v8639
    %10975 = vmatpush.bf16.msra.mxu0 %v8634
    %10976 = vmatpush.bf16.msra.mxu0 %v8629
    %10977 = vmatmul.bf16.gmra.mxu0 %v5271
    %v10978 = vpop.f32.mrf.mxu0
    %v10979 = vadd.f32 %v10965, %v10978
    %v10980 = vpop.f32.mrf.mxu0
    %v10981 = vadd.f32 %v10967, %v10980
    %10982 = vdwg.mxu0
    %10983 = vmatpush.bf16.msra.mxu0 %v8704
    %10984 = vmatpush.bf16.msra.mxu0 %v8699
    %10985 = vmatpush.bf16.msra.mxu0 %v8694
    %10986 = vmatpush.bf16.msra.mxu0 %v8689
    %10987 = vmatpush.bf16.msra.mxu0 %v8684
    %10988 = vmatpush.bf16.msra.mxu0 %v8679
    %10989 = vmatpush.bf16.msra.mxu0 %v8674
    %10990 = vmatpush.bf16.msra.mxu0 %v8669
    %10991 = vmatmul.bf16.gmra.mxu0 %v5272
    %v10992 = vpop.f32.mrf.mxu0
    %v10993 = vadd.f32 %v10979, %v10992
    %v10994 = vpop.f32.mrf.mxu0
    %v10995 = vadd.f32 %v10981, %v10994
    %10996 = vdwg.mxu0
    %10997 = vmatpush.bf16.msra.mxu0 %v8744
    %10998 = vmatpush.bf16.msra.mxu0 %v8739
    %10999 = vmatpush.bf16.msra.mxu0 %v8734
    %11000 = vmatpush.bf16.msra.mxu0 %v8729
    %11001 = vmatpush.bf16.msra.mxu0 %v8724
    %11002 = vmatpush.bf16.msra.mxu0 %v8719
    %11003 = vmatpush.bf16.msra.mxu0 %v8714
    %11004 = vmatpush.bf16.msra.mxu0 %v8709
    %11005 = vmatmul.bf16.gmra.mxu0 %v5273
    %v11006 = vpop.f32.mrf.mxu0
    %v11007 = vadd.f32 %v10993, %v11006
    %v11008 = vpop.f32.mrf.mxu0
    %v11009 = vadd.f32 %v10995, %v11008
    %11010 = vdwg.mxu0
    %11011 = vmatpush.bf16.msra.mxu0 %v8784
    %11012 = vmatpush.bf16.msra.mxu0 %v8779
    %11013 = vmatpush.bf16.msra.mxu0 %v8774
    %11014 = vmatpush.bf16.msra.mxu0 %v8769
    %11015 = vmatpush.bf16.msra.mxu0 %v8764
    %11016 = vmatpush.bf16.msra.mxu0 %v8759
    %11017 = vmatpush.bf16.msra.mxu0 %v8754
    %11018 = vmatpush.bf16.msra.mxu0 %v8749
    %11019 = vmatmul.bf16.gmra.mxu0 %v5274
    %v11020 = vpop.f32.mrf.mxu0
    %v11021 = vadd.f32 %v11007, %v11020
    %v11022 = vpop.f32.mrf.mxu0
    %v11023 = vadd.f32 %v11009, %v11022
    %11024 = vdwg.mxu0
    %11025 = vmatpush.bf16.msra.mxu0 %v8824
    %11026 = vmatpush.bf16.msra.mxu0 %v8819
    %11027 = vmatpush.bf16.msra.mxu0 %v8814
    %11028 = vmatpush.bf16.msra.mxu0 %v8809
    %11029 = vmatpush.bf16.msra.mxu0 %v8804
    %11030 = vmatpush.bf16.msra.mxu0 %v8799
    %11031 = vmatpush.bf16.msra.mxu0 %v8794
    %11032 = vmatpush.bf16.msra.mxu0 %v8789
    %11033 = vmatmul.bf16.gmra.mxu0 %v5275
    %v11034 = vpop.f32.mrf.mxu0
    %v11035 = vadd.f32 %v11021, %v11034
    %v11036 = vpop.f32.mrf.mxu0
    %v11037 = vadd.f32 %v11023, %v11036
    %11038 = vdwg.mxu0
    %11039 = vmatpush.bf16.msra.mxu0 %v8864
    %11040 = vmatpush.bf16.msra.mxu0 %v8859
    %11041 = vmatpush.bf16.msra.mxu0 %v8854
    %11042 = vmatpush.bf16.msra.mxu0 %v8849
    %11043 = vmatpush.bf16.msra.mxu0 %v8844
    %11044 = vmatpush.bf16.msra.mxu0 %v8839
    %11045 = vmatpush.bf16.msra.mxu0 %v8834
    %11046 = vmatpush.bf16.msra.mxu0 %v8829
    %11047 = vmatmul.bf16.gmra.mxu0 %v5276
    %v11048 = vpop.f32.mrf.mxu0
    %v11049 = vadd.f32 %v11035, %v11048
    %v11050 = vpop.f32.mrf.mxu0
    %v11051 = vadd.f32 %v11037, %v11050
    %11052 = vdwg.mxu0
    %11053 = vmatpush.bf16.msra.mxu0 %v8904
    %11054 = vmatpush.bf16.msra.mxu0 %v8899
    %11055 = vmatpush.bf16.msra.mxu0 %v8894
    %11056 = vmatpush.bf16.msra.mxu0 %v8889
    %11057 = vmatpush.bf16.msra.mxu0 %v8884
    %11058 = vmatpush.bf16.msra.mxu0 %v8879
    %11059 = vmatpush.bf16.msra.mxu0 %v8874
    %11060 = vmatpush.bf16.msra.mxu0 %v8869
    %11061 = vmatmul.bf16.gmra.mxu0 %v5277
    %v11062 = vpop.f32.mrf.mxu0
    %v11063 = vadd.f32 %v11049, %v11062
    %v11064 = vpop.f32.mrf.mxu0
    %v11065 = vadd.f32 %v11051, %v11064
    %11066 = vdwg.mxu0
    %11067 = vmatpush.bf16.msra.mxu0 %v8944
    %11068 = vmatpush.bf16.msra.mxu0 %v8939
    %11069 = vmatpush.bf16.msra.mxu0 %v8934
    %11070 = vmatpush.bf16.msra.mxu0 %v8929
    %11071 = vmatpush.bf16.msra.mxu0 %v8924
    %11072 = vmatpush.bf16.msra.mxu0 %v8919
    %11073 = vmatpush.bf16.msra.mxu0 %v8914
    %11074 = vmatpush.bf16.msra.mxu0 %v8909
    %11075 = vmatmul.bf16.gmra.mxu0 %v5278
    %v11076 = vpop.f32.mrf.mxu0
    %v11077 = vadd.f32 %v11063, %v11076
    %v11078 = vpop.f32.mrf.mxu0
    %v11079 = vadd.f32 %v11065, %v11078
    %11080 = vdwg.mxu0
    %11081 = vmatpush.bf16.msra.mxu0 %v8984
    %11082 = vmatpush.bf16.msra.mxu0 %v8979
    %11083 = vmatpush.bf16.msra.mxu0 %v8974
    %11084 = vmatpush.bf16.msra.mxu0 %v8969
    %11085 = vmatpush.bf16.msra.mxu0 %v8964
    %11086 = vmatpush.bf16.msra.mxu0 %v8959
    %11087 = vmatpush.bf16.msra.mxu0 %v8954
    %11088 = vmatpush.bf16.msra.mxu0 %v8949
    %11089 = vmatmul.bf16.gmra.mxu0 %v5279
    %v11090 = vpop.f32.mrf.mxu0
    %v11091 = vadd.f32 %v11077, %v11090
    %v11092 = vpop.f32.mrf.mxu0
    %v11093 = vadd.f32 %v11079, %v11092
    %11094 = vdwg.mxu0
    %11095 = vmatpush.bf16.msra.mxu0 %v9024
    %11096 = vmatpush.bf16.msra.mxu0 %v9019
    %11097 = vmatpush.bf16.msra.mxu0 %v9014
    %11098 = vmatpush.bf16.msra.mxu0 %v9009
    %11099 = vmatpush.bf16.msra.mxu0 %v9004
    %11100 = vmatpush.bf16.msra.mxu0 %v8999
    %11101 = vmatpush.bf16.msra.mxu0 %v8994
    %11102 = vmatpush.bf16.msra.mxu0 %v8989
    %11103 = vmatmul.bf16.gmra.mxu0 %v5280
    %v11104 = vpop.f32.mrf.mxu0
    %v11105 = vadd.f32 %v11091, %v11104
    %v11106 = vpop.f32.mrf.mxu0
    %v11107 = vadd.f32 %v11093, %v11106
    %11108 = vdwg.mxu0
    %11109 = vmatpush.bf16.msra.mxu0 %v9064
    %11110 = vmatpush.bf16.msra.mxu0 %v9059
    %11111 = vmatpush.bf16.msra.mxu0 %v9054
    %11112 = vmatpush.bf16.msra.mxu0 %v9049
    %11113 = vmatpush.bf16.msra.mxu0 %v9044
    %11114 = vmatpush.bf16.msra.mxu0 %v9039
    %11115 = vmatpush.bf16.msra.mxu0 %v9034
    %11116 = vmatpush.bf16.msra.mxu0 %v9029
    %11117 = vmatmul.bf16.gmra.mxu0 %v5281
    %v11118 = vpop.f32.mrf.mxu0
    %v11119 = vadd.f32 %v11105, %v11118
    %v11120 = vpop.f32.mrf.mxu0
    %v11121 = vadd.f32 %v11107, %v11120
    %11122 = vdwg.mxu0
    %11123 = vmatpush.bf16.msra.mxu0 %v9104
    %11124 = vmatpush.bf16.msra.mxu0 %v9099
    %11125 = vmatpush.bf16.msra.mxu0 %v9094
    %11126 = vmatpush.bf16.msra.mxu0 %v9089
    %11127 = vmatpush.bf16.msra.mxu0 %v9084
    %11128 = vmatpush.bf16.msra.mxu0 %v9079
    %11129 = vmatpush.bf16.msra.mxu0 %v9074
    %11130 = vmatpush.bf16.msra.mxu0 %v9069
    %11131 = vmatmul.bf16.gmra.mxu0 %v5282
    %v11132 = vpop.f32.mrf.mxu0
    %v11133 = vadd.f32 %v11119, %v11132
    %v11134 = vpop.f32.mrf.mxu0
    %v11135 = vadd.f32 %v11121, %v11134
    %11136 = vdwg.mxu0
    %11137 = vmatpush.bf16.msra.mxu0 %v9144
    %11138 = vmatpush.bf16.msra.mxu0 %v9139
    %11139 = vmatpush.bf16.msra.mxu0 %v9134
    %11140 = vmatpush.bf16.msra.mxu0 %v9129
    %11141 = vmatpush.bf16.msra.mxu0 %v9124
    %11142 = vmatpush.bf16.msra.mxu0 %v9119
    %11143 = vmatpush.bf16.msra.mxu0 %v9114
    %11144 = vmatpush.bf16.msra.mxu0 %v9109
    %11145 = vmatmul.bf16.gmra.mxu0 %v5283
    %v11146 = vpop.f32.mrf.mxu0
    %v11147 = vadd.f32 %v11133, %v11146
    %v11148 = vpop.f32.mrf.mxu0
    %v11149 = vadd.f32 %v11135, %v11148
    %11150 = vdwg.mxu0
    %11151 = vmatpush.bf16.msra.mxu0 %v9184
    %11152 = vmatpush.bf16.msra.mxu0 %v9179
    %11153 = vmatpush.bf16.msra.mxu0 %v9174
    %11154 = vmatpush.bf16.msra.mxu0 %v9169
    %11155 = vmatpush.bf16.msra.mxu0 %v9164
    %11156 = vmatpush.bf16.msra.mxu0 %v9159
    %11157 = vmatpush.bf16.msra.mxu0 %v9154
    %11158 = vmatpush.bf16.msra.mxu0 %v9149
    %11159 = vmatmul.bf16.gmra.mxu0 %v5284
    %v11160 = vpop.f32.mrf.mxu0
    %v11161 = vadd.f32 %v11147, %v11160
    %v11162 = vpop.f32.mrf.mxu0
    %v11163 = vadd.f32 %v11149, %v11162
    %11164 = vdwg.mxu0
    %11165 = vst [vmem:[#allocation2] sm:$0xff] %v10153
    %11166 = vst [vmem:[#allocation2 + $0x8] sm:$0xff] %v10405
    %11167 = vst [vmem:[#allocation2 + $0x10] sm:$0xff] %v10657
    %11168 = vst [vmem:[#allocation2 + $0x18] sm:$0xff] %v10909
    %11169 = vst.msk [vmem:[#allocation2 + $0x20] sm:$0xff] %vm3967, %v11161
    %11170 = vst [vmem:[#allocation2 + $0x28] sm:$0xff] %v10155
    %11171 = vst [vmem:[#allocation2 + $0x30] sm:$0xff] %v10407
    %11172 = vst [vmem:[#allocation2 + $0x38] sm:$0xff] %v10659
    %11173 = vst [vmem:[#allocation2 + $0x40] sm:$0xff] %v10911
    %11174 = vst.msk [vmem:[#allocation2 + $0x48] sm:$0xff] %vm3967, %v11163
    // Predicated region
    $region22: #{tpu_custom_call.1} parent=1 // pred_check
      _
    $region23: #{tpu_custom_call.1} parent=1 // pred_check_branch
      %11176 = sbr.rel (0) target = $region25
    $region24: #{tpu_custom_call.1} parent=1 // pred_region
      %11178 = vsyncadd [#allocation3], 0
      %s11179 = sshll.u32 [#allocation2], 4
      %s11180 = int_to_ptr.vmem [resolvable:$true] %s11179
      %s11181 = sshll.u32 %s5, 4
      %s11182 = int_to_ptr.hbm [resolvable:$true] %s11181
      %11187 = dma.vmem_to_hbm [thread:$0]  %s11180, 1280, %s11182, [#allocation3], 640, 640, 40
    $region25: #{tpu_custom_call.1} parent=1 // pred_fallthru
      _
    // Predicated region
    $region26: #{tpu_custom_call.1} parent=1 // pred_check
      _
    $region27: #{tpu_custom_call.1} parent=1 // pred_check_branch
      %11189 = sbr.rel (0) target = $region29
    $region28: #{tpu_custom_call.1} parent=1 // pred_region
      %11191 = dma.done [#allocation3], 1280
    $region29: #{tpu_custom_call.1} parent=1 // pred_fallthru
      _
    %11192 = vsyncpa [#allocation3], 1

</llo_original>
